<compile_context>
chip_gen: v7x
topology: tpu7x:2x2x1
jax: 0.10.0
libtpu: 0.0.40
codegen_flags: <defaults>
</compile_context>

<pallas_src>
import functools

import jax
import jax.numpy as jnp
from jax import lax
from jax.experimental import pallas as pl
from jax.experimental.pallas import tpu as pltpu

EPS = 1e-5      # nn.BatchNorm2d default eps
LANE = 128      # TPU lane width: channel dims are padded to this (lane-dense)

# Matmul compute dtype.  jnp.float32 tracks the f32 reference closely; on
# v6e/v7x set to jnp.bfloat16 for ~2x MXU throughput at production shapes
# (and loosen the numerical tolerance accordingly).
MXU_DTYPE = jnp.float32


def _round_up(x, m):
    return (x + m - 1) // m * m


def _dot(a, b):
    return jnp.dot(a.astype(MXU_DTYPE), b.astype(MXU_DTYPE),
                   preferred_element_type=jnp.float32)


# ---------------------------------------------------------------------------
# Fused Bottleneck kernel (runs once: grid=(1,))
# ---------------------------------------------------------------------------
def _make_bottleneck_kernel(Mp, CP, W, margin, inv_count):
    """Mp = N*(H+2)*(W+2) halo-grid rows, CP = lane-padded channels,
    margin = scratch halo rows (>= W+3, multiple of 8),
    inv_count = 1 / (N*H*W) for the training-mode BN statistics."""
    row_stride = W + 2  # flattened-index delta for a +1 shift in y

    def kernel(x_ref, w1_ref, w2_ref, w3_ref, bn_ref, mask_ref, o_ref, h1s_ref):
        mask = mask_ref[...]    # (Mp, 1) f32 — 1.0 on real pixels, 0.0 on halo

        def bn_fold(h, gamma, beta, *, apply_mask):
            # Training-mode BN over the N*H*W real pixels, folded to one FMA.
            # var = E[h^2] - mean^2 (single reduction pass; benign at BN scale).
            hm = h * mask if apply_mask else h
            mean = jnp.sum(hm, axis=0, keepdims=True) * inv_count
            ex2 = jnp.sum(hm * hm, axis=0, keepdims=True) * inv_count
            var = ex2 - mean * mean
            a = gamma * lax.rsqrt(var + EPS)
            return a, beta - mean * a

        # ---- conv1 (1x1) + bn1 + relu ------------------------------------
        h = _dot(x_ref[...], w1_ref[...])
        # x's halo rows are exactly zero, hence so are h's -> no mask needed
        # for the statistics of bn1.
        a, b = bn_fold(h, bn_ref[0:1, :], bn_ref[1:2, :], apply_mask=False)
        # The mask re-imposes conv2's zero padding on the halo rows of h1.
        h1 = jnp.maximum(h * a + b, 0.0) * mask                    # (Mp, CP)

        # ---- conv2 (3x3, stride 1, pad 1) as 9 shifted-slice matmuls ------
        # h1 sits in a VMEM scratch with `margin` rows above and below, so
        # each tap is a contiguous (Mp, CP) slice at offset dy*(W+2)+dx.
        # Only the margins need zeroing (the interior is overwritten by h1);
        # uninitialized margins could hold NaN/Inf and poison the BN sums.
        zeros_margin = jnp.zeros((margin, CP), jnp.float32)
        h1s_ref[0:margin, :] = zeros_margin
        h1s_ref[margin + Mp:2 * margin + Mp, :] = zeros_margin
        h1s_ref[margin:margin + Mp, :] = h1

        acc = jnp.zeros_like(h1)
        for t in range(9):
            dy, dx = t // 3 - 1, t % 3 - 1
            start = margin + dy * row_stride + dx
            acc = acc + _dot(h1s_ref[start:start + Mp, :], w2_ref[t])
        a, b = bn_fold(acc, bn_ref[2:3, :], bn_ref[3:4, :], apply_mask=True)
        h2 = jnp.maximum(acc * a + b, 0.0)                         # (Mp, CP)

        # ---- conv3 (1x1) + bn3 + residual + relu --------------------------
        # (halo rows carry dead values; they are cropped in the wrapper)
        h = _dot(h2, w3_ref[...])
        a, b = bn_fold(h, bn_ref[4:5, :], bn_ref[5:6, :], apply_mask=True)
        o_ref[...] = jnp.maximum(h * a + b + x_ref[...], 0.0)

    return kernel


# ---------------------------------------------------------------------------
# Bottleneck forward (stride=1, dilation=1, downsample=None)
# ---------------------------------------------------------------------------
@jax.jit
def bottleneck_forward(x_nchw, p):
    N, Cin, H, W = x_nchw.shape
    planes = p["w1"].shape[0]
    Cout = 4 * planes
    assert Cin == Cout, "downsample=None requires inplanes == planes * 4"

    Mp = N * (H + 2) * (W + 2)                 # halo-grid rows
    assert Mp % 8 == 0, "N*(H+2)*(W+2) must be a multiple of the sublane tile"
    CP = _round_up(max(Cin, planes, Cout), LANE)     # lane-dense channel dim
    margin = _round_up(W + 3, 8)                     # scratch halo, aligned

    def pad_to(a, axis, size):
        pads = [(0, 0)] * a.ndim
        pads[axis] = (0, size - a.shape[axis])
        return jnp.pad(a, pads)

    # Activations: NCHW -> NHWC -> spatially zero-padded halo grid ->
    # (rows, channels), channels zero-padded to CP lanes.
    x_halo = jnp.pad(jnp.transpose(x_nchw, (0, 2, 3, 1)),
                     ((0, 0), (1, 1), (1, 1), (0, 0)))       # (N, H+2, W+2, Cin)
    x2d = pad_to(x_halo.reshape(Mp, Cin), 1, CP)             # (Mp, CP)

    # Interior-pixel mask (1.0 on real pixels, 0.0 on halo rows).
    mask = (jnp.zeros((N, H + 2, W + 2), jnp.float32)
            .at[:, 1:H + 1, 1:W + 1].set(1.0)).reshape(Mp, 1)

    # Conv weights as (K, C) matmul operands, zero-padded to (CP, CP).
    w1 = p["w1"].reshape(planes, Cin).T                               # (Cin, planes)
    w1_p = pad_to(pad_to(w1, 0, CP), 1, CP)
    w2 = jnp.transpose(p["w2"], (2, 3, 1, 0)).reshape(9, planes, planes)  # (tap,in,out)
    w2_p = pad_to(pad_to(w2, 1, CP), 2, CP)                           # (9, CP, CP)
    w3 = p["w3"].reshape(Cout, planes).T                              # (planes, Cout)
    w3_p = pad_to(pad_to(w3, 0, CP), 1, CP)

    # BN affine params packed row-wise: [g1, b1, g2, b2, g3, b3], padded to CP.
    bn_p = jnp.stack([pad_to(p[k], 0, CP)
                      for k in ("g1", "b1", "g2", "b2", "g3", "b3")])  # (6, CP)

    kernel = _make_bottleneck_kernel(Mp, CP, W, margin, 1.0 / (N * H * W))
    flops = 2 * Mp * CP * CP * 11                    # 11 (Mp,CP)x(CP,CP) matmuls
    bytes_accessed = 4 * (2 * Mp * CP + Mp + 11 * CP * CP + 6 * CP)

    out2d = pl.pallas_call(
        kernel,
        out_shape=jax.ShapeDtypeStruct((Mp, CP), jnp.float32),
        grid=(1,),
        in_specs=[
            pl.BlockSpec((Mp, CP), lambda i: (0, 0)),          # x (also residual)
            pl.BlockSpec((CP, CP), lambda i: (0, 0)),          # w1
            pl.BlockSpec((9, CP, CP), lambda i: (0, 0, 0)),    # w2 (9 taps)
            pl.BlockSpec((CP, CP), lambda i: (0, 0)),          # w3
            pl.BlockSpec((6, CP), lambda i: (0, 0)),           # bn gammas/betas
            pl.BlockSpec((Mp, 1), lambda i: (0, 0)),           # interior mask
        ],
        out_specs=pl.BlockSpec((Mp, CP), lambda i: (0, 0)),
        scratch_shapes=[pltpu.VMEM((Mp + 2 * margin, CP), jnp.float32)],
        input_output_aliases={0: 0},        # residual input buffer -> output
        compiler_params=pltpu.CompilerParams(
            dimension_semantics=("arbitrary",),
            vmem_limit_bytes=32 * 1024 * 1024),
        cost_estimate=pl.CostEstimate(flops=flops,
                                      transcendentals=3 * CP,
                                      bytes_accessed=bytes_accessed),
    )(x2d, w1_p, w2_p, w3_p, bn_p, mask)

    # Crop the halo + channel padding and return to NCHW.
    out = out2d.reshape(N, H + 2, W + 2, CP)[:, 1:H + 1, 1:W + 1, :Cout]
    return jnp.transpose(out, (0, 3, 1, 2))


# ---------------------------------------------------------------------------
# Pure-JAX reference (mirrors the PyTorch module in train() mode, NCHW)
# ---------------------------------------------------------------------------
def bottleneck_reference(x, p):
    def bn(h, gamma, beta):
        mean = jnp.mean(h, axis=(0, 2, 3), keepdims=True)
        var = jnp.mean((h - mean) ** 2, axis=(0, 2, 3), keepdims=True)
        return ((h - mean) * lax.rsqrt(var + EPS)
                * gamma[None, :, None, None] + beta[None, :, None, None])

    conv = functools.partial(
        lax.conv_general_dilated,
        dimension_numbers=("NCHW", "OIHW", "NCHW"),
        precision=lax.Precision.HIGHEST,
    )
    h = jax.nn.relu(bn(conv(x, p["w1"], (1, 1), "VALID"), p["g1"], p["b1"]))
    h = jax.nn.relu(bn(conv(h, p["w2"], (1, 1), [(1, 1), (1, 1)]), p["g2"], p["b2"]))
    h = bn(conv(h, p["w3"], (1, 1), "VALID"), p["g3"], p["b3"])
    return jax.nn.relu(h + x)  # downsample is None -> residual = x


# ---------------------------------------------------------------------------
if __name__ == "__main__":
    # Small shapes consistent with the module: inplanes = planes * expansion.
    N, H, W = 2, 16, 16
    planes = 4
    inplanes = planes * 4  # 16

    key = jax.random.PRNGKey(0)
    kx, k1, k2, k3 = jax.random.split(key, 4)

    x = jax.random.normal(kx, (N, inplanes, H, W), dtype=jnp.float32)

    params = {
        # conv weights in PyTorch OIHW layout
        "w1": 0.1 * jax.random.normal(k1, (planes, inplanes, 1, 1), jnp.float32),
        "w2": 0.1 * jax.random.normal(k2, (planes, planes, 3, 3), jnp.float32),
        "w3": 0.1 * jax.random.normal(k3, (planes * 4, planes, 1, 1), jnp.float32),
        # BatchNorm affine params (deterministic, non-trivial)
        "g1": jnp.linspace(0.5, 1.5, planes, dtype=jnp.float32),
        "b1": jnp.linspace(-0.2, 0.2, planes, dtype=jnp.float32),
        "g2": jnp.linspace(0.8, 1.2, planes, dtype=jnp.float32),
        "b2": jnp.linspace(-0.1, 0.1, planes, dtype=jnp.float32),
        "g3": jnp.linspace(0.6, 1.4, planes * 4, dtype=jnp.float32),
        "b3": jnp.linspace(-0.3, 0.3, planes * 4, dtype=jnp.float32),
    }

    out = jax.block_until_ready(bottleneck_forward(x, params))
    ref = jax.block_until_ready(bottleneck_reference(x, params))

    assert out.shape == (N, inplanes, H, W)
    max_err = float(jnp.max(jnp.abs(out - ref)))
    assert jnp.allclose(out, ref, rtol=1e-2, atol=1e-2), f"max abs err = {max_err}"
    print("KERNEL_OK")
</pallas_src>

<mosaic_0001>
module attributes {stable_mosaic.version = 11 : i64} {
  func.func @kernel(%arg0: i32, %arg1: memref<648x128xf32, #tpu.memory_space<vmem>>, %arg2: memref<128x128xf32, #tpu.memory_space<vmem>>, %arg3: memref<9x128x128xf32, #tpu.memory_space<vmem>>, %arg4: memref<128x128xf32, #tpu.memory_space<vmem>>, %arg5: memref<6x128xf32, #tpu.memory_space<vmem>>, %arg6: memref<648x1xf32, #tpu.memory_space<vmem>>, %arg7: memref<648x128xf32, #tpu.memory_space<vmem>>, %arg8: memref<696x128xf32, #tpu.memory_space<vmem>>) attributes {dimension_semantics = [#tpu.dimension_semantics<arbitrary>], iteration_bounds = array<i64: 1>, scalar_prefetch = 0 : i64, scratch_operands = 1 : i64, tpu.core_type = #tpu.core_type<tc>, window_params = [{pipeline_mode = #tpu.pipeline_mode<synchronous>, transform_indices = @transform_0, window_bounds = array<i64: 648, 128>}, {pipeline_mode = #tpu.pipeline_mode<synchronous>, transform_indices = @transform_1, window_bounds = array<i64: 128, 128>}, {pipeline_mode = #tpu.pipeline_mode<synchronous>, transform_indices = @transform_2, window_bounds = array<i64: 9, 128, 128>}, {pipeline_mode = #tpu.pipeline_mode<synchronous>, transform_indices = @transform_3, window_bounds = array<i64: 128, 128>}, {pipeline_mode = #tpu.pipeline_mode<synchronous>, transform_indices = @transform_4, window_bounds = array<i64: 6, 128>}, {pipeline_mode = #tpu.pipeline_mode<synchronous>, transform_indices = @transform_5, window_bounds = array<i64: 648, 1>}, {pipeline_mode = #tpu.pipeline_mode<synchronous>, transform_indices = @transform_6, window_bounds = array<i64: 648, 128>}]} {
    %c0 = arith.constant 0 : index
    %c0_0 = arith.constant 0 : index
    %0 = vector.load %arg6[%c0, %c0_0] : memref<648x1xf32, #tpu.memory_space<vmem>>, vector<648x1xf32>
    %c0_1 = arith.constant 0 : index
    %c0_2 = arith.constant 0 : index
    %1 = vector.load %arg1[%c0_1, %c0_2] : memref<648x128xf32, #tpu.memory_space<vmem>>, vector<648x128xf32>
    %c0_3 = arith.constant 0 : index
    %c0_4 = arith.constant 0 : index
    %2 = vector.load %arg2[%c0_3, %c0_4] : memref<128x128xf32, #tpu.memory_space<vmem>>, vector<128x128xf32>
    %cst = arith.constant dense<0.000000e+00> : vector<648x128xf32>
    %3 = tpu.matmul %1, %2, %cst {dimension_numbers = #tpu.dot_dimension_numbers<[1], [0], [0], [1], [0, 0, 1, 1], [], []>} : vector<648x128xf32>, vector<128x128xf32>, vector<648x128xf32> -> vector<648x128xf32>
    %c0_5 = arith.constant 0 : index
    %c0_6 = arith.constant 0 : index
    %4 = vector.load %arg5[%c0_5, %c0_6] : memref<6x128xf32, #tpu.memory_space<vmem>>, vector<1x128xf32>
    %c1 = arith.constant 1 : index
    %c0_7 = arith.constant 0 : index
    %5 = vector.load %arg5[%c1, %c0_7] : memref<6x128xf32, #tpu.memory_space<vmem>>, vector<1x128xf32>
    %cst_8 = arith.constant dense<0.000000e+00> : vector<128xf32>
    %6 = vector.multi_reduction <add>, %3, %cst_8 [0] : vector<648x128xf32> to vector<128xf32>
    %7 = vector.shape_cast %6 : vector<128xf32> to vector<1x128xf32>
    %cst_9 = arith.constant 0.001953125 : f32
    %8 = vector.broadcast %cst_9 : f32 to vector<1x128xf32>
    %9 = arith.mulf %7, %8 : vector<1x128xf32>
    %10 = arith.mulf %3, %3 : vector<648x128xf32>
    %cst_10 = arith.constant dense<0.000000e+00> : vector<128xf32>
    %11 = vector.multi_reduction <add>, %10, %cst_10 [0] : vector<648x128xf32> to vector<128xf32>
    %12 = vector.shape_cast %11 : vector<128xf32> to vector<1x128xf32>
    %cst_11 = arith.constant 0.001953125 : f32
    %13 = vector.broadcast %cst_11 : f32 to vector<1x128xf32>
    %14 = arith.mulf %12, %13 : vector<1x128xf32>
    %15 = arith.mulf %9, %9 : vector<1x128xf32>
    %16 = arith.subf %14, %15 : vector<1x128xf32>
    %cst_12 = arith.constant 9.99999974E-6 : f32
    %17 = vector.broadcast %cst_12 : f32 to vector<1x128xf32>
    %18 = arith.addf %16, %17 : vector<1x128xf32>
    %19 = math.rsqrt %18 : vector<1x128xf32>
    %20 = arith.mulf %4, %19 : vector<1x128xf32>
    %21 = arith.mulf %9, %20 : vector<1x128xf32>
    %22 = arith.subf %5, %21 : vector<1x128xf32>
    %23 = vector.broadcast %20 : vector<1x128xf32> to vector<648x128xf32>
    %24 = arith.mulf %3, %23 : vector<648x128xf32>
    %25 = vector.broadcast %22 : vector<1x128xf32> to vector<648x128xf32>
    %26 = arith.addf %24, %25 : vector<648x128xf32>
    %cst_13 = arith.constant 0.000000e+00 : f32
    %27 = vector.broadcast %cst_13 : f32 to vector<648x128xf32>
    %28 = arith.maximumf %26, %27 : vector<648x128xf32>
    %29 = vector.broadcast %0 : vector<648x1xf32> to vector<648x128xf32>
    %30 = arith.mulf %28, %29 : vector<648x128xf32>
    %cst_14 = arith.constant 0.000000e+00 : f32
    %31 = vector.broadcast %cst_14 : f32 to vector<24x128xf32>
    %c0_15 = arith.constant 0 : index
    %c0_16 = arith.constant 0 : index
    %32 = vector.load %arg8[%c0_15, %c0_16] : memref<696x128xf32, #tpu.memory_space<vmem>>, vector<24x128xf32>
    tpu.vector_store %arg8[%c0_15, %c0_16], %31 {strides = array<i32>} : memref<696x128xf32, #tpu.memory_space<vmem>>, vector<24x128xf32>,
    %c672 = arith.constant 672 : index
    %c0_17 = arith.constant 0 : index
    %33 = vector.load %arg8[%c672, %c0_17] : memref<696x128xf32, #tpu.memory_space<vmem>>, vector<24x128xf32>
    tpu.vector_store %arg8[%c672, %c0_17], %31 {strides = array<i32>} : memref<696x128xf32, #tpu.memory_space<vmem>>, vector<24x128xf32>,
    %c24 = arith.constant 24 : index
    %c0_18 = arith.constant 0 : index
    %34 = vector.load %arg8[%c24, %c0_18] : memref<696x128xf32, #tpu.memory_space<vmem>>, vector<648x128xf32>
    tpu.vector_store %arg8[%c24, %c0_18], %30 {strides = array<i32>} : memref<696x128xf32, #tpu.memory_space<vmem>>, vector<648x128xf32>,
    %cst_19 = arith.constant 0.000000e+00 : f32
    %35 = vector.broadcast %cst_19 : f32 to vector<648x128xf32>
    %c5 = arith.constant 5 : index
    %c0_20 = arith.constant 0 : index
    %36 = vector.load %arg8[%c5, %c0_20] : memref<696x128xf32, #tpu.memory_space<vmem>>, vector<648x128xf32>
    %c0_21 = arith.constant 0 : index
    %c0_22 = arith.constant 0 : index
    %c0_23 = arith.constant 0 : index
    %37 = vector.load %arg3[%c0_21, %c0_22, %c0_23] : memref<9x128x128xf32, #tpu.memory_space<vmem>>, vector<1x128x128xf32>
    %38 = vector.shape_cast %37 : vector<1x128x128xf32> to vector<128x128xf32>
    %cst_24 = arith.constant dense<0.000000e+00> : vector<648x128xf32>
    %39 = tpu.matmul %36, %38, %cst_24 {dimension_numbers = #tpu.dot_dimension_numbers<[1], [0], [0], [1], [0, 0, 1, 1], [], []>} : vector<648x128xf32>, vector<128x128xf32>, vector<648x128xf32> -> vector<648x128xf32>
    %40 = arith.addf %35, %39 : vector<648x128xf32>
    %c6 = arith.constant 6 : index
    %c0_25 = arith.constant 0 : index
    %41 = vector.load %arg8[%c6, %c0_25] : memref<696x128xf32, #tpu.memory_space<vmem>>, vector<648x128xf32>
    %c1_26 = arith.constant 1 : index
    %c0_27 = arith.constant 0 : index
    %c0_28 = arith.constant 0 : index
    %42 = vector.load %arg3[%c1_26, %c0_27, %c0_28] : memref<9x128x128xf32, #tpu.memory_space<vmem>>, vector<1x128x128xf32>
    %43 = vector.shape_cast %42 : vector<1x128x128xf32> to vector<128x128xf32>
    %cst_29 = arith.constant dense<0.000000e+00> : vector<648x128xf32>
    %44 = tpu.matmul %41, %43, %cst_29 {dimension_numbers = #tpu.dot_dimension_numbers<[1], [0], [0], [1], [0, 0, 1, 1], [], []>} : vector<648x128xf32>, vector<128x128xf32>, vector<648x128xf32> -> vector<648x128xf32>
    %45 = arith.addf %40, %44 : vector<648x128xf32>
    %c7 = arith.constant 7 : index
    %c0_30 = arith.constant 0 : index
    %46 = vector.load %arg8[%c7, %c0_30] : memref<696x128xf32, #tpu.memory_space<vmem>>, vector<648x128xf32>
    %c2 = arith.constant 2 : index
    %c0_31 = arith.constant 0 : index
    %c0_32 = arith.constant 0 : index
    %47 = vector.load %arg3[%c2, %c0_31, %c0_32] : memref<9x128x128xf32, #tpu.memory_space<vmem>>, vector<1x128x128xf32>
    %48 = vector.shape_cast %47 : vector<1x128x128xf32> to vector<128x128xf32>
    %cst_33 = arith.constant dense<0.000000e+00> : vector<648x128xf32>
    %49 = tpu.matmul %46, %48, %cst_33 {dimension_numbers = #tpu.dot_dimension_numbers<[1], [0], [0], [1], [0, 0, 1, 1], [], []>} : vector<648x128xf32>, vector<128x128xf32>, vector<648x128xf32> -> vector<648x128xf32>
    %50 = arith.addf %45, %49 : vector<648x128xf32>
    %c23 = arith.constant 23 : index
    %c0_34 = arith.constant 0 : index
    %51 = vector.load %arg8[%c23, %c0_34] : memref<696x128xf32, #tpu.memory_space<vmem>>, vector<648x128xf32>
    %c3 = arith.constant 3 : index
    %c0_35 = arith.constant 0 : index
    %c0_36 = arith.constant 0 : index
    %52 = vector.load %arg3[%c3, %c0_35, %c0_36] : memref<9x128x128xf32, #tpu.memory_space<vmem>>, vector<1x128x128xf32>
    %53 = vector.shape_cast %52 : vector<1x128x128xf32> to vector<128x128xf32>
    %cst_37 = arith.constant dense<0.000000e+00> : vector<648x128xf32>
    %54 = tpu.matmul %51, %53, %cst_37 {dimension_numbers = #tpu.dot_dimension_numbers<[1], [0], [0], [1], [0, 0, 1, 1], [], []>} : vector<648x128xf32>, vector<128x128xf32>, vector<648x128xf32> -> vector<648x128xf32>
    %55 = arith.addf %50, %54 : vector<648x128xf32>
    %c24_38 = arith.constant 24 : index
    %c0_39 = arith.constant 0 : index
    %56 = vector.load %arg8[%c24_38, %c0_39] : memref<696x128xf32, #tpu.memory_space<vmem>>, vector<648x128xf32>
    %c4 = arith.constant 4 : index
    %c0_40 = arith.constant 0 : index
    %c0_41 = arith.constant 0 : index
    %57 = vector.load %arg3[%c4, %c0_40, %c0_41] : memref<9x128x128xf32, #tpu.memory_space<vmem>>, vector<1x128x128xf32>
    %58 = vector.shape_cast %57 : vector<1x128x128xf32> to vector<128x128xf32>
    %cst_42 = arith.constant dense<0.000000e+00> : vector<648x128xf32>
    %59 = tpu.matmul %56, %58, %cst_42 {dimension_numbers = #tpu.dot_dimension_numbers<[1], [0], [0], [1], [0, 0, 1, 1], [], []>} : vector<648x128xf32>, vector<128x128xf32>, vector<648x128xf32> -> vector<648x128xf32>
    %60 = arith.addf %55, %59 : vector<648x128xf32>
    %c25 = arith.constant 25 : index
    %c0_43 = arith.constant 0 : index
    %61 = vector.load %arg8[%c25, %c0_43] : memref<696x128xf32, #tpu.memory_space<vmem>>, vector<648x128xf32>
    %c5_44 = arith.constant 5 : index
    %c0_45 = arith.constant 0 : index
    %c0_46 = arith.constant 0 : index
    %62 = vector.load %arg3[%c5_44, %c0_45, %c0_46] : memref<9x128x128xf32, #tpu.memory_space<vmem>>, vector<1x128x128xf32>
    %63 = vector.shape_cast %62 : vector<1x128x128xf32> to vector<128x128xf32>
    %cst_47 = arith.constant dense<0.000000e+00> : vector<648x128xf32>
    %64 = tpu.matmul %61, %63, %cst_47 {dimension_numbers = #tpu.dot_dimension_numbers<[1], [0], [0], [1], [0, 0, 1, 1], [], []>} : vector<648x128xf32>, vector<128x128xf32>, vector<648x128xf32> -> vector<648x128xf32>
    %65 = arith.addf %60, %64 : vector<648x128xf32>
    %c41 = arith.constant 41 : index
    %c0_48 = arith.constant 0 : index
    %66 = vector.load %arg8[%c41, %c0_48] : memref<696x128xf32, #tpu.memory_space<vmem>>, vector<648x128xf32>
    %c6_49 = arith.constant 6 : index
    %c0_50 = arith.constant 0 : index
    %c0_51 = arith.constant 0 : index
    %67 = vector.load %arg3[%c6_49, %c0_50, %c0_51] : memref<9x128x128xf32, #tpu.memory_space<vmem>>, vector<1x128x128xf32>
    %68 = vector.shape_cast %67 : vector<1x128x128xf32> to vector<128x128xf32>
    %cst_52 = arith.constant dense<0.000000e+00> : vector<648x128xf32>
    %69 = tpu.matmul %66, %68, %cst_52 {dimension_numbers = #tpu.dot_dimension_numbers<[1], [0], [0], [1], [0, 0, 1, 1], [], []>} : vector<648x128xf32>, vector<128x128xf32>, vector<648x128xf32> -> vector<648x128xf32>
    %70 = arith.addf %65, %69 : vector<648x128xf32>
    %c42 = arith.constant 42 : index
    %c0_53 = arith.constant 0 : index
    %71 = vector.load %arg8[%c42, %c0_53] : memref<696x128xf32, #tpu.memory_space<vmem>>, vector<648x128xf32>
    %c7_54 = arith.constant 7 : index
    %c0_55 = arith.constant 0 : index
    %c0_56 = arith.constant 0 : index
    %72 = vector.load %arg3[%c7_54, %c0_55, %c0_56] : memref<9x128x128xf32, #tpu.memory_space<vmem>>, vector<1x128x128xf32>
    %73 = vector.shape_cast %72 : vector<1x128x128xf32> to vector<128x128xf32>
    %cst_57 = arith.constant dense<0.000000e+00> : vector<648x128xf32>
    %74 = tpu.matmul %71, %73, %cst_57 {dimension_numbers = #tpu.dot_dimension_numbers<[1], [0], [0], [1], [0, 0, 1, 1], [], []>} : vector<648x128xf32>, vector<128x128xf32>, vector<648x128xf32> -> vector<648x128xf32>
    %75 = arith.addf %70, %74 : vector<648x128xf32>
    %c43 = arith.constant 43 : index
    %c0_58 = arith.constant 0 : index
    %76 = vector.load %arg8[%c43, %c0_58] : memref<696x128xf32, #tpu.memory_space<vmem>>, vector<648x128xf32>
    %c8 = arith.constant 8 : index
    %c0_59 = arith.constant 0 : index
    %c0_60 = arith.constant 0 : index
    %77 = vector.load %arg3[%c8, %c0_59, %c0_60] : memref<9x128x128xf32, #tpu.memory_space<vmem>>, vector<1x128x128xf32>
    %78 = vector.shape_cast %77 : vector<1x128x128xf32> to vector<128x128xf32>
    %cst_61 = arith.constant dense<0.000000e+00> : vector<648x128xf32>
    %79 = tpu.matmul %76, %78, %cst_61 {dimension_numbers = #tpu.dot_dimension_numbers<[1], [0], [0], [1], [0, 0, 1, 1], [], []>} : vector<648x128xf32>, vector<128x128xf32>, vector<648x128xf32> -> vector<648x128xf32>
    %80 = arith.addf %75, %79 : vector<648x128xf32>
    %c2_62 = arith.constant 2 : index
    %c0_63 = arith.constant 0 : index
    %81 = vector.load %arg5[%c2_62, %c0_63] : memref<6x128xf32, #tpu.memory_space<vmem>>, vector<1x128xf32>
    %c3_64 = arith.constant 3 : index
    %c0_65 = arith.constant 0 : index
    %82 = vector.load %arg5[%c3_64, %c0_65] : memref<6x128xf32, #tpu.memory_space<vmem>>, vector<1x128xf32>
    %83 = vector.broadcast %0 : vector<648x1xf32> to vector<648x128xf32>
    %84 = arith.mulf %80, %83 : vector<648x128xf32>
    %cst_66 = arith.constant dense<0.000000e+00> : vector<128xf32>
    %85 = vector.multi_reduction <add>, %84, %cst_66 [0] : vector<648x128xf32> to vector<128xf32>
    %86 = vector.shape_cast %85 : vector<128xf32> to vector<1x128xf32>
    %cst_67 = arith.constant 0.001953125 : f32
    %87 = vector.broadcast %cst_67 : f32 to vector<1x128xf32>
    %88 = arith.mulf %86, %87 : vector<1x128xf32>
    %89 = arith.mulf %84, %84 : vector<648x128xf32>
    %cst_68 = arith.constant dense<0.000000e+00> : vector<128xf32>
    %90 = vector.multi_reduction <add>, %89, %cst_68 [0] : vector<648x128xf32> to vector<128xf32>
    %91 = vector.shape_cast %90 : vector<128xf32> to vector<1x128xf32>
    %cst_69 = arith.constant 0.001953125 : f32
    %92 = vector.broadcast %cst_69 : f32 to vector<1x128xf32>
    %93 = arith.mulf %91, %92 : vector<1x128xf32>
    %94 = arith.mulf %88, %88 : vector<1x128xf32>
    %95 = arith.subf %93, %94 : vector<1x128xf32>
    %cst_70 = arith.constant 9.99999974E-6 : f32
    %96 = vector.broadcast %cst_70 : f32 to vector<1x128xf32>
    %97 = arith.addf %95, %96 : vector<1x128xf32>
    %98 = math.rsqrt %97 : vector<1x128xf32>
    %99 = arith.mulf %81, %98 : vector<1x128xf32>
    %100 = arith.mulf %88, %99 : vector<1x128xf32>
    %101 = arith.subf %82, %100 : vector<1x128xf32>
    %102 = vector.broadcast %99 : vector<1x128xf32> to vector<648x128xf32>
    %103 = arith.mulf %80, %102 : vector<648x128xf32>
    %104 = vector.broadcast %101 : vector<1x128xf32> to vector<648x128xf32>
    %105 = arith.addf %103, %104 : vector<648x128xf32>
    %cst_71 = arith.constant 0.000000e+00 : f32
    %106 = vector.broadcast %cst_71 : f32 to vector<648x128xf32>
    %107 = arith.maximumf %105, %106 : vector<648x128xf32>
    %c0_72 = arith.constant 0 : index
    %c0_73 = arith.constant 0 : index
    %108 = vector.load %arg4[%c0_72, %c0_73] : memref<128x128xf32, #tpu.memory_space<vmem>>, vector<128x128xf32>
    %cst_74 = arith.constant dense<0.000000e+00> : vector<648x128xf32>
    %109 = tpu.matmul %107, %108, %cst_74 {dimension_numbers = #tpu.dot_dimension_numbers<[1], [0], [0], [1], [0, 0, 1, 1], [], []>} : vector<648x128xf32>, vector<128x128xf32>, vector<648x128xf32> -> vector<648x128xf32>
    %c4_75 = arith.constant 4 : index
    %c0_76 = arith.constant 0 : index
    %110 = vector.load %arg5[%c4_75, %c0_76] : memref<6x128xf32, #tpu.memory_space<vmem>>, vector<1x128xf32>
    %c5_77 = arith.constant 5 : index
    %c0_78 = arith.constant 0 : index
    %111 = vector.load %arg5[%c5_77, %c0_78] : memref<6x128xf32, #tpu.memory_space<vmem>>, vector<1x128xf32>
    %112 = vector.broadcast %0 : vector<648x1xf32> to vector<648x128xf32>
    %113 = arith.mulf %109, %112 : vector<648x128xf32>
    %cst_79 = arith.constant dense<0.000000e+00> : vector<128xf32>
    %114 = vector.multi_reduction <add>, %113, %cst_79 [0] : vector<648x128xf32> to vector<128xf32>
    %115 = vector.shape_cast %114 : vector<128xf32> to vector<1x128xf32>
    %cst_80 = arith.constant 0.001953125 : f32
    %116 = vector.broadcast %cst_80 : f32 to vector<1x128xf32>
    %117 = arith.mulf %115, %116 : vector<1x128xf32>
    %118 = arith.mulf %113, %113 : vector<648x128xf32>
    %cst_81 = arith.constant dense<0.000000e+00> : vector<128xf32>
    %119 = vector.multi_reduction <add>, %118, %cst_81 [0] : vector<648x128xf32> to vector<128xf32>
    %120 = vector.shape_cast %119 : vector<128xf32> to vector<1x128xf32>
    %cst_82 = arith.constant 0.001953125 : f32
    %121 = vector.broadcast %cst_82 : f32 to vector<1x128xf32>
    %122 = arith.mulf %120, %121 : vector<1x128xf32>
    %123 = arith.mulf %117, %117 : vector<1x128xf32>
    %124 = arith.subf %122, %123 : vector<1x128xf32>
    %cst_83 = arith.constant 9.99999974E-6 : f32
    %125 = vector.broadcast %cst_83 : f32 to vector<1x128xf32>
    %126 = arith.addf %124, %125 : vector<1x128xf32>
    %127 = math.rsqrt %126 : vector<1x128xf32>
    %128 = arith.mulf %110, %127 : vector<1x128xf32>
    %129 = arith.mulf %117, %128 : vector<1x128xf32>
    %130 = arith.subf %111, %129 : vector<1x128xf32>
    %131 = vector.broadcast %128 : vector<1x128xf32> to vector<648x128xf32>
    %132 = arith.mulf %109, %131 : vector<648x128xf32>
    %133 = vector.broadcast %130 : vector<1x128xf32> to vector<648x128xf32>
    %134 = arith.addf %132, %133 : vector<648x128xf32>
    %c0_84 = arith.constant 0 : index
    %c0_85 = arith.constant 0 : index
    %135 = vector.load %arg1[%c0_84, %c0_85] : memref<648x128xf32, #tpu.memory_space<vmem>>, vector<648x128xf32>
    %136 = arith.addf %134, %135 : vector<648x128xf32>
    %cst_86 = arith.constant 0.000000e+00 : f32
    %137 = vector.broadcast %cst_86 : f32 to vector<648x128xf32>
    %138 = arith.maximumf %136, %137 : vector<648x128xf32>
    %c0_87 = arith.constant 0 : index
    %c0_88 = arith.constant 0 : index
    %139 = vector.load %arg7[%c0_87, %c0_88] : memref<648x128xf32, #tpu.memory_space<vmem>>, vector<648x128xf32>
    tpu.vector_store %arg7[%c0_87, %c0_88], %138 {strides = array<i32>} : memref<648x128xf32, #tpu.memory_space<vmem>>, vector<648x128xf32>,
    return
  }
  func.func @transform_0(%arg0: i32) -> (i32, i32) {
    %c0_i32 = arith.constant 0 : i32
    %c0_i32_0 = arith.constant 0 : i32
    %c0_i32_1 = arith.constant 0 : i32
    return %c0_i32, %c0_i32_0 : i32, i32
  }
  func.func @transform_1(%arg0: i32) -> (i32, i32) {
    %c0_i32 = arith.constant 0 : i32
    %c0_i32_0 = arith.constant 0 : i32
    %c0_i32_1 = arith.constant 0 : i32
    return %c0_i32, %c0_i32_0 : i32, i32
  }
  func.func @transform_2(%arg0: i32) -> (i32, i32, i32) {
    %c0_i32 = arith.constant 0 : i32
    %c0_i32_0 = arith.constant 0 : i32
    %c0_i32_1 = arith.constant 0 : i32
    %c0_i32_2 = arith.constant 0 : i32
    return %c0_i32, %c0_i32_0, %c0_i32_1 : i32, i32, i32
  }
  func.func @transform_3(%arg0: i32) -> (i32, i32) {
    %c0_i32 = arith.constant 0 : i32
    %c0_i32_0 = arith.constant 0 : i32
    %c0_i32_1 = arith.constant 0 : i32
    return %c0_i32, %c0_i32_0 : i32, i32
  }
  func.func @transform_4(%arg0: i32) -> (i32, i32) {
    %c0_i32 = arith.constant 0 : i32
    %c0_i32_0 = arith.constant 0 : i32
    %c0_i32_1 = arith.constant 0 : i32
    return %c0_i32, %c0_i32_0 : i32, i32
  }
  func.func @transform_5(%arg0: i32) -> (i32, i32) {
    %c0_i32 = arith.constant 0 : i32
    %c0_i32_0 = arith.constant 0 : i32
    %c0_i32_1 = arith.constant 0 : i32
    return %c0_i32, %c0_i32_0 : i32, i32
  }
  func.func @transform_6(%arg0: i32) -> (i32, i32) {
    %c0_i32 = arith.constant 0 : i32
    %c0_i32_0 = arith.constant 0 : i32
    %c0_i32_1 = arith.constant 0 : i32
    return %c0_i32, %c0_i32_0 : i32, i32
  }
}

</mosaic_0001>

<llo_original>
// kernel: bottleneck_forward.1
$region0: #{bottleneck_forward.1}
  #allocation0 [shape = 'u32[]', space=smem, size = 0x4, offset = 0x4, fixed_abs, tag = 'smem constant byte address 0x4 - core index']
  #allocation1 [shape = 'u32[144,128]{1,0:T(1,128)}', space=vmem, size = 0x12000, scoped, tag = 'internal scratch']
  #allocation2 [shape = 'f32[696,128]{1,0:T(8,128)}', space=vmem, size = 0x57000, scoped, tag = 'scratch operand']
  %s0 = inlined_call_operand.vmem [shape: f32[648,128], index: 0, kind: input, shape index: {}, may-alias: {0,6}]
  %s1 = inlined_call_operand.vmem [shape: f32[128,128], index: 1, kind: input, shape index: {}]
  %s2 = inlined_call_operand.vmem [shape: f32[9,128,128], index: 2, kind: input, shape index: {}]
  %s3 = inlined_call_operand.vmem [shape: f32[128,128], index: 3, kind: input, shape index: {}]
  %s4 = inlined_call_operand.vmem [shape: f32[6,128], index: 4, kind: input, shape index: {}]
  %s5 = inlined_call_operand.vmem [shape: f32[648,1], index: 5, kind: input, shape index: {}]
  %s6 = inlined_call_operand.vmem [shape: f32[648,128], index: 6, kind: output, shape index: {}, may-alias: {0,6}]
  %s7 = sld [smem:[#allocation0]]
  $region34: #{bottleneck_forward.1} parent=0
    _
  %s9 = ssub.s32 1, %s7
  %s10 = scalar_select 0, %s9, %s7
  // Predicated region
  $region2: #{bottleneck_forward.1} parent=0 // pred_check
    _
  $region3: #{bottleneck_forward.1} parent=0 // pred_check_branch
    %12 = sbr.rel (0) target = $region5
  $region4: #{bottleneck_forward.1} parent=0 // pred_region
    _
  $region5: #{bottleneck_forward.1} parent=0 // pred_fallthru
    _
  // Predicated region
  $region6: #{bottleneck_forward.1} parent=0 // pred_check
    _
  $region7: #{bottleneck_forward.1} parent=0 // pred_check_branch
    %14 = sbr.rel (0) target = $region9
  $region8: #{bottleneck_forward.1} parent=0 // pred_region
    _
  $region9: #{bottleneck_forward.1} parent=0 // pred_fallthru
    _
  // Predicated region
  $region10: #{bottleneck_forward.1} parent=0 // pred_check
    _
  $region11: #{bottleneck_forward.1} parent=0 // pred_check_branch
    %16 = sbr.rel (0) target = $region13
  $region12: #{bottleneck_forward.1} parent=0 // pred_region
    _
  $region13: #{bottleneck_forward.1} parent=0 // pred_fallthru
    _
  // Predicated region
  $region14: #{bottleneck_forward.1} parent=0 // pred_check
    _
  $region15: #{bottleneck_forward.1} parent=0 // pred_check_branch
    %18 = sbr.rel (0) target = $region17
  $region16: #{bottleneck_forward.1} parent=0 // pred_region
    _
  $region17: #{bottleneck_forward.1} parent=0 // pred_fallthru
    _
  // Predicated region
  $region18: #{bottleneck_forward.1} parent=0 // pred_check
    _
  $region19: #{bottleneck_forward.1} parent=0 // pred_check_branch
    %20 = sbr.rel (0) target = $region21
  $region20: #{bottleneck_forward.1} parent=0 // pred_region
    _
  $region21: #{bottleneck_forward.1} parent=0 // pred_fallthru
    _
  // Predicated region
  $region22: #{bottleneck_forward.1} parent=0 // pred_check
    _
  $region23: #{bottleneck_forward.1} parent=0 // pred_check_branch
    %22 = sbr.rel (0) target = $region25
  $region24: #{bottleneck_forward.1} parent=0 // pred_region
    _
  $region25: #{bottleneck_forward.1} parent=0 // pred_fallthru
    _
  %v23 = vld [vmem:[%s5] sm:$0xff]
  %v24 = vld [vmem:[%s5 + $0x8] sm:$0xff]
  %v25 = vld [vmem:[%s5 + $0x10] sm:$0xff]
  %v26 = vld [vmem:[%s5 + $0x18] sm:$0xff]
  %v27 = vld [vmem:[%s5 + $0x20] sm:$0xff]
  %v28 = vld [vmem:[%s5 + $0x28] sm:$0xff]
  %v29 = vld [vmem:[%s5 + $0x30] sm:$0xff]
  %v30 = vld [vmem:[%s5 + $0x38] sm:$0xff]
  %v31 = vld [vmem:[%s5 + $0x40] sm:$0xff]
  %v32 = vld [vmem:[%s5 + $0x48] sm:$0xff]
  %v33 = vld [vmem:[%s5 + $0x50] sm:$0xff]
  %v34 = vld [vmem:[%s5 + $0x58] sm:$0xff]
  %v35 = vld [vmem:[%s5 + $0x60] sm:$0xff]
  %v36 = vld [vmem:[%s5 + $0x68] sm:$0xff]
  %v37 = vld [vmem:[%s5 + $0x70] sm:$0xff]
  %v38 = vld [vmem:[%s5 + $0x78] sm:$0xff]
  %v39 = vld [vmem:[%s5 + $0x80] sm:$0xff]
  %v40 = vld [vmem:[%s5 + $0x88] sm:$0xff]
  %v41 = vld [vmem:[%s5 + $0x90] sm:$0xff]
  %v42 = vld [vmem:[%s5 + $0x98] sm:$0xff]
  %v43 = vld [vmem:[%s5 + $0xa0] sm:$0xff]
  %v44 = vld [vmem:[%s5 + $0xa8] sm:$0xff]
  %v45 = vld [vmem:[%s5 + $0xb0] sm:$0xff]
  %v46 = vld [vmem:[%s5 + $0xb8] sm:$0xff]
  %v47 = vld [vmem:[%s5 + $0xc0] sm:$0xff]
  %v48 = vld [vmem:[%s5 + $0xc8] sm:$0xff]
  %v49 = vld [vmem:[%s5 + $0xd0] sm:$0xff]
  %v50 = vld [vmem:[%s5 + $0xd8] sm:$0xff]
  %v51 = vld [vmem:[%s5 + $0xe0] sm:$0xff]
  %v52 = vld [vmem:[%s5 + $0xe8] sm:$0xff]
  %v53 = vld [vmem:[%s5 + $0xf0] sm:$0xff]
  %v54 = vld [vmem:[%s5 + $0xf8] sm:$0xff]
  %v55 = vld [vmem:[%s5 + $0x100] sm:$0xff]
  %v56 = vld [vmem:[%s5 + $0x108] sm:$0xff]
  %v57 = vld [vmem:[%s5 + $0x110] sm:$0xff]
  %v58 = vld [vmem:[%s5 + $0x118] sm:$0xff]
  %v59 = vld [vmem:[%s5 + $0x120] sm:$0xff]
  %v60 = vld [vmem:[%s5 + $0x128] sm:$0xff]
  %v61 = vld [vmem:[%s5 + $0x130] sm:$0xff]
  %v62 = vld [vmem:[%s5 + $0x138] sm:$0xff]
  %v63 = vld [vmem:[%s5 + $0x140] sm:$0xff]
  %v64 = vld [vmem:[%s5 + $0x148] sm:$0xff]
  %v65 = vld [vmem:[%s5 + $0x150] sm:$0xff]
  %v66 = vld [vmem:[%s5 + $0x158] sm:$0xff]
  %v67 = vld [vmem:[%s5 + $0x160] sm:$0xff]
  %v68 = vld [vmem:[%s5 + $0x168] sm:$0xff]
  %v69 = vld [vmem:[%s5 + $0x170] sm:$0xff]
  %v70 = vld [vmem:[%s5 + $0x178] sm:$0xff]
  %v71 = vld [vmem:[%s5 + $0x180] sm:$0xff]
  %v72 = vld [vmem:[%s5 + $0x188] sm:$0xff]
  %v73 = vld [vmem:[%s5 + $0x190] sm:$0xff]
  %v74 = vld [vmem:[%s5 + $0x198] sm:$0xff]
  %v75 = vld [vmem:[%s5 + $0x1a0] sm:$0xff]
  %v76 = vld [vmem:[%s5 + $0x1a8] sm:$0xff]
  %v77 = vld [vmem:[%s5 + $0x1b0] sm:$0xff]
  %v78 = vld [vmem:[%s5 + $0x1b8] sm:$0xff]
  %v79 = vld [vmem:[%s5 + $0x1c0] sm:$0xff]
  %v80 = vld [vmem:[%s5 + $0x1c8] sm:$0xff]
  %v81 = vld [vmem:[%s5 + $0x1d0] sm:$0xff]
  %v82 = vld [vmem:[%s5 + $0x1d8] sm:$0xff]
  %v83 = vld [vmem:[%s5 + $0x1e0] sm:$0xff]
  %v84 = vld [vmem:[%s5 + $0x1e8] sm:$0xff]
  %v85 = vld [vmem:[%s5 + $0x1f0] sm:$0xff]
  %v86 = vld [vmem:[%s5 + $0x1f8] sm:$0xff]
  %v87 = vld [vmem:[%s5 + $0x200] sm:$0xff]
  %v88 = vld [vmem:[%s5 + $0x208] sm:$0xff]
  %v89 = vld [vmem:[%s5 + $0x210] sm:$0xff]
  %v90 = vld [vmem:[%s5 + $0x218] sm:$0xff]
  %v91 = vld [vmem:[%s5 + $0x220] sm:$0xff]
  %v92 = vld [vmem:[%s5 + $0x228] sm:$0xff]
  %v93 = vld [vmem:[%s5 + $0x230] sm:$0xff]
  %v94 = vld [vmem:[%s5 + $0x238] sm:$0xff]
  %v95 = vld [vmem:[%s5 + $0x240] sm:$0xff]
  %v96 = vld [vmem:[%s5 + $0x248] sm:$0xff]
  %v97 = vld [vmem:[%s5 + $0x250] sm:$0xff]
  %v98 = vld [vmem:[%s5 + $0x258] sm:$0xff]
  %v99 = vld [vmem:[%s5 + $0x260] sm:$0xff]
  %v100 = vld [vmem:[%s5 + $0x268] sm:$0xff]
  %v101 = vld [vmem:[%s5 + $0x270] sm:$0xff]
  %v102 = vld [vmem:[%s5 + $0x278] sm:$0xff]
  %v103 = vld [vmem:[%s5 + $0x280] sm:$0xff]
  %v104 = vld [vmem:[%s0] sm:$0xff]
  %v105 = vld [vmem:[%s0 + $0x8] sm:$0xff]
  %v106 = vld [vmem:[%s0 + $0x10] sm:$0xff]
  %v107 = vld [vmem:[%s0 + $0x18] sm:$0xff]
  %v108 = vld [vmem:[%s0 + $0x20] sm:$0xff]
  %v109 = vld [vmem:[%s0 + $0x28] sm:$0xff]
  %v110 = vld [vmem:[%s0 + $0x30] sm:$0xff]
  %v111 = vld [vmem:[%s0 + $0x38] sm:$0xff]
  %v112 = vld [vmem:[%s0 + $0x40] sm:$0xff]
  %v113 = vld [vmem:[%s0 + $0x48] sm:$0xff]
  %v114 = vld [vmem:[%s0 + $0x50] sm:$0xff]
  %v115 = vld [vmem:[%s0 + $0x58] sm:$0xff]
  %v116 = vld [vmem:[%s0 + $0x60] sm:$0xff]
  %v117 = vld [vmem:[%s0 + $0x68] sm:$0xff]
  %v118 = vld [vmem:[%s0 + $0x70] sm:$0xff]
  %v119 = vld [vmem:[%s0 + $0x78] sm:$0xff]
  %v120 = vld [vmem:[%s0 + $0x80] sm:$0xff]
  %v121 = vld [vmem:[%s0 + $0x88] sm:$0xff]
  %v122 = vld [vmem:[%s0 + $0x90] sm:$0xff]
  %v123 = vld [vmem:[%s0 + $0x98] sm:$0xff]
  %v124 = vld [vmem:[%s0 + $0xa0] sm:$0xff]
  %v125 = vld [vmem:[%s0 + $0xa8] sm:$0xff]
  %v126 = vld [vmem:[%s0 + $0xb0] sm:$0xff]
  %v127 = vld [vmem:[%s0 + $0xb8] sm:$0xff]
  %v128 = vld [vmem:[%s0 + $0xc0] sm:$0xff]
  %v129 = vld [vmem:[%s0 + $0xc8] sm:$0xff]
  %v130 = vld [vmem:[%s0 + $0xd0] sm:$0xff]
  %v131 = vld [vmem:[%s0 + $0xd8] sm:$0xff]
  %v132 = vld [vmem:[%s0 + $0xe0] sm:$0xff]
  %v133 = vld [vmem:[%s0 + $0xe8] sm:$0xff]
  %v134 = vld [vmem:[%s0 + $0xf0] sm:$0xff]
  %v135 = vld [vmem:[%s0 + $0xf8] sm:$0xff]
  %v136 = vld [vmem:[%s0 + $0x100] sm:$0xff]
  %v137 = vld [vmem:[%s0 + $0x108] sm:$0xff]
  %v138 = vld [vmem:[%s0 + $0x110] sm:$0xff]
  %v139 = vld [vmem:[%s0 + $0x118] sm:$0xff]
  %v140 = vld [vmem:[%s0 + $0x120] sm:$0xff]
  %v141 = vld [vmem:[%s0 + $0x128] sm:$0xff]
  %v142 = vld [vmem:[%s0 + $0x130] sm:$0xff]
  %v143 = vld [vmem:[%s0 + $0x138] sm:$0xff]
  %v144 = vld [vmem:[%s0 + $0x140] sm:$0xff]
  %v145 = vld [vmem:[%s0 + $0x148] sm:$0xff]
  %v146 = vld [vmem:[%s0 + $0x150] sm:$0xff]
  %v147 = vld [vmem:[%s0 + $0x158] sm:$0xff]
  %v148 = vld [vmem:[%s0 + $0x160] sm:$0xff]
  %v149 = vld [vmem:[%s0 + $0x168] sm:$0xff]
  %v150 = vld [vmem:[%s0 + $0x170] sm:$0xff]
  %v151 = vld [vmem:[%s0 + $0x178] sm:$0xff]
  %v152 = vld [vmem:[%s0 + $0x180] sm:$0xff]
  %v153 = vld [vmem:[%s0 + $0x188] sm:$0xff]
  %v154 = vld [vmem:[%s0 + $0x190] sm:$0xff]
  %v155 = vld [vmem:[%s0 + $0x198] sm:$0xff]
  %v156 = vld [vmem:[%s0 + $0x1a0] sm:$0xff]
  %v157 = vld [vmem:[%s0 + $0x1a8] sm:$0xff]
  %v158 = vld [vmem:[%s0 + $0x1b0] sm:$0xff]
  %v159 = vld [vmem:[%s0 + $0x1b8] sm:$0xff]
  %v160 = vld [vmem:[%s0 + $0x1c0] sm:$0xff]
  %v161 = vld [vmem:[%s0 + $0x1c8] sm:$0xff]
  %v162 = vld [vmem:[%s0 + $0x1d0] sm:$0xff]
  %v163 = vld [vmem:[%s0 + $0x1d8] sm:$0xff]
  %v164 = vld [vmem:[%s0 + $0x1e0] sm:$0xff]
  %v165 = vld [vmem:[%s0 + $0x1e8] sm:$0xff]
  %v166 = vld [vmem:[%s0 + $0x1f0] sm:$0xff]
  %v167 = vld [vmem:[%s0 + $0x1f8] sm:$0xff]
  %v168 = vld [vmem:[%s0 + $0x200] sm:$0xff]
  %v169 = vld [vmem:[%s0 + $0x208] sm:$0xff]
  %v170 = vld [vmem:[%s0 + $0x210] sm:$0xff]
  %v171 = vld [vmem:[%s0 + $0x218] sm:$0xff]
  %v172 = vld [vmem:[%s0 + $0x220] sm:$0xff]
  %v173 = vld [vmem:[%s0 + $0x228] sm:$0xff]
  %v174 = vld [vmem:[%s0 + $0x230] sm:$0xff]
  %v175 = vld [vmem:[%s0 + $0x238] sm:$0xff]
  %v176 = vld [vmem:[%s0 + $0x240] sm:$0xff]
  %v177 = vld [vmem:[%s0 + $0x248] sm:$0xff]
  %v178 = vld [vmem:[%s0 + $0x250] sm:$0xff]
  %v179 = vld [vmem:[%s0 + $0x258] sm:$0xff]
  %v180 = vld [vmem:[%s0 + $0x260] sm:$0xff]
  %v181 = vld [vmem:[%s0 + $0x268] sm:$0xff]
  %v182 = vld [vmem:[%s0 + $0x270] sm:$0xff]
  %v183 = vld [vmem:[%s0 + $0x278] sm:$0xff]
  %v184 = vld [vmem:[%s0 + $0x280] sm:$0xff]
  %v185 = vld [vmem:[%s1] sm:$0xff]
  %v186 = vld [vmem:[%s1 + $0x8] sm:$0xff]
  %v187 = vld [vmem:[%s1 + $0x10] sm:$0xff]
  %v188 = vld [vmem:[%s1 + $0x18] sm:$0xff]
  %v189 = vld [vmem:[%s1 + $0x20] sm:$0xff]
  %v190 = vld [vmem:[%s1 + $0x28] sm:$0xff]
  %v191 = vld [vmem:[%s1 + $0x30] sm:$0xff]
  %v192 = vld [vmem:[%s1 + $0x38] sm:$0xff]
  %v193 = vld [vmem:[%s1 + $0x40] sm:$0xff]
  %v194 = vld [vmem:[%s1 + $0x48] sm:$0xff]
  %v195 = vld [vmem:[%s1 + $0x50] sm:$0xff]
  %v196 = vld [vmem:[%s1 + $0x58] sm:$0xff]
  %v197 = vld [vmem:[%s1 + $0x60] sm:$0xff]
  %v198 = vld [vmem:[%s1 + $0x68] sm:$0xff]
  %v199 = vld [vmem:[%s1 + $0x70] sm:$0xff]
  %v200 = vld [vmem:[%s1 + $0x78] sm:$0xff]
  %201 = vmatprep.subr.mxu0 0.0
  %202 = vmatpush1.msra.mxu0 %v185
  %203 = vmatprep.subr.mxu0 0.0
  %204 = vmatpush1.msra.mxu0 %v186
  %205 = vmatprep.subr.mxu0 0.0
  %206 = vmatpush1.msra.mxu0 %v187
  %207 = vmatprep.subr.mxu0 0.0
  %208 = vmatpush1.msra.mxu0 %v188
  %209 = vmatprep.subr.mxu0 0.0
  %210 = vmatpush1.msra.mxu0 %v189
  %211 = vmatprep.subr.mxu0 0.0
  %212 = vmatpush1.msra.mxu0 %v190
  %213 = vmatprep.subr.mxu0 0.0
  %214 = vmatpush1.msra.mxu0 %v191
  %215 = vmatprep.subr.mxu0 0.0
  %216 = vmatpush1.msra.mxu0 %v192
  %217 = vmatprep.subr.mxu0 0.0
  %218 = vmatpush1.msra.mxu0 %v193
  %219 = vmatprep.subr.mxu0 0.0
  %220 = vmatpush1.msra.mxu0 %v194
  %221 = vmatprep.subr.mxu0 0.0
  %222 = vmatpush1.msra.mxu0 %v195
  %223 = vmatprep.subr.mxu0 0.0
  %224 = vmatpush1.msra.mxu0 %v196
  %225 = vmatprep.subr.mxu0 0.0
  %226 = vmatpush1.msra.mxu0 %v197
  %227 = vmatprep.subr.mxu0 0.0
  %228 = vmatpush1.msra.mxu0 %v198
  %229 = vmatprep.subr.mxu0 0.0
  %230 = vmatpush1.msra.mxu0 %v199
  %231 = vmatprep.subr.mxu0 0.0
  %232 = vmatpush1.msra.mxu0 %v200
  %233 = vmatprep.subr.mxu0 0.0
  %234 = vmatpush1.msra.mxu0 0.0
  %235 = vmatprep.subr.mxu0 0.0
  %236 = vmatpush1.msra.mxu0 0.0
  %237 = vmatprep.subr.mxu0 0.0
  %238 = vmatpush1.msra.mxu0 0.0
  %239 = vmatprep.subr.mxu0 0.0
  %240 = vmatpush1.msra.mxu0 0.0
  %241 = vmatprep.subr.mxu0 0.0
  %242 = vmatpush1.msra.mxu0 0.0
  %243 = vmatprep.subr.mxu0 0.0
  %244 = vmatpush1.msra.mxu0 0.0
  %245 = vmatprep.subr.mxu0 0.0
  %246 = vmatpush1.msra.mxu0 0.0
  %247 = vmatprep.subr.mxu0 0.0
  %248 = vmatpush1.msra.mxu0 0.0
  %249 = vmatprep.subr.mxu0 0.0
  %250 = vmatpush1.msra.mxu0 0.0
  %251 = vmatprep.subr.mxu0 0.0
  %252 = vmatpush1.msra.mxu0 0.0
  %253 = vmatprep.subr.mxu0 0.0
  %254 = vmatpush1.msra.mxu0 0.0
  %255 = vmatprep.subr.mxu0 0.0
  %256 = vmatpush1.msra.mxu0 0.0
  %257 = vmatprep.subr.mxu0 0.0
  %258 = vmatpush1.msra.mxu0 0.0
  %259 = vmatprep.subr.mxu0 0.0
  %260 = vmatpush1.msra.mxu0 0.0
  %261 = vmatprep.subr.mxu0 0.0
  %262 = vmatpush1.msra.mxu0 0.0
  %263 = vmatprep.subr.mxu0 0.0
  %264 = vmatpush1.msra.mxu0 0.0
  %265 = vmatprep.mubr.f32.mxu0 0.0
  %266 = vmatmul.mubr.f32.gmra.mrb[0].mxu0 %v104
  %v267 = vpop.f32.mrb[0].mxu0
  %v268 = vadd.f32 0.0, %v267
  %v269 = vpop.f32.mrb[0].mxu0
  %270 = vmatprep.mubr.f32.mxu0 0.0
  %271 = vmatmul.mubr.f32.gmra.mrb[0].mxu0 %v105
  %v272 = vpop.f32.mrb[0].mxu0
  %v273 = vadd.f32 0.0, %v272
  %v274 = vpop.f32.mrb[0].mxu0
  %275 = vmatprep.mubr.f32.mxu0 0.0
  %276 = vmatmul.mubr.f32.gmra.mrb[0].mxu0 %v106
  %v277 = vpop.f32.mrb[0].mxu0
  %v278 = vadd.f32 0.0, %v277
  %v279 = vpop.f32.mrb[0].mxu0
  %280 = vmatprep.mubr.f32.mxu0 0.0
  %281 = vmatmul.mubr.f32.gmra.mrb[0].mxu0 %v107
  %v282 = vpop.f32.mrb[0].mxu0
  %v283 = vadd.f32 0.0, %v282
  %v284 = vpop.f32.mrb[0].mxu0
  %285 = vmatprep.mubr.f32.mxu0 0.0
  %286 = vmatmul.mubr.f32.gmra.mrb[0].mxu0 %v108
  %v287 = vpop.f32.mrb[0].mxu0
  %v288 = vadd.f32 0.0, %v287
  %v289 = vpop.f32.mrb[0].mxu0
  %290 = vmatprep.mubr.f32.mxu0 0.0
  %291 = vmatmul.mubr.f32.gmra.mrb[0].mxu0 %v109
  %v292 = vpop.f32.mrb[0].mxu0
  %v293 = vadd.f32 0.0, %v292
  %v294 = vpop.f32.mrb[0].mxu0
  %295 = vmatprep.mubr.f32.mxu0 0.0
  %296 = vmatmul.mubr.f32.gmra.mrb[0].mxu0 %v110
  %v297 = vpop.f32.mrb[0].mxu0
  %v298 = vadd.f32 0.0, %v297
  %v299 = vpop.f32.mrb[0].mxu0
  %300 = vmatprep.mubr.f32.mxu0 0.0
  %301 = vmatmul.mubr.f32.gmra.mrb[0].mxu0 %v111
  %v302 = vpop.f32.mrb[0].mxu0
  %v303 = vadd.f32 0.0, %v302
  %v304 = vpop.f32.mrb[0].mxu0
  %305 = vmatprep.mubr.f32.mxu0 0.0
  %306 = vmatmul.mubr.f32.gmra.mrb[0].mxu0 %v112
  %v307 = vpop.f32.mrb[0].mxu0
  %v308 = vadd.f32 0.0, %v307
  %v309 = vpop.f32.mrb[0].mxu0
  %310 = vmatprep.mubr.f32.mxu0 0.0
  %311 = vmatmul.mubr.f32.gmra.mrb[0].mxu0 %v113
  %v312 = vpop.f32.mrb[0].mxu0
  %v313 = vadd.f32 0.0, %v312
  %v314 = vpop.f32.mrb[0].mxu0
  %315 = vmatprep.mubr.f32.mxu0 0.0
  %316 = vmatmul.mubr.f32.gmra.mrb[0].mxu0 %v114
  %v317 = vpop.f32.mrb[0].mxu0
  %v318 = vadd.f32 0.0, %v317
  %v319 = vpop.f32.mrb[0].mxu0
  %320 = vmatprep.mubr.f32.mxu0 0.0
  %321 = vmatmul.mubr.f32.gmra.mrb[0].mxu0 %v115
  %v322 = vpop.f32.mrb[0].mxu0
  %v323 = vadd.f32 0.0, %v322
  %v324 = vpop.f32.mrb[0].mxu0
  %325 = vmatprep.mubr.f32.mxu0 0.0
  %326 = vmatmul.mubr.f32.gmra.mrb[0].mxu0 %v116
  %v327 = vpop.f32.mrb[0].mxu0
  %v328 = vadd.f32 0.0, %v327
  %v329 = vpop.f32.mrb[0].mxu0
  %330 = vmatprep.mubr.f32.mxu0 0.0
  %331 = vmatmul.mubr.f32.gmra.mrb[0].mxu0 %v117
  %v332 = vpop.f32.mrb[0].mxu0
  %v333 = vadd.f32 0.0, %v332
  %v334 = vpop.f32.mrb[0].mxu0
  %335 = vmatprep.mubr.f32.mxu0 0.0
  %336 = vmatmul.mubr.f32.gmra.mrb[0].mxu0 %v118
  %v337 = vpop.f32.mrb[0].mxu0
  %v338 = vadd.f32 0.0, %v337
  %v339 = vpop.f32.mrb[0].mxu0
  %340 = vmatprep.mubr.f32.mxu0 0.0
  %341 = vmatmul.mubr.f32.gmra.mrb[0].mxu0 %v119
  %v342 = vpop.f32.mrb[0].mxu0
  %v343 = vadd.f32 0.0, %v342
  %v344 = vpop.f32.mrb[0].mxu0
  %345 = vmatprep.mubr.f32.mxu0 0.0
  %346 = vmatmul.mubr.f32.gmra.mrb[0].mxu0 %v120
  %v347 = vpop.f32.mrb[0].mxu0
  %v348 = vadd.f32 0.0, %v347
  %v349 = vpop.f32.mrb[0].mxu0
  %350 = vmatprep.mubr.f32.mxu0 0.0
  %351 = vmatmul.mubr.f32.gmra.mrb[0].mxu0 %v121
  %v352 = vpop.f32.mrb[0].mxu0
  %v353 = vadd.f32 0.0, %v352
  %v354 = vpop.f32.mrb[0].mxu0
  %355 = vmatprep.mubr.f32.mxu0 0.0
  %356 = vmatmul.mubr.f32.gmra.mrb[0].mxu0 %v122
  %v357 = vpop.f32.mrb[0].mxu0
  %v358 = vadd.f32 0.0, %v357
  %v359 = vpop.f32.mrb[0].mxu0
  %360 = vmatprep.mubr.f32.mxu0 0.0
  %361 = vmatmul.mubr.f32.gmra.mrb[0].mxu0 %v123
  %v362 = vpop.f32.mrb[0].mxu0
  %v363 = vadd.f32 0.0, %v362
  %v364 = vpop.f32.mrb[0].mxu0
  %365 = vmatprep.mubr.f32.mxu0 0.0
  %366 = vmatmul.mubr.f32.gmra.mrb[0].mxu0 %v124
  %v367 = vpop.f32.mrb[0].mxu0
  %v368 = vadd.f32 0.0, %v367
  %v369 = vpop.f32.mrb[0].mxu0
  %370 = vmatprep.mubr.f32.mxu0 0.0
  %371 = vmatmul.mubr.f32.gmra.mrb[0].mxu0 %v125
  %v372 = vpop.f32.mrb[0].mxu0
  %v373 = vadd.f32 0.0, %v372
  %v374 = vpop.f32.mrb[0].mxu0
  %375 = vmatprep.mubr.f32.mxu0 0.0
  %376 = vmatmul.mubr.f32.gmra.mrb[0].mxu0 %v126
  %v377 = vpop.f32.mrb[0].mxu0
  %v378 = vadd.f32 0.0, %v377
  %v379 = vpop.f32.mrb[0].mxu0
  %380 = vmatprep.mubr.f32.mxu0 0.0
  %381 = vmatmul.mubr.f32.gmra.mrb[0].mxu0 %v127
  %v382 = vpop.f32.mrb[0].mxu0
  %v383 = vadd.f32 0.0, %v382
  %v384 = vpop.f32.mrb[0].mxu0
  %385 = vmatprep.mubr.f32.mxu0 0.0
  %386 = vmatmul.mubr.f32.gmra.mrb[0].mxu0 %v128
  %v387 = vpop.f32.mrb[0].mxu0
  %v388 = vadd.f32 0.0, %v387
  %v389 = vpop.f32.mrb[0].mxu0
  %390 = vmatprep.mubr.f32.mxu0 0.0
  %391 = vmatmul.mubr.f32.gmra.mrb[0].mxu0 %v129
  %v392 = vpop.f32.mrb[0].mxu0
  %v393 = vadd.f32 0.0, %v392
  %v394 = vpop.f32.mrb[0].mxu0
  %395 = vmatprep.mubr.f32.mxu0 0.0
  %396 = vmatmul.mubr.f32.gmra.mrb[0].mxu0 %v130
  %v397 = vpop.f32.mrb[0].mxu0
  %v398 = vadd.f32 0.0, %v397
  %v399 = vpop.f32.mrb[0].mxu0
  %400 = vmatprep.mubr.f32.mxu0 0.0
  %401 = vmatmul.mubr.f32.gmra.mrb[0].mxu0 %v131
  %v402 = vpop.f32.mrb[0].mxu0
  %v403 = vadd.f32 0.0, %v402
  %v404 = vpop.f32.mrb[0].mxu0
  %405 = vmatprep.mubr.f32.mxu0 0.0
  %406 = vmatmul.mubr.f32.gmra.mrb[0].mxu0 %v132
  %v407 = vpop.f32.mrb[0].mxu0
  %v408 = vadd.f32 0.0, %v407
  %v409 = vpop.f32.mrb[0].mxu0
  %410 = vmatprep.mubr.f32.mxu0 0.0
  %411 = vmatmul.mubr.f32.gmra.mrb[0].mxu0 %v133
  %v412 = vpop.f32.mrb[0].mxu0
  %v413 = vadd.f32 0.0, %v412
  %v414 = vpop.f32.mrb[0].mxu0
  %415 = vmatprep.mubr.f32.mxu0 0.0
  %416 = vmatmul.mubr.f32.gmra.mrb[0].mxu0 %v134
  %v417 = vpop.f32.mrb[0].mxu0
  %v418 = vadd.f32 0.0, %v417
  %v419 = vpop.f32.mrb[0].mxu0
  %420 = vmatprep.mubr.f32.mxu0 0.0
  %421 = vmatmul.mubr.f32.gmra.mrb[0].mxu0 %v135
  %v422 = vpop.f32.mrb[0].mxu0
  %v423 = vadd.f32 0.0, %v422
  %v424 = vpop.f32.mrb[0].mxu0
  %425 = vmatprep.mubr.f32.mxu0 0.0
  %426 = vmatmul.mubr.f32.gmra.mrb[0].mxu0 %v136
  %v427 = vpop.f32.mrb[0].mxu0
  %v428 = vadd.f32 0.0, %v427
  %v429 = vpop.f32.mrb[0].mxu0
  %430 = vmatprep.mubr.f32.mxu0 0.0
  %431 = vmatmul.mubr.f32.gmra.mrb[0].mxu0 %v137
  %v432 = vpop.f32.mrb[0].mxu0
  %v433 = vadd.f32 0.0, %v432
  %v434 = vpop.f32.mrb[0].mxu0
  %435 = vmatprep.mubr.f32.mxu0 0.0
  %436 = vmatmul.mubr.f32.gmra.mrb[0].mxu0 %v138
  %v437 = vpop.f32.mrb[0].mxu0
  %v438 = vadd.f32 0.0, %v437
  %v439 = vpop.f32.mrb[0].mxu0
  %440 = vmatprep.mubr.f32.mxu0 0.0
  %441 = vmatmul.mubr.f32.gmra.mrb[0].mxu0 %v139
  %v442 = vpop.f32.mrb[0].mxu0
  %v443 = vadd.f32 0.0, %v442
  %v444 = vpop.f32.mrb[0].mxu0
  %445 = vmatprep.mubr.f32.mxu0 0.0
  %446 = vmatmul.mubr.f32.gmra.mrb[0].mxu0 %v140
  %v447 = vpop.f32.mrb[0].mxu0
  %v448 = vadd.f32 0.0, %v447
  %v449 = vpop.f32.mrb[0].mxu0
  %450 = vmatprep.mubr.f32.mxu0 0.0
  %451 = vmatmul.mubr.f32.gmra.mrb[0].mxu0 %v141
  %v452 = vpop.f32.mrb[0].mxu0
  %v453 = vadd.f32 0.0, %v452
  %v454 = vpop.f32.mrb[0].mxu0
  %455 = vmatprep.mubr.f32.mxu0 0.0
  %456 = vmatmul.mubr.f32.gmra.mrb[0].mxu0 %v142
  %v457 = vpop.f32.mrb[0].mxu0
  %v458 = vadd.f32 0.0, %v457
  %v459 = vpop.f32.mrb[0].mxu0
  %460 = vmatprep.mubr.f32.mxu0 0.0
  %461 = vmatmul.mubr.f32.gmra.mrb[0].mxu0 %v143
  %v462 = vpop.f32.mrb[0].mxu0
  %v463 = vadd.f32 0.0, %v462
  %v464 = vpop.f32.mrb[0].mxu0
  %465 = vmatprep.mubr.f32.mxu0 0.0
  %466 = vmatmul.mubr.f32.gmra.mrb[0].mxu0 %v144
  %v467 = vpop.f32.mrb[0].mxu0
  %v468 = vadd.f32 0.0, %v467
  %v469 = vpop.f32.mrb[0].mxu0
  %470 = vmatprep.mubr.f32.mxu0 0.0
  %471 = vmatmul.mubr.f32.gmra.mrb[0].mxu0 %v145
  %v472 = vpop.f32.mrb[0].mxu0
  %v473 = vadd.f32 0.0, %v472
  %v474 = vpop.f32.mrb[0].mxu0
  %475 = vmatprep.mubr.f32.mxu0 0.0
  %476 = vmatmul.mubr.f32.gmra.mrb[0].mxu0 %v146
  %v477 = vpop.f32.mrb[0].mxu0
  %v478 = vadd.f32 0.0, %v477
  %v479 = vpop.f32.mrb[0].mxu0
  %480 = vmatprep.mubr.f32.mxu0 0.0
  %481 = vmatmul.mubr.f32.gmra.mrb[0].mxu0 %v147
  %v482 = vpop.f32.mrb[0].mxu0
  %v483 = vadd.f32 0.0, %v482
  %v484 = vpop.f32.mrb[0].mxu0
  %485 = vmatprep.mubr.f32.mxu0 0.0
  %486 = vmatmul.mubr.f32.gmra.mrb[0].mxu0 %v148
  %v487 = vpop.f32.mrb[0].mxu0
  %v488 = vadd.f32 0.0, %v487
  %v489 = vpop.f32.mrb[0].mxu0
  %490 = vmatprep.mubr.f32.mxu0 0.0
  %491 = vmatmul.mubr.f32.gmra.mrb[0].mxu0 %v149
  %v492 = vpop.f32.mrb[0].mxu0
  %v493 = vadd.f32 0.0, %v492
  %v494 = vpop.f32.mrb[0].mxu0
  %495 = vmatprep.mubr.f32.mxu0 0.0
  %496 = vmatmul.mubr.f32.gmra.mrb[0].mxu0 %v150
  %v497 = vpop.f32.mrb[0].mxu0
  %v498 = vadd.f32 0.0, %v497
  %v499 = vpop.f32.mrb[0].mxu0
  %500 = vmatprep.mubr.f32.mxu0 0.0
  %501 = vmatmul.mubr.f32.gmra.mrb[0].mxu0 %v151
  %v502 = vpop.f32.mrb[0].mxu0
  %v503 = vadd.f32 0.0, %v502
  %v504 = vpop.f32.mrb[0].mxu0
  %505 = vmatprep.mubr.f32.mxu0 0.0
  %506 = vmatmul.mubr.f32.gmra.mrb[0].mxu0 %v152
  %v507 = vpop.f32.mrb[0].mxu0
  %v508 = vadd.f32 0.0, %v507
  %v509 = vpop.f32.mrb[0].mxu0
  %510 = vmatprep.mubr.f32.mxu0 0.0
  %511 = vmatmul.mubr.f32.gmra.mrb[0].mxu0 %v153
  %v512 = vpop.f32.mrb[0].mxu0
  %v513 = vadd.f32 0.0, %v512
  %v514 = vpop.f32.mrb[0].mxu0
  %515 = vmatprep.mubr.f32.mxu0 0.0
  %516 = vmatmul.mubr.f32.gmra.mrb[0].mxu0 %v154
  %v517 = vpop.f32.mrb[0].mxu0
  %v518 = vadd.f32 0.0, %v517
  %v519 = vpop.f32.mrb[0].mxu0
  %520 = vmatprep.mubr.f32.mxu0 0.0
  %521 = vmatmul.mubr.f32.gmra.mrb[0].mxu0 %v155
  %v522 = vpop.f32.mrb[0].mxu0
  %v523 = vadd.f32 0.0, %v522
  %v524 = vpop.f32.mrb[0].mxu0
  %525 = vmatprep.mubr.f32.mxu0 0.0
  %526 = vmatmul.mubr.f32.gmra.mrb[0].mxu0 %v156
  %v527 = vpop.f32.mrb[0].mxu0
  %v528 = vadd.f32 0.0, %v527
  %v529 = vpop.f32.mrb[0].mxu0
  %530 = vmatprep.mubr.f32.mxu0 0.0
  %531 = vmatmul.mubr.f32.gmra.mrb[0].mxu0 %v157
  %v532 = vpop.f32.mrb[0].mxu0
  %v533 = vadd.f32 0.0, %v532
  %v534 = vpop.f32.mrb[0].mxu0
  %535 = vmatprep.mubr.f32.mxu0 0.0
  %536 = vmatmul.mubr.f32.gmra.mrb[0].mxu0 %v158
  %v537 = vpop.f32.mrb[0].mxu0
  %v538 = vadd.f32 0.0, %v537
  %v539 = vpop.f32.mrb[0].mxu0
  %540 = vmatprep.mubr.f32.mxu0 0.0
  %541 = vmatmul.mubr.f32.gmra.mrb[0].mxu0 %v159
  %v542 = vpop.f32.mrb[0].mxu0
  %v543 = vadd.f32 0.0, %v542
  %v544 = vpop.f32.mrb[0].mxu0
  %545 = vmatprep.mubr.f32.mxu0 0.0
  %546 = vmatmul.mubr.f32.gmra.mrb[0].mxu0 %v160
  %v547 = vpop.f32.mrb[0].mxu0
  %v548 = vadd.f32 0.0, %v547
  %v549 = vpop.f32.mrb[0].mxu0
  %550 = vmatprep.mubr.f32.mxu0 0.0
  %551 = vmatmul.mubr.f32.gmra.mrb[0].mxu0 %v161
  %v552 = vpop.f32.mrb[0].mxu0
  %v553 = vadd.f32 0.0, %v552
  %v554 = vpop.f32.mrb[0].mxu0
  %555 = vmatprep.mubr.f32.mxu0 0.0
  %556 = vmatmul.mubr.f32.gmra.mrb[0].mxu0 %v162
  %v557 = vpop.f32.mrb[0].mxu0
  %v558 = vadd.f32 0.0, %v557
  %v559 = vpop.f32.mrb[0].mxu0
  %560 = vmatprep.mubr.f32.mxu0 0.0
  %561 = vmatmul.mubr.f32.gmra.mrb[0].mxu0 %v163
  %v562 = vpop.f32.mrb[0].mxu0
  %v563 = vadd.f32 0.0, %v562
  %v564 = vpop.f32.mrb[0].mxu0
  %565 = vmatprep.mubr.f32.mxu0 0.0
  %566 = vmatmul.mubr.f32.gmra.mrb[0].mxu0 %v164
  %v567 = vpop.f32.mrb[0].mxu0
  %v568 = vadd.f32 0.0, %v567
  %v569 = vpop.f32.mrb[0].mxu0
  %570 = vmatprep.mubr.f32.mxu0 0.0
  %571 = vmatmul.mubr.f32.gmra.mrb[0].mxu0 %v165
  %v572 = vpop.f32.mrb[0].mxu0
  %v573 = vadd.f32 0.0, %v572
  %v574 = vpop.f32.mrb[0].mxu0
  %575 = vmatprep.mubr.f32.mxu0 0.0
  %576 = vmatmul.mubr.f32.gmra.mrb[0].mxu0 %v166
  %v577 = vpop.f32.mrb[0].mxu0
  %v578 = vadd.f32 0.0, %v577
  %v579 = vpop.f32.mrb[0].mxu0
  %580 = vmatprep.mubr.f32.mxu0 0.0
  %581 = vmatmul.mubr.f32.gmra.mrb[0].mxu0 %v167
  %v582 = vpop.f32.mrb[0].mxu0
  %v583 = vadd.f32 0.0, %v582
  %v584 = vpop.f32.mrb[0].mxu0
  %585 = vmatprep.mubr.f32.mxu0 0.0
  %586 = vmatmul.mubr.f32.gmra.mrb[0].mxu0 %v168
  %v587 = vpop.f32.mrb[0].mxu0
  %v588 = vadd.f32 0.0, %v587
  %v589 = vpop.f32.mrb[0].mxu0
  %590 = vmatprep.mubr.f32.mxu0 0.0
  %591 = vmatmul.mubr.f32.gmra.mrb[0].mxu0 %v169
  %v592 = vpop.f32.mrb[0].mxu0
  %v593 = vadd.f32 0.0, %v592
  %v594 = vpop.f32.mrb[0].mxu0
  %595 = vmatprep.mubr.f32.mxu0 0.0
  %596 = vmatmul.mubr.f32.gmra.mrb[0].mxu0 %v170
  %v597 = vpop.f32.mrb[0].mxu0
  %v598 = vadd.f32 0.0, %v597
  %v599 = vpop.f32.mrb[0].mxu0
  %600 = vmatprep.mubr.f32.mxu0 0.0
  %601 = vmatmul.mubr.f32.gmra.mrb[0].mxu0 %v171
  %v602 = vpop.f32.mrb[0].mxu0
  %v603 = vadd.f32 0.0, %v602
  %v604 = vpop.f32.mrb[0].mxu0
  %605 = vmatprep.mubr.f32.mxu0 0.0
  %606 = vmatmul.mubr.f32.gmra.mrb[0].mxu0 %v172
  %v607 = vpop.f32.mrb[0].mxu0
  %v608 = vadd.f32 0.0, %v607
  %v609 = vpop.f32.mrb[0].mxu0
  %610 = vmatprep.mubr.f32.mxu0 0.0
  %611 = vmatmul.mubr.f32.gmra.mrb[0].mxu0 %v173
  %v612 = vpop.f32.mrb[0].mxu0
  %v613 = vadd.f32 0.0, %v612
  %v614 = vpop.f32.mrb[0].mxu0
  %615 = vmatprep.mubr.f32.mxu0 0.0
  %616 = vmatmul.mubr.f32.gmra.mrb[0].mxu0 %v174
  %v617 = vpop.f32.mrb[0].mxu0
  %v618 = vadd.f32 0.0, %v617
  %v619 = vpop.f32.mrb[0].mxu0
  %620 = vmatprep.mubr.f32.mxu0 0.0
  %621 = vmatmul.mubr.f32.gmra.mrb[0].mxu0 %v175
  %v622 = vpop.f32.mrb[0].mxu0
  %v623 = vadd.f32 0.0, %v622
  %v624 = vpop.f32.mrb[0].mxu0
  %625 = vmatprep.mubr.f32.mxu0 0.0
  %626 = vmatmul.mubr.f32.gmra.mrb[0].mxu0 %v176
  %v627 = vpop.f32.mrb[0].mxu0
  %v628 = vadd.f32 0.0, %v627
  %v629 = vpop.f32.mrb[0].mxu0
  %630 = vmatprep.mubr.f32.mxu0 0.0
  %631 = vmatmul.mubr.f32.gmra.mrb[0].mxu0 %v177
  %v632 = vpop.f32.mrb[0].mxu0
  %v633 = vadd.f32 0.0, %v632
  %v634 = vpop.f32.mrb[0].mxu0
  %635 = vmatprep.mubr.f32.mxu0 0.0
  %636 = vmatmul.mubr.f32.gmra.mrb[0].mxu0 %v178
  %v637 = vpop.f32.mrb[0].mxu0
  %v638 = vadd.f32 0.0, %v637
  %v639 = vpop.f32.mrb[0].mxu0
  %640 = vmatprep.mubr.f32.mxu0 0.0
  %641 = vmatmul.mubr.f32.gmra.mrb[0].mxu0 %v179
  %v642 = vpop.f32.mrb[0].mxu0
  %v643 = vadd.f32 0.0, %v642
  %v644 = vpop.f32.mrb[0].mxu0
  %645 = vmatprep.mubr.f32.mxu0 0.0
  %646 = vmatmul.mubr.f32.gmra.mrb[0].mxu0 %v180
  %v647 = vpop.f32.mrb[0].mxu0
  %v648 = vadd.f32 0.0, %v647
  %v649 = vpop.f32.mrb[0].mxu0
  %650 = vmatprep.mubr.f32.mxu0 0.0
  %651 = vmatmul.mubr.f32.gmra.mrb[0].mxu0 %v181
  %v652 = vpop.f32.mrb[0].mxu0
  %v653 = vadd.f32 0.0, %v652
  %v654 = vpop.f32.mrb[0].mxu0
  %655 = vmatprep.mubr.f32.mxu0 0.0
  %656 = vmatmul.mubr.f32.gmra.mrb[0].mxu0 %v182
  %v657 = vpop.f32.mrb[0].mxu0
  %v658 = vadd.f32 0.0, %v657
  %v659 = vpop.f32.mrb[0].mxu0
  %660 = vmatprep.mubr.f32.mxu0 0.0
  %661 = vmatmul.mubr.f32.gmra.mrb[0].mxu0 %v183
  %v662 = vpop.f32.mrb[0].mxu0
  %v663 = vadd.f32 0.0, %v662
  %v664 = vpop.f32.mrb[0].mxu0
  %665 = vmatprep.mubr.f32.mxu0 0.0
  %666 = vmatmul.mubr.f32.gmra.mrb[0].mxu0 %v184
  %v667 = vpop.f32.mrb[0].mxu0
  %v668 = vadd.f32 0.0, %v667
  %v669 = vpop.f32.mrb[0].mxu0
  %670 = vdwg.mxu0
  %v671 = vld [vmem:[%s4] sm:$0x1]
  %v672 = vld [vmem:[%s4 + $0x1] sm:$0x1]
  %v673 = vadd.f32 %v268, %v273
  %v674 = vadd.f32 %v673, %v278
  %v675 = vadd.f32 %v674, %v283
  %v676 = vadd.f32 %v675, %v288
  %v677 = vadd.f32 %v676, %v293
  %v678 = vadd.f32 %v677, %v298
  %v679 = vadd.f32 %v678, %v303
  %v680 = vadd.f32 %v679, %v308
  %v681 = vadd.f32 %v680, %v313
  %v682 = vadd.f32 %v681, %v318
  %v683 = vadd.f32 %v682, %v323
  %v684 = vadd.f32 %v683, %v328
  %v685 = vadd.f32 %v684, %v333
  %v686 = vadd.f32 %v685, %v338
  %v687 = vadd.f32 %v686, %v343
  %v688 = vadd.f32 %v687, %v348
  %v689 = vadd.f32 %v688, %v353
  %v690 = vadd.f32 %v689, %v358
  %v691 = vadd.f32 %v690, %v363
  %v692 = vadd.f32 %v691, %v368
  %v693 = vadd.f32 %v692, %v373
  %v694 = vadd.f32 %v693, %v378
  %v695 = vadd.f32 %v694, %v383
  %v696 = vadd.f32 %v695, %v388
  %v697 = vadd.f32 %v696, %v393
  %v698 = vadd.f32 %v697, %v398
  %v699 = vadd.f32 %v698, %v403
  %v700 = vadd.f32 %v699, %v408
  %v701 = vadd.f32 %v700, %v413
  %v702 = vadd.f32 %v701, %v418
  %v703 = vadd.f32 %v702, %v423
  %v704 = vadd.f32 %v703, %v428
  %v705 = vadd.f32 %v704, %v433
  %v706 = vadd.f32 %v705, %v438
  %v707 = vadd.f32 %v706, %v443
  %v708 = vadd.f32 %v707, %v448
  %v709 = vadd.f32 %v708, %v453
  %v710 = vadd.f32 %v709, %v458
  %v711 = vadd.f32 %v710, %v463
  %v712 = vadd.f32 %v711, %v468
  %v713 = vadd.f32 %v712, %v473
  %v714 = vadd.f32 %v713, %v478
  %v715 = vadd.f32 %v714, %v483
  %v716 = vadd.f32 %v715, %v488
  %v717 = vadd.f32 %v716, %v493
  %v718 = vadd.f32 %v717, %v498
  %v719 = vadd.f32 %v718, %v503
  %v720 = vadd.f32 %v719, %v508
  %v721 = vadd.f32 %v720, %v513
  %v722 = vadd.f32 %v721, %v518
  %v723 = vadd.f32 %v722, %v523
  %v724 = vadd.f32 %v723, %v528
  %v725 = vadd.f32 %v724, %v533
  %v726 = vadd.f32 %v725, %v538
  %v727 = vadd.f32 %v726, %v543
  %v728 = vadd.f32 %v727, %v548
  %v729 = vadd.f32 %v728, %v553
  %v730 = vadd.f32 %v729, %v558
  %v731 = vadd.f32 %v730, %v563
  %v732 = vadd.f32 %v731, %v568
  %v733 = vadd.f32 %v732, %v573
  %v734 = vadd.f32 %v733, %v578
  %v735 = vadd.f32 %v734, %v583
  %v736 = vadd.f32 %v735, %v588
  %v737 = vadd.f32 %v736, %v593
  %v738 = vadd.f32 %v737, %v598
  %v739 = vadd.f32 %v738, %v603
  %v740 = vadd.f32 %v739, %v608
  %v741 = vadd.f32 %v740, %v613
  %v742 = vadd.f32 %v741, %v618
  %v743 = vadd.f32 %v742, %v623
  %v744 = vadd.f32 %v743, %v628
  %v745 = vadd.f32 %v744, %v633
  %v746 = vadd.f32 %v745, %v638
  %v747 = vadd.f32 %v746, %v643
  %v748 = vadd.f32 %v747, %v648
  %v749 = vadd.f32 %v748, %v653
  %v750 = vadd.f32 %v749, %v658
  %v751 = vadd.f32 %v750, %v663
  %v752 = vadd.f32 %v751, %v668
  %v753 = vrot.slane %v752, 4
  %v754 = vadd.f32 %v752, %v753
  %v755 = vrot.slane %v754, 2
  %v756 = vadd.f32 %v754, %v755
  %v757 = vrot.slane %v756, 1
  %v758 = vadd.f32 %v756, %v757
  %v759 = vmul.f32 %v758, 0.001953125
  %v760 = vmul.f32 %v268, %v268
  %v761 = vmul.f32 %v273, %v273
  %v762 = vmul.f32 %v278, %v278
  %v763 = vmul.f32 %v283, %v283
  %v764 = vmul.f32 %v288, %v288
  %v765 = vmul.f32 %v293, %v293
  %v766 = vmul.f32 %v298, %v298
  %v767 = vmul.f32 %v303, %v303
  %v768 = vmul.f32 %v308, %v308
  %v769 = vmul.f32 %v313, %v313
  %v770 = vmul.f32 %v318, %v318
  %v771 = vmul.f32 %v323, %v323
  %v772 = vmul.f32 %v328, %v328
  %v773 = vmul.f32 %v333, %v333
  %v774 = vmul.f32 %v338, %v338
  %v775 = vmul.f32 %v343, %v343
  %v776 = vmul.f32 %v348, %v348
  %v777 = vmul.f32 %v353, %v353
  %v778 = vmul.f32 %v358, %v358
  %v779 = vmul.f32 %v363, %v363
  %v780 = vmul.f32 %v368, %v368
  %v781 = vmul.f32 %v373, %v373
  %v782 = vmul.f32 %v378, %v378
  %v783 = vmul.f32 %v383, %v383
  %v784 = vmul.f32 %v388, %v388
  %v785 = vmul.f32 %v393, %v393
  %v786 = vmul.f32 %v398, %v398
  %v787 = vmul.f32 %v403, %v403
  %v788 = vmul.f32 %v408, %v408
  %v789 = vmul.f32 %v413, %v413
  %v790 = vmul.f32 %v418, %v418
  %v791 = vmul.f32 %v423, %v423
  %v792 = vmul.f32 %v428, %v428
  %v793 = vmul.f32 %v433, %v433
  %v794 = vmul.f32 %v438, %v438
  %v795 = vmul.f32 %v443, %v443
  %v796 = vmul.f32 %v448, %v448
  %v797 = vmul.f32 %v453, %v453
  %v798 = vmul.f32 %v458, %v458
  %v799 = vmul.f32 %v463, %v463
  %v800 = vmul.f32 %v468, %v468
  %v801 = vmul.f32 %v473, %v473
  %v802 = vmul.f32 %v478, %v478
  %v803 = vmul.f32 %v483, %v483
  %v804 = vmul.f32 %v488, %v488
  %v805 = vmul.f32 %v493, %v493
  %v806 = vmul.f32 %v498, %v498
  %v807 = vmul.f32 %v503, %v503
  %v808 = vmul.f32 %v508, %v508
  %v809 = vmul.f32 %v513, %v513
  %v810 = vmul.f32 %v518, %v518
  %v811 = vmul.f32 %v523, %v523
  %v812 = vmul.f32 %v528, %v528
  %v813 = vmul.f32 %v533, %v533
  %v814 = vmul.f32 %v538, %v538
  %v815 = vmul.f32 %v543, %v543
  %v816 = vmul.f32 %v548, %v548
  %v817 = vmul.f32 %v553, %v553
  %v818 = vmul.f32 %v558, %v558
  %v819 = vmul.f32 %v563, %v563
  %v820 = vmul.f32 %v568, %v568
  %v821 = vmul.f32 %v573, %v573
  %v822 = vmul.f32 %v578, %v578
  %v823 = vmul.f32 %v583, %v583
  %v824 = vmul.f32 %v588, %v588
  %v825 = vmul.f32 %v593, %v593
  %v826 = vmul.f32 %v598, %v598
  %v827 = vmul.f32 %v603, %v603
  %v828 = vmul.f32 %v608, %v608
  %v829 = vmul.f32 %v613, %v613
  %v830 = vmul.f32 %v618, %v618
  %v831 = vmul.f32 %v623, %v623
  %v832 = vmul.f32 %v628, %v628
  %v833 = vmul.f32 %v633, %v633
  %v834 = vmul.f32 %v638, %v638
  %v835 = vmul.f32 %v643, %v643
  %v836 = vmul.f32 %v648, %v648
  %v837 = vmul.f32 %v653, %v653
  %v838 = vmul.f32 %v658, %v658
  %v839 = vmul.f32 %v663, %v663
  %v840 = vmul.f32 %v668, %v668
  %v841 = vadd.f32 %v760, %v761
  %v842 = vadd.f32 %v841, %v762
  %v843 = vadd.f32 %v842, %v763
  %v844 = vadd.f32 %v843, %v764
  %v845 = vadd.f32 %v844, %v765
  %v846 = vadd.f32 %v845, %v766
  %v847 = vadd.f32 %v846, %v767
  %v848 = vadd.f32 %v847, %v768
  %v849 = vadd.f32 %v848, %v769
  %v850 = vadd.f32 %v849, %v770
  %v851 = vadd.f32 %v850, %v771
  %v852 = vadd.f32 %v851, %v772
  %v853 = vadd.f32 %v852, %v773
  %v854 = vadd.f32 %v853, %v774
  %v855 = vadd.f32 %v854, %v775
  %v856 = vadd.f32 %v855, %v776
  %v857 = vadd.f32 %v856, %v777
  %v858 = vadd.f32 %v857, %v778
  %v859 = vadd.f32 %v858, %v779
  %v860 = vadd.f32 %v859, %v780
  %v861 = vadd.f32 %v860, %v781
  %v862 = vadd.f32 %v861, %v782
  %v863 = vadd.f32 %v862, %v783
  %v864 = vadd.f32 %v863, %v784
  %v865 = vadd.f32 %v864, %v785
  %v866 = vadd.f32 %v865, %v786
  %v867 = vadd.f32 %v866, %v787
  %v868 = vadd.f32 %v867, %v788
  %v869 = vadd.f32 %v868, %v789
  %v870 = vadd.f32 %v869, %v790
  %v871 = vadd.f32 %v870, %v791
  %v872 = vadd.f32 %v871, %v792
  %v873 = vadd.f32 %v872, %v793
  %v874 = vadd.f32 %v873, %v794
  %v875 = vadd.f32 %v874, %v795
  %v876 = vadd.f32 %v875, %v796
  %v877 = vadd.f32 %v876, %v797
  %v878 = vadd.f32 %v877, %v798
  %v879 = vadd.f32 %v878, %v799
  %v880 = vadd.f32 %v879, %v800
  %v881 = vadd.f32 %v880, %v801
  %v882 = vadd.f32 %v881, %v802
  %v883 = vadd.f32 %v882, %v803
  %v884 = vadd.f32 %v883, %v804
  %v885 = vadd.f32 %v884, %v805
  %v886 = vadd.f32 %v885, %v806
  %v887 = vadd.f32 %v886, %v807
  %v888 = vadd.f32 %v887, %v808
  %v889 = vadd.f32 %v888, %v809
  %v890 = vadd.f32 %v889, %v810
  %v891 = vadd.f32 %v890, %v811
  %v892 = vadd.f32 %v891, %v812
  %v893 = vadd.f32 %v892, %v813
  %v894 = vadd.f32 %v893, %v814
  %v895 = vadd.f32 %v894, %v815
  %v896 = vadd.f32 %v895, %v816
  %v897 = vadd.f32 %v896, %v817
  %v898 = vadd.f32 %v897, %v818
  %v899 = vadd.f32 %v898, %v819
  %v900 = vadd.f32 %v899, %v820
  %v901 = vadd.f32 %v900, %v821
  %v902 = vadd.f32 %v901, %v822
  %v903 = vadd.f32 %v902, %v823
  %v904 = vadd.f32 %v903, %v824
  %v905 = vadd.f32 %v904, %v825
  %v906 = vadd.f32 %v905, %v826
  %v907 = vadd.f32 %v906, %v827
  %v908 = vadd.f32 %v907, %v828
  %v909 = vadd.f32 %v908, %v829
  %v910 = vadd.f32 %v909, %v830
  %v911 = vadd.f32 %v910, %v831
  %v912 = vadd.f32 %v911, %v832
  %v913 = vadd.f32 %v912, %v833
  %v914 = vadd.f32 %v913, %v834
  %v915 = vadd.f32 %v914, %v835
  %v916 = vadd.f32 %v915, %v836
  %v917 = vadd.f32 %v916, %v837
  %v918 = vadd.f32 %v917, %v838
  %v919 = vadd.f32 %v918, %v839
  %v920 = vadd.f32 %v919, %v840
  %v921 = vrot.slane %v920, 4
  %v922 = vadd.f32 %v920, %v921
  %v923 = vrot.slane %v922, 2
  %v924 = vadd.f32 %v922, %v923
  %v925 = vrot.slane %v924, 1
  %v926 = vadd.f32 %v924, %v925
  %v927 = vmul.f32 %v926, 0.001953125
  %v928 = vmul.f32 %v759, %v759
  %v929 = vsub.f32 %v927, %v928
  %v930 = vadd.f32 %v929, 1e-05
  %v931 = vrsqrt.pop %v930
  %v932 = vmul.f32 %v671, %v931
  %v933 = vmul.f32 %v759, %v932
  %v934 = vsub.f32 %v672, %v933
  %v935 = vlaneseq
  %v936 = vshrl.u32 %v935, 7
  %v937 = vsub.s32 0, %v936
  %v938 = vrot.slane %v932, %v937
  %v939 = vmul.f32 %v268, %v938
  %v940 = vmul.f32 %v273, %v938
  %v941 = vmul.f32 %v278, %v938
  %v942 = vmul.f32 %v283, %v938
  %v943 = vmul.f32 %v288, %v938
  %v944 = vmul.f32 %v293, %v938
  %v945 = vmul.f32 %v298, %v938
  %v946 = vmul.f32 %v303, %v938
  %v947 = vmul.f32 %v308, %v938
  %v948 = vmul.f32 %v313, %v938
  %v949 = vmul.f32 %v318, %v938
  %v950 = vmul.f32 %v323, %v938
  %v951 = vmul.f32 %v328, %v938
  %v952 = vmul.f32 %v333, %v938
  %v953 = vmul.f32 %v338, %v938
  %v954 = vmul.f32 %v343, %v938
  %v955 = vmul.f32 %v348, %v938
  %v956 = vmul.f32 %v353, %v938
  %v957 = vmul.f32 %v358, %v938
  %v958 = vmul.f32 %v363, %v938
  %v959 = vmul.f32 %v368, %v938
  %v960 = vmul.f32 %v373, %v938
  %v961 = vmul.f32 %v378, %v938
  %v962 = vmul.f32 %v383, %v938
  %v963 = vmul.f32 %v388, %v938
  %v964 = vmul.f32 %v393, %v938
  %v965 = vmul.f32 %v398, %v938
  %v966 = vmul.f32 %v403, %v938
  %v967 = vmul.f32 %v408, %v938
  %v968 = vmul.f32 %v413, %v938
  %v969 = vmul.f32 %v418, %v938
  %v970 = vmul.f32 %v423, %v938
  %v971 = vmul.f32 %v428, %v938
  %v972 = vmul.f32 %v433, %v938
  %v973 = vmul.f32 %v438, %v938
  %v974 = vmul.f32 %v443, %v938
  %v975 = vmul.f32 %v448, %v938
  %v976 = vmul.f32 %v453, %v938
  %v977 = vmul.f32 %v458, %v938
  %v978 = vmul.f32 %v463, %v938
  %v979 = vmul.f32 %v468, %v938
  %v980 = vmul.f32 %v473, %v938
  %v981 = vmul.f32 %v478, %v938
  %v982 = vmul.f32 %v483, %v938
  %v983 = vmul.f32 %v488, %v938
  %v984 = vmul.f32 %v493, %v938
  %v985 = vmul.f32 %v498, %v938
  %v986 = vmul.f32 %v503, %v938
  %v987 = vmul.f32 %v508, %v938
  %v988 = vmul.f32 %v513, %v938
  %v989 = vmul.f32 %v518, %v938
  %v990 = vmul.f32 %v523, %v938
  %v991 = vmul.f32 %v528, %v938
  %v992 = vmul.f32 %v533, %v938
  %v993 = vmul.f32 %v538, %v938
  %v994 = vmul.f32 %v543, %v938
  %v995 = vmul.f32 %v548, %v938
  %v996 = vmul.f32 %v553, %v938
  %v997 = vmul.f32 %v558, %v938
  %v998 = vmul.f32 %v563, %v938
  %v999 = vmul.f32 %v568, %v938
  %v1000 = vmul.f32 %v573, %v938
  %v1001 = vmul.f32 %v578, %v938
  %v1002 = vmul.f32 %v583, %v938
  %v1003 = vmul.f32 %v588, %v938
  %v1004 = vmul.f32 %v593, %v938
  %v1005 = vmul.f32 %v598, %v938
  %v1006 = vmul.f32 %v603, %v938
  %v1007 = vmul.f32 %v608, %v938
  %v1008 = vmul.f32 %v613, %v938
  %v1009 = vmul.f32 %v618, %v938
  %v1010 = vmul.f32 %v623, %v938
  %v1011 = vmul.f32 %v628, %v938
  %v1012 = vmul.f32 %v633, %v938
  %v1013 = vmul.f32 %v638, %v938
  %v1014 = vmul.f32 %v643, %v938
  %v1015 = vmul.f32 %v648, %v938
  %v1016 = vmul.f32 %v653, %v938
  %v1017 = vmul.f32 %v658, %v938
  %v1018 = vmul.f32 %v663, %v938
  %v1019 = vmul.f32 %v668, %v938
  %v1020 = vlaneseq
  %v1021 = vshrl.u32 %v1020, 7
  %v1022 = vsub.s32 0, %v1021
  %v1023 = vrot.slane %v934, %v1022
  %v1024 = vadd.f32 %v939, %v1023
  %v1025 = vadd.f32 %v940, %v1023
  %v1026 = vadd.f32 %v941, %v1023
  %v1027 = vadd.f32 %v942, %v1023
  %v1028 = vadd.f32 %v943, %v1023
  %v1029 = vadd.f32 %v944, %v1023
  %v1030 = vadd.f32 %v945, %v1023
  %v1031 = vadd.f32 %v946, %v1023
  %v1032 = vadd.f32 %v947, %v1023
  %v1033 = vadd.f32 %v948, %v1023
  %v1034 = vadd.f32 %v949, %v1023
  %v1035 = vadd.f32 %v950, %v1023
  %v1036 = vadd.f32 %v951, %v1023
  %v1037 = vadd.f32 %v952, %v1023
  %v1038 = vadd.f32 %v953, %v1023
  %v1039 = vadd.f32 %v954, %v1023
  %v1040 = vadd.f32 %v955, %v1023
  %v1041 = vadd.f32 %v956, %v1023
  %v1042 = vadd.f32 %v957, %v1023
  %v1043 = vadd.f32 %v958, %v1023
  %v1044 = vadd.f32 %v959, %v1023
  %v1045 = vadd.f32 %v960, %v1023
  %v1046 = vadd.f32 %v961, %v1023
  %v1047 = vadd.f32 %v962, %v1023
  %v1048 = vadd.f32 %v963, %v1023
  %v1049 = vadd.f32 %v964, %v1023
  %v1050 = vadd.f32 %v965, %v1023
  %v1051 = vadd.f32 %v966, %v1023
  %v1052 = vadd.f32 %v967, %v1023
  %v1053 = vadd.f32 %v968, %v1023
  %v1054 = vadd.f32 %v969, %v1023
  %v1055 = vadd.f32 %v970, %v1023
  %v1056 = vadd.f32 %v971, %v1023
  %v1057 = vadd.f32 %v972, %v1023
  %v1058 = vadd.f32 %v973, %v1023
  %v1059 = vadd.f32 %v974, %v1023
  %v1060 = vadd.f32 %v975, %v1023
  %v1061 = vadd.f32 %v976, %v1023
  %v1062 = vadd.f32 %v977, %v1023
  %v1063 = vadd.f32 %v978, %v1023
  %v1064 = vadd.f32 %v979, %v1023
  %v1065 = vadd.f32 %v980, %v1023
  %v1066 = vadd.f32 %v981, %v1023
  %v1067 = vadd.f32 %v982, %v1023
  %v1068 = vadd.f32 %v983, %v1023
  %v1069 = vadd.f32 %v984, %v1023
  %v1070 = vadd.f32 %v985, %v1023
  %v1071 = vadd.f32 %v986, %v1023
  %v1072 = vadd.f32 %v987, %v1023
  %v1073 = vadd.f32 %v988, %v1023
  %v1074 = vadd.f32 %v989, %v1023
  %v1075 = vadd.f32 %v990, %v1023
  %v1076 = vadd.f32 %v991, %v1023
  %v1077 = vadd.f32 %v992, %v1023
  %v1078 = vadd.f32 %v993, %v1023
  %v1079 = vadd.f32 %v994, %v1023
  %v1080 = vadd.f32 %v995, %v1023
  %v1081 = vadd.f32 %v996, %v1023
  %v1082 = vadd.f32 %v997, %v1023
  %v1083 = vadd.f32 %v998, %v1023
  %v1084 = vadd.f32 %v999, %v1023
  %v1085 = vadd.f32 %v1000, %v1023
  %v1086 = vadd.f32 %v1001, %v1023
  %v1087 = vadd.f32 %v1002, %v1023
  %v1088 = vadd.f32 %v1003, %v1023
  %v1089 = vadd.f32 %v1004, %v1023
  %v1090 = vadd.f32 %v1005, %v1023
  %v1091 = vadd.f32 %v1006, %v1023
  %v1092 = vadd.f32 %v1007, %v1023
  %v1093 = vadd.f32 %v1008, %v1023
  %v1094 = vadd.f32 %v1009, %v1023
  %v1095 = vadd.f32 %v1010, %v1023
  %v1096 = vadd.f32 %v1011, %v1023
  %v1097 = vadd.f32 %v1012, %v1023
  %v1098 = vadd.f32 %v1013, %v1023
  %v1099 = vadd.f32 %v1014, %v1023
  %v1100 = vadd.f32 %v1015, %v1023
  %v1101 = vadd.f32 %v1016, %v1023
  %v1102 = vadd.f32 %v1017, %v1023
  %v1103 = vadd.f32 %v1018, %v1023
  %v1104 = vadd.f32 %v1019, %v1023
  %v1105 = vmax.f32 %v1024, 0.0
  %v1106 = vmax.f32 %v1025, 0.0
  %v1107 = vmax.f32 %v1026, 0.0
  %v1108 = vmax.f32 %v1027, 0.0
  %v1109 = vmax.f32 %v1028, 0.0
  %v1110 = vmax.f32 %v1029, 0.0
  %v1111 = vmax.f32 %v1030, 0.0
  %v1112 = vmax.f32 %v1031, 0.0
  %v1113 = vmax.f32 %v1032, 0.0
  %v1114 = vmax.f32 %v1033, 0.0
  %v1115 = vmax.f32 %v1034, 0.0
  %v1116 = vmax.f32 %v1035, 0.0
  %v1117 = vmax.f32 %v1036, 0.0
  %v1118 = vmax.f32 %v1037, 0.0
  %v1119 = vmax.f32 %v1038, 0.0
  %v1120 = vmax.f32 %v1039, 0.0
  %v1121 = vmax.f32 %v1040, 0.0
  %v1122 = vmax.f32 %v1041, 0.0
  %v1123 = vmax.f32 %v1042, 0.0
  %v1124 = vmax.f32 %v1043, 0.0
  %v1125 = vmax.f32 %v1044, 0.0
  %v1126 = vmax.f32 %v1045, 0.0
  %v1127 = vmax.f32 %v1046, 0.0
  %v1128 = vmax.f32 %v1047, 0.0
  %v1129 = vmax.f32 %v1048, 0.0
  %v1130 = vmax.f32 %v1049, 0.0
  %v1131 = vmax.f32 %v1050, 0.0
  %v1132 = vmax.f32 %v1051, 0.0
  %v1133 = vmax.f32 %v1052, 0.0
  %v1134 = vmax.f32 %v1053, 0.0
  %v1135 = vmax.f32 %v1054, 0.0
  %v1136 = vmax.f32 %v1055, 0.0
  %v1137 = vmax.f32 %v1056, 0.0
  %v1138 = vmax.f32 %v1057, 0.0
  %v1139 = vmax.f32 %v1058, 0.0
  %v1140 = vmax.f32 %v1059, 0.0
  %v1141 = vmax.f32 %v1060, 0.0
  %v1142 = vmax.f32 %v1061, 0.0
  %v1143 = vmax.f32 %v1062, 0.0
  %v1144 = vmax.f32 %v1063, 0.0
  %v1145 = vmax.f32 %v1064, 0.0
  %v1146 = vmax.f32 %v1065, 0.0
  %v1147 = vmax.f32 %v1066, 0.0
  %v1148 = vmax.f32 %v1067, 0.0
  %v1149 = vmax.f32 %v1068, 0.0
  %v1150 = vmax.f32 %v1069, 0.0
  %v1151 = vmax.f32 %v1070, 0.0
  %v1152 = vmax.f32 %v1071, 0.0
  %v1153 = vmax.f32 %v1072, 0.0
  %v1154 = vmax.f32 %v1073, 0.0
  %v1155 = vmax.f32 %v1074, 0.0
  %v1156 = vmax.f32 %v1075, 0.0
  %v1157 = vmax.f32 %v1076, 0.0
  %v1158 = vmax.f32 %v1077, 0.0
  %v1159 = vmax.f32 %v1078, 0.0
  %v1160 = vmax.f32 %v1079, 0.0
  %v1161 = vmax.f32 %v1080, 0.0
  %v1162 = vmax.f32 %v1081, 0.0
  %v1163 = vmax.f32 %v1082, 0.0
  %v1164 = vmax.f32 %v1083, 0.0
  %v1165 = vmax.f32 %v1084, 0.0
  %v1166 = vmax.f32 %v1085, 0.0
  %v1167 = vmax.f32 %v1086, 0.0
  %v1168 = vmax.f32 %v1087, 0.0
  %v1169 = vmax.f32 %v1088, 0.0
  %v1170 = vmax.f32 %v1089, 0.0
  %v1171 = vmax.f32 %v1090, 0.0
  %v1172 = vmax.f32 %v1091, 0.0
  %v1173 = vmax.f32 %v1092, 0.0
  %v1174 = vmax.f32 %v1093, 0.0
  %v1175 = vmax.f32 %v1094, 0.0
  %v1176 = vmax.f32 %v1095, 0.0
  %v1177 = vmax.f32 %v1096, 0.0
  %v1178 = vmax.f32 %v1097, 0.0
  %v1179 = vmax.f32 %v1098, 0.0
  %v1180 = vmax.f32 %v1099, 0.0
  %v1181 = vmax.f32 %v1100, 0.0
  %v1182 = vmax.f32 %v1101, 0.0
  %v1183 = vmax.f32 %v1102, 0.0
  %v1184 = vmax.f32 %v1103, 0.0
  %v1185 = vmax.f32 %v1104, 0.0
  %1187 = vset.pattern.permute.xlu0 0
  %1188 = vperm.xlu0 %1187, %v23
  %v1189 = vpop.permute.xlu0 %1188
  %1192 = vset.pattern.permute.xlu0 0
  %1193 = vperm.xlu0 %1192, %v24
  %v1194 = vpop.permute.xlu0 %1193
  %1197 = vset.pattern.permute.xlu0 0
  %1198 = vperm.xlu0 %1197, %v25
  %v1199 = vpop.permute.xlu0 %1198
  %1202 = vset.pattern.permute.xlu0 0
  %1203 = vperm.xlu0 %1202, %v26
  %v1204 = vpop.permute.xlu0 %1203
  %1207 = vset.pattern.permute.xlu0 0
  %1208 = vperm.xlu0 %1207, %v27
  %v1209 = vpop.permute.xlu0 %1208
  %1212 = vset.pattern.permute.xlu0 0
  %1213 = vperm.xlu0 %1212, %v28
  %v1214 = vpop.permute.xlu0 %1213
  %1217 = vset.pattern.permute.xlu0 0
  %1218 = vperm.xlu0 %1217, %v29
  %v1219 = vpop.permute.xlu0 %1218
  %1222 = vset.pattern.permute.xlu0 0
  %1223 = vperm.xlu0 %1222, %v30
  %v1224 = vpop.permute.xlu0 %1223
  %1227 = vset.pattern.permute.xlu0 0
  %1228 = vperm.xlu0 %1227, %v31
  %v1229 = vpop.permute.xlu0 %1228
  %1232 = vset.pattern.permute.xlu0 0
  %1233 = vperm.xlu0 %1232, %v32
  %v1234 = vpop.permute.xlu0 %1233
  %1237 = vset.pattern.permute.xlu0 0
  %1238 = vperm.xlu0 %1237, %v33
  %v1239 = vpop.permute.xlu0 %1238
  %1242 = vset.pattern.permute.xlu0 0
  %1243 = vperm.xlu0 %1242, %v34
  %v1244 = vpop.permute.xlu0 %1243
  %1247 = vset.pattern.permute.xlu0 0
  %1248 = vperm.xlu0 %1247, %v35
  %v1249 = vpop.permute.xlu0 %1248
  %1252 = vset.pattern.permute.xlu0 0
  %1253 = vperm.xlu0 %1252, %v36
  %v1254 = vpop.permute.xlu0 %1253
  %1257 = vset.pattern.permute.xlu0 0
  %1258 = vperm.xlu0 %1257, %v37
  %v1259 = vpop.permute.xlu0 %1258
  %1262 = vset.pattern.permute.xlu0 0
  %1263 = vperm.xlu0 %1262, %v38
  %v1264 = vpop.permute.xlu0 %1263
  %1267 = vset.pattern.permute.xlu0 0
  %1268 = vperm.xlu0 %1267, %v39
  %v1269 = vpop.permute.xlu0 %1268
  %1272 = vset.pattern.permute.xlu0 0
  %1273 = vperm.xlu0 %1272, %v40
  %v1274 = vpop.permute.xlu0 %1273
  %1277 = vset.pattern.permute.xlu0 0
  %1278 = vperm.xlu0 %1277, %v41
  %v1279 = vpop.permute.xlu0 %1278
  %1282 = vset.pattern.permute.xlu0 0
  %1283 = vperm.xlu0 %1282, %v42
  %v1284 = vpop.permute.xlu0 %1283
  %1287 = vset.pattern.permute.xlu0 0
  %1288 = vperm.xlu0 %1287, %v43
  %v1289 = vpop.permute.xlu0 %1288
  %1292 = vset.pattern.permute.xlu0 0
  %1293 = vperm.xlu0 %1292, %v44
  %v1294 = vpop.permute.xlu0 %1293
  %1297 = vset.pattern.permute.xlu0 0
  %1298 = vperm.xlu0 %1297, %v45
  %v1299 = vpop.permute.xlu0 %1298
  %1302 = vset.pattern.permute.xlu0 0
  %1303 = vperm.xlu0 %1302, %v46
  %v1304 = vpop.permute.xlu0 %1303
  %1307 = vset.pattern.permute.xlu0 0
  %1308 = vperm.xlu0 %1307, %v47
  %v1309 = vpop.permute.xlu0 %1308
  %1312 = vset.pattern.permute.xlu0 0
  %1313 = vperm.xlu0 %1312, %v48
  %v1314 = vpop.permute.xlu0 %1313
  %1317 = vset.pattern.permute.xlu0 0
  %1318 = vperm.xlu0 %1317, %v49
  %v1319 = vpop.permute.xlu0 %1318
  %1322 = vset.pattern.permute.xlu0 0
  %1323 = vperm.xlu0 %1322, %v50
  %v1324 = vpop.permute.xlu0 %1323
  %1327 = vset.pattern.permute.xlu0 0
  %1328 = vperm.xlu0 %1327, %v51
  %v1329 = vpop.permute.xlu0 %1328
  %1332 = vset.pattern.permute.xlu0 0
  %1333 = vperm.xlu0 %1332, %v52
  %v1334 = vpop.permute.xlu0 %1333
  %1337 = vset.pattern.permute.xlu0 0
  %1338 = vperm.xlu0 %1337, %v53
  %v1339 = vpop.permute.xlu0 %1338
  %1342 = vset.pattern.permute.xlu0 0
  %1343 = vperm.xlu0 %1342, %v54
  %v1344 = vpop.permute.xlu0 %1343
  %1347 = vset.pattern.permute.xlu0 0
  %1348 = vperm.xlu0 %1347, %v55
  %v1349 = vpop.permute.xlu0 %1348
  %1352 = vset.pattern.permute.xlu0 0
  %1353 = vperm.xlu0 %1352, %v56
  %v1354 = vpop.permute.xlu0 %1353
  %1357 = vset.pattern.permute.xlu0 0
  %1358 = vperm.xlu0 %1357, %v57
  %v1359 = vpop.permute.xlu0 %1358
  %1362 = vset.pattern.permute.xlu0 0
  %1363 = vperm.xlu0 %1362, %v58
  %v1364 = vpop.permute.xlu0 %1363
  %1367 = vset.pattern.permute.xlu0 0
  %1368 = vperm.xlu0 %1367, %v59
  %v1369 = vpop.permute.xlu0 %1368
  %1372 = vset.pattern.permute.xlu0 0
  %1373 = vperm.xlu0 %1372, %v60
  %v1374 = vpop.permute.xlu0 %1373
  %1377 = vset.pattern.permute.xlu0 0
  %1378 = vperm.xlu0 %1377, %v61
  %v1379 = vpop.permute.xlu0 %1378
  %1382 = vset.pattern.permute.xlu0 0
  %1383 = vperm.xlu0 %1382, %v62
  %v1384 = vpop.permute.xlu0 %1383
  %1387 = vset.pattern.permute.xlu0 0
  %1388 = vperm.xlu0 %1387, %v63
  %v1389 = vpop.permute.xlu0 %1388
  %1392 = vset.pattern.permute.xlu0 0
  %1393 = vperm.xlu0 %1392, %v64
  %v1394 = vpop.permute.xlu0 %1393
  %1397 = vset.pattern.permute.xlu0 0
  %1398 = vperm.xlu0 %1397, %v65
  %v1399 = vpop.permute.xlu0 %1398
  %1402 = vset.pattern.permute.xlu0 0
  %1403 = vperm.xlu0 %1402, %v66
  %v1404 = vpop.permute.xlu0 %1403
  %1407 = vset.pattern.permute.xlu0 0
  %1408 = vperm.xlu0 %1407, %v67
  %v1409 = vpop.permute.xlu0 %1408
  %1412 = vset.pattern.permute.xlu0 0
  %1413 = vperm.xlu0 %1412, %v68
  %v1414 = vpop.permute.xlu0 %1413
  %1417 = vset.pattern.permute.xlu0 0
  %1418 = vperm.xlu0 %1417, %v69
  %v1419 = vpop.permute.xlu0 %1418
  %1422 = vset.pattern.permute.xlu0 0
  %1423 = vperm.xlu0 %1422, %v70
  %v1424 = vpop.permute.xlu0 %1423
  %1427 = vset.pattern.permute.xlu0 0
  %1428 = vperm.xlu0 %1427, %v71
  %v1429 = vpop.permute.xlu0 %1428
  %1432 = vset.pattern.permute.xlu0 0
  %1433 = vperm.xlu0 %1432, %v72
  %v1434 = vpop.permute.xlu0 %1433
  %1437 = vset.pattern.permute.xlu0 0
  %1438 = vperm.xlu0 %1437, %v73
  %v1439 = vpop.permute.xlu0 %1438
  %1442 = vset.pattern.permute.xlu0 0
  %1443 = vperm.xlu0 %1442, %v74
  %v1444 = vpop.permute.xlu0 %1443
  %1447 = vset.pattern.permute.xlu0 0
  %1448 = vperm.xlu0 %1447, %v75
  %v1449 = vpop.permute.xlu0 %1448
  %1452 = vset.pattern.permute.xlu0 0
  %1453 = vperm.xlu0 %1452, %v76
  %v1454 = vpop.permute.xlu0 %1453
  %1457 = vset.pattern.permute.xlu0 0
  %1458 = vperm.xlu0 %1457, %v77
  %v1459 = vpop.permute.xlu0 %1458
  %1462 = vset.pattern.permute.xlu0 0
  %1463 = vperm.xlu0 %1462, %v78
  %v1464 = vpop.permute.xlu0 %1463
  %1467 = vset.pattern.permute.xlu0 0
  %1468 = vperm.xlu0 %1467, %v79
  %v1469 = vpop.permute.xlu0 %1468
  %1472 = vset.pattern.permute.xlu0 0
  %1473 = vperm.xlu0 %1472, %v80
  %v1474 = vpop.permute.xlu0 %1473
  %1477 = vset.pattern.permute.xlu0 0
  %1478 = vperm.xlu0 %1477, %v81
  %v1479 = vpop.permute.xlu0 %1478
  %1482 = vset.pattern.permute.xlu0 0
  %1483 = vperm.xlu0 %1482, %v82
  %v1484 = vpop.permute.xlu0 %1483
  %1487 = vset.pattern.permute.xlu0 0
  %1488 = vperm.xlu0 %1487, %v83
  %v1489 = vpop.permute.xlu0 %1488
  %1492 = vset.pattern.permute.xlu0 0
  %1493 = vperm.xlu0 %1492, %v84
  %v1494 = vpop.permute.xlu0 %1493
  %1497 = vset.pattern.permute.xlu0 0
  %1498 = vperm.xlu0 %1497, %v85
  %v1499 = vpop.permute.xlu0 %1498
  %1502 = vset.pattern.permute.xlu0 0
  %1503 = vperm.xlu0 %1502, %v86
  %v1504 = vpop.permute.xlu0 %1503
  %1507 = vset.pattern.permute.xlu0 0
  %1508 = vperm.xlu0 %1507, %v87
  %v1509 = vpop.permute.xlu0 %1508
  %1512 = vset.pattern.permute.xlu0 0
  %1513 = vperm.xlu0 %1512, %v88
  %v1514 = vpop.permute.xlu0 %1513
  %1517 = vset.pattern.permute.xlu0 0
  %1518 = vperm.xlu0 %1517, %v89
  %v1519 = vpop.permute.xlu0 %1518
  %1522 = vset.pattern.permute.xlu0 0
  %1523 = vperm.xlu0 %1522, %v90
  %v1524 = vpop.permute.xlu0 %1523
  %1527 = vset.pattern.permute.xlu0 0
  %1528 = vperm.xlu0 %1527, %v91
  %v1529 = vpop.permute.xlu0 %1528
  %1532 = vset.pattern.permute.xlu0 0
  %1533 = vperm.xlu0 %1532, %v92
  %v1534 = vpop.permute.xlu0 %1533
  %1537 = vset.pattern.permute.xlu0 0
  %1538 = vperm.xlu0 %1537, %v93
  %v1539 = vpop.permute.xlu0 %1538
  %1542 = vset.pattern.permute.xlu0 0
  %1543 = vperm.xlu0 %1542, %v94
  %v1544 = vpop.permute.xlu0 %1543
  %1547 = vset.pattern.permute.xlu0 0
  %1548 = vperm.xlu0 %1547, %v95
  %v1549 = vpop.permute.xlu0 %1548
  %1552 = vset.pattern.permute.xlu0 0
  %1553 = vperm.xlu0 %1552, %v96
  %v1554 = vpop.permute.xlu0 %1553
  %1557 = vset.pattern.permute.xlu0 0
  %1558 = vperm.xlu0 %1557, %v97
  %v1559 = vpop.permute.xlu0 %1558
  %1562 = vset.pattern.permute.xlu0 0
  %1563 = vperm.xlu0 %1562, %v98
  %v1564 = vpop.permute.xlu0 %1563
  %1567 = vset.pattern.permute.xlu0 0
  %1568 = vperm.xlu0 %1567, %v99
  %v1569 = vpop.permute.xlu0 %1568
  %1572 = vset.pattern.permute.xlu0 0
  %1573 = vperm.xlu0 %1572, %v100
  %v1574 = vpop.permute.xlu0 %1573
  %1577 = vset.pattern.permute.xlu0 0
  %1578 = vperm.xlu0 %1577, %v101
  %v1579 = vpop.permute.xlu0 %1578
  %1582 = vset.pattern.permute.xlu0 0
  %1583 = vperm.xlu0 %1582, %v102
  %v1584 = vpop.permute.xlu0 %1583
  %1587 = vset.pattern.permute.xlu0 0
  %1588 = vperm.xlu0 %1587, %v103
  %v1589 = vpop.permute.xlu0 %1588
  %v1591 = vmul.f32 %v1105, %v1189
  %v1592 = vmul.f32 %v1106, %v1194
  %v1593 = vmul.f32 %v1107, %v1199
  %v1594 = vmul.f32 %v1108, %v1204
  %v1595 = vmul.f32 %v1109, %v1209
  %v1596 = vmul.f32 %v1110, %v1214
  %v1597 = vmul.f32 %v1111, %v1219
  %v1598 = vmul.f32 %v1112, %v1224
  %v1599 = vmul.f32 %v1113, %v1229
  %v1600 = vmul.f32 %v1114, %v1234
  %v1601 = vmul.f32 %v1115, %v1239
  %v1602 = vmul.f32 %v1116, %v1244
  %v1603 = vmul.f32 %v1117, %v1249
  %v1604 = vmul.f32 %v1118, %v1254
  %v1605 = vmul.f32 %v1119, %v1259
  %v1606 = vmul.f32 %v1120, %v1264
  %v1607 = vmul.f32 %v1121, %v1269
  %v1608 = vmul.f32 %v1122, %v1274
  %v1609 = vmul.f32 %v1123, %v1279
  %v1610 = vmul.f32 %v1124, %v1284
  %v1611 = vmul.f32 %v1125, %v1289
  %v1612 = vmul.f32 %v1126, %v1294
  %v1613 = vmul.f32 %v1127, %v1299
  %v1614 = vmul.f32 %v1128, %v1304
  %v1615 = vmul.f32 %v1129, %v1309
  %v1616 = vmul.f32 %v1130, %v1314
  %v1617 = vmul.f32 %v1131, %v1319
  %v1618 = vmul.f32 %v1132, %v1324
  %v1619 = vmul.f32 %v1133, %v1329
  %v1620 = vmul.f32 %v1134, %v1334
  %v1621 = vmul.f32 %v1135, %v1339
  %v1622 = vmul.f32 %v1136, %v1344
  %v1623 = vmul.f32 %v1137, %v1349
  %v1624 = vmul.f32 %v1138, %v1354
  %v1625 = vmul.f32 %v1139, %v1359
  %v1626 = vmul.f32 %v1140, %v1364
  %v1627 = vmul.f32 %v1141, %v1369
  %v1628 = vmul.f32 %v1142, %v1374
  %v1629 = vmul.f32 %v1143, %v1379
  %v1630 = vmul.f32 %v1144, %v1384
  %v1631 = vmul.f32 %v1145, %v1389
  %v1632 = vmul.f32 %v1146, %v1394
  %v1633 = vmul.f32 %v1147, %v1399
  %v1634 = vmul.f32 %v1148, %v1404
  %v1635 = vmul.f32 %v1149, %v1409
  %v1636 = vmul.f32 %v1150, %v1414
  %v1637 = vmul.f32 %v1151, %v1419
  %v1638 = vmul.f32 %v1152, %v1424
  %v1639 = vmul.f32 %v1153, %v1429
  %v1640 = vmul.f32 %v1154, %v1434
  %v1641 = vmul.f32 %v1155, %v1439
  %v1642 = vmul.f32 %v1156, %v1444
  %v1643 = vmul.f32 %v1157, %v1449
  %v1644 = vmul.f32 %v1158, %v1454
  %v1645 = vmul.f32 %v1159, %v1459
  %v1646 = vmul.f32 %v1160, %v1464
  %v1647 = vmul.f32 %v1161, %v1469
  %v1648 = vmul.f32 %v1162, %v1474
  %v1649 = vmul.f32 %v1163, %v1479
  %v1650 = vmul.f32 %v1164, %v1484
  %v1651 = vmul.f32 %v1165, %v1489
  %v1652 = vmul.f32 %v1166, %v1494
  %v1653 = vmul.f32 %v1167, %v1499
  %v1654 = vmul.f32 %v1168, %v1504
  %v1655 = vmul.f32 %v1169, %v1509
  %v1656 = vmul.f32 %v1170, %v1514
  %v1657 = vmul.f32 %v1171, %v1519
  %v1658 = vmul.f32 %v1172, %v1524
  %v1659 = vmul.f32 %v1173, %v1529
  %v1660 = vmul.f32 %v1174, %v1534
  %v1661 = vmul.f32 %v1175, %v1539
  %v1662 = vmul.f32 %v1176, %v1544
  %v1663 = vmul.f32 %v1177, %v1549
  %v1664 = vmul.f32 %v1178, %v1554
  %v1665 = vmul.f32 %v1179, %v1559
  %v1666 = vmul.f32 %v1180, %v1564
  %v1667 = vmul.f32 %v1181, %v1569
  %v1668 = vmul.f32 %v1182, %v1574
  %v1669 = vmul.f32 %v1183, %v1579
  %v1670 = vmul.f32 %v1184, %v1584
  %v1671 = vmul.f32 %v1185, %v1589
  %1672 = vst [vmem:[#allocation2] sm:$0xff] 0.0
  %1673 = vst [vmem:[#allocation2 + $0x8] sm:$0xff] 0.0
  %1674 = vst [vmem:[#allocation2 + $0x10] sm:$0xff] 0.0
  %1675 = vst [vmem:[#allocation2 + $0x2a0] sm:$0xff] 0.0
  %1676 = vst [vmem:[#allocation2 + $0x2a8] sm:$0xff] 0.0
  %1677 = vst [vmem:[#allocation2 + $0x2b0] sm:$0xff] 0.0
  %1678 = vst [vmem:[#allocation2 + $0x18] sm:$0xff] %v1591
  %1679 = vst [vmem:[#allocation2 + $0x20] sm:$0xff] %v1592
  %1680 = vst [vmem:[#allocation2 + $0x28] sm:$0xff] %v1593
  %1681 = vst [vmem:[#allocation2 + $0x30] sm:$0xff] %v1594
  %1682 = vst [vmem:[#allocation2 + $0x38] sm:$0xff] %v1595
  %1683 = vst [vmem:[#allocation2 + $0x40] sm:$0xff] %v1596
  %1684 = vst [vmem:[#allocation2 + $0x48] sm:$0xff] %v1597
  %1685 = vst [vmem:[#allocation2 + $0x50] sm:$0xff] %v1598
  %1686 = vst [vmem:[#allocation2 + $0x58] sm:$0xff] %v1599
  %1687 = vst [vmem:[#allocation2 + $0x60] sm:$0xff] %v1600
  %1688 = vst [vmem:[#allocation2 + $0x68] sm:$0xff] %v1601
  %1689 = vst [vmem:[#allocation2 + $0x70] sm:$0xff] %v1602
  %1690 = vst [vmem:[#allocation2 + $0x78] sm:$0xff] %v1603
  %1691 = vst [vmem:[#allocation2 + $0x80] sm:$0xff] %v1604
  %1692 = vst [vmem:[#allocation2 + $0x88] sm:$0xff] %v1605
  %1693 = vst [vmem:[#allocation2 + $0x90] sm:$0xff] %v1606
  %1694 = vst [vmem:[#allocation2 + $0x98] sm:$0xff] %v1607
  %1695 = vst [vmem:[#allocation2 + $0xa0] sm:$0xff] %v1608
  %1696 = vst [vmem:[#allocation2 + $0xa8] sm:$0xff] %v1609
  %1697 = vst [vmem:[#allocation2 + $0xb0] sm:$0xff] %v1610
  %1698 = vst [vmem:[#allocation2 + $0xb8] sm:$0xff] %v1611
  %1699 = vst [vmem:[#allocation2 + $0xc0] sm:$0xff] %v1612
  %1700 = vst [vmem:[#allocation2 + $0xc8] sm:$0xff] %v1613
  %1701 = vst [vmem:[#allocation2 + $0xd0] sm:$0xff] %v1614
  %1702 = vst [vmem:[#allocation2 + $0xd8] sm:$0xff] %v1615
  %1703 = vst [vmem:[#allocation2 + $0xe0] sm:$0xff] %v1616
  %1704 = vst [vmem:[#allocation2 + $0xe8] sm:$0xff] %v1617
  %1705 = vst [vmem:[#allocation2 + $0xf0] sm:$0xff] %v1618
  %1706 = vst [vmem:[#allocation2 + $0xf8] sm:$0xff] %v1619
  %1707 = vst [vmem:[#allocation2 + $0x100] sm:$0xff] %v1620
  %1708 = vst [vmem:[#allocation2 + $0x108] sm:$0xff] %v1621
  %1709 = vst [vmem:[#allocation2 + $0x110] sm:$0xff] %v1622
  %1710 = vst [vmem:[#allocation2 + $0x118] sm:$0xff] %v1623
  %1711 = vst [vmem:[#allocation2 + $0x120] sm:$0xff] %v1624
  %1712 = vst [vmem:[#allocation2 + $0x128] sm:$0xff] %v1625
  %1713 = vst [vmem:[#allocation2 + $0x130] sm:$0xff] %v1626
  %1714 = vst [vmem:[#allocation2 + $0x138] sm:$0xff] %v1627
  %1715 = vst [vmem:[#allocation2 + $0x140] sm:$0xff] %v1628
  %1716 = vst [vmem:[#allocation2 + $0x148] sm:$0xff] %v1629
  %1717 = vst [vmem:[#allocation2 + $0x150] sm:$0xff] %v1630
  %1718 = vst [vmem:[#allocation2 + $0x158] sm:$0xff] %v1631
  %1719 = vst [vmem:[#allocation2 + $0x160] sm:$0xff] %v1632
  %1720 = vst [vmem:[#allocation2 + $0x168] sm:$0xff] %v1633
  %1721 = vst [vmem:[#allocation2 + $0x170] sm:$0xff] %v1634
  %1722 = vst [vmem:[#allocation2 + $0x178] sm:$0xff] %v1635
  %1723 = vst [vmem:[#allocation2 + $0x180] sm:$0xff] %v1636
  %1724 = vst [vmem:[#allocation2 + $0x188] sm:$0xff] %v1637
  %1725 = vst [vmem:[#allocation2 + $0x190] sm:$0xff] %v1638
  %1726 = vst [vmem:[#allocation2 + $0x198] sm:$0xff] %v1639
  %1727 = vst [vmem:[#allocation2 + $0x1a0] sm:$0xff] %v1640
  %1728 = vst [vmem:[#allocation2 + $0x1a8] sm:$0xff] %v1641
  %1729 = vst [vmem:[#allocation2 + $0x1b0] sm:$0xff] %v1642
  %1730 = vst [vmem:[#allocation2 + $0x1b8] sm:$0xff] %v1643
  %1731 = vst [vmem:[#allocation2 + $0x1c0] sm:$0xff] %v1644
  %1732 = vst [vmem:[#allocation2 + $0x1c8] sm:$0xff] %v1645
  %1733 = vst [vmem:[#allocation2 + $0x1d0] sm:$0xff] %v1646
  %1734 = vst [vmem:[#allocation2 + $0x1d8] sm:$0xff] %v1647
  %1735 = vst [vmem:[#allocation2 + $0x1e0] sm:$0xff] %v1648
  %1736 = vst [vmem:[#allocation2 + $0x1e8] sm:$0xff] %v1649
  %1737 = vst [vmem:[#allocation2 + $0x1f0] sm:$0xff] %v1650
  %1738 = vst [vmem:[#allocation2 + $0x1f8] sm:$0xff] %v1651
  %1739 = vst [vmem:[#allocation2 + $0x200] sm:$0xff] %v1652
  %1740 = vst [vmem:[#allocation2 + $0x208] sm:$0xff] %v1653
  %1741 = vst [vmem:[#allocation2 + $0x210] sm:$0xff] %v1654
  %1742 = vst [vmem:[#allocation2 + $0x218] sm:$0xff] %v1655
  %1743 = vst [vmem:[#allocation2 + $0x220] sm:$0xff] %v1656
  %1744 = vst [vmem:[#allocation2 + $0x228] sm:$0xff] %v1657
  %1745 = vst [vmem:[#allocation2 + $0x230] sm:$0xff] %v1658
  %1746 = vst [vmem:[#allocation2 + $0x238] sm:$0xff] %v1659
  %1747 = vst [vmem:[#allocation2 + $0x240] sm:$0xff] %v1660
  %1748 = vst [vmem:[#allocation2 + $0x248] sm:$0xff] %v1661
  %1749 = vst [vmem:[#allocation2 + $0x250] sm:$0xff] %v1662
  %1750 = vst [vmem:[#allocation2 + $0x258] sm:$0xff] %v1663
  %1751 = vst [vmem:[#allocation2 + $0x260] sm:$0xff] %v1664
  %1752 = vst [vmem:[#allocation2 + $0x268] sm:$0xff] %v1665
  %1753 = vst [vmem:[#allocation2 + $0x270] sm:$0xff] %v1666
  %1754 = vst [vmem:[#allocation2 + $0x278] sm:$0xff] %v1667
  %1755 = vst [vmem:[#allocation2 + $0x280] sm:$0xff] %v1668
  %1756 = vst [vmem:[#allocation2 + $0x288] sm:$0xff] %v1669
  %1757 = vst [vmem:[#allocation2 + $0x290] sm:$0xff] %v1670
  %1758 = vst [vmem:[#allocation2 + $0x298] sm:$0xff] %v1671
  %v1759 = vld [vmem:[#allocation2 + $0x5] sm:$0xff]
  %v1760 = vld [vmem:[#allocation2 + $0xd] sm:$0xff]
  %v1761 = vld [vmem:[#allocation2 + $0x15] sm:$0xff]
  %v1762 = vld [vmem:[#allocation2 + $0x1d] sm:$0xff]
  %v1763 = vld [vmem:[#allocation2 + $0x25] sm:$0xff]
  %v1764 = vld [vmem:[#allocation2 + $0x2d] sm:$0xff]
  %v1765 = vld [vmem:[#allocation2 + $0x35] sm:$0xff]
  %v1766 = vld [vmem:[#allocation2 + $0x3d] sm:$0xff]
  %v1767 = vld [vmem:[#allocation2 + $0x45] sm:$0xff]
  %v1768 = vld [vmem:[#allocation2 + $0x4d] sm:$0xff]
  %v1769 = vld [vmem:[#allocation2 + $0x55] sm:$0xff]
  %v1770 = vld [vmem:[#allocation2 + $0x5d] sm:$0xff]
  %v1771 = vld [vmem:[#allocation2 + $0x65] sm:$0xff]
  %v1772 = vld [vmem:[#allocation2 + $0x6d] sm:$0xff]
  %v1773 = vld [vmem:[#allocation2 + $0x75] sm:$0xff]
  %v1774 = vld [vmem:[#allocation2 + $0x7d] sm:$0xff]
  %v1775 = vld [vmem:[#allocation2 + $0x85] sm:$0xff]
  %v1776 = vld [vmem:[#allocation2 + $0x8d] sm:$0xff]
  %v1777 = vld [vmem:[#allocation2 + $0x95] sm:$0xff]
  %v1778 = vld [vmem:[#allocation2 + $0x9d] sm:$0xff]
  %v1779 = vld [vmem:[#allocation2 + $0xa5] sm:$0xff]
  %v1780 = vld [vmem:[#allocation2 + $0xad] sm:$0xff]
  %v1781 = vld [vmem:[#allocation2 + $0xb5] sm:$0xff]
  %v1782 = vld [vmem:[#allocation2 + $0xbd] sm:$0xff]
  %v1783 = vld [vmem:[#allocation2 + $0xc5] sm:$0xff]
  %v1784 = vld [vmem:[#allocation2 + $0xcd] sm:$0xff]
  %v1785 = vld [vmem:[#allocation2 + $0xd5] sm:$0xff]
  %v1786 = vld [vmem:[#allocation2 + $0xdd] sm:$0xff]
  %v1787 = vld [vmem:[#allocation2 + $0xe5] sm:$0xff]
  %v1788 = vld [vmem:[#allocation2 + $0xed] sm:$0xff]
  %v1789 = vld [vmem:[#allocation2 + $0xf5] sm:$0xff]
  %v1790 = vld [vmem:[#allocation2 + $0xfd] sm:$0xff]
  %v1791 = vld [vmem:[#allocation2 + $0x105] sm:$0xff]
  %v1792 = vld [vmem:[#allocation2 + $0x10d] sm:$0xff]
  %v1793 = vld [vmem:[#allocation2 + $0x115] sm:$0xff]
  %v1794 = vld [vmem:[#allocation2 + $0x11d] sm:$0xff]
  %v1795 = vld [vmem:[#allocation2 + $0x125] sm:$0xff]
  %v1796 = vld [vmem:[#allocation2 + $0x12d] sm:$0xff]
  %v1797 = vld [vmem:[#allocation2 + $0x135] sm:$0xff]
  %v1798 = vld [vmem:[#allocation2 + $0x13d] sm:$0xff]
  %v1799 = vld [vmem:[#allocation2 + $0x145] sm:$0xff]
  %v1800 = vld [vmem:[#allocation2 + $0x14d] sm:$0xff]
  %v1801 = vld [vmem:[#allocation2 + $0x155] sm:$0xff]
  %v1802 = vld [vmem:[#allocation2 + $0x15d] sm:$0xff]
  %v1803 = vld [vmem:[#allocation2 + $0x165] sm:$0xff]
  %v1804 = vld [vmem:[#allocation2 + $0x16d] sm:$0xff]
  %v1805 = vld [vmem:[#allocation2 + $0x175] sm:$0xff]
  %v1806 = vld [vmem:[#allocation2 + $0x17d] sm:$0xff]
  %v1807 = vld [vmem:[#allocation2 + $0x185] sm:$0xff]
  %v1808 = vld [vmem:[#allocation2 + $0x18d] sm:$0xff]
  %v1809 = vld [vmem:[#allocation2 + $0x195] sm:$0xff]
  %v1810 = vld [vmem:[#allocation2 + $0x19d] sm:$0xff]
  %v1811 = vld [vmem:[#allocation2 + $0x1a5] sm:$0xff]
  %v1812 = vld [vmem:[#allocation2 + $0x1ad] sm:$0xff]
  %v1813 = vld [vmem:[#allocation2 + $0x1b5] sm:$0xff]
  %v1814 = vld [vmem:[#allocation2 + $0x1bd] sm:$0xff]
  %v1815 = vld [vmem:[#allocation2 + $0x1c5] sm:$0xff]
  %v1816 = vld [vmem:[#allocation2 + $0x1cd] sm:$0xff]
  %v1817 = vld [vmem:[#allocation2 + $0x1d5] sm:$0xff]
  %v1818 = vld [vmem:[#allocation2 + $0x1dd] sm:$0xff]
  %v1819 = vld [vmem:[#allocation2 + $0x1e5] sm:$0xff]
  %v1820 = vld [vmem:[#allocation2 + $0x1ed] sm:$0xff]
  %v1821 = vld [vmem:[#allocation2 + $0x1f5] sm:$0xff]
  %v1822 = vld [vmem:[#allocation2 + $0x1fd] sm:$0xff]
  %v1823 = vld [vmem:[#allocation2 + $0x205] sm:$0xff]
  %v1824 = vld [vmem:[#allocation2 + $0x20d] sm:$0xff]
  %v1825 = vld [vmem:[#allocation2 + $0x215] sm:$0xff]
  %v1826 = vld [vmem:[#allocation2 + $0x21d] sm:$0xff]
  %v1827 = vld [vmem:[#allocation2 + $0x225] sm:$0xff]
  %v1828 = vld [vmem:[#allocation2 + $0x22d] sm:$0xff]
  %v1829 = vld [vmem:[#allocation2 + $0x235] sm:$0xff]
  %v1830 = vld [vmem:[#allocation2 + $0x23d] sm:$0xff]
  %v1831 = vld [vmem:[#allocation2 + $0x245] sm:$0xff]
  %v1832 = vld [vmem:[#allocation2 + $0x24d] sm:$0xff]
  %v1833 = vld [vmem:[#allocation2 + $0x255] sm:$0xff]
  %v1834 = vld [vmem:[#allocation2 + $0x25d] sm:$0xff]
  %v1835 = vld [vmem:[#allocation2 + $0x265] sm:$0xff]
  %v1836 = vld [vmem:[#allocation2 + $0x26d] sm:$0xff]
  %v1837 = vld [vmem:[#allocation2 + $0x275] sm:$0xff]
  %v1838 = vld [vmem:[#allocation2 + $0x27d] sm:$0xff]
  %v1839 = vld [vmem:[#allocation2 + $0x285] sm:$0xff]
  %v1840 = vld [vmem:[%s2] sm:$0xff]
  %v1841 = vld [vmem:[%s2 + $0x8] sm:$0xff]
  %v1842 = vld [vmem:[%s2 + $0x10] sm:$0xff]
  %v1843 = vld [vmem:[%s2 + $0x18] sm:$0xff]
  %v1844 = vld [vmem:[%s2 + $0x20] sm:$0xff]
  %v1845 = vld [vmem:[%s2 + $0x28] sm:$0xff]
  %v1846 = vld [vmem:[%s2 + $0x30] sm:$0xff]
  %v1847 = vld [vmem:[%s2 + $0x38] sm:$0xff]
  %v1848 = vld [vmem:[%s2 + $0x40] sm:$0xff]
  %v1849 = vld [vmem:[%s2 + $0x48] sm:$0xff]
  %v1850 = vld [vmem:[%s2 + $0x50] sm:$0xff]
  %v1851 = vld [vmem:[%s2 + $0x58] sm:$0xff]
  %v1852 = vld [vmem:[%s2 + $0x60] sm:$0xff]
  %v1853 = vld [vmem:[%s2 + $0x68] sm:$0xff]
  %v1854 = vld [vmem:[%s2 + $0x70] sm:$0xff]
  %v1855 = vld [vmem:[%s2 + $0x78] sm:$0xff]
  %v1856 = vld [vmem:[#allocation2 + $0x6] sm:$0xff]
  %v1857 = vld [vmem:[#allocation2 + $0xe] sm:$0xff]
  %v1858 = vld [vmem:[#allocation2 + $0x16] sm:$0xff]
  %v1859 = vld [vmem:[#allocation2 + $0x1e] sm:$0xff]
  %v1860 = vld [vmem:[#allocation2 + $0x26] sm:$0xff]
  %v1861 = vld [vmem:[#allocation2 + $0x2e] sm:$0xff]
  %v1862 = vld [vmem:[#allocation2 + $0x36] sm:$0xff]
  %v1863 = vld [vmem:[#allocation2 + $0x3e] sm:$0xff]
  %v1864 = vld [vmem:[#allocation2 + $0x46] sm:$0xff]
  %v1865 = vld [vmem:[#allocation2 + $0x4e] sm:$0xff]
  %v1866 = vld [vmem:[#allocation2 + $0x56] sm:$0xff]
  %v1867 = vld [vmem:[#allocation2 + $0x5e] sm:$0xff]
  %v1868 = vld [vmem:[#allocation2 + $0x66] sm:$0xff]
  %v1869 = vld [vmem:[#allocation2 + $0x6e] sm:$0xff]
  %v1870 = vld [vmem:[#allocation2 + $0x76] sm:$0xff]
  %v1871 = vld [vmem:[#allocation2 + $0x7e] sm:$0xff]
  %v1872 = vld [vmem:[#allocation2 + $0x86] sm:$0xff]
  %v1873 = vld [vmem:[#allocation2 + $0x8e] sm:$0xff]
  %v1874 = vld [vmem:[#allocation2 + $0x96] sm:$0xff]
  %v1875 = vld [vmem:[#allocation2 + $0x9e] sm:$0xff]
  %v1876 = vld [vmem:[#allocation2 + $0xa6] sm:$0xff]
  %v1877 = vld [vmem:[#allocation2 + $0xae] sm:$0xff]
  %v1878 = vld [vmem:[#allocation2 + $0xb6] sm:$0xff]
  %v1879 = vld [vmem:[#allocation2 + $0xbe] sm:$0xff]
  %v1880 = vld [vmem:[#allocation2 + $0xc6] sm:$0xff]
  %v1881 = vld [vmem:[#allocation2 + $0xce] sm:$0xff]
  %v1882 = vld [vmem:[#allocation2 + $0xd6] sm:$0xff]
  %v1883 = vld [vmem:[#allocation2 + $0xde] sm:$0xff]
  %v1884 = vld [vmem:[#allocation2 + $0xe6] sm:$0xff]
  %v1885 = vld [vmem:[#allocation2 + $0xee] sm:$0xff]
  %v1886 = vld [vmem:[#allocation2 + $0xf6] sm:$0xff]
  %v1887 = vld [vmem:[#allocation2 + $0xfe] sm:$0xff]
  %v1888 = vld [vmem:[#allocation2 + $0x106] sm:$0xff]
  %v1889 = vld [vmem:[#allocation2 + $0x10e] sm:$0xff]
  %v1890 = vld [vmem:[#allocation2 + $0x116] sm:$0xff]
  %v1891 = vld [vmem:[#allocation2 + $0x11e] sm:$0xff]
  %v1892 = vld [vmem:[#allocation2 + $0x126] sm:$0xff]
  %v1893 = vld [vmem:[#allocation2 + $0x12e] sm:$0xff]
  %v1894 = vld [vmem:[#allocation2 + $0x136] sm:$0xff]
  %v1895 = vld [vmem:[#allocation2 + $0x13e] sm:$0xff]
  %v1896 = vld [vmem:[#allocation2 + $0x146] sm:$0xff]
  %v1897 = vld [vmem:[#allocation2 + $0x14e] sm:$0xff]
  %v1898 = vld [vmem:[#allocation2 + $0x156] sm:$0xff]
  %v1899 = vld [vmem:[#allocation2 + $0x15e] sm:$0xff]
  %v1900 = vld [vmem:[#allocation2 + $0x166] sm:$0xff]
  %v1901 = vld [vmem:[#allocation2 + $0x16e] sm:$0xff]
  %v1902 = vld [vmem:[#allocation2 + $0x176] sm:$0xff]
  %v1903 = vld [vmem:[#allocation2 + $0x17e] sm:$0xff]
  %v1904 = vld [vmem:[#allocation2 + $0x186] sm:$0xff]
  %v1905 = vld [vmem:[#allocation2 + $0x18e] sm:$0xff]
  %v1906 = vld [vmem:[#allocation2 + $0x196] sm:$0xff]
  %v1907 = vld [vmem:[#allocation2 + $0x19e] sm:$0xff]
  %v1908 = vld [vmem:[#allocation2 + $0x1a6] sm:$0xff]
  %v1909 = vld [vmem:[#allocation2 + $0x1ae] sm:$0xff]
  %v1910 = vld [vmem:[#allocation2 + $0x1b6] sm:$0xff]
  %v1911 = vld [vmem:[#allocation2 + $0x1be] sm:$0xff]
  %v1912 = vld [vmem:[#allocation2 + $0x1c6] sm:$0xff]
  %v1913 = vld [vmem:[#allocation2 + $0x1ce] sm:$0xff]
  %v1914 = vld [vmem:[#allocation2 + $0x1d6] sm:$0xff]
  %v1915 = vld [vmem:[#allocation2 + $0x1de] sm:$0xff]
  %v1916 = vld [vmem:[#allocation2 + $0x1e6] sm:$0xff]
  %v1917 = vld [vmem:[#allocation2 + $0x1ee] sm:$0xff]
  %v1918 = vld [vmem:[#allocation2 + $0x1f6] sm:$0xff]
  %v1919 = vld [vmem:[#allocation2 + $0x1fe] sm:$0xff]
  %v1920 = vld [vmem:[#allocation2 + $0x206] sm:$0xff]
  %v1921 = vld [vmem:[#allocation2 + $0x20e] sm:$0xff]
  %v1922 = vld [vmem:[#allocation2 + $0x216] sm:$0xff]
  %v1923 = vld [vmem:[#allocation2 + $0x21e] sm:$0xff]
  %v1924 = vld [vmem:[#allocation2 + $0x226] sm:$0xff]
  %v1925 = vld [vmem:[#allocation2 + $0x22e] sm:$0xff]
  %v1926 = vld [vmem:[#allocation2 + $0x236] sm:$0xff]
  %v1927 = vld [vmem:[#allocation2 + $0x23e] sm:$0xff]
  %v1928 = vld [vmem:[#allocation2 + $0x246] sm:$0xff]
  %v1929 = vld [vmem:[#allocation2 + $0x24e] sm:$0xff]
  %v1930 = vld [vmem:[#allocation2 + $0x256] sm:$0xff]
  %v1931 = vld [vmem:[#allocation2 + $0x25e] sm:$0xff]
  %v1932 = vld [vmem:[#allocation2 + $0x266] sm:$0xff]
  %v1933 = vld [vmem:[#allocation2 + $0x26e] sm:$0xff]
  %v1934 = vld [vmem:[#allocation2 + $0x276] sm:$0xff]
  %v1935 = vld [vmem:[#allocation2 + $0x27e] sm:$0xff]
  %v1936 = vld [vmem:[#allocation2 + $0x286] sm:$0xff]
  %s1937 = scalar_lea.vmem %s2, 128
  %v1938 = vld [vmem:[%s1937] sm:$0xff]
  %v1939 = vld [vmem:[%s1937 + $0x8] sm:$0xff]
  %v1940 = vld [vmem:[%s1937 + $0x10] sm:$0xff]
  %v1941 = vld [vmem:[%s1937 + $0x18] sm:$0xff]
  %v1942 = vld [vmem:[%s1937 + $0x20] sm:$0xff]
  %v1943 = vld [vmem:[%s1937 + $0x28] sm:$0xff]
  %v1944 = vld [vmem:[%s1937 + $0x30] sm:$0xff]
  %v1945 = vld [vmem:[%s1937 + $0x38] sm:$0xff]
  %v1946 = vld [vmem:[%s1937 + $0x40] sm:$0xff]
  %v1947 = vld [vmem:[%s1937 + $0x48] sm:$0xff]
  %v1948 = vld [vmem:[%s1937 + $0x50] sm:$0xff]
  %v1949 = vld [vmem:[%s1937 + $0x58] sm:$0xff]
  %v1950 = vld [vmem:[%s1937 + $0x60] sm:$0xff]
  %v1951 = vld [vmem:[%s1937 + $0x68] sm:$0xff]
  %v1952 = vld [vmem:[%s1937 + $0x70] sm:$0xff]
  %v1953 = vld [vmem:[%s1937 + $0x78] sm:$0xff]
  %1954 = vmatprep.subr.mxu0 0.0
  %1955 = vmatpush1.msra.mxu0 %v1938
  %1956 = vmatprep.subr.mxu0 0.0
  %1957 = vmatpush1.msra.mxu0 %v1939
  %1958 = vmatprep.subr.mxu0 0.0
  %1959 = vmatpush1.msra.mxu0 %v1940
  %1960 = vmatprep.subr.mxu0 0.0
  %1961 = vmatpush1.msra.mxu0 %v1941
  %1962 = vmatprep.subr.mxu0 0.0
  %1963 = vmatpush1.msra.mxu0 %v1942
  %1964 = vmatprep.subr.mxu0 0.0
  %1965 = vmatpush1.msra.mxu0 %v1943
  %1966 = vmatprep.subr.mxu0 0.0
  %1967 = vmatpush1.msra.mxu0 %v1944
  %1968 = vmatprep.subr.mxu0 0.0
  %1969 = vmatpush1.msra.mxu0 %v1945
  %1970 = vmatprep.subr.mxu0 0.0
  %1971 = vmatpush1.msra.mxu0 %v1946
  %1972 = vmatprep.subr.mxu0 0.0
  %1973 = vmatpush1.msra.mxu0 %v1947
  %1974 = vmatprep.subr.mxu0 0.0
  %1975 = vmatpush1.msra.mxu0 %v1948
  %1976 = vmatprep.subr.mxu0 0.0
  %1977 = vmatpush1.msra.mxu0 %v1949
  %1978 = vmatprep.subr.mxu0 0.0
  %1979 = vmatpush1.msra.mxu0 %v1950
  %1980 = vmatprep.subr.mxu0 0.0
  %1981 = vmatpush1.msra.mxu0 %v1951
  %1982 = vmatprep.subr.mxu0 0.0
  %1983 = vmatpush1.msra.mxu0 %v1952
  %1984 = vmatprep.subr.mxu0 0.0
  %1985 = vmatpush1.msra.mxu0 %v1953
  %1986 = vmatprep.subr.mxu0 0.0
  %1987 = vmatpush1.msra.mxu0 0.0
  %1988 = vmatprep.subr.mxu0 0.0
  %1989 = vmatpush1.msra.mxu0 0.0
  %1990 = vmatprep.subr.mxu0 0.0
  %1991 = vmatpush1.msra.mxu0 0.0
  %1992 = vmatprep.subr.mxu0 0.0
  %1993 = vmatpush1.msra.mxu0 0.0
  %1994 = vmatprep.subr.mxu0 0.0
  %1995 = vmatpush1.msra.mxu0 0.0
  %1996 = vmatprep.subr.mxu0 0.0
  %1997 = vmatpush1.msra.mxu0 0.0
  %1998 = vmatprep.subr.mxu0 0.0
  %1999 = vmatpush1.msra.mxu0 0.0
  %2000 = vmatprep.subr.mxu0 0.0
  %2001 = vmatpush1.msra.mxu0 0.0
  %2002 = vmatprep.subr.mxu0 0.0
  %2003 = vmatpush1.msra.mxu0 0.0
  %2004 = vmatprep.subr.mxu0 0.0
  %2005 = vmatpush1.msra.mxu0 0.0
  %2006 = vmatprep.subr.mxu0 0.0
  %2007 = vmatpush1.msra.mxu0 0.0
  %2008 = vmatprep.subr.mxu0 0.0
  %2009 = vmatpush1.msra.mxu0 0.0
  %2010 = vmatprep.subr.mxu0 0.0
  %2011 = vmatpush1.msra.mxu0 0.0
  %2012 = vmatprep.subr.mxu0 0.0
  %2013 = vmatpush1.msra.mxu0 0.0
  %2014 = vmatprep.subr.mxu0 0.0
  %2015 = vmatpush1.msra.mxu0 0.0
  %2016 = vmatprep.subr.mxu0 0.0
  %2017 = vmatpush1.msra.mxu0 0.0
  %2018 = vmatprep.mubr.f32.mxu0 0.0
  %2019 = vmatmul.mubr.f32.gmra.mrb[0].mxu0 %v1856
  %v2020 = vpop.f32.mrb[0].mxu0
  %v2021 = vadd.f32 0.0, %v2020
  %v2022 = vpop.f32.mrb[0].mxu0
  %2023 = vmatprep.mubr.f32.mxu0 0.0
  %2024 = vmatmul.mubr.f32.gmra.mrb[0].mxu0 %v1857
  %v2025 = vpop.f32.mrb[0].mxu0
  %v2026 = vadd.f32 0.0, %v2025
  %v2027 = vpop.f32.mrb[0].mxu0
  %2028 = vmatprep.mubr.f32.mxu0 0.0
  %2029 = vmatmul.mubr.f32.gmra.mrb[0].mxu0 %v1858
  %v2030 = vpop.f32.mrb[0].mxu0
  %v2031 = vadd.f32 0.0, %v2030
  %v2032 = vpop.f32.mrb[0].mxu0
  %2033 = vmatprep.mubr.f32.mxu0 0.0
  %2034 = vmatmul.mubr.f32.gmra.mrb[0].mxu0 %v1859
  %v2035 = vpop.f32.mrb[0].mxu0
  %v2036 = vadd.f32 0.0, %v2035
  %v2037 = vpop.f32.mrb[0].mxu0
  %2038 = vmatprep.mubr.f32.mxu0 0.0
  %2039 = vmatmul.mubr.f32.gmra.mrb[0].mxu0 %v1860
  %v2040 = vpop.f32.mrb[0].mxu0
  %v2041 = vadd.f32 0.0, %v2040
  %v2042 = vpop.f32.mrb[0].mxu0
  %2043 = vmatprep.mubr.f32.mxu0 0.0
  %2044 = vmatmul.mubr.f32.gmra.mrb[0].mxu0 %v1861
  %v2045 = vpop.f32.mrb[0].mxu0
  %v2046 = vadd.f32 0.0, %v2045
  %v2047 = vpop.f32.mrb[0].mxu0
  %2048 = vmatprep.mubr.f32.mxu0 0.0
  %2049 = vmatmul.mubr.f32.gmra.mrb[0].mxu0 %v1862
  %v2050 = vpop.f32.mrb[0].mxu0
  %v2051 = vadd.f32 0.0, %v2050
  %v2052 = vpop.f32.mrb[0].mxu0
  %2053 = vmatprep.mubr.f32.mxu0 0.0
  %2054 = vmatmul.mubr.f32.gmra.mrb[0].mxu0 %v1863
  %v2055 = vpop.f32.mrb[0].mxu0
  %v2056 = vadd.f32 0.0, %v2055
  %v2057 = vpop.f32.mrb[0].mxu0
  %2058 = vmatprep.mubr.f32.mxu0 0.0
  %2059 = vmatmul.mubr.f32.gmra.mrb[0].mxu0 %v1864
  %v2060 = vpop.f32.mrb[0].mxu0
  %v2061 = vadd.f32 0.0, %v2060
  %v2062 = vpop.f32.mrb[0].mxu0
  %2063 = vmatprep.mubr.f32.mxu0 0.0
  %2064 = vmatmul.mubr.f32.gmra.mrb[0].mxu0 %v1865
  %v2065 = vpop.f32.mrb[0].mxu0
  %v2066 = vadd.f32 0.0, %v2065
  %v2067 = vpop.f32.mrb[0].mxu0
  %2068 = vmatprep.mubr.f32.mxu0 0.0
  %2069 = vmatmul.mubr.f32.gmra.mrb[0].mxu0 %v1866
  %v2070 = vpop.f32.mrb[0].mxu0
  %v2071 = vadd.f32 0.0, %v2070
  %v2072 = vpop.f32.mrb[0].mxu0
  %2073 = vmatprep.mubr.f32.mxu0 0.0
  %2074 = vmatmul.mubr.f32.gmra.mrb[0].mxu0 %v1867
  %v2075 = vpop.f32.mrb[0].mxu0
  %v2076 = vadd.f32 0.0, %v2075
  %v2077 = vpop.f32.mrb[0].mxu0
  %2078 = vmatprep.mubr.f32.mxu0 0.0
  %2079 = vmatmul.mubr.f32.gmra.mrb[0].mxu0 %v1868
  %v2080 = vpop.f32.mrb[0].mxu0
  %v2081 = vadd.f32 0.0, %v2080
  %v2082 = vpop.f32.mrb[0].mxu0
  %2083 = vmatprep.mubr.f32.mxu0 0.0
  %2084 = vmatmul.mubr.f32.gmra.mrb[0].mxu0 %v1869
  %v2085 = vpop.f32.mrb[0].mxu0
  %v2086 = vadd.f32 0.0, %v2085
  %v2087 = vpop.f32.mrb[0].mxu0
  %2088 = vmatprep.mubr.f32.mxu0 0.0
  %2089 = vmatmul.mubr.f32.gmra.mrb[0].mxu0 %v1870
  %v2090 = vpop.f32.mrb[0].mxu0
  %v2091 = vadd.f32 0.0, %v2090
  %v2092 = vpop.f32.mrb[0].mxu0
  %2093 = vmatprep.mubr.f32.mxu0 0.0
  %2094 = vmatmul.mubr.f32.gmra.mrb[0].mxu0 %v1871
  %v2095 = vpop.f32.mrb[0].mxu0
  %v2096 = vadd.f32 0.0, %v2095
  %v2097 = vpop.f32.mrb[0].mxu0
  %2098 = vmatprep.mubr.f32.mxu0 0.0
  %2099 = vmatmul.mubr.f32.gmra.mrb[0].mxu0 %v1872
  %v2100 = vpop.f32.mrb[0].mxu0
  %v2101 = vadd.f32 0.0, %v2100
  %v2102 = vpop.f32.mrb[0].mxu0
  %2103 = vmatprep.mubr.f32.mxu0 0.0
  %2104 = vmatmul.mubr.f32.gmra.mrb[0].mxu0 %v1873
  %v2105 = vpop.f32.mrb[0].mxu0
  %v2106 = vadd.f32 0.0, %v2105
  %v2107 = vpop.f32.mrb[0].mxu0
  %2108 = vmatprep.mubr.f32.mxu0 0.0
  %2109 = vmatmul.mubr.f32.gmra.mrb[0].mxu0 %v1874
  %v2110 = vpop.f32.mrb[0].mxu0
  %v2111 = vadd.f32 0.0, %v2110
  %v2112 = vpop.f32.mrb[0].mxu0
  %2113 = vmatprep.mubr.f32.mxu0 0.0
  %2114 = vmatmul.mubr.f32.gmra.mrb[0].mxu0 %v1875
  %v2115 = vpop.f32.mrb[0].mxu0
  %v2116 = vadd.f32 0.0, %v2115
  %v2117 = vpop.f32.mrb[0].mxu0
  %2118 = vmatprep.mubr.f32.mxu0 0.0
  %2119 = vmatmul.mubr.f32.gmra.mrb[0].mxu0 %v1876
  %v2120 = vpop.f32.mrb[0].mxu0
  %v2121 = vadd.f32 0.0, %v2120
  %v2122 = vpop.f32.mrb[0].mxu0
  %2123 = vmatprep.mubr.f32.mxu0 0.0
  %2124 = vmatmul.mubr.f32.gmra.mrb[0].mxu0 %v1877
  %v2125 = vpop.f32.mrb[0].mxu0
  %v2126 = vadd.f32 0.0, %v2125
  %v2127 = vpop.f32.mrb[0].mxu0
  %2128 = vmatprep.mubr.f32.mxu0 0.0
  %2129 = vmatmul.mubr.f32.gmra.mrb[0].mxu0 %v1878
  %v2130 = vpop.f32.mrb[0].mxu0
  %v2131 = vadd.f32 0.0, %v2130
  %v2132 = vpop.f32.mrb[0].mxu0
  %2133 = vmatprep.mubr.f32.mxu0 0.0
  %2134 = vmatmul.mubr.f32.gmra.mrb[0].mxu0 %v1879
  %v2135 = vpop.f32.mrb[0].mxu0
  %v2136 = vadd.f32 0.0, %v2135
  %v2137 = vpop.f32.mrb[0].mxu0
  %2138 = vmatprep.mubr.f32.mxu0 0.0
  %2139 = vmatmul.mubr.f32.gmra.mrb[0].mxu0 %v1880
  %v2140 = vpop.f32.mrb[0].mxu0
  %v2141 = vadd.f32 0.0, %v2140
  %v2142 = vpop.f32.mrb[0].mxu0
  %2143 = vmatprep.mubr.f32.mxu0 0.0
  %2144 = vmatmul.mubr.f32.gmra.mrb[0].mxu0 %v1881
  %v2145 = vpop.f32.mrb[0].mxu0
  %v2146 = vadd.f32 0.0, %v2145
  %v2147 = vpop.f32.mrb[0].mxu0
  %2148 = vmatprep.mubr.f32.mxu0 0.0
  %2149 = vmatmul.mubr.f32.gmra.mrb[0].mxu0 %v1882
  %v2150 = vpop.f32.mrb[0].mxu0
  %v2151 = vadd.f32 0.0, %v2150
  %v2152 = vpop.f32.mrb[0].mxu0
  %2153 = vmatprep.mubr.f32.mxu0 0.0
  %2154 = vmatmul.mubr.f32.gmra.mrb[0].mxu0 %v1883
  %v2155 = vpop.f32.mrb[0].mxu0
  %v2156 = vadd.f32 0.0, %v2155
  %v2157 = vpop.f32.mrb[0].mxu0
  %2158 = vmatprep.mubr.f32.mxu0 0.0
  %2159 = vmatmul.mubr.f32.gmra.mrb[0].mxu0 %v1884
  %v2160 = vpop.f32.mrb[0].mxu0
  %v2161 = vadd.f32 0.0, %v2160
  %v2162 = vpop.f32.mrb[0].mxu0
  %2163 = vmatprep.mubr.f32.mxu0 0.0
  %2164 = vmatmul.mubr.f32.gmra.mrb[0].mxu0 %v1885
  %v2165 = vpop.f32.mrb[0].mxu0
  %v2166 = vadd.f32 0.0, %v2165
  %v2167 = vpop.f32.mrb[0].mxu0
  %2168 = vmatprep.mubr.f32.mxu0 0.0
  %2169 = vmatmul.mubr.f32.gmra.mrb[0].mxu0 %v1886
  %v2170 = vpop.f32.mrb[0].mxu0
  %v2171 = vadd.f32 0.0, %v2170
  %v2172 = vpop.f32.mrb[0].mxu0
  %2173 = vmatprep.mubr.f32.mxu0 0.0
  %2174 = vmatmul.mubr.f32.gmra.mrb[0].mxu0 %v1887
  %v2175 = vpop.f32.mrb[0].mxu0
  %v2176 = vadd.f32 0.0, %v2175
  %v2177 = vpop.f32.mrb[0].mxu0
  %2178 = vmatprep.mubr.f32.mxu0 0.0
  %2179 = vmatmul.mubr.f32.gmra.mrb[0].mxu0 %v1888
  %v2180 = vpop.f32.mrb[0].mxu0
  %v2181 = vadd.f32 0.0, %v2180
  %v2182 = vpop.f32.mrb[0].mxu0
  %2183 = vmatprep.mubr.f32.mxu0 0.0
  %2184 = vmatmul.mubr.f32.gmra.mrb[0].mxu0 %v1889
  %v2185 = vpop.f32.mrb[0].mxu0
  %v2186 = vadd.f32 0.0, %v2185
  %v2187 = vpop.f32.mrb[0].mxu0
  %2188 = vmatprep.mubr.f32.mxu0 0.0
  %2189 = vmatmul.mubr.f32.gmra.mrb[0].mxu0 %v1890
  %v2190 = vpop.f32.mrb[0].mxu0
  %v2191 = vadd.f32 0.0, %v2190
  %v2192 = vpop.f32.mrb[0].mxu0
  %2193 = vmatprep.mubr.f32.mxu0 0.0
  %2194 = vmatmul.mubr.f32.gmra.mrb[0].mxu0 %v1891
  %v2195 = vpop.f32.mrb[0].mxu0
  %v2196 = vadd.f32 0.0, %v2195
  %v2197 = vpop.f32.mrb[0].mxu0
  %2198 = vmatprep.mubr.f32.mxu0 0.0
  %2199 = vmatmul.mubr.f32.gmra.mrb[0].mxu0 %v1892
  %v2200 = vpop.f32.mrb[0].mxu0
  %v2201 = vadd.f32 0.0, %v2200
  %v2202 = vpop.f32.mrb[0].mxu0
  %2203 = vmatprep.mubr.f32.mxu0 0.0
  %2204 = vmatmul.mubr.f32.gmra.mrb[0].mxu0 %v1893
  %v2205 = vpop.f32.mrb[0].mxu0
  %v2206 = vadd.f32 0.0, %v2205
  %v2207 = vpop.f32.mrb[0].mxu0
  %2208 = vmatprep.mubr.f32.mxu0 0.0
  %2209 = vmatmul.mubr.f32.gmra.mrb[0].mxu0 %v1894
  %v2210 = vpop.f32.mrb[0].mxu0
  %v2211 = vadd.f32 0.0, %v2210
  %v2212 = vpop.f32.mrb[0].mxu0
  %2213 = vmatprep.mubr.f32.mxu0 0.0
  %2214 = vmatmul.mubr.f32.gmra.mrb[0].mxu0 %v1895
  %v2215 = vpop.f32.mrb[0].mxu0
  %v2216 = vadd.f32 0.0, %v2215
  %v2217 = vpop.f32.mrb[0].mxu0
  %2218 = vmatprep.mubr.f32.mxu0 0.0
  %2219 = vmatmul.mubr.f32.gmra.mrb[0].mxu0 %v1896
  %v2220 = vpop.f32.mrb[0].mxu0
  %v2221 = vadd.f32 0.0, %v2220
  %v2222 = vpop.f32.mrb[0].mxu0
  %2223 = vmatprep.mubr.f32.mxu0 0.0
  %2224 = vmatmul.mubr.f32.gmra.mrb[0].mxu0 %v1897
  %v2225 = vpop.f32.mrb[0].mxu0
  %v2226 = vadd.f32 0.0, %v2225
  %v2227 = vpop.f32.mrb[0].mxu0
  %2228 = vmatprep.mubr.f32.mxu0 0.0
  %2229 = vmatmul.mubr.f32.gmra.mrb[0].mxu0 %v1898
  %v2230 = vpop.f32.mrb[0].mxu0
  %v2231 = vadd.f32 0.0, %v2230
  %v2232 = vpop.f32.mrb[0].mxu0
  %2233 = vmatprep.mubr.f32.mxu0 0.0
  %2234 = vmatmul.mubr.f32.gmra.mrb[0].mxu0 %v1899
  %v2235 = vpop.f32.mrb[0].mxu0
  %v2236 = vadd.f32 0.0, %v2235
  %v2237 = vpop.f32.mrb[0].mxu0
  %2238 = vmatprep.mubr.f32.mxu0 0.0
  %2239 = vmatmul.mubr.f32.gmra.mrb[0].mxu0 %v1900
  %v2240 = vpop.f32.mrb[0].mxu0
  %v2241 = vadd.f32 0.0, %v2240
  %v2242 = vpop.f32.mrb[0].mxu0
  %2243 = vmatprep.mubr.f32.mxu0 0.0
  %2244 = vmatmul.mubr.f32.gmra.mrb[0].mxu0 %v1901
  %v2245 = vpop.f32.mrb[0].mxu0
  %v2246 = vadd.f32 0.0, %v2245
  %v2247 = vpop.f32.mrb[0].mxu0
  %2248 = vmatprep.mubr.f32.mxu0 0.0
  %2249 = vmatmul.mubr.f32.gmra.mrb[0].mxu0 %v1902
  %v2250 = vpop.f32.mrb[0].mxu0
  %v2251 = vadd.f32 0.0, %v2250
  %v2252 = vpop.f32.mrb[0].mxu0
  %2253 = vmatprep.mubr.f32.mxu0 0.0
  %2254 = vmatmul.mubr.f32.gmra.mrb[0].mxu0 %v1903
  %v2255 = vpop.f32.mrb[0].mxu0
  %v2256 = vadd.f32 0.0, %v2255
  %v2257 = vpop.f32.mrb[0].mxu0
  %2258 = vmatprep.mubr.f32.mxu0 0.0
  %2259 = vmatmul.mubr.f32.gmra.mrb[0].mxu0 %v1904
  %v2260 = vpop.f32.mrb[0].mxu0
  %v2261 = vadd.f32 0.0, %v2260
  %v2262 = vpop.f32.mrb[0].mxu0
  %2263 = vmatprep.mubr.f32.mxu0 0.0
  %2264 = vmatmul.mubr.f32.gmra.mrb[0].mxu0 %v1905
  %v2265 = vpop.f32.mrb[0].mxu0
  %v2266 = vadd.f32 0.0, %v2265
  %v2267 = vpop.f32.mrb[0].mxu0
  %2268 = vmatprep.mubr.f32.mxu0 0.0
  %2269 = vmatmul.mubr.f32.gmra.mrb[0].mxu0 %v1906
  %v2270 = vpop.f32.mrb[0].mxu0
  %v2271 = vadd.f32 0.0, %v2270
  %v2272 = vpop.f32.mrb[0].mxu0
  %2273 = vmatprep.mubr.f32.mxu0 0.0
  %2274 = vmatmul.mubr.f32.gmra.mrb[0].mxu0 %v1907
  %v2275 = vpop.f32.mrb[0].mxu0
  %v2276 = vadd.f32 0.0, %v2275
  %v2277 = vpop.f32.mrb[0].mxu0
  %2278 = vmatprep.mubr.f32.mxu0 0.0
  %2279 = vmatmul.mubr.f32.gmra.mrb[0].mxu0 %v1908
  %v2280 = vpop.f32.mrb[0].mxu0
  %v2281 = vadd.f32 0.0, %v2280
  %v2282 = vpop.f32.mrb[0].mxu0
  %2283 = vmatprep.mubr.f32.mxu0 0.0
  %2284 = vmatmul.mubr.f32.gmra.mrb[0].mxu0 %v1909
  %v2285 = vpop.f32.mrb[0].mxu0
  %v2286 = vadd.f32 0.0, %v2285
  %v2287 = vpop.f32.mrb[0].mxu0
  %2288 = vmatprep.mubr.f32.mxu0 0.0
  %2289 = vmatmul.mubr.f32.gmra.mrb[0].mxu0 %v1910
  %v2290 = vpop.f32.mrb[0].mxu0
  %v2291 = vadd.f32 0.0, %v2290
  %v2292 = vpop.f32.mrb[0].mxu0
  %2293 = vmatprep.mubr.f32.mxu0 0.0
  %2294 = vmatmul.mubr.f32.gmra.mrb[0].mxu0 %v1911
  %v2295 = vpop.f32.mrb[0].mxu0
  %v2296 = vadd.f32 0.0, %v2295
  %v2297 = vpop.f32.mrb[0].mxu0
  %2298 = vmatprep.mubr.f32.mxu0 0.0
  %2299 = vmatmul.mubr.f32.gmra.mrb[0].mxu0 %v1912
  %v2300 = vpop.f32.mrb[0].mxu0
  %v2301 = vadd.f32 0.0, %v2300
  %v2302 = vpop.f32.mrb[0].mxu0
  %2303 = vmatprep.mubr.f32.mxu0 0.0
  %2304 = vmatmul.mubr.f32.gmra.mrb[0].mxu0 %v1913
  %v2305 = vpop.f32.mrb[0].mxu0
  %v2306 = vadd.f32 0.0, %v2305
  %v2307 = vpop.f32.mrb[0].mxu0
  %2308 = vmatprep.mubr.f32.mxu0 0.0
  %2309 = vmatmul.mubr.f32.gmra.mrb[0].mxu0 %v1914
  %v2310 = vpop.f32.mrb[0].mxu0
  %v2311 = vadd.f32 0.0, %v2310
  %v2312 = vpop.f32.mrb[0].mxu0
  %2313 = vmatprep.mubr.f32.mxu0 0.0
  %2314 = vmatmul.mubr.f32.gmra.mrb[0].mxu0 %v1915
  %v2315 = vpop.f32.mrb[0].mxu0
  %v2316 = vadd.f32 0.0, %v2315
  %v2317 = vpop.f32.mrb[0].mxu0
  %2318 = vmatprep.mubr.f32.mxu0 0.0
  %2319 = vmatmul.mubr.f32.gmra.mrb[0].mxu0 %v1916
  %v2320 = vpop.f32.mrb[0].mxu0
  %v2321 = vadd.f32 0.0, %v2320
  %v2322 = vpop.f32.mrb[0].mxu0
  %2323 = vmatprep.mubr.f32.mxu0 0.0
  %2324 = vmatmul.mubr.f32.gmra.mrb[0].mxu0 %v1917
  %v2325 = vpop.f32.mrb[0].mxu0
  %v2326 = vadd.f32 0.0, %v2325
  %v2327 = vpop.f32.mrb[0].mxu0
  %2328 = vmatprep.mubr.f32.mxu0 0.0
  %2329 = vmatmul.mubr.f32.gmra.mrb[0].mxu0 %v1918
  %v2330 = vpop.f32.mrb[0].mxu0
  %v2331 = vadd.f32 0.0, %v2330
  %v2332 = vpop.f32.mrb[0].mxu0
  %2333 = vmatprep.mubr.f32.mxu0 0.0
  %2334 = vmatmul.mubr.f32.gmra.mrb[0].mxu0 %v1919
  %v2335 = vpop.f32.mrb[0].mxu0
  %v2336 = vadd.f32 0.0, %v2335
  %v2337 = vpop.f32.mrb[0].mxu0
  %2338 = vmatprep.mubr.f32.mxu0 0.0
  %2339 = vmatmul.mubr.f32.gmra.mrb[0].mxu0 %v1920
  %v2340 = vpop.f32.mrb[0].mxu0
  %v2341 = vadd.f32 0.0, %v2340
  %v2342 = vpop.f32.mrb[0].mxu0
  %2343 = vmatprep.mubr.f32.mxu0 0.0
  %2344 = vmatmul.mubr.f32.gmra.mrb[0].mxu0 %v1921
  %v2345 = vpop.f32.mrb[0].mxu0
  %v2346 = vadd.f32 0.0, %v2345
  %v2347 = vpop.f32.mrb[0].mxu0
  %2348 = vmatprep.mubr.f32.mxu0 0.0
  %2349 = vmatmul.mubr.f32.gmra.mrb[0].mxu0 %v1922
  %v2350 = vpop.f32.mrb[0].mxu0
  %v2351 = vadd.f32 0.0, %v2350
  %v2352 = vpop.f32.mrb[0].mxu0
  %2353 = vmatprep.mubr.f32.mxu0 0.0
  %2354 = vmatmul.mubr.f32.gmra.mrb[0].mxu0 %v1923
  %v2355 = vpop.f32.mrb[0].mxu0
  %v2356 = vadd.f32 0.0, %v2355
  %v2357 = vpop.f32.mrb[0].mxu0
  %2358 = vmatprep.mubr.f32.mxu0 0.0
  %2359 = vmatmul.mubr.f32.gmra.mrb[0].mxu0 %v1924
  %v2360 = vpop.f32.mrb[0].mxu0
  %v2361 = vadd.f32 0.0, %v2360
  %v2362 = vpop.f32.mrb[0].mxu0
  %2363 = vmatprep.mubr.f32.mxu0 0.0
  %2364 = vmatmul.mubr.f32.gmra.mrb[0].mxu0 %v1925
  %v2365 = vpop.f32.mrb[0].mxu0
  %v2366 = vadd.f32 0.0, %v2365
  %v2367 = vpop.f32.mrb[0].mxu0
  %2368 = vmatprep.mubr.f32.mxu0 0.0
  %2369 = vmatmul.mubr.f32.gmra.mrb[0].mxu0 %v1926
  %v2370 = vpop.f32.mrb[0].mxu0
  %v2371 = vadd.f32 0.0, %v2370
  %v2372 = vpop.f32.mrb[0].mxu0
  %2373 = vmatprep.mubr.f32.mxu0 0.0
  %2374 = vmatmul.mubr.f32.gmra.mrb[0].mxu0 %v1927
  %v2375 = vpop.f32.mrb[0].mxu0
  %v2376 = vadd.f32 0.0, %v2375
  %v2377 = vpop.f32.mrb[0].mxu0
  %2378 = vmatprep.mubr.f32.mxu0 0.0
  %2379 = vmatmul.mubr.f32.gmra.mrb[0].mxu0 %v1928
  %v2380 = vpop.f32.mrb[0].mxu0
  %v2381 = vadd.f32 0.0, %v2380
  %v2382 = vpop.f32.mrb[0].mxu0
  %2383 = vmatprep.mubr.f32.mxu0 0.0
  %2384 = vmatmul.mubr.f32.gmra.mrb[0].mxu0 %v1929
  %v2385 = vpop.f32.mrb[0].mxu0
  %v2386 = vadd.f32 0.0, %v2385
  %v2387 = vpop.f32.mrb[0].mxu0
  %2388 = vmatprep.mubr.f32.mxu0 0.0
  %2389 = vmatmul.mubr.f32.gmra.mrb[0].mxu0 %v1930
  %v2390 = vpop.f32.mrb[0].mxu0
  %v2391 = vadd.f32 0.0, %v2390
  %v2392 = vpop.f32.mrb[0].mxu0
  %2393 = vmatprep.mubr.f32.mxu0 0.0
  %2394 = vmatmul.mubr.f32.gmra.mrb[0].mxu0 %v1931
  %v2395 = vpop.f32.mrb[0].mxu0
  %v2396 = vadd.f32 0.0, %v2395
  %v2397 = vpop.f32.mrb[0].mxu0
  %2398 = vmatprep.mubr.f32.mxu0 0.0
  %2399 = vmatmul.mubr.f32.gmra.mrb[0].mxu0 %v1932
  %v2400 = vpop.f32.mrb[0].mxu0
  %v2401 = vadd.f32 0.0, %v2400
  %v2402 = vpop.f32.mrb[0].mxu0
  %2403 = vmatprep.mubr.f32.mxu0 0.0
  %2404 = vmatmul.mubr.f32.gmra.mrb[0].mxu0 %v1933
  %v2405 = vpop.f32.mrb[0].mxu0
  %v2406 = vadd.f32 0.0, %v2405
  %v2407 = vpop.f32.mrb[0].mxu0
  %2408 = vmatprep.mubr.f32.mxu0 0.0
  %2409 = vmatmul.mubr.f32.gmra.mrb[0].mxu0 %v1934
  %v2410 = vpop.f32.mrb[0].mxu0
  %v2411 = vadd.f32 0.0, %v2410
  %v2412 = vpop.f32.mrb[0].mxu0
  %2413 = vmatprep.mubr.f32.mxu0 0.0
  %2414 = vmatmul.mubr.f32.gmra.mrb[0].mxu0 %v1935
  %v2415 = vpop.f32.mrb[0].mxu0
  %v2416 = vadd.f32 0.0, %v2415
  %v2417 = vpop.f32.mrb[0].mxu0
  %2418 = vmatprep.mubr.f32.mxu0 0.0
  %2419 = vmatmul.mubr.f32.gmra.mrb[0].mxu0 %v1936
  %v2420 = vpop.f32.mrb[0].mxu0
  %v2421 = vadd.f32 0.0, %v2420
  %v2422 = vpop.f32.mrb[0].mxu0
  %2423 = vdwg.mxu0
  %2424 = vmatprep.subr.mxu0 0.0
  %2425 = vmatpush1.msra.mxu0 %v1840
  %2426 = vmatprep.subr.mxu0 0.0
  %2427 = vmatpush1.msra.mxu0 %v1841
  %2428 = vmatprep.subr.mxu0 0.0
  %2429 = vmatpush1.msra.mxu0 %v1842
  %2430 = vmatprep.subr.mxu0 0.0
  %2431 = vmatpush1.msra.mxu0 %v1843
  %2432 = vmatprep.subr.mxu0 0.0
  %2433 = vmatpush1.msra.mxu0 %v1844
  %2434 = vmatprep.subr.mxu0 0.0
  %2435 = vmatpush1.msra.mxu0 %v1845
  %2436 = vmatprep.subr.mxu0 0.0
  %2437 = vmatpush1.msra.mxu0 %v1846
  %2438 = vmatprep.subr.mxu0 0.0
  %2439 = vmatpush1.msra.mxu0 %v1847
  %2440 = vmatprep.subr.mxu0 0.0
  %2441 = vmatpush1.msra.mxu0 %v1848
  %2442 = vmatprep.subr.mxu0 0.0
  %2443 = vmatpush1.msra.mxu0 %v1849
  %2444 = vmatprep.subr.mxu0 0.0
  %2445 = vmatpush1.msra.mxu0 %v1850
  %2446 = vmatprep.subr.mxu0 0.0
  %2447 = vmatpush1.msra.mxu0 %v1851
  %2448 = vmatprep.subr.mxu0 0.0
  %2449 = vmatpush1.msra.mxu0 %v1852
  %2450 = vmatprep.subr.mxu0 0.0
  %2451 = vmatpush1.msra.mxu0 %v1853
  %2452 = vmatprep.subr.mxu0 0.0
  %2453 = vmatpush1.msra.mxu0 %v1854
  %2454 = vmatprep.subr.mxu0 0.0
  %2455 = vmatpush1.msra.mxu0 %v1855
  %2456 = vmatprep.subr.mxu0 0.0
  %2457 = vmatpush1.msra.mxu0 0.0
  %2458 = vmatprep.subr.mxu0 0.0
  %2459 = vmatpush1.msra.mxu0 0.0
  %2460 = vmatprep.subr.mxu0 0.0
  %2461 = vmatpush1.msra.mxu0 0.0
  %2462 = vmatprep.subr.mxu0 0.0
  %2463 = vmatpush1.msra.mxu0 0.0
  %2464 = vmatprep.subr.mxu0 0.0
  %2465 = vmatpush1.msra.mxu0 0.0
  %2466 = vmatprep.subr.mxu0 0.0
  %2467 = vmatpush1.msra.mxu0 0.0
  %2468 = vmatprep.subr.mxu0 0.0
  %2469 = vmatpush1.msra.mxu0 0.0
  %2470 = vmatprep.subr.mxu0 0.0
  %2471 = vmatpush1.msra.mxu0 0.0
  %2472 = vmatprep.subr.mxu0 0.0
  %2473 = vmatpush1.msra.mxu0 0.0
  %2474 = vmatprep.subr.mxu0 0.0
  %2475 = vmatpush1.msra.mxu0 0.0
  %2476 = vmatprep.subr.mxu0 0.0
  %2477 = vmatpush1.msra.mxu0 0.0
  %2478 = vmatprep.subr.mxu0 0.0
  %2479 = vmatpush1.msra.mxu0 0.0
  %2480 = vmatprep.subr.mxu0 0.0
  %2481 = vmatpush1.msra.mxu0 0.0
  %2482 = vmatprep.subr.mxu0 0.0
  %2483 = vmatpush1.msra.mxu0 0.0
  %2484 = vmatprep.subr.mxu0 0.0
  %2485 = vmatpush1.msra.mxu0 0.0
  %2486 = vmatprep.subr.mxu0 0.0
  %2487 = vmatpush1.msra.mxu0 0.0
  %2488 = vmatprep.mubr.f32.mxu0 0.0
  %2489 = vmatmul.mubr.f32.gmra.mrb[0].mxu0 %v1759
  %v2490 = vpop.f32.mrb[0].mxu0
  %v2491 = vadd.f32 %v2021, %v2490
  %v2492 = vpop.f32.mrb[0].mxu0
  %2493 = vmatprep.mubr.f32.mxu0 0.0
  %2494 = vmatmul.mubr.f32.gmra.mrb[0].mxu0 %v1760
  %v2495 = vpop.f32.mrb[0].mxu0
  %v2496 = vadd.f32 %v2026, %v2495
  %v2497 = vpop.f32.mrb[0].mxu0
  %2498 = vmatprep.mubr.f32.mxu0 0.0
  %2499 = vmatmul.mubr.f32.gmra.mrb[0].mxu0 %v1761
  %v2500 = vpop.f32.mrb[0].mxu0
  %v2501 = vadd.f32 %v2031, %v2500
  %v2502 = vpop.f32.mrb[0].mxu0
  %2503 = vmatprep.mubr.f32.mxu0 0.0
  %2504 = vmatmul.mubr.f32.gmra.mrb[0].mxu0 %v1762
  %v2505 = vpop.f32.mrb[0].mxu0
  %v2506 = vadd.f32 %v2036, %v2505
  %v2507 = vpop.f32.mrb[0].mxu0
  %2508 = vmatprep.mubr.f32.mxu0 0.0
  %2509 = vmatmul.mubr.f32.gmra.mrb[0].mxu0 %v1763
  %v2510 = vpop.f32.mrb[0].mxu0
  %v2511 = vadd.f32 %v2041, %v2510
  %v2512 = vpop.f32.mrb[0].mxu0
  %2513 = vmatprep.mubr.f32.mxu0 0.0
  %2514 = vmatmul.mubr.f32.gmra.mrb[0].mxu0 %v1764
  %v2515 = vpop.f32.mrb[0].mxu0
  %v2516 = vadd.f32 %v2046, %v2515
  %v2517 = vpop.f32.mrb[0].mxu0
  %2518 = vmatprep.mubr.f32.mxu0 0.0
  %2519 = vmatmul.mubr.f32.gmra.mrb[0].mxu0 %v1765
  %v2520 = vpop.f32.mrb[0].mxu0
  %v2521 = vadd.f32 %v2051, %v2520
  %v2522 = vpop.f32.mrb[0].mxu0
  %2523 = vmatprep.mubr.f32.mxu0 0.0
  %2524 = vmatmul.mubr.f32.gmra.mrb[0].mxu0 %v1766
  %v2525 = vpop.f32.mrb[0].mxu0
  %v2526 = vadd.f32 %v2056, %v2525
  %v2527 = vpop.f32.mrb[0].mxu0
  %2528 = vmatprep.mubr.f32.mxu0 0.0
  %2529 = vmatmul.mubr.f32.gmra.mrb[0].mxu0 %v1767
  %v2530 = vpop.f32.mrb[0].mxu0
  %v2531 = vadd.f32 %v2061, %v2530
  %v2532 = vpop.f32.mrb[0].mxu0
  %2533 = vmatprep.mubr.f32.mxu0 0.0
  %2534 = vmatmul.mubr.f32.gmra.mrb[0].mxu0 %v1768
  %v2535 = vpop.f32.mrb[0].mxu0
  %v2536 = vadd.f32 %v2066, %v2535
  %v2537 = vpop.f32.mrb[0].mxu0
  %2538 = vmatprep.mubr.f32.mxu0 0.0
  %2539 = vmatmul.mubr.f32.gmra.mrb[0].mxu0 %v1769
  %v2540 = vpop.f32.mrb[0].mxu0
  %v2541 = vadd.f32 %v2071, %v2540
  %v2542 = vpop.f32.mrb[0].mxu0
  %2543 = vmatprep.mubr.f32.mxu0 0.0
  %2544 = vmatmul.mubr.f32.gmra.mrb[0].mxu0 %v1770
  %v2545 = vpop.f32.mrb[0].mxu0
  %v2546 = vadd.f32 %v2076, %v2545
  %v2547 = vpop.f32.mrb[0].mxu0
  %2548 = vmatprep.mubr.f32.mxu0 0.0
  %2549 = vmatmul.mubr.f32.gmra.mrb[0].mxu0 %v1771
  %v2550 = vpop.f32.mrb[0].mxu0
  %v2551 = vadd.f32 %v2081, %v2550
  %v2552 = vpop.f32.mrb[0].mxu0
  %2553 = vmatprep.mubr.f32.mxu0 0.0
  %2554 = vmatmul.mubr.f32.gmra.mrb[0].mxu0 %v1772
  %v2555 = vpop.f32.mrb[0].mxu0
  %v2556 = vadd.f32 %v2086, %v2555
  %v2557 = vpop.f32.mrb[0].mxu0
  %2558 = vmatprep.mubr.f32.mxu0 0.0
  %2559 = vmatmul.mubr.f32.gmra.mrb[0].mxu0 %v1773
  %v2560 = vpop.f32.mrb[0].mxu0
  %v2561 = vadd.f32 %v2091, %v2560
  %v2562 = vpop.f32.mrb[0].mxu0
  %2563 = vmatprep.mubr.f32.mxu0 0.0
  %2564 = vmatmul.mubr.f32.gmra.mrb[0].mxu0 %v1774
  %v2565 = vpop.f32.mrb[0].mxu0
  %v2566 = vadd.f32 %v2096, %v2565
  %v2567 = vpop.f32.mrb[0].mxu0
  %2568 = vmatprep.mubr.f32.mxu0 0.0
  %2569 = vmatmul.mubr.f32.gmra.mrb[0].mxu0 %v1775
  %v2570 = vpop.f32.mrb[0].mxu0
  %v2571 = vadd.f32 %v2101, %v2570
  %v2572 = vpop.f32.mrb[0].mxu0
  %2573 = vmatprep.mubr.f32.mxu0 0.0
  %2574 = vmatmul.mubr.f32.gmra.mrb[0].mxu0 %v1776
  %v2575 = vpop.f32.mrb[0].mxu0
  %v2576 = vadd.f32 %v2106, %v2575
  %v2577 = vpop.f32.mrb[0].mxu0
  %2578 = vmatprep.mubr.f32.mxu0 0.0
  %2579 = vmatmul.mubr.f32.gmra.mrb[0].mxu0 %v1777
  %v2580 = vpop.f32.mrb[0].mxu0
  %v2581 = vadd.f32 %v2111, %v2580
  %v2582 = vpop.f32.mrb[0].mxu0
  %2583 = vmatprep.mubr.f32.mxu0 0.0
  %2584 = vmatmul.mubr.f32.gmra.mrb[0].mxu0 %v1778
  %v2585 = vpop.f32.mrb[0].mxu0
  %v2586 = vadd.f32 %v2116, %v2585
  %v2587 = vpop.f32.mrb[0].mxu0
  %2588 = vmatprep.mubr.f32.mxu0 0.0
  %2589 = vmatmul.mubr.f32.gmra.mrb[0].mxu0 %v1779
  %v2590 = vpop.f32.mrb[0].mxu0
  %v2591 = vadd.f32 %v2121, %v2590
  %v2592 = vpop.f32.mrb[0].mxu0
  %2593 = vmatprep.mubr.f32.mxu0 0.0
  %2594 = vmatmul.mubr.f32.gmra.mrb[0].mxu0 %v1780
  %v2595 = vpop.f32.mrb[0].mxu0
  %v2596 = vadd.f32 %v2126, %v2595
  %v2597 = vpop.f32.mrb[0].mxu0
  %2598 = vmatprep.mubr.f32.mxu0 0.0
  %2599 = vmatmul.mubr.f32.gmra.mrb[0].mxu0 %v1781
  %v2600 = vpop.f32.mrb[0].mxu0
  %v2601 = vadd.f32 %v2131, %v2600
  %v2602 = vpop.f32.mrb[0].mxu0
  %2603 = vmatprep.mubr.f32.mxu0 0.0
  %2604 = vmatmul.mubr.f32.gmra.mrb[0].mxu0 %v1782
  %v2605 = vpop.f32.mrb[0].mxu0
  %v2606 = vadd.f32 %v2136, %v2605
  %v2607 = vpop.f32.mrb[0].mxu0
  %2608 = vmatprep.mubr.f32.mxu0 0.0
  %2609 = vmatmul.mubr.f32.gmra.mrb[0].mxu0 %v1783
  %v2610 = vpop.f32.mrb[0].mxu0
  %v2611 = vadd.f32 %v2141, %v2610
  %v2612 = vpop.f32.mrb[0].mxu0
  %2613 = vmatprep.mubr.f32.mxu0 0.0
  %2614 = vmatmul.mubr.f32.gmra.mrb[0].mxu0 %v1784
  %v2615 = vpop.f32.mrb[0].mxu0
  %v2616 = vadd.f32 %v2146, %v2615
  %v2617 = vpop.f32.mrb[0].mxu0
  %2618 = vmatprep.mubr.f32.mxu0 0.0
  %2619 = vmatmul.mubr.f32.gmra.mrb[0].mxu0 %v1785
  %v2620 = vpop.f32.mrb[0].mxu0
  %v2621 = vadd.f32 %v2151, %v2620
  %v2622 = vpop.f32.mrb[0].mxu0
  %2623 = vmatprep.mubr.f32.mxu0 0.0
  %2624 = vmatmul.mubr.f32.gmra.mrb[0].mxu0 %v1786
  %v2625 = vpop.f32.mrb[0].mxu0
  %v2626 = vadd.f32 %v2156, %v2625
  %v2627 = vpop.f32.mrb[0].mxu0
  %2628 = vmatprep.mubr.f32.mxu0 0.0
  %2629 = vmatmul.mubr.f32.gmra.mrb[0].mxu0 %v1787
  %v2630 = vpop.f32.mrb[0].mxu0
  %v2631 = vadd.f32 %v2161, %v2630
  %v2632 = vpop.f32.mrb[0].mxu0
  %2633 = vmatprep.mubr.f32.mxu0 0.0
  %2634 = vmatmul.mubr.f32.gmra.mrb[0].mxu0 %v1788
  %v2635 = vpop.f32.mrb[0].mxu0
  %v2636 = vadd.f32 %v2166, %v2635
  %v2637 = vpop.f32.mrb[0].mxu0
  %2638 = vmatprep.mubr.f32.mxu0 0.0
  %2639 = vmatmul.mubr.f32.gmra.mrb[0].mxu0 %v1789
  %v2640 = vpop.f32.mrb[0].mxu0
  %v2641 = vadd.f32 %v2171, %v2640
  %v2642 = vpop.f32.mrb[0].mxu0
  %2643 = vmatprep.mubr.f32.mxu0 0.0
  %2644 = vmatmul.mubr.f32.gmra.mrb[0].mxu0 %v1790
  %v2645 = vpop.f32.mrb[0].mxu0
  %v2646 = vadd.f32 %v2176, %v2645
  %v2647 = vpop.f32.mrb[0].mxu0
  %2648 = vmatprep.mubr.f32.mxu0 0.0
  %2649 = vmatmul.mubr.f32.gmra.mrb[0].mxu0 %v1791
  %v2650 = vpop.f32.mrb[0].mxu0
  %v2651 = vadd.f32 %v2181, %v2650
  %v2652 = vpop.f32.mrb[0].mxu0
  %2653 = vmatprep.mubr.f32.mxu0 0.0
  %2654 = vmatmul.mubr.f32.gmra.mrb[0].mxu0 %v1792
  %v2655 = vpop.f32.mrb[0].mxu0
  %v2656 = vadd.f32 %v2186, %v2655
  %v2657 = vpop.f32.mrb[0].mxu0
  %2658 = vmatprep.mubr.f32.mxu0 0.0
  %2659 = vmatmul.mubr.f32.gmra.mrb[0].mxu0 %v1793
  %v2660 = vpop.f32.mrb[0].mxu0
  %v2661 = vadd.f32 %v2191, %v2660
  %v2662 = vpop.f32.mrb[0].mxu0
  %2663 = vmatprep.mubr.f32.mxu0 0.0
  %2664 = vmatmul.mubr.f32.gmra.mrb[0].mxu0 %v1794
  %v2665 = vpop.f32.mrb[0].mxu0
  %v2666 = vadd.f32 %v2196, %v2665
  %v2667 = vpop.f32.mrb[0].mxu0
  %2668 = vmatprep.mubr.f32.mxu0 0.0
  %2669 = vmatmul.mubr.f32.gmra.mrb[0].mxu0 %v1795
  %v2670 = vpop.f32.mrb[0].mxu0
  %v2671 = vadd.f32 %v2201, %v2670
  %v2672 = vpop.f32.mrb[0].mxu0
  %2673 = vmatprep.mubr.f32.mxu0 0.0
  %2674 = vmatmul.mubr.f32.gmra.mrb[0].mxu0 %v1796
  %v2675 = vpop.f32.mrb[0].mxu0
  %v2676 = vadd.f32 %v2206, %v2675
  %v2677 = vpop.f32.mrb[0].mxu0
  %2678 = vmatprep.mubr.f32.mxu0 0.0
  %2679 = vmatmul.mubr.f32.gmra.mrb[0].mxu0 %v1797
  %v2680 = vpop.f32.mrb[0].mxu0
  %v2681 = vadd.f32 %v2211, %v2680
  %v2682 = vpop.f32.mrb[0].mxu0
  %2683 = vmatprep.mubr.f32.mxu0 0.0
  %2684 = vmatmul.mubr.f32.gmra.mrb[0].mxu0 %v1798
  %v2685 = vpop.f32.mrb[0].mxu0
  %v2686 = vadd.f32 %v2216, %v2685
  %v2687 = vpop.f32.mrb[0].mxu0
  %2688 = vmatprep.mubr.f32.mxu0 0.0
  %2689 = vmatmul.mubr.f32.gmra.mrb[0].mxu0 %v1799
  %v2690 = vpop.f32.mrb[0].mxu0
  %v2691 = vadd.f32 %v2221, %v2690
  %v2692 = vpop.f32.mrb[0].mxu0
  %2693 = vmatprep.mubr.f32.mxu0 0.0
  %2694 = vmatmul.mubr.f32.gmra.mrb[0].mxu0 %v1800
  %v2695 = vpop.f32.mrb[0].mxu0
  %v2696 = vadd.f32 %v2226, %v2695
  %v2697 = vpop.f32.mrb[0].mxu0
  %2698 = vmatprep.mubr.f32.mxu0 0.0
  %2699 = vmatmul.mubr.f32.gmra.mrb[0].mxu0 %v1801
  %v2700 = vpop.f32.mrb[0].mxu0
  %v2701 = vadd.f32 %v2231, %v2700
  %v2702 = vpop.f32.mrb[0].mxu0
  %2703 = vmatprep.mubr.f32.mxu0 0.0
  %2704 = vmatmul.mubr.f32.gmra.mrb[0].mxu0 %v1802
  %v2705 = vpop.f32.mrb[0].mxu0
  %v2706 = vadd.f32 %v2236, %v2705
  %v2707 = vpop.f32.mrb[0].mxu0
  %2708 = vmatprep.mubr.f32.mxu0 0.0
  %2709 = vmatmul.mubr.f32.gmra.mrb[0].mxu0 %v1803
  %v2710 = vpop.f32.mrb[0].mxu0
  %v2711 = vadd.f32 %v2241, %v2710
  %v2712 = vpop.f32.mrb[0].mxu0
  %2713 = vmatprep.mubr.f32.mxu0 0.0
  %2714 = vmatmul.mubr.f32.gmra.mrb[0].mxu0 %v1804
  %v2715 = vpop.f32.mrb[0].mxu0
  %v2716 = vadd.f32 %v2246, %v2715
  %v2717 = vpop.f32.mrb[0].mxu0
  %2718 = vmatprep.mubr.f32.mxu0 0.0
  %2719 = vmatmul.mubr.f32.gmra.mrb[0].mxu0 %v1805
  %v2720 = vpop.f32.mrb[0].mxu0
  %v2721 = vadd.f32 %v2251, %v2720
  %v2722 = vpop.f32.mrb[0].mxu0
  %2723 = vmatprep.mubr.f32.mxu0 0.0
  %2724 = vmatmul.mubr.f32.gmra.mrb[0].mxu0 %v1806
  %v2725 = vpop.f32.mrb[0].mxu0
  %v2726 = vadd.f32 %v2256, %v2725
  %v2727 = vpop.f32.mrb[0].mxu0
  %2728 = vmatprep.mubr.f32.mxu0 0.0
  %2729 = vmatmul.mubr.f32.gmra.mrb[0].mxu0 %v1807
  %v2730 = vpop.f32.mrb[0].mxu0
  %v2731 = vadd.f32 %v2261, %v2730
  %v2732 = vpop.f32.mrb[0].mxu0
  %2733 = vmatprep.mubr.f32.mxu0 0.0
  %2734 = vmatmul.mubr.f32.gmra.mrb[0].mxu0 %v1808
  %v2735 = vpop.f32.mrb[0].mxu0
  %v2736 = vadd.f32 %v2266, %v2735
  %v2737 = vpop.f32.mrb[0].mxu0
  %2738 = vmatprep.mubr.f32.mxu0 0.0
  %2739 = vmatmul.mubr.f32.gmra.mrb[0].mxu0 %v1809
  %v2740 = vpop.f32.mrb[0].mxu0
  %v2741 = vadd.f32 %v2271, %v2740
  %v2742 = vpop.f32.mrb[0].mxu0
  %2743 = vmatprep.mubr.f32.mxu0 0.0
  %2744 = vmatmul.mubr.f32.gmra.mrb[0].mxu0 %v1810
  %v2745 = vpop.f32.mrb[0].mxu0
  %v2746 = vadd.f32 %v2276, %v2745
  %v2747 = vpop.f32.mrb[0].mxu0
  %2748 = vmatprep.mubr.f32.mxu0 0.0
  %2749 = vmatmul.mubr.f32.gmra.mrb[0].mxu0 %v1811
  %v2750 = vpop.f32.mrb[0].mxu0
  %v2751 = vadd.f32 %v2281, %v2750
  %v2752 = vpop.f32.mrb[0].mxu0
  %2753 = vmatprep.mubr.f32.mxu0 0.0
  %2754 = vmatmul.mubr.f32.gmra.mrb[0].mxu0 %v1812
  %v2755 = vpop.f32.mrb[0].mxu0
  %v2756 = vadd.f32 %v2286, %v2755
  %v2757 = vpop.f32.mrb[0].mxu0
  %2758 = vmatprep.mubr.f32.mxu0 0.0
  %2759 = vmatmul.mubr.f32.gmra.mrb[0].mxu0 %v1813
  %v2760 = vpop.f32.mrb[0].mxu0
  %v2761 = vadd.f32 %v2291, %v2760
  %v2762 = vpop.f32.mrb[0].mxu0
  %2763 = vmatprep.mubr.f32.mxu0 0.0
  %2764 = vmatmul.mubr.f32.gmra.mrb[0].mxu0 %v1814
  %v2765 = vpop.f32.mrb[0].mxu0
  %v2766 = vadd.f32 %v2296, %v2765
  %v2767 = vpop.f32.mrb[0].mxu0
  %2768 = vmatprep.mubr.f32.mxu0 0.0
  %2769 = vmatmul.mubr.f32.gmra.mrb[0].mxu0 %v1815
  %v2770 = vpop.f32.mrb[0].mxu0
  %v2771 = vadd.f32 %v2301, %v2770
  %v2772 = vpop.f32.mrb[0].mxu0
  %2773 = vmatprep.mubr.f32.mxu0 0.0
  %2774 = vmatmul.mubr.f32.gmra.mrb[0].mxu0 %v1816
  %v2775 = vpop.f32.mrb[0].mxu0
  %v2776 = vadd.f32 %v2306, %v2775
  %v2777 = vpop.f32.mrb[0].mxu0
  %2778 = vmatprep.mubr.f32.mxu0 0.0
  %2779 = vmatmul.mubr.f32.gmra.mrb[0].mxu0 %v1817
  %v2780 = vpop.f32.mrb[0].mxu0
  %v2781 = vadd.f32 %v2311, %v2780
  %v2782 = vpop.f32.mrb[0].mxu0
  %2783 = vmatprep.mubr.f32.mxu0 0.0
  %2784 = vmatmul.mubr.f32.gmra.mrb[0].mxu0 %v1818
  %v2785 = vpop.f32.mrb[0].mxu0
  %v2786 = vadd.f32 %v2316, %v2785
  %v2787 = vpop.f32.mrb[0].mxu0
  %2788 = vmatprep.mubr.f32.mxu0 0.0
  %2789 = vmatmul.mubr.f32.gmra.mrb[0].mxu0 %v1819
  %v2790 = vpop.f32.mrb[0].mxu0
  %v2791 = vadd.f32 %v2321, %v2790
  %v2792 = vpop.f32.mrb[0].mxu0
  %2793 = vmatprep.mubr.f32.mxu0 0.0
  %2794 = vmatmul.mubr.f32.gmra.mrb[0].mxu0 %v1820
  %v2795 = vpop.f32.mrb[0].mxu0
  %v2796 = vadd.f32 %v2326, %v2795
  %v2797 = vpop.f32.mrb[0].mxu0
  %2798 = vmatprep.mubr.f32.mxu0 0.0
  %2799 = vmatmul.mubr.f32.gmra.mrb[0].mxu0 %v1821
  %v2800 = vpop.f32.mrb[0].mxu0
  %v2801 = vadd.f32 %v2331, %v2800
  %v2802 = vpop.f32.mrb[0].mxu0
  %2803 = vmatprep.mubr.f32.mxu0 0.0
  %2804 = vmatmul.mubr.f32.gmra.mrb[0].mxu0 %v1822
  %v2805 = vpop.f32.mrb[0].mxu0
  %v2806 = vadd.f32 %v2336, %v2805
  %v2807 = vpop.f32.mrb[0].mxu0
  %2808 = vmatprep.mubr.f32.mxu0 0.0
  %2809 = vmatmul.mubr.f32.gmra.mrb[0].mxu0 %v1823
  %v2810 = vpop.f32.mrb[0].mxu0
  %v2811 = vadd.f32 %v2341, %v2810
  %v2812 = vpop.f32.mrb[0].mxu0
  %2813 = vmatprep.mubr.f32.mxu0 0.0
  %2814 = vmatmul.mubr.f32.gmra.mrb[0].mxu0 %v1824
  %v2815 = vpop.f32.mrb[0].mxu0
  %v2816 = vadd.f32 %v2346, %v2815
  %v2817 = vpop.f32.mrb[0].mxu0
  %2818 = vmatprep.mubr.f32.mxu0 0.0
  %2819 = vmatmul.mubr.f32.gmra.mrb[0].mxu0 %v1825
  %v2820 = vpop.f32.mrb[0].mxu0
  %v2821 = vadd.f32 %v2351, %v2820
  %v2822 = vpop.f32.mrb[0].mxu0
  %2823 = vmatprep.mubr.f32.mxu0 0.0
  %2824 = vmatmul.mubr.f32.gmra.mrb[0].mxu0 %v1826
  %v2825 = vpop.f32.mrb[0].mxu0
  %v2826 = vadd.f32 %v2356, %v2825
  %v2827 = vpop.f32.mrb[0].mxu0
  %2828 = vmatprep.mubr.f32.mxu0 0.0
  %2829 = vmatmul.mubr.f32.gmra.mrb[0].mxu0 %v1827
  %v2830 = vpop.f32.mrb[0].mxu0
  %v2831 = vadd.f32 %v2361, %v2830
  %v2832 = vpop.f32.mrb[0].mxu0
  %2833 = vmatprep.mubr.f32.mxu0 0.0
  %2834 = vmatmul.mubr.f32.gmra.mrb[0].mxu0 %v1828
  %v2835 = vpop.f32.mrb[0].mxu0
  %v2836 = vadd.f32 %v2366, %v2835
  %v2837 = vpop.f32.mrb[0].mxu0
  %2838 = vmatprep.mubr.f32.mxu0 0.0
  %2839 = vmatmul.mubr.f32.gmra.mrb[0].mxu0 %v1829
  %v2840 = vpop.f32.mrb[0].mxu0
  %v2841 = vadd.f32 %v2371, %v2840
  %v2842 = vpop.f32.mrb[0].mxu0
  %2843 = vmatprep.mubr.f32.mxu0 0.0
  %2844 = vmatmul.mubr.f32.gmra.mrb[0].mxu0 %v1830
  %v2845 = vpop.f32.mrb[0].mxu0
  %v2846 = vadd.f32 %v2376, %v2845
  %v2847 = vpop.f32.mrb[0].mxu0
  %2848 = vmatprep.mubr.f32.mxu0 0.0
  %2849 = vmatmul.mubr.f32.gmra.mrb[0].mxu0 %v1831
  %v2850 = vpop.f32.mrb[0].mxu0
  %v2851 = vadd.f32 %v2381, %v2850
  %v2852 = vpop.f32.mrb[0].mxu0
  %2853 = vmatprep.mubr.f32.mxu0 0.0
  %2854 = vmatmul.mubr.f32.gmra.mrb[0].mxu0 %v1832
  %v2855 = vpop.f32.mrb[0].mxu0
  %v2856 = vadd.f32 %v2386, %v2855
  %v2857 = vpop.f32.mrb[0].mxu0
  %2858 = vmatprep.mubr.f32.mxu0 0.0
  %2859 = vmatmul.mubr.f32.gmra.mrb[0].mxu0 %v1833
  %v2860 = vpop.f32.mrb[0].mxu0
  %v2861 = vadd.f32 %v2391, %v2860
  %v2862 = vpop.f32.mrb[0].mxu0
  %2863 = vmatprep.mubr.f32.mxu0 0.0
  %2864 = vmatmul.mubr.f32.gmra.mrb[0].mxu0 %v1834
  %v2865 = vpop.f32.mrb[0].mxu0
  %v2866 = vadd.f32 %v2396, %v2865
  %v2867 = vpop.f32.mrb[0].mxu0
  %2868 = vmatprep.mubr.f32.mxu0 0.0
  %2869 = vmatmul.mubr.f32.gmra.mrb[0].mxu0 %v1835
  %v2870 = vpop.f32.mrb[0].mxu0
  %v2871 = vadd.f32 %v2401, %v2870
  %v2872 = vpop.f32.mrb[0].mxu0
  %2873 = vmatprep.mubr.f32.mxu0 0.0
  %2874 = vmatmul.mubr.f32.gmra.mrb[0].mxu0 %v1836
  %v2875 = vpop.f32.mrb[0].mxu0
  %v2876 = vadd.f32 %v2406, %v2875
  %v2877 = vpop.f32.mrb[0].mxu0
  %2878 = vmatprep.mubr.f32.mxu0 0.0
  %2879 = vmatmul.mubr.f32.gmra.mrb[0].mxu0 %v1837
  %v2880 = vpop.f32.mrb[0].mxu0
  %v2881 = vadd.f32 %v2411, %v2880
  %v2882 = vpop.f32.mrb[0].mxu0
  %2883 = vmatprep.mubr.f32.mxu0 0.0
  %2884 = vmatmul.mubr.f32.gmra.mrb[0].mxu0 %v1838
  %v2885 = vpop.f32.mrb[0].mxu0
  %v2886 = vadd.f32 %v2416, %v2885
  %v2887 = vpop.f32.mrb[0].mxu0
  %2888 = vmatprep.mubr.f32.mxu0 0.0
  %2889 = vmatmul.mubr.f32.gmra.mrb[0].mxu0 %v1839
  %v2890 = vpop.f32.mrb[0].mxu0
  %v2891 = vadd.f32 %v2421, %v2890
  %v2892 = vpop.f32.mrb[0].mxu0
  %2893 = vdwg.mxu0
  %v2894 = vld [vmem:[#allocation2 + $0x7] sm:$0xff]
  %v2895 = vld [vmem:[#allocation2 + $0xf] sm:$0xff]
  %v2896 = vld [vmem:[#allocation2 + $0x17] sm:$0xff]
  %v2897 = vld [vmem:[#allocation2 + $0x1f] sm:$0xff]
  %v2898 = vld [vmem:[#allocation2 + $0x27] sm:$0xff]
  %v2899 = vld [vmem:[#allocation2 + $0x2f] sm:$0xff]
  %v2900 = vld [vmem:[#allocation2 + $0x37] sm:$0xff]
  %v2901 = vld [vmem:[#allocation2 + $0x3f] sm:$0xff]
  %v2902 = vld [vmem:[#allocation2 + $0x47] sm:$0xff]
  %v2903 = vld [vmem:[#allocation2 + $0x4f] sm:$0xff]
  %v2904 = vld [vmem:[#allocation2 + $0x57] sm:$0xff]
  %v2905 = vld [vmem:[#allocation2 + $0x5f] sm:$0xff]
  %v2906 = vld [vmem:[#allocation2 + $0x67] sm:$0xff]
  %v2907 = vld [vmem:[#allocation2 + $0x6f] sm:$0xff]
  %v2908 = vld [vmem:[#allocation2 + $0x77] sm:$0xff]
  %v2909 = vld [vmem:[#allocation2 + $0x7f] sm:$0xff]
  %v2910 = vld [vmem:[#allocation2 + $0x87] sm:$0xff]
  %v2911 = vld [vmem:[#allocation2 + $0x8f] sm:$0xff]
  %v2912 = vld [vmem:[#allocation2 + $0x97] sm:$0xff]
  %v2913 = vld [vmem:[#allocation2 + $0x9f] sm:$0xff]
  %v2914 = vld [vmem:[#allocation2 + $0xa7] sm:$0xff]
  %v2915 = vld [vmem:[#allocation2 + $0xaf] sm:$0xff]
  %v2916 = vld [vmem:[#allocation2 + $0xb7] sm:$0xff]
  %v2917 = vld [vmem:[#allocation2 + $0xbf] sm:$0xff]
  %v2918 = vld [vmem:[#allocation2 + $0xc7] sm:$0xff]
  %v2919 = vld [vmem:[#allocation2 + $0xcf] sm:$0xff]
  %v2920 = vld [vmem:[#allocation2 + $0xd7] sm:$0xff]
  %v2921 = vld [vmem:[#allocation2 + $0xdf] sm:$0xff]
  %v2922 = vld [vmem:[#allocation2 + $0xe7] sm:$0xff]
  %v2923 = vld [vmem:[#allocation2 + $0xef] sm:$0xff]
  %v2924 = vld [vmem:[#allocation2 + $0xf7] sm:$0xff]
  %v2925 = vld [vmem:[#allocation2 + $0xff] sm:$0xff]
  %v2926 = vld [vmem:[#allocation2 + $0x107] sm:$0xff]
  %v2927 = vld [vmem:[#allocation2 + $0x10f] sm:$0xff]
  %v2928 = vld [vmem:[#allocation2 + $0x117] sm:$0xff]
  %v2929 = vld [vmem:[#allocation2 + $0x11f] sm:$0xff]
  %v2930 = vld [vmem:[#allocation2 + $0x127] sm:$0xff]
  %v2931 = vld [vmem:[#allocation2 + $0x12f] sm:$0xff]
  %v2932 = vld [vmem:[#allocation2 + $0x137] sm:$0xff]
  %v2933 = vld [vmem:[#allocation2 + $0x13f] sm:$0xff]
  %v2934 = vld [vmem:[#allocation2 + $0x147] sm:$0xff]
  %v2935 = vld [vmem:[#allocation2 + $0x14f] sm:$0xff]
  %v2936 = vld [vmem:[#allocation2 + $0x157] sm:$0xff]
  %v2937 = vld [vmem:[#allocation2 + $0x15f] sm:$0xff]
  %v2938 = vld [vmem:[#allocation2 + $0x167] sm:$0xff]
  %v2939 = vld [vmem:[#allocation2 + $0x16f] sm:$0xff]
  %v2940 = vld [vmem:[#allocation2 + $0x177] sm:$0xff]
  %v2941 = vld [vmem:[#allocation2 + $0x17f] sm:$0xff]
  %v2942 = vld [vmem:[#allocation2 + $0x187] sm:$0xff]
  %v2943 = vld [vmem:[#allocation2 + $0x18f] sm:$0xff]
  %v2944 = vld [vmem:[#allocation2 + $0x197] sm:$0xff]
  %v2945 = vld [vmem:[#allocation2 + $0x19f] sm:$0xff]
  %v2946 = vld [vmem:[#allocation2 + $0x1a7] sm:$0xff]
  %v2947 = vld [vmem:[#allocation2 + $0x1af] sm:$0xff]
  %v2948 = vld [vmem:[#allocation2 + $0x1b7] sm:$0xff]
  %v2949 = vld [vmem:[#allocation2 + $0x1bf] sm:$0xff]
  %v2950 = vld [vmem:[#allocation2 + $0x1c7] sm:$0xff]
  %v2951 = vld [vmem:[#allocation2 + $0x1cf] sm:$0xff]
  %v2952 = vld [vmem:[#allocation2 + $0x1d7] sm:$0xff]
  %v2953 = vld [vmem:[#allocation2 + $0x1df] sm:$0xff]
  %v2954 = vld [vmem:[#allocation2 + $0x1e7] sm:$0xff]
  %v2955 = vld [vmem:[#allocation2 + $0x1ef] sm:$0xff]
  %v2956 = vld [vmem:[#allocation2 + $0x1f7] sm:$0xff]
  %v2957 = vld [vmem:[#allocation2 + $0x1ff] sm:$0xff]
  %v2958 = vld [vmem:[#allocation2 + $0x207] sm:$0xff]
  %v2959 = vld [vmem:[#allocation2 + $0x20f] sm:$0xff]
  %v2960 = vld [vmem:[#allocation2 + $0x217] sm:$0xff]
  %v2961 = vld [vmem:[#allocation2 + $0x21f] sm:$0xff]
  %v2962 = vld [vmem:[#allocation2 + $0x227] sm:$0xff]
  %v2963 = vld [vmem:[#allocation2 + $0x22f] sm:$0xff]
  %v2964 = vld [vmem:[#allocation2 + $0x237] sm:$0xff]
  %v2965 = vld [vmem:[#allocation2 + $0x23f] sm:$0xff]
  %v2966 = vld [vmem:[#allocation2 + $0x247] sm:$0xff]
  %v2967 = vld [vmem:[#allocation2 + $0x24f] sm:$0xff]
  %v2968 = vld [vmem:[#allocation2 + $0x257] sm:$0xff]
  %v2969 = vld [vmem:[#allocation2 + $0x25f] sm:$0xff]
  %v2970 = vld [vmem:[#allocation2 + $0x267] sm:$0xff]
  %v2971 = vld [vmem:[#allocation2 + $0x26f] sm:$0xff]
  %v2972 = vld [vmem:[#allocation2 + $0x277] sm:$0xff]
  %v2973 = vld [vmem:[#allocation2 + $0x27f] sm:$0xff]
  %v2974 = vld [vmem:[#allocation2 + $0x287] sm:$0xff]
  %s2975 = scalar_lea.vmem %s2, 256
  %v2976 = vld [vmem:[%s2975] sm:$0xff]
  %v2977 = vld [vmem:[%s2975 + $0x8] sm:$0xff]
  %v2978 = vld [vmem:[%s2975 + $0x10] sm:$0xff]
  %v2979 = vld [vmem:[%s2975 + $0x18] sm:$0xff]
  %v2980 = vld [vmem:[%s2975 + $0x20] sm:$0xff]
  %v2981 = vld [vmem:[%s2975 + $0x28] sm:$0xff]
  %v2982 = vld [vmem:[%s2975 + $0x30] sm:$0xff]
  %v2983 = vld [vmem:[%s2975 + $0x38] sm:$0xff]
  %v2984 = vld [vmem:[%s2975 + $0x40] sm:$0xff]
  %v2985 = vld [vmem:[%s2975 + $0x48] sm:$0xff]
  %v2986 = vld [vmem:[%s2975 + $0x50] sm:$0xff]
  %v2987 = vld [vmem:[%s2975 + $0x58] sm:$0xff]
  %v2988 = vld [vmem:[%s2975 + $0x60] sm:$0xff]
  %v2989 = vld [vmem:[%s2975 + $0x68] sm:$0xff]
  %v2990 = vld [vmem:[%s2975 + $0x70] sm:$0xff]
  %v2991 = vld [vmem:[%s2975 + $0x78] sm:$0xff]
  %2992 = vmatprep.subr.mxu0 0.0
  %2993 = vmatpush1.msra.mxu0 %v2976
  %2994 = vmatprep.subr.mxu0 0.0
  %2995 = vmatpush1.msra.mxu0 %v2977
  %2996 = vmatprep.subr.mxu0 0.0
  %2997 = vmatpush1.msra.mxu0 %v2978
  %2998 = vmatprep.subr.mxu0 0.0
  %2999 = vmatpush1.msra.mxu0 %v2979
  %3000 = vmatprep.subr.mxu0 0.0
  %3001 = vmatpush1.msra.mxu0 %v2980
  %3002 = vmatprep.subr.mxu0 0.0
  %3003 = vmatpush1.msra.mxu0 %v2981
  %3004 = vmatprep.subr.mxu0 0.0
  %3005 = vmatpush1.msra.mxu0 %v2982
  %3006 = vmatprep.subr.mxu0 0.0
  %3007 = vmatpush1.msra.mxu0 %v2983
  %3008 = vmatprep.subr.mxu0 0.0
  %3009 = vmatpush1.msra.mxu0 %v2984
  %3010 = vmatprep.subr.mxu0 0.0
  %3011 = vmatpush1.msra.mxu0 %v2985
  %3012 = vmatprep.subr.mxu0 0.0
  %3013 = vmatpush1.msra.mxu0 %v2986
  %3014 = vmatprep.subr.mxu0 0.0
  %3015 = vmatpush1.msra.mxu0 %v2987
  %3016 = vmatprep.subr.mxu0 0.0
  %3017 = vmatpush1.msra.mxu0 %v2988
  %3018 = vmatprep.subr.mxu0 0.0
  %3019 = vmatpush1.msra.mxu0 %v2989
  %3020 = vmatprep.subr.mxu0 0.0
  %3021 = vmatpush1.msra.mxu0 %v2990
  %3022 = vmatprep.subr.mxu0 0.0
  %3023 = vmatpush1.msra.mxu0 %v2991
  %3024 = vmatprep.subr.mxu0 0.0
  %3025 = vmatpush1.msra.mxu0 0.0
  %3026 = vmatprep.subr.mxu0 0.0
  %3027 = vmatpush1.msra.mxu0 0.0
  %3028 = vmatprep.subr.mxu0 0.0
  %3029 = vmatpush1.msra.mxu0 0.0
  %3030 = vmatprep.subr.mxu0 0.0
  %3031 = vmatpush1.msra.mxu0 0.0
  %3032 = vmatprep.subr.mxu0 0.0
  %3033 = vmatpush1.msra.mxu0 0.0
  %3034 = vmatprep.subr.mxu0 0.0
  %3035 = vmatpush1.msra.mxu0 0.0
  %3036 = vmatprep.subr.mxu0 0.0
  %3037 = vmatpush1.msra.mxu0 0.0
  %3038 = vmatprep.subr.mxu0 0.0
  %3039 = vmatpush1.msra.mxu0 0.0
  %3040 = vmatprep.subr.mxu0 0.0
  %3041 = vmatpush1.msra.mxu0 0.0
  %3042 = vmatprep.subr.mxu0 0.0
  %3043 = vmatpush1.msra.mxu0 0.0
  %3044 = vmatprep.subr.mxu0 0.0
  %3045 = vmatpush1.msra.mxu0 0.0
  %3046 = vmatprep.subr.mxu0 0.0
  %3047 = vmatpush1.msra.mxu0 0.0
  %3048 = vmatprep.subr.mxu0 0.0
  %3049 = vmatpush1.msra.mxu0 0.0
  %3050 = vmatprep.subr.mxu0 0.0
  %3051 = vmatpush1.msra.mxu0 0.0
  %3052 = vmatprep.subr.mxu0 0.0
  %3053 = vmatpush1.msra.mxu0 0.0
  %3054 = vmatprep.subr.mxu0 0.0
  %3055 = vmatpush1.msra.mxu0 0.0
  %3056 = vmatprep.mubr.f32.mxu0 0.0
  %3057 = vmatmul.mubr.f32.gmra.mrb[0].mxu0 %v2894
  %v3058 = vpop.f32.mrb[0].mxu0
  %v3059 = vadd.f32 0.0, %v3058
  %v3060 = vpop.f32.mrb[0].mxu0
  %3061 = vmatprep.mubr.f32.mxu0 0.0
  %3062 = vmatmul.mubr.f32.gmra.mrb[0].mxu0 %v2895
  %v3063 = vpop.f32.mrb[0].mxu0
  %v3064 = vadd.f32 0.0, %v3063
  %v3065 = vpop.f32.mrb[0].mxu0
  %3066 = vmatprep.mubr.f32.mxu0 0.0
  %3067 = vmatmul.mubr.f32.gmra.mrb[0].mxu0 %v2896
  %v3068 = vpop.f32.mrb[0].mxu0
  %v3069 = vadd.f32 0.0, %v3068
  %v3070 = vpop.f32.mrb[0].mxu0
  %3071 = vmatprep.mubr.f32.mxu0 0.0
  %3072 = vmatmul.mubr.f32.gmra.mrb[0].mxu0 %v2897
  %v3073 = vpop.f32.mrb[0].mxu0
  %v3074 = vadd.f32 0.0, %v3073
  %v3075 = vpop.f32.mrb[0].mxu0
  %3076 = vmatprep.mubr.f32.mxu0 0.0
  %3077 = vmatmul.mubr.f32.gmra.mrb[0].mxu0 %v2898
  %v3078 = vpop.f32.mrb[0].mxu0
  %v3079 = vadd.f32 0.0, %v3078
  %v3080 = vpop.f32.mrb[0].mxu0
  %3081 = vmatprep.mubr.f32.mxu0 0.0
  %3082 = vmatmul.mubr.f32.gmra.mrb[0].mxu0 %v2899
  %v3083 = vpop.f32.mrb[0].mxu0
  %v3084 = vadd.f32 0.0, %v3083
  %v3085 = vpop.f32.mrb[0].mxu0
  %3086 = vmatprep.mubr.f32.mxu0 0.0
  %3087 = vmatmul.mubr.f32.gmra.mrb[0].mxu0 %v2900
  %v3088 = vpop.f32.mrb[0].mxu0
  %v3089 = vadd.f32 0.0, %v3088
  %v3090 = vpop.f32.mrb[0].mxu0
  %3091 = vmatprep.mubr.f32.mxu0 0.0
  %3092 = vmatmul.mubr.f32.gmra.mrb[0].mxu0 %v2901
  %v3093 = vpop.f32.mrb[0].mxu0
  %v3094 = vadd.f32 0.0, %v3093
  %v3095 = vpop.f32.mrb[0].mxu0
  %3096 = vmatprep.mubr.f32.mxu0 0.0
  %3097 = vmatmul.mubr.f32.gmra.mrb[0].mxu0 %v2902
  %v3098 = vpop.f32.mrb[0].mxu0
  %v3099 = vadd.f32 0.0, %v3098
  %v3100 = vpop.f32.mrb[0].mxu0
  %3101 = vmatprep.mubr.f32.mxu0 0.0
  %3102 = vmatmul.mubr.f32.gmra.mrb[0].mxu0 %v2903
  %v3103 = vpop.f32.mrb[0].mxu0
  %v3104 = vadd.f32 0.0, %v3103
  %v3105 = vpop.f32.mrb[0].mxu0
  %3106 = vmatprep.mubr.f32.mxu0 0.0
  %3107 = vmatmul.mubr.f32.gmra.mrb[0].mxu0 %v2904
  %v3108 = vpop.f32.mrb[0].mxu0
  %v3109 = vadd.f32 0.0, %v3108
  %v3110 = vpop.f32.mrb[0].mxu0
  %3111 = vmatprep.mubr.f32.mxu0 0.0
  %3112 = vmatmul.mubr.f32.gmra.mrb[0].mxu0 %v2905
  %v3113 = vpop.f32.mrb[0].mxu0
  %v3114 = vadd.f32 0.0, %v3113
  %v3115 = vpop.f32.mrb[0].mxu0
  %3116 = vmatprep.mubr.f32.mxu0 0.0
  %3117 = vmatmul.mubr.f32.gmra.mrb[0].mxu0 %v2906
  %v3118 = vpop.f32.mrb[0].mxu0
  %v3119 = vadd.f32 0.0, %v3118
  %v3120 = vpop.f32.mrb[0].mxu0
  %3121 = vmatprep.mubr.f32.mxu0 0.0
  %3122 = vmatmul.mubr.f32.gmra.mrb[0].mxu0 %v2907
  %v3123 = vpop.f32.mrb[0].mxu0
  %v3124 = vadd.f32 0.0, %v3123
  %v3125 = vpop.f32.mrb[0].mxu0
  %3126 = vmatprep.mubr.f32.mxu0 0.0
  %3127 = vmatmul.mubr.f32.gmra.mrb[0].mxu0 %v2908
  %v3128 = vpop.f32.mrb[0].mxu0
  %v3129 = vadd.f32 0.0, %v3128
  %v3130 = vpop.f32.mrb[0].mxu0
  %3131 = vmatprep.mubr.f32.mxu0 0.0
  %3132 = vmatmul.mubr.f32.gmra.mrb[0].mxu0 %v2909
  %v3133 = vpop.f32.mrb[0].mxu0
  %v3134 = vadd.f32 0.0, %v3133
  %v3135 = vpop.f32.mrb[0].mxu0
  %3136 = vmatprep.mubr.f32.mxu0 0.0
  %3137 = vmatmul.mubr.f32.gmra.mrb[0].mxu0 %v2910
  %v3138 = vpop.f32.mrb[0].mxu0
  %v3139 = vadd.f32 0.0, %v3138
  %v3140 = vpop.f32.mrb[0].mxu0
  %3141 = vmatprep.mubr.f32.mxu0 0.0
  %3142 = vmatmul.mubr.f32.gmra.mrb[0].mxu0 %v2911
  %v3143 = vpop.f32.mrb[0].mxu0
  %v3144 = vadd.f32 0.0, %v3143
  %v3145 = vpop.f32.mrb[0].mxu0
  %3146 = vmatprep.mubr.f32.mxu0 0.0
  %3147 = vmatmul.mubr.f32.gmra.mrb[0].mxu0 %v2912
  %v3148 = vpop.f32.mrb[0].mxu0
  %v3149 = vadd.f32 0.0, %v3148
  %v3150 = vpop.f32.mrb[0].mxu0
  %3151 = vmatprep.mubr.f32.mxu0 0.0
  %3152 = vmatmul.mubr.f32.gmra.mrb[0].mxu0 %v2913
  %v3153 = vpop.f32.mrb[0].mxu0
  %v3154 = vadd.f32 0.0, %v3153
  %v3155 = vpop.f32.mrb[0].mxu0
  %3156 = vmatprep.mubr.f32.mxu0 0.0
  %3157 = vmatmul.mubr.f32.gmra.mrb[0].mxu0 %v2914
  %v3158 = vpop.f32.mrb[0].mxu0
  %v3159 = vadd.f32 0.0, %v3158
  %v3160 = vpop.f32.mrb[0].mxu0
  %3161 = vmatprep.mubr.f32.mxu0 0.0
  %3162 = vmatmul.mubr.f32.gmra.mrb[0].mxu0 %v2915
  %v3163 = vpop.f32.mrb[0].mxu0
  %v3164 = vadd.f32 0.0, %v3163
  %v3165 = vpop.f32.mrb[0].mxu0
  %3166 = vmatprep.mubr.f32.mxu0 0.0
  %3167 = vmatmul.mubr.f32.gmra.mrb[0].mxu0 %v2916
  %v3168 = vpop.f32.mrb[0].mxu0
  %v3169 = vadd.f32 0.0, %v3168
  %v3170 = vpop.f32.mrb[0].mxu0
  %3171 = vmatprep.mubr.f32.mxu0 0.0
  %3172 = vmatmul.mubr.f32.gmra.mrb[0].mxu0 %v2917
  %v3173 = vpop.f32.mrb[0].mxu0
  %v3174 = vadd.f32 0.0, %v3173
  %v3175 = vpop.f32.mrb[0].mxu0
  %3176 = vmatprep.mubr.f32.mxu0 0.0
  %3177 = vmatmul.mubr.f32.gmra.mrb[0].mxu0 %v2918
  %v3178 = vpop.f32.mrb[0].mxu0
  %v3179 = vadd.f32 0.0, %v3178
  %v3180 = vpop.f32.mrb[0].mxu0
  %3181 = vmatprep.mubr.f32.mxu0 0.0
  %3182 = vmatmul.mubr.f32.gmra.mrb[0].mxu0 %v2919
  %v3183 = vpop.f32.mrb[0].mxu0
  %v3184 = vadd.f32 0.0, %v3183
  %v3185 = vpop.f32.mrb[0].mxu0
  %3186 = vmatprep.mubr.f32.mxu0 0.0
  %3187 = vmatmul.mubr.f32.gmra.mrb[0].mxu0 %v2920
  %v3188 = vpop.f32.mrb[0].mxu0
  %v3189 = vadd.f32 0.0, %v3188
  %v3190 = vpop.f32.mrb[0].mxu0
  %3191 = vmatprep.mubr.f32.mxu0 0.0
  %3192 = vmatmul.mubr.f32.gmra.mrb[0].mxu0 %v2921
  %v3193 = vpop.f32.mrb[0].mxu0
  %v3194 = vadd.f32 0.0, %v3193
  %v3195 = vpop.f32.mrb[0].mxu0
  %3196 = vmatprep.mubr.f32.mxu0 0.0
  %3197 = vmatmul.mubr.f32.gmra.mrb[0].mxu0 %v2922
  %v3198 = vpop.f32.mrb[0].mxu0
  %v3199 = vadd.f32 0.0, %v3198
  %v3200 = vpop.f32.mrb[0].mxu0
  %3201 = vmatprep.mubr.f32.mxu0 0.0
  %3202 = vmatmul.mubr.f32.gmra.mrb[0].mxu0 %v2923
  %v3203 = vpop.f32.mrb[0].mxu0
  %v3204 = vadd.f32 0.0, %v3203
  %v3205 = vpop.f32.mrb[0].mxu0
  %3206 = vmatprep.mubr.f32.mxu0 0.0
  %3207 = vmatmul.mubr.f32.gmra.mrb[0].mxu0 %v2924
  %v3208 = vpop.f32.mrb[0].mxu0
  %v3209 = vadd.f32 0.0, %v3208
  %v3210 = vpop.f32.mrb[0].mxu0
  %3211 = vmatprep.mubr.f32.mxu0 0.0
  %3212 = vmatmul.mubr.f32.gmra.mrb[0].mxu0 %v2925
  %v3213 = vpop.f32.mrb[0].mxu0
  %v3214 = vadd.f32 0.0, %v3213
  %v3215 = vpop.f32.mrb[0].mxu0
  %3216 = vmatprep.mubr.f32.mxu0 0.0
  %3217 = vmatmul.mubr.f32.gmra.mrb[0].mxu0 %v2926
  %v3218 = vpop.f32.mrb[0].mxu0
  %v3219 = vadd.f32 0.0, %v3218
  %v3220 = vpop.f32.mrb[0].mxu0
  %3221 = vmatprep.mubr.f32.mxu0 0.0
  %3222 = vmatmul.mubr.f32.gmra.mrb[0].mxu0 %v2927
  %v3223 = vpop.f32.mrb[0].mxu0
  %v3224 = vadd.f32 0.0, %v3223
  %v3225 = vpop.f32.mrb[0].mxu0
  %3226 = vmatprep.mubr.f32.mxu0 0.0
  %3227 = vmatmul.mubr.f32.gmra.mrb[0].mxu0 %v2928
  %v3228 = vpop.f32.mrb[0].mxu0
  %v3229 = vadd.f32 0.0, %v3228
  %v3230 = vpop.f32.mrb[0].mxu0
  %3231 = vmatprep.mubr.f32.mxu0 0.0
  %3232 = vmatmul.mubr.f32.gmra.mrb[0].mxu0 %v2929
  %v3233 = vpop.f32.mrb[0].mxu0
  %v3234 = vadd.f32 0.0, %v3233
  %v3235 = vpop.f32.mrb[0].mxu0
  %3236 = vmatprep.mubr.f32.mxu0 0.0
  %3237 = vmatmul.mubr.f32.gmra.mrb[0].mxu0 %v2930
  %v3238 = vpop.f32.mrb[0].mxu0
  %v3239 = vadd.f32 0.0, %v3238
  %v3240 = vpop.f32.mrb[0].mxu0
  %3241 = vmatprep.mubr.f32.mxu0 0.0
  %3242 = vmatmul.mubr.f32.gmra.mrb[0].mxu0 %v2931
  %v3243 = vpop.f32.mrb[0].mxu0
  %v3244 = vadd.f32 0.0, %v3243
  %v3245 = vpop.f32.mrb[0].mxu0
  %3246 = vmatprep.mubr.f32.mxu0 0.0
  %3247 = vmatmul.mubr.f32.gmra.mrb[0].mxu0 %v2932
  %v3248 = vpop.f32.mrb[0].mxu0
  %v3249 = vadd.f32 0.0, %v3248
  %v3250 = vpop.f32.mrb[0].mxu0
  %3251 = vmatprep.mubr.f32.mxu0 0.0
  %3252 = vmatmul.mubr.f32.gmra.mrb[0].mxu0 %v2933
  %v3253 = vpop.f32.mrb[0].mxu0
  %v3254 = vadd.f32 0.0, %v3253
  %v3255 = vpop.f32.mrb[0].mxu0
  %3256 = vmatprep.mubr.f32.mxu0 0.0
  %3257 = vmatmul.mubr.f32.gmra.mrb[0].mxu0 %v2934
  %v3258 = vpop.f32.mrb[0].mxu0
  %v3259 = vadd.f32 0.0, %v3258
  %v3260 = vpop.f32.mrb[0].mxu0
  %3261 = vmatprep.mubr.f32.mxu0 0.0
  %3262 = vmatmul.mubr.f32.gmra.mrb[0].mxu0 %v2935
  %v3263 = vpop.f32.mrb[0].mxu0
  %v3264 = vadd.f32 0.0, %v3263
  %v3265 = vpop.f32.mrb[0].mxu0
  %3266 = vmatprep.mubr.f32.mxu0 0.0
  %3267 = vmatmul.mubr.f32.gmra.mrb[0].mxu0 %v2936
  %v3268 = vpop.f32.mrb[0].mxu0
  %v3269 = vadd.f32 0.0, %v3268
  %v3270 = vpop.f32.mrb[0].mxu0
  %3271 = vmatprep.mubr.f32.mxu0 0.0
  %3272 = vmatmul.mubr.f32.gmra.mrb[0].mxu0 %v2937
  %v3273 = vpop.f32.mrb[0].mxu0
  %v3274 = vadd.f32 0.0, %v3273
  %v3275 = vpop.f32.mrb[0].mxu0
  %3276 = vmatprep.mubr.f32.mxu0 0.0
  %3277 = vmatmul.mubr.f32.gmra.mrb[0].mxu0 %v2938
  %v3278 = vpop.f32.mrb[0].mxu0
  %v3279 = vadd.f32 0.0, %v3278
  %v3280 = vpop.f32.mrb[0].mxu0
  %3281 = vmatprep.mubr.f32.mxu0 0.0
  %3282 = vmatmul.mubr.f32.gmra.mrb[0].mxu0 %v2939
  %v3283 = vpop.f32.mrb[0].mxu0
  %v3284 = vadd.f32 0.0, %v3283
  %v3285 = vpop.f32.mrb[0].mxu0
  %3286 = vmatprep.mubr.f32.mxu0 0.0
  %3287 = vmatmul.mubr.f32.gmra.mrb[0].mxu0 %v2940
  %v3288 = vpop.f32.mrb[0].mxu0
  %v3289 = vadd.f32 0.0, %v3288
  %v3290 = vpop.f32.mrb[0].mxu0
  %3291 = vmatprep.mubr.f32.mxu0 0.0
  %3292 = vmatmul.mubr.f32.gmra.mrb[0].mxu0 %v2941
  %v3293 = vpop.f32.mrb[0].mxu0
  %v3294 = vadd.f32 0.0, %v3293
  %v3295 = vpop.f32.mrb[0].mxu0
  %3296 = vmatprep.mubr.f32.mxu0 0.0
  %3297 = vmatmul.mubr.f32.gmra.mrb[0].mxu0 %v2942
  %v3298 = vpop.f32.mrb[0].mxu0
  %v3299 = vadd.f32 0.0, %v3298
  %v3300 = vpop.f32.mrb[0].mxu0
  %3301 = vmatprep.mubr.f32.mxu0 0.0
  %3302 = vmatmul.mubr.f32.gmra.mrb[0].mxu0 %v2943
  %v3303 = vpop.f32.mrb[0].mxu0
  %v3304 = vadd.f32 0.0, %v3303
  %v3305 = vpop.f32.mrb[0].mxu0
  %3306 = vmatprep.mubr.f32.mxu0 0.0
  %3307 = vmatmul.mubr.f32.gmra.mrb[0].mxu0 %v2944
  %v3308 = vpop.f32.mrb[0].mxu0
  %v3309 = vadd.f32 0.0, %v3308
  %v3310 = vpop.f32.mrb[0].mxu0
  %3311 = vmatprep.mubr.f32.mxu0 0.0
  %3312 = vmatmul.mubr.f32.gmra.mrb[0].mxu0 %v2945
  %v3313 = vpop.f32.mrb[0].mxu0
  %v3314 = vadd.f32 0.0, %v3313
  %v3315 = vpop.f32.mrb[0].mxu0
  %3316 = vmatprep.mubr.f32.mxu0 0.0
  %3317 = vmatmul.mubr.f32.gmra.mrb[0].mxu0 %v2946
  %v3318 = vpop.f32.mrb[0].mxu0
  %v3319 = vadd.f32 0.0, %v3318
  %v3320 = vpop.f32.mrb[0].mxu0
  %3321 = vmatprep.mubr.f32.mxu0 0.0
  %3322 = vmatmul.mubr.f32.gmra.mrb[0].mxu0 %v2947
  %v3323 = vpop.f32.mrb[0].mxu0
  %v3324 = vadd.f32 0.0, %v3323
  %v3325 = vpop.f32.mrb[0].mxu0
  %3326 = vmatprep.mubr.f32.mxu0 0.0
  %3327 = vmatmul.mubr.f32.gmra.mrb[0].mxu0 %v2948
  %v3328 = vpop.f32.mrb[0].mxu0
  %v3329 = vadd.f32 0.0, %v3328
  %v3330 = vpop.f32.mrb[0].mxu0
  %3331 = vmatprep.mubr.f32.mxu0 0.0
  %3332 = vmatmul.mubr.f32.gmra.mrb[0].mxu0 %v2949
  %v3333 = vpop.f32.mrb[0].mxu0
  %v3334 = vadd.f32 0.0, %v3333
  %v3335 = vpop.f32.mrb[0].mxu0
  %3336 = vmatprep.mubr.f32.mxu0 0.0
  %3337 = vmatmul.mubr.f32.gmra.mrb[0].mxu0 %v2950
  %v3338 = vpop.f32.mrb[0].mxu0
  %v3339 = vadd.f32 0.0, %v3338
  %v3340 = vpop.f32.mrb[0].mxu0
  %3341 = vmatprep.mubr.f32.mxu0 0.0
  %3342 = vmatmul.mubr.f32.gmra.mrb[0].mxu0 %v2951
  %v3343 = vpop.f32.mrb[0].mxu0
  %v3344 = vadd.f32 0.0, %v3343
  %v3345 = vpop.f32.mrb[0].mxu0
  %3346 = vmatprep.mubr.f32.mxu0 0.0
  %3347 = vmatmul.mubr.f32.gmra.mrb[0].mxu0 %v2952
  %v3348 = vpop.f32.mrb[0].mxu0
  %v3349 = vadd.f32 0.0, %v3348
  %v3350 = vpop.f32.mrb[0].mxu0
  %3351 = vmatprep.mubr.f32.mxu0 0.0
  %3352 = vmatmul.mubr.f32.gmra.mrb[0].mxu0 %v2953
  %v3353 = vpop.f32.mrb[0].mxu0
  %v3354 = vadd.f32 0.0, %v3353
  %v3355 = vpop.f32.mrb[0].mxu0
  %3356 = vmatprep.mubr.f32.mxu0 0.0
  %3357 = vmatmul.mubr.f32.gmra.mrb[0].mxu0 %v2954
  %v3358 = vpop.f32.mrb[0].mxu0
  %v3359 = vadd.f32 0.0, %v3358
  %v3360 = vpop.f32.mrb[0].mxu0
  %3361 = vmatprep.mubr.f32.mxu0 0.0
  %3362 = vmatmul.mubr.f32.gmra.mrb[0].mxu0 %v2955
  %v3363 = vpop.f32.mrb[0].mxu0
  %v3364 = vadd.f32 0.0, %v3363
  %v3365 = vpop.f32.mrb[0].mxu0
  %3366 = vmatprep.mubr.f32.mxu0 0.0
  %3367 = vmatmul.mubr.f32.gmra.mrb[0].mxu0 %v2956
  %v3368 = vpop.f32.mrb[0].mxu0
  %v3369 = vadd.f32 0.0, %v3368
  %v3370 = vpop.f32.mrb[0].mxu0
  %3371 = vmatprep.mubr.f32.mxu0 0.0
  %3372 = vmatmul.mubr.f32.gmra.mrb[0].mxu0 %v2957
  %v3373 = vpop.f32.mrb[0].mxu0
  %v3374 = vadd.f32 0.0, %v3373
  %v3375 = vpop.f32.mrb[0].mxu0
  %3376 = vmatprep.mubr.f32.mxu0 0.0
  %3377 = vmatmul.mubr.f32.gmra.mrb[0].mxu0 %v2958
  %v3378 = vpop.f32.mrb[0].mxu0
  %v3379 = vadd.f32 0.0, %v3378
  %v3380 = vpop.f32.mrb[0].mxu0
  %3381 = vmatprep.mubr.f32.mxu0 0.0
  %3382 = vmatmul.mubr.f32.gmra.mrb[0].mxu0 %v2959
  %v3383 = vpop.f32.mrb[0].mxu0
  %v3384 = vadd.f32 0.0, %v3383
  %v3385 = vpop.f32.mrb[0].mxu0
  %3386 = vmatprep.mubr.f32.mxu0 0.0
  %3387 = vmatmul.mubr.f32.gmra.mrb[0].mxu0 %v2960
  %v3388 = vpop.f32.mrb[0].mxu0
  %v3389 = vadd.f32 0.0, %v3388
  %v3390 = vpop.f32.mrb[0].mxu0
  %3391 = vmatprep.mubr.f32.mxu0 0.0
  %3392 = vmatmul.mubr.f32.gmra.mrb[0].mxu0 %v2961
  %v3393 = vpop.f32.mrb[0].mxu0
  %v3394 = vadd.f32 0.0, %v3393
  %v3395 = vpop.f32.mrb[0].mxu0
  %3396 = vmatprep.mubr.f32.mxu0 0.0
  %3397 = vmatmul.mubr.f32.gmra.mrb[0].mxu0 %v2962
  %v3398 = vpop.f32.mrb[0].mxu0
  %v3399 = vadd.f32 0.0, %v3398
  %v3400 = vpop.f32.mrb[0].mxu0
  %3401 = vmatprep.mubr.f32.mxu0 0.0
  %3402 = vmatmul.mubr.f32.gmra.mrb[0].mxu0 %v2963
  %v3403 = vpop.f32.mrb[0].mxu0
  %v3404 = vadd.f32 0.0, %v3403
  %v3405 = vpop.f32.mrb[0].mxu0
  %3406 = vmatprep.mubr.f32.mxu0 0.0
  %3407 = vmatmul.mubr.f32.gmra.mrb[0].mxu0 %v2964
  %v3408 = vpop.f32.mrb[0].mxu0
  %v3409 = vadd.f32 0.0, %v3408
  %v3410 = vpop.f32.mrb[0].mxu0
  %3411 = vmatprep.mubr.f32.mxu0 0.0
  %3412 = vmatmul.mubr.f32.gmra.mrb[0].mxu0 %v2965
  %v3413 = vpop.f32.mrb[0].mxu0
  %v3414 = vadd.f32 0.0, %v3413
  %v3415 = vpop.f32.mrb[0].mxu0
  %3416 = vmatprep.mubr.f32.mxu0 0.0
  %3417 = vmatmul.mubr.f32.gmra.mrb[0].mxu0 %v2966
  %v3418 = vpop.f32.mrb[0].mxu0
  %v3419 = vadd.f32 0.0, %v3418
  %v3420 = vpop.f32.mrb[0].mxu0
  %3421 = vmatprep.mubr.f32.mxu0 0.0
  %3422 = vmatmul.mubr.f32.gmra.mrb[0].mxu0 %v2967
  %v3423 = vpop.f32.mrb[0].mxu0
  %v3424 = vadd.f32 0.0, %v3423
  %v3425 = vpop.f32.mrb[0].mxu0
  %3426 = vmatprep.mubr.f32.mxu0 0.0
  %3427 = vmatmul.mubr.f32.gmra.mrb[0].mxu0 %v2968
  %v3428 = vpop.f32.mrb[0].mxu0
  %v3429 = vadd.f32 0.0, %v3428
  %v3430 = vpop.f32.mrb[0].mxu0
  %3431 = vmatprep.mubr.f32.mxu0 0.0
  %3432 = vmatmul.mubr.f32.gmra.mrb[0].mxu0 %v2969
  %v3433 = vpop.f32.mrb[0].mxu0
  %v3434 = vadd.f32 0.0, %v3433
  %v3435 = vpop.f32.mrb[0].mxu0
  %3436 = vmatprep.mubr.f32.mxu0 0.0
  %3437 = vmatmul.mubr.f32.gmra.mrb[0].mxu0 %v2970
  %v3438 = vpop.f32.mrb[0].mxu0
  %v3439 = vadd.f32 0.0, %v3438
  %v3440 = vpop.f32.mrb[0].mxu0
  %3441 = vmatprep.mubr.f32.mxu0 0.0
  %3442 = vmatmul.mubr.f32.gmra.mrb[0].mxu0 %v2971
  %v3443 = vpop.f32.mrb[0].mxu0
  %v3444 = vadd.f32 0.0, %v3443
  %v3445 = vpop.f32.mrb[0].mxu0
  %3446 = vmatprep.mubr.f32.mxu0 0.0
  %3447 = vmatmul.mubr.f32.gmra.mrb[0].mxu0 %v2972
  %v3448 = vpop.f32.mrb[0].mxu0
  %v3449 = vadd.f32 0.0, %v3448
  %v3450 = vpop.f32.mrb[0].mxu0
  %3451 = vmatprep.mubr.f32.mxu0 0.0
  %3452 = vmatmul.mubr.f32.gmra.mrb[0].mxu0 %v2973
  %v3453 = vpop.f32.mrb[0].mxu0
  %v3454 = vadd.f32 0.0, %v3453
  %v3455 = vpop.f32.mrb[0].mxu0
  %3456 = vmatprep.mubr.f32.mxu0 0.0
  %3457 = vmatmul.mubr.f32.gmra.mrb[0].mxu0 %v2974
  %v3458 = vpop.f32.mrb[0].mxu0
  %v3459 = vadd.f32 0.0, %v3458
  %v3460 = vpop.f32.mrb[0].mxu0
  %3461 = vdwg.mxu0
  %v3462 = vadd.f32 %v2491, %v3059
  %v3463 = vadd.f32 %v2496, %v3064
  %v3464 = vadd.f32 %v2501, %v3069
  %v3465 = vadd.f32 %v2506, %v3074
  %v3466 = vadd.f32 %v2511, %v3079
  %v3467 = vadd.f32 %v2516, %v3084
  %v3468 = vadd.f32 %v2521, %v3089
  %v3469 = vadd.f32 %v2526, %v3094
  %v3470 = vadd.f32 %v2531, %v3099
  %v3471 = vadd.f32 %v2536, %v3104
  %v3472 = vadd.f32 %v2541, %v3109
  %v3473 = vadd.f32 %v2546, %v3114
  %v3474 = vadd.f32 %v2551, %v3119
  %v3475 = vadd.f32 %v2556, %v3124
  %v3476 = vadd.f32 %v2561, %v3129
  %v3477 = vadd.f32 %v2566, %v3134
  %v3478 = vadd.f32 %v2571, %v3139
  %v3479 = vadd.f32 %v2576, %v3144
  %v3480 = vadd.f32 %v2581, %v3149
  %v3481 = vadd.f32 %v2586, %v3154
  %v3482 = vadd.f32 %v2591, %v3159
  %v3483 = vadd.f32 %v2596, %v3164
  %v3484 = vadd.f32 %v2601, %v3169
  %v3485 = vadd.f32 %v2606, %v3174
  %v3486 = vadd.f32 %v2611, %v3179
  %v3487 = vadd.f32 %v2616, %v3184
  %v3488 = vadd.f32 %v2621, %v3189
  %v3489 = vadd.f32 %v2626, %v3194
  %v3490 = vadd.f32 %v2631, %v3199
  %v3491 = vadd.f32 %v2636, %v3204
  %v3492 = vadd.f32 %v2641, %v3209
  %v3493 = vadd.f32 %v2646, %v3214
  %v3494 = vadd.f32 %v2651, %v3219
  %v3495 = vadd.f32 %v2656, %v3224
  %v3496 = vadd.f32 %v2661, %v3229
  %v3497 = vadd.f32 %v2666, %v3234
  %v3498 = vadd.f32 %v2671, %v3239
  %v3499 = vadd.f32 %v2676, %v3244
  %v3500 = vadd.f32 %v2681, %v3249
  %v3501 = vadd.f32 %v2686, %v3254
  %v3502 = vadd.f32 %v2691, %v3259
  %v3503 = vadd.f32 %v2696, %v3264
  %v3504 = vadd.f32 %v2701, %v3269
  %v3505 = vadd.f32 %v2706, %v3274
  %v3506 = vadd.f32 %v2711, %v3279
  %v3507 = vadd.f32 %v2716, %v3284
  %v3508 = vadd.f32 %v2721, %v3289
  %v3509 = vadd.f32 %v2726, %v3294
  %v3510 = vadd.f32 %v2731, %v3299
  %v3511 = vadd.f32 %v2736, %v3304
  %v3512 = vadd.f32 %v2741, %v3309
  %v3513 = vadd.f32 %v2746, %v3314
  %v3514 = vadd.f32 %v2751, %v3319
  %v3515 = vadd.f32 %v2756, %v3324
  %v3516 = vadd.f32 %v2761, %v3329
  %v3517 = vadd.f32 %v2766, %v3334
  %v3518 = vadd.f32 %v2771, %v3339
  %v3519 = vadd.f32 %v2776, %v3344
  %v3520 = vadd.f32 %v2781, %v3349
  %v3521 = vadd.f32 %v2786, %v3354
  %v3522 = vadd.f32 %v2791, %v3359
  %v3523 = vadd.f32 %v2796, %v3364
  %v3524 = vadd.f32 %v2801, %v3369
  %v3525 = vadd.f32 %v2806, %v3374
  %v3526 = vadd.f32 %v2811, %v3379
  %v3527 = vadd.f32 %v2816, %v3384
  %v3528 = vadd.f32 %v2821, %v3389
  %v3529 = vadd.f32 %v2826, %v3394
  %v3530 = vadd.f32 %v2831, %v3399
  %v3531 = vadd.f32 %v2836, %v3404
  %v3532 = vadd.f32 %v2841, %v3409
  %v3533 = vadd.f32 %v2846, %v3414
  %v3534 = vadd.f32 %v2851, %v3419
  %v3535 = vadd.f32 %v2856, %v3424
  %v3536 = vadd.f32 %v2861, %v3429
  %v3537 = vadd.f32 %v2866, %v3434
  %v3538 = vadd.f32 %v2871, %v3439
  %v3539 = vadd.f32 %v2876, %v3444
  %v3540 = vadd.f32 %v2881, %v3449
  %v3541 = vadd.f32 %v2886, %v3454
  %v3542 = vadd.f32 %v2891, %v3459
  %v3543 = vld [vmem:[#allocation2 + $0x17] sm:$0xff]
  %v3544 = vld [vmem:[#allocation2 + $0x1f] sm:$0xff]
  %v3545 = vld [vmem:[#allocation2 + $0x27] sm:$0xff]
  %v3546 = vld [vmem:[#allocation2 + $0x2f] sm:$0xff]
  %v3547 = vld [vmem:[#allocation2 + $0x37] sm:$0xff]
  %v3548 = vld [vmem:[#allocation2 + $0x3f] sm:$0xff]
  %v3549 = vld [vmem:[#allocation2 + $0x47] sm:$0xff]
  %v3550 = vld [vmem:[#allocation2 + $0x4f] sm:$0xff]
  %v3551 = vld [vmem:[#allocation2 + $0x57] sm:$0xff]
  %v3552 = vld [vmem:[#allocation2 + $0x5f] sm:$0xff]
  %v3553 = vld [vmem:[#allocation2 + $0x67] sm:$0xff]
  %v3554 = vld [vmem:[#allocation2 + $0x6f] sm:$0xff]
  %v3555 = vld [vmem:[#allocation2 + $0x77] sm:$0xff]
  %v3556 = vld [vmem:[#allocation2 + $0x7f] sm:$0xff]
  %v3557 = vld [vmem:[#allocation2 + $0x87] sm:$0xff]
  %v3558 = vld [vmem:[#allocation2 + $0x8f] sm:$0xff]
  %v3559 = vld [vmem:[#allocation2 + $0x97] sm:$0xff]
  %v3560 = vld [vmem:[#allocation2 + $0x9f] sm:$0xff]
  %v3561 = vld [vmem:[#allocation2 + $0xa7] sm:$0xff]
  %v3562 = vld [vmem:[#allocation2 + $0xaf] sm:$0xff]
  %v3563 = vld [vmem:[#allocation2 + $0xb7] sm:$0xff]
  %v3564 = vld [vmem:[#allocation2 + $0xbf] sm:$0xff]
  %v3565 = vld [vmem:[#allocation2 + $0xc7] sm:$0xff]
  %v3566 = vld [vmem:[#allocation2 + $0xcf] sm:$0xff]
  %v3567 = vld [vmem:[#allocation2 + $0xd7] sm:$0xff]
  %v3568 = vld [vmem:[#allocation2 + $0xdf] sm:$0xff]
  %v3569 = vld [vmem:[#allocation2 + $0xe7] sm:$0xff]
  %v3570 = vld [vmem:[#allocation2 + $0xef] sm:$0xff]
  %v3571 = vld [vmem:[#allocation2 + $0xf7] sm:$0xff]
  %v3572 = vld [vmem:[#allocation2 + $0xff] sm:$0xff]
  %v3573 = vld [vmem:[#allocation2 + $0x107] sm:$0xff]
  %v3574 = vld [vmem:[#allocation2 + $0x10f] sm:$0xff]
  %v3575 = vld [vmem:[#allocation2 + $0x117] sm:$0xff]
  %v3576 = vld [vmem:[#allocation2 + $0x11f] sm:$0xff]
  %v3577 = vld [vmem:[#allocation2 + $0x127] sm:$0xff]
  %v3578 = vld [vmem:[#allocation2 + $0x12f] sm:$0xff]
  %v3579 = vld [vmem:[#allocation2 + $0x137] sm:$0xff]
  %v3580 = vld [vmem:[#allocation2 + $0x13f] sm:$0xff]
  %v3581 = vld [vmem:[#allocation2 + $0x147] sm:$0xff]
  %v3582 = vld [vmem:[#allocation2 + $0x14f] sm:$0xff]
  %v3583 = vld [vmem:[#allocation2 + $0x157] sm:$0xff]
  %v3584 = vld [vmem:[#allocation2 + $0x15f] sm:$0xff]
  %v3585 = vld [vmem:[#allocation2 + $0x167] sm:$0xff]
  %v3586 = vld [vmem:[#allocation2 + $0x16f] sm:$0xff]
  %v3587 = vld [vmem:[#allocation2 + $0x177] sm:$0xff]
  %v3588 = vld [vmem:[#allocation2 + $0x17f] sm:$0xff]
  %v3589 = vld [vmem:[#allocation2 + $0x187] sm:$0xff]
  %v3590 = vld [vmem:[#allocation2 + $0x18f] sm:$0xff]
  %v3591 = vld [vmem:[#allocation2 + $0x197] sm:$0xff]
  %v3592 = vld [vmem:[#allocation2 + $0x19f] sm:$0xff]
  %v3593 = vld [vmem:[#allocation2 + $0x1a7] sm:$0xff]
  %v3594 = vld [vmem:[#allocation2 + $0x1af] sm:$0xff]
  %v3595 = vld [vmem:[#allocation2 + $0x1b7] sm:$0xff]
  %v3596 = vld [vmem:[#allocation2 + $0x1bf] sm:$0xff]
  %v3597 = vld [vmem:[#allocation2 + $0x1c7] sm:$0xff]
  %v3598 = vld [vmem:[#allocation2 + $0x1cf] sm:$0xff]
  %v3599 = vld [vmem:[#allocation2 + $0x1d7] sm:$0xff]
  %v3600 = vld [vmem:[#allocation2 + $0x1df] sm:$0xff]
  %v3601 = vld [vmem:[#allocation2 + $0x1e7] sm:$0xff]
  %v3602 = vld [vmem:[#allocation2 + $0x1ef] sm:$0xff]
  %v3603 = vld [vmem:[#allocation2 + $0x1f7] sm:$0xff]
  %v3604 = vld [vmem:[#allocation2 + $0x1ff] sm:$0xff]
  %v3605 = vld [vmem:[#allocation2 + $0x207] sm:$0xff]
  %v3606 = vld [vmem:[#allocation2 + $0x20f] sm:$0xff]
  %v3607 = vld [vmem:[#allocation2 + $0x217] sm:$0xff]
  %v3608 = vld [vmem:[#allocation2 + $0x21f] sm:$0xff]
  %v3609 = vld [vmem:[#allocation2 + $0x227] sm:$0xff]
  %v3610 = vld [vmem:[#allocation2 + $0x22f] sm:$0xff]
  %v3611 = vld [vmem:[#allocation2 + $0x237] sm:$0xff]
  %v3612 = vld [vmem:[#allocation2 + $0x23f] sm:$0xff]
  %v3613 = vld [vmem:[#allocation2 + $0x247] sm:$0xff]
  %v3614 = vld [vmem:[#allocation2 + $0x24f] sm:$0xff]
  %v3615 = vld [vmem:[#allocation2 + $0x257] sm:$0xff]
  %v3616 = vld [vmem:[#allocation2 + $0x25f] sm:$0xff]
  %v3617 = vld [vmem:[#allocation2 + $0x267] sm:$0xff]
  %v3618 = vld [vmem:[#allocation2 + $0x26f] sm:$0xff]
  %v3619 = vld [vmem:[#allocation2 + $0x277] sm:$0xff]
  %v3620 = vld [vmem:[#allocation2 + $0x27f] sm:$0xff]
  %v3621 = vld [vmem:[#allocation2 + $0x287] sm:$0xff]
  %v3622 = vld [vmem:[#allocation2 + $0x28f] sm:$0xff]
  %v3623 = vld [vmem:[#allocation2 + $0x297] sm:$0xff]
  %s3624 = scalar_lea.vmem %s2, 384
  %v3625 = vld [vmem:[%s3624] sm:$0xff]
  %v3626 = vld [vmem:[%s3624 + $0x8] sm:$0xff]
  %v3627 = vld [vmem:[%s3624 + $0x10] sm:$0xff]
  %v3628 = vld [vmem:[%s3624 + $0x18] sm:$0xff]
  %v3629 = vld [vmem:[%s3624 + $0x20] sm:$0xff]
  %v3630 = vld [vmem:[%s3624 + $0x28] sm:$0xff]
  %v3631 = vld [vmem:[%s3624 + $0x30] sm:$0xff]
  %v3632 = vld [vmem:[%s3624 + $0x38] sm:$0xff]
  %v3633 = vld [vmem:[%s3624 + $0x40] sm:$0xff]
  %v3634 = vld [vmem:[%s3624 + $0x48] sm:$0xff]
  %v3635 = vld [vmem:[%s3624 + $0x50] sm:$0xff]
  %v3636 = vld [vmem:[%s3624 + $0x58] sm:$0xff]
  %v3637 = vld [vmem:[%s3624 + $0x60] sm:$0xff]
  %v3638 = vld [vmem:[%s3624 + $0x68] sm:$0xff]
  %v3639 = vld [vmem:[%s3624 + $0x70] sm:$0xff]
  %v3640 = vld [vmem:[%s3624 + $0x78] sm:$0xff]
  %3641 = vmatprep.subr.mxu0 0.0
  %3642 = vmatpush1.msra.mxu0 %v3625
  %3643 = vmatprep.subr.mxu0 0.0
  %3644 = vmatpush1.msra.mxu0 %v3626
  %3645 = vmatprep.subr.mxu0 0.0
  %3646 = vmatpush1.msra.mxu0 %v3627
  %3647 = vmatprep.subr.mxu0 0.0
  %3648 = vmatpush1.msra.mxu0 %v3628
  %3649 = vmatprep.subr.mxu0 0.0
  %3650 = vmatpush1.msra.mxu0 %v3629
  %3651 = vmatprep.subr.mxu0 0.0
  %3652 = vmatpush1.msra.mxu0 %v3630
  %3653 = vmatprep.subr.mxu0 0.0
  %3654 = vmatpush1.msra.mxu0 %v3631
  %3655 = vmatprep.subr.mxu0 0.0
  %3656 = vmatpush1.msra.mxu0 %v3632
  %3657 = vmatprep.subr.mxu0 0.0
  %3658 = vmatpush1.msra.mxu0 %v3633
  %3659 = vmatprep.subr.mxu0 0.0
  %3660 = vmatpush1.msra.mxu0 %v3634
  %3661 = vmatprep.subr.mxu0 0.0
  %3662 = vmatpush1.msra.mxu0 %v3635
  %3663 = vmatprep.subr.mxu0 0.0
  %3664 = vmatpush1.msra.mxu0 %v3636
  %3665 = vmatprep.subr.mxu0 0.0
  %3666 = vmatpush1.msra.mxu0 %v3637
  %3667 = vmatprep.subr.mxu0 0.0
  %3668 = vmatpush1.msra.mxu0 %v3638
  %3669 = vmatprep.subr.mxu0 0.0
  %3670 = vmatpush1.msra.mxu0 %v3639
  %3671 = vmatprep.subr.mxu0 0.0
  %3672 = vmatpush1.msra.mxu0 %v3640
  %3673 = vmatprep.subr.mxu0 0.0
  %3674 = vmatpush1.msra.mxu0 0.0
  %3675 = vmatprep.subr.mxu0 0.0
  %3676 = vmatpush1.msra.mxu0 0.0
  %3677 = vmatprep.subr.mxu0 0.0
  %3678 = vmatpush1.msra.mxu0 0.0
  %3679 = vmatprep.subr.mxu0 0.0
  %3680 = vmatpush1.msra.mxu0 0.0
  %3681 = vmatprep.subr.mxu0 0.0
  %3682 = vmatpush1.msra.mxu0 0.0
  %3683 = vmatprep.subr.mxu0 0.0
  %3684 = vmatpush1.msra.mxu0 0.0
  %3685 = vmatprep.subr.mxu0 0.0
  %3686 = vmatpush1.msra.mxu0 0.0
  %3687 = vmatprep.subr.mxu0 0.0
  %3688 = vmatpush1.msra.mxu0 0.0
  %3689 = vmatprep.subr.mxu0 0.0
  %3690 = vmatpush1.msra.mxu0 0.0
  %3691 = vmatprep.subr.mxu0 0.0
  %3692 = vmatpush1.msra.mxu0 0.0
  %3693 = vmatprep.subr.mxu0 0.0
  %3694 = vmatpush1.msra.mxu0 0.0
  %3695 = vmatprep.subr.mxu0 0.0
  %3696 = vmatpush1.msra.mxu0 0.0
  %3697 = vmatprep.subr.mxu0 0.0
  %3698 = vmatpush1.msra.mxu0 0.0
  %3699 = vmatprep.subr.mxu0 0.0
  %3700 = vmatpush1.msra.mxu0 0.0
  %3701 = vmatprep.subr.mxu0 0.0
  %3702 = vmatpush1.msra.mxu0 0.0
  %3703 = vmatprep.subr.mxu0 0.0
  %3704 = vmatpush1.msra.mxu0 0.0
  %3705 = vmatprep.mubr.f32.mxu0 0.0
  %3706 = vmatmul.mubr.f32.gmra.mrb[0].mxu0 %v3543
  %v3707 = vpop.f32.mrb[0].mxu0
  %v3708 = vadd.f32 0.0, %v3707
  %v3709 = vpop.f32.mrb[0].mxu0
  %3710 = vmatprep.mubr.f32.mxu0 0.0
  %3711 = vmatmul.mubr.f32.gmra.mrb[0].mxu0 %v3544
  %v3712 = vpop.f32.mrb[0].mxu0
  %v3713 = vadd.f32 0.0, %v3712
  %v3714 = vpop.f32.mrb[0].mxu0
  %3715 = vmatprep.mubr.f32.mxu0 0.0
  %3716 = vmatmul.mubr.f32.gmra.mrb[0].mxu0 %v3545
  %v3717 = vpop.f32.mrb[0].mxu0
  %v3718 = vadd.f32 0.0, %v3717
  %v3719 = vpop.f32.mrb[0].mxu0
  %3720 = vmatprep.mubr.f32.mxu0 0.0
  %3721 = vmatmul.mubr.f32.gmra.mrb[0].mxu0 %v3546
  %v3722 = vpop.f32.mrb[0].mxu0
  %v3723 = vadd.f32 0.0, %v3722
  %v3724 = vpop.f32.mrb[0].mxu0
  %3725 = vmatprep.mubr.f32.mxu0 0.0
  %3726 = vmatmul.mubr.f32.gmra.mrb[0].mxu0 %v3547
  %v3727 = vpop.f32.mrb[0].mxu0
  %v3728 = vadd.f32 0.0, %v3727
  %v3729 = vpop.f32.mrb[0].mxu0
  %3730 = vmatprep.mubr.f32.mxu0 0.0
  %3731 = vmatmul.mubr.f32.gmra.mrb[0].mxu0 %v3548
  %v3732 = vpop.f32.mrb[0].mxu0
  %v3733 = vadd.f32 0.0, %v3732
  %v3734 = vpop.f32.mrb[0].mxu0
  %3735 = vmatprep.mubr.f32.mxu0 0.0
  %3736 = vmatmul.mubr.f32.gmra.mrb[0].mxu0 %v3549
  %v3737 = vpop.f32.mrb[0].mxu0
  %v3738 = vadd.f32 0.0, %v3737
  %v3739 = vpop.f32.mrb[0].mxu0
  %3740 = vmatprep.mubr.f32.mxu0 0.0
  %3741 = vmatmul.mubr.f32.gmra.mrb[0].mxu0 %v3550
  %v3742 = vpop.f32.mrb[0].mxu0
  %v3743 = vadd.f32 0.0, %v3742
  %v3744 = vpop.f32.mrb[0].mxu0
  %3745 = vmatprep.mubr.f32.mxu0 0.0
  %3746 = vmatmul.mubr.f32.gmra.mrb[0].mxu0 %v3551
  %v3747 = vpop.f32.mrb[0].mxu0
  %v3748 = vadd.f32 0.0, %v3747
  %v3749 = vpop.f32.mrb[0].mxu0
  %3750 = vmatprep.mubr.f32.mxu0 0.0
  %3751 = vmatmul.mubr.f32.gmra.mrb[0].mxu0 %v3552
  %v3752 = vpop.f32.mrb[0].mxu0
  %v3753 = vadd.f32 0.0, %v3752
  %v3754 = vpop.f32.mrb[0].mxu0
  %3755 = vmatprep.mubr.f32.mxu0 0.0
  %3756 = vmatmul.mubr.f32.gmra.mrb[0].mxu0 %v3553
  %v3757 = vpop.f32.mrb[0].mxu0
  %v3758 = vadd.f32 0.0, %v3757
  %v3759 = vpop.f32.mrb[0].mxu0
  %3760 = vmatprep.mubr.f32.mxu0 0.0
  %3761 = vmatmul.mubr.f32.gmra.mrb[0].mxu0 %v3554
  %v3762 = vpop.f32.mrb[0].mxu0
  %v3763 = vadd.f32 0.0, %v3762
  %v3764 = vpop.f32.mrb[0].mxu0
  %3765 = vmatprep.mubr.f32.mxu0 0.0
  %3766 = vmatmul.mubr.f32.gmra.mrb[0].mxu0 %v3555
  %v3767 = vpop.f32.mrb[0].mxu0
  %v3768 = vadd.f32 0.0, %v3767
  %v3769 = vpop.f32.mrb[0].mxu0
  %3770 = vmatprep.mubr.f32.mxu0 0.0
  %3771 = vmatmul.mubr.f32.gmra.mrb[0].mxu0 %v3556
  %v3772 = vpop.f32.mrb[0].mxu0
  %v3773 = vadd.f32 0.0, %v3772
  %v3774 = vpop.f32.mrb[0].mxu0
  %3775 = vmatprep.mubr.f32.mxu0 0.0
  %3776 = vmatmul.mubr.f32.gmra.mrb[0].mxu0 %v3557
  %v3777 = vpop.f32.mrb[0].mxu0
  %v3778 = vadd.f32 0.0, %v3777
  %v3779 = vpop.f32.mrb[0].mxu0
  %3780 = vmatprep.mubr.f32.mxu0 0.0
  %3781 = vmatmul.mubr.f32.gmra.mrb[0].mxu0 %v3558
  %v3782 = vpop.f32.mrb[0].mxu0
  %v3783 = vadd.f32 0.0, %v3782
  %v3784 = vpop.f32.mrb[0].mxu0
  %3785 = vmatprep.mubr.f32.mxu0 0.0
  %3786 = vmatmul.mubr.f32.gmra.mrb[0].mxu0 %v3559
  %v3787 = vpop.f32.mrb[0].mxu0
  %v3788 = vadd.f32 0.0, %v3787
  %v3789 = vpop.f32.mrb[0].mxu0
  %3790 = vmatprep.mubr.f32.mxu0 0.0
  %3791 = vmatmul.mubr.f32.gmra.mrb[0].mxu0 %v3560
  %v3792 = vpop.f32.mrb[0].mxu0
  %v3793 = vadd.f32 0.0, %v3792
  %v3794 = vpop.f32.mrb[0].mxu0
  %3795 = vmatprep.mubr.f32.mxu0 0.0
  %3796 = vmatmul.mubr.f32.gmra.mrb[0].mxu0 %v3561
  %v3797 = vpop.f32.mrb[0].mxu0
  %v3798 = vadd.f32 0.0, %v3797
  %v3799 = vpop.f32.mrb[0].mxu0
  %3800 = vmatprep.mubr.f32.mxu0 0.0
  %3801 = vmatmul.mubr.f32.gmra.mrb[0].mxu0 %v3562
  %v3802 = vpop.f32.mrb[0].mxu0
  %v3803 = vadd.f32 0.0, %v3802
  %v3804 = vpop.f32.mrb[0].mxu0
  %3805 = vmatprep.mubr.f32.mxu0 0.0
  %3806 = vmatmul.mubr.f32.gmra.mrb[0].mxu0 %v3563
  %v3807 = vpop.f32.mrb[0].mxu0
  %v3808 = vadd.f32 0.0, %v3807
  %v3809 = vpop.f32.mrb[0].mxu0
  %3810 = vmatprep.mubr.f32.mxu0 0.0
  %3811 = vmatmul.mubr.f32.gmra.mrb[0].mxu0 %v3564
  %v3812 = vpop.f32.mrb[0].mxu0
  %v3813 = vadd.f32 0.0, %v3812
  %v3814 = vpop.f32.mrb[0].mxu0
  %3815 = vmatprep.mubr.f32.mxu0 0.0
  %3816 = vmatmul.mubr.f32.gmra.mrb[0].mxu0 %v3565
  %v3817 = vpop.f32.mrb[0].mxu0
  %v3818 = vadd.f32 0.0, %v3817
  %v3819 = vpop.f32.mrb[0].mxu0
  %3820 = vmatprep.mubr.f32.mxu0 0.0
  %3821 = vmatmul.mubr.f32.gmra.mrb[0].mxu0 %v3566
  %v3822 = vpop.f32.mrb[0].mxu0
  %v3823 = vadd.f32 0.0, %v3822
  %v3824 = vpop.f32.mrb[0].mxu0
  %3825 = vmatprep.mubr.f32.mxu0 0.0
  %3826 = vmatmul.mubr.f32.gmra.mrb[0].mxu0 %v3567
  %v3827 = vpop.f32.mrb[0].mxu0
  %v3828 = vadd.f32 0.0, %v3827
  %v3829 = vpop.f32.mrb[0].mxu0
  %3830 = vmatprep.mubr.f32.mxu0 0.0
  %3831 = vmatmul.mubr.f32.gmra.mrb[0].mxu0 %v3568
  %v3832 = vpop.f32.mrb[0].mxu0
  %v3833 = vadd.f32 0.0, %v3832
  %v3834 = vpop.f32.mrb[0].mxu0
  %3835 = vmatprep.mubr.f32.mxu0 0.0
  %3836 = vmatmul.mubr.f32.gmra.mrb[0].mxu0 %v3569
  %v3837 = vpop.f32.mrb[0].mxu0
  %v3838 = vadd.f32 0.0, %v3837
  %v3839 = vpop.f32.mrb[0].mxu0
  %3840 = vmatprep.mubr.f32.mxu0 0.0
  %3841 = vmatmul.mubr.f32.gmra.mrb[0].mxu0 %v3570
  %v3842 = vpop.f32.mrb[0].mxu0
  %v3843 = vadd.f32 0.0, %v3842
  %v3844 = vpop.f32.mrb[0].mxu0
  %3845 = vmatprep.mubr.f32.mxu0 0.0
  %3846 = vmatmul.mubr.f32.gmra.mrb[0].mxu0 %v3571
  %v3847 = vpop.f32.mrb[0].mxu0
  %v3848 = vadd.f32 0.0, %v3847
  %v3849 = vpop.f32.mrb[0].mxu0
  %3850 = vmatprep.mubr.f32.mxu0 0.0
  %3851 = vmatmul.mubr.f32.gmra.mrb[0].mxu0 %v3572
  %v3852 = vpop.f32.mrb[0].mxu0
  %v3853 = vadd.f32 0.0, %v3852
  %v3854 = vpop.f32.mrb[0].mxu0
  %3855 = vmatprep.mubr.f32.mxu0 0.0
  %3856 = vmatmul.mubr.f32.gmra.mrb[0].mxu0 %v3573
  %v3857 = vpop.f32.mrb[0].mxu0
  %v3858 = vadd.f32 0.0, %v3857
  %v3859 = vpop.f32.mrb[0].mxu0
  %3860 = vmatprep.mubr.f32.mxu0 0.0
  %3861 = vmatmul.mubr.f32.gmra.mrb[0].mxu0 %v3574
  %v3862 = vpop.f32.mrb[0].mxu0
  %v3863 = vadd.f32 0.0, %v3862
  %v3864 = vpop.f32.mrb[0].mxu0
  %3865 = vmatprep.mubr.f32.mxu0 0.0
  %3866 = vmatmul.mubr.f32.gmra.mrb[0].mxu0 %v3575
  %v3867 = vpop.f32.mrb[0].mxu0
  %v3868 = vadd.f32 0.0, %v3867
  %v3869 = vpop.f32.mrb[0].mxu0
  %3870 = vmatprep.mubr.f32.mxu0 0.0
  %3871 = vmatmul.mubr.f32.gmra.mrb[0].mxu0 %v3576
  %v3872 = vpop.f32.mrb[0].mxu0
  %v3873 = vadd.f32 0.0, %v3872
  %v3874 = vpop.f32.mrb[0].mxu0
  %3875 = vmatprep.mubr.f32.mxu0 0.0
  %3876 = vmatmul.mubr.f32.gmra.mrb[0].mxu0 %v3577
  %v3877 = vpop.f32.mrb[0].mxu0
  %v3878 = vadd.f32 0.0, %v3877
  %v3879 = vpop.f32.mrb[0].mxu0
  %3880 = vmatprep.mubr.f32.mxu0 0.0
  %3881 = vmatmul.mubr.f32.gmra.mrb[0].mxu0 %v3578
  %v3882 = vpop.f32.mrb[0].mxu0
  %v3883 = vadd.f32 0.0, %v3882
  %v3884 = vpop.f32.mrb[0].mxu0
  %3885 = vmatprep.mubr.f32.mxu0 0.0
  %3886 = vmatmul.mubr.f32.gmra.mrb[0].mxu0 %v3579
  %v3887 = vpop.f32.mrb[0].mxu0
  %v3888 = vadd.f32 0.0, %v3887
  %v3889 = vpop.f32.mrb[0].mxu0
  %3890 = vmatprep.mubr.f32.mxu0 0.0
  %3891 = vmatmul.mubr.f32.gmra.mrb[0].mxu0 %v3580
  %v3892 = vpop.f32.mrb[0].mxu0
  %v3893 = vadd.f32 0.0, %v3892
  %v3894 = vpop.f32.mrb[0].mxu0
  %3895 = vmatprep.mubr.f32.mxu0 0.0
  %3896 = vmatmul.mubr.f32.gmra.mrb[0].mxu0 %v3581
  %v3897 = vpop.f32.mrb[0].mxu0
  %v3898 = vadd.f32 0.0, %v3897
  %v3899 = vpop.f32.mrb[0].mxu0
  %3900 = vmatprep.mubr.f32.mxu0 0.0
  %3901 = vmatmul.mubr.f32.gmra.mrb[0].mxu0 %v3582
  %v3902 = vpop.f32.mrb[0].mxu0
  %v3903 = vadd.f32 0.0, %v3902
  %v3904 = vpop.f32.mrb[0].mxu0
  %3905 = vmatprep.mubr.f32.mxu0 0.0
  %3906 = vmatmul.mubr.f32.gmra.mrb[0].mxu0 %v3583
  %v3907 = vpop.f32.mrb[0].mxu0
  %v3908 = vadd.f32 0.0, %v3907
  %v3909 = vpop.f32.mrb[0].mxu0
  %3910 = vmatprep.mubr.f32.mxu0 0.0
  %3911 = vmatmul.mubr.f32.gmra.mrb[0].mxu0 %v3584
  %v3912 = vpop.f32.mrb[0].mxu0
  %v3913 = vadd.f32 0.0, %v3912
  %v3914 = vpop.f32.mrb[0].mxu0
  %3915 = vmatprep.mubr.f32.mxu0 0.0
  %3916 = vmatmul.mubr.f32.gmra.mrb[0].mxu0 %v3585
  %v3917 = vpop.f32.mrb[0].mxu0
  %v3918 = vadd.f32 0.0, %v3917
  %v3919 = vpop.f32.mrb[0].mxu0
  %3920 = vmatprep.mubr.f32.mxu0 0.0
  %3921 = vmatmul.mubr.f32.gmra.mrb[0].mxu0 %v3586
  %v3922 = vpop.f32.mrb[0].mxu0
  %v3923 = vadd.f32 0.0, %v3922
  %v3924 = vpop.f32.mrb[0].mxu0
  %3925 = vmatprep.mubr.f32.mxu0 0.0
  %3926 = vmatmul.mubr.f32.gmra.mrb[0].mxu0 %v3587
  %v3927 = vpop.f32.mrb[0].mxu0
  %v3928 = vadd.f32 0.0, %v3927
  %v3929 = vpop.f32.mrb[0].mxu0
  %3930 = vmatprep.mubr.f32.mxu0 0.0
  %3931 = vmatmul.mubr.f32.gmra.mrb[0].mxu0 %v3588
  %v3932 = vpop.f32.mrb[0].mxu0
  %v3933 = vadd.f32 0.0, %v3932
  %v3934 = vpop.f32.mrb[0].mxu0
  %3935 = vmatprep.mubr.f32.mxu0 0.0
  %3936 = vmatmul.mubr.f32.gmra.mrb[0].mxu0 %v3589
  %v3937 = vpop.f32.mrb[0].mxu0
  %v3938 = vadd.f32 0.0, %v3937
  %v3939 = vpop.f32.mrb[0].mxu0
  %3940 = vmatprep.mubr.f32.mxu0 0.0
  %3941 = vmatmul.mubr.f32.gmra.mrb[0].mxu0 %v3590
  %v3942 = vpop.f32.mrb[0].mxu0
  %v3943 = vadd.f32 0.0, %v3942
  %v3944 = vpop.f32.mrb[0].mxu0
  %3945 = vmatprep.mubr.f32.mxu0 0.0
  %3946 = vmatmul.mubr.f32.gmra.mrb[0].mxu0 %v3591
  %v3947 = vpop.f32.mrb[0].mxu0
  %v3948 = vadd.f32 0.0, %v3947
  %v3949 = vpop.f32.mrb[0].mxu0
  %3950 = vmatprep.mubr.f32.mxu0 0.0
  %3951 = vmatmul.mubr.f32.gmra.mrb[0].mxu0 %v3592
  %v3952 = vpop.f32.mrb[0].mxu0
  %v3953 = vadd.f32 0.0, %v3952
  %v3954 = vpop.f32.mrb[0].mxu0
  %3955 = vmatprep.mubr.f32.mxu0 0.0
  %3956 = vmatmul.mubr.f32.gmra.mrb[0].mxu0 %v3593
  %v3957 = vpop.f32.mrb[0].mxu0
  %v3958 = vadd.f32 0.0, %v3957
  %v3959 = vpop.f32.mrb[0].mxu0
  %3960 = vmatprep.mubr.f32.mxu0 0.0
  %3961 = vmatmul.mubr.f32.gmra.mrb[0].mxu0 %v3594
  %v3962 = vpop.f32.mrb[0].mxu0
  %v3963 = vadd.f32 0.0, %v3962
  %v3964 = vpop.f32.mrb[0].mxu0
  %3965 = vmatprep.mubr.f32.mxu0 0.0
  %3966 = vmatmul.mubr.f32.gmra.mrb[0].mxu0 %v3595
  %v3967 = vpop.f32.mrb[0].mxu0
  %v3968 = vadd.f32 0.0, %v3967
  %v3969 = vpop.f32.mrb[0].mxu0
  %3970 = vmatprep.mubr.f32.mxu0 0.0
  %3971 = vmatmul.mubr.f32.gmra.mrb[0].mxu0 %v3596
  %v3972 = vpop.f32.mrb[0].mxu0
  %v3973 = vadd.f32 0.0, %v3972
  %v3974 = vpop.f32.mrb[0].mxu0
  %3975 = vmatprep.mubr.f32.mxu0 0.0
  %3976 = vmatmul.mubr.f32.gmra.mrb[0].mxu0 %v3597
  %v3977 = vpop.f32.mrb[0].mxu0
  %v3978 = vadd.f32 0.0, %v3977
  %v3979 = vpop.f32.mrb[0].mxu0
  %3980 = vmatprep.mubr.f32.mxu0 0.0
  %3981 = vmatmul.mubr.f32.gmra.mrb[0].mxu0 %v3598
  %v3982 = vpop.f32.mrb[0].mxu0
  %v3983 = vadd.f32 0.0, %v3982
  %v3984 = vpop.f32.mrb[0].mxu0
  %3985 = vmatprep.mubr.f32.mxu0 0.0
  %3986 = vmatmul.mubr.f32.gmra.mrb[0].mxu0 %v3599
  %v3987 = vpop.f32.mrb[0].mxu0
  %v3988 = vadd.f32 0.0, %v3987
  %v3989 = vpop.f32.mrb[0].mxu0
  %3990 = vmatprep.mubr.f32.mxu0 0.0
  %3991 = vmatmul.mubr.f32.gmra.mrb[0].mxu0 %v3600
  %v3992 = vpop.f32.mrb[0].mxu0
  %v3993 = vadd.f32 0.0, %v3992
  %v3994 = vpop.f32.mrb[0].mxu0
  %3995 = vmatprep.mubr.f32.mxu0 0.0
  %3996 = vmatmul.mubr.f32.gmra.mrb[0].mxu0 %v3601
  %v3997 = vpop.f32.mrb[0].mxu0
  %v3998 = vadd.f32 0.0, %v3997
  %v3999 = vpop.f32.mrb[0].mxu0
  %4000 = vmatprep.mubr.f32.mxu0 0.0
  %4001 = vmatmul.mubr.f32.gmra.mrb[0].mxu0 %v3602
  %v4002 = vpop.f32.mrb[0].mxu0
  %v4003 = vadd.f32 0.0, %v4002
  %v4004 = vpop.f32.mrb[0].mxu0
  %4005 = vmatprep.mubr.f32.mxu0 0.0
  %4006 = vmatmul.mubr.f32.gmra.mrb[0].mxu0 %v3603
  %v4007 = vpop.f32.mrb[0].mxu0
  %v4008 = vadd.f32 0.0, %v4007
  %v4009 = vpop.f32.mrb[0].mxu0
  %4010 = vmatprep.mubr.f32.mxu0 0.0
  %4011 = vmatmul.mubr.f32.gmra.mrb[0].mxu0 %v3604
  %v4012 = vpop.f32.mrb[0].mxu0
  %v4013 = vadd.f32 0.0, %v4012
  %v4014 = vpop.f32.mrb[0].mxu0
  %4015 = vmatprep.mubr.f32.mxu0 0.0
  %4016 = vmatmul.mubr.f32.gmra.mrb[0].mxu0 %v3605
  %v4017 = vpop.f32.mrb[0].mxu0
  %v4018 = vadd.f32 0.0, %v4017
  %v4019 = vpop.f32.mrb[0].mxu0
  %4020 = vmatprep.mubr.f32.mxu0 0.0
  %4021 = vmatmul.mubr.f32.gmra.mrb[0].mxu0 %v3606
  %v4022 = vpop.f32.mrb[0].mxu0
  %v4023 = vadd.f32 0.0, %v4022
  %v4024 = vpop.f32.mrb[0].mxu0
  %4025 = vmatprep.mubr.f32.mxu0 0.0
  %4026 = vmatmul.mubr.f32.gmra.mrb[0].mxu0 %v3607
  %v4027 = vpop.f32.mrb[0].mxu0
  %v4028 = vadd.f32 0.0, %v4027
  %v4029 = vpop.f32.mrb[0].mxu0
  %4030 = vmatprep.mubr.f32.mxu0 0.0
  %4031 = vmatmul.mubr.f32.gmra.mrb[0].mxu0 %v3608
  %v4032 = vpop.f32.mrb[0].mxu0
  %v4033 = vadd.f32 0.0, %v4032
  %v4034 = vpop.f32.mrb[0].mxu0
  %4035 = vmatprep.mubr.f32.mxu0 0.0
  %4036 = vmatmul.mubr.f32.gmra.mrb[0].mxu0 %v3609
  %v4037 = vpop.f32.mrb[0].mxu0
  %v4038 = vadd.f32 0.0, %v4037
  %v4039 = vpop.f32.mrb[0].mxu0
  %4040 = vmatprep.mubr.f32.mxu0 0.0
  %4041 = vmatmul.mubr.f32.gmra.mrb[0].mxu0 %v3610
  %v4042 = vpop.f32.mrb[0].mxu0
  %v4043 = vadd.f32 0.0, %v4042
  %v4044 = vpop.f32.mrb[0].mxu0
  %4045 = vmatprep.mubr.f32.mxu0 0.0
  %4046 = vmatmul.mubr.f32.gmra.mrb[0].mxu0 %v3611
  %v4047 = vpop.f32.mrb[0].mxu0
  %v4048 = vadd.f32 0.0, %v4047
  %v4049 = vpop.f32.mrb[0].mxu0
  %4050 = vmatprep.mubr.f32.mxu0 0.0
  %4051 = vmatmul.mubr.f32.gmra.mrb[0].mxu0 %v3612
  %v4052 = vpop.f32.mrb[0].mxu0
  %v4053 = vadd.f32 0.0, %v4052
  %v4054 = vpop.f32.mrb[0].mxu0
  %4055 = vmatprep.mubr.f32.mxu0 0.0
  %4056 = vmatmul.mubr.f32.gmra.mrb[0].mxu0 %v3613
  %v4057 = vpop.f32.mrb[0].mxu0
  %v4058 = vadd.f32 0.0, %v4057
  %v4059 = vpop.f32.mrb[0].mxu0
  %4060 = vmatprep.mubr.f32.mxu0 0.0
  %4061 = vmatmul.mubr.f32.gmra.mrb[0].mxu0 %v3614
  %v4062 = vpop.f32.mrb[0].mxu0
  %v4063 = vadd.f32 0.0, %v4062
  %v4064 = vpop.f32.mrb[0].mxu0
  %4065 = vmatprep.mubr.f32.mxu0 0.0
  %4066 = vmatmul.mubr.f32.gmra.mrb[0].mxu0 %v3615
  %v4067 = vpop.f32.mrb[0].mxu0
  %v4068 = vadd.f32 0.0, %v4067
  %v4069 = vpop.f32.mrb[0].mxu0
  %4070 = vmatprep.mubr.f32.mxu0 0.0
  %4071 = vmatmul.mubr.f32.gmra.mrb[0].mxu0 %v3616
  %v4072 = vpop.f32.mrb[0].mxu0
  %v4073 = vadd.f32 0.0, %v4072
  %v4074 = vpop.f32.mrb[0].mxu0
  %4075 = vmatprep.mubr.f32.mxu0 0.0
  %4076 = vmatmul.mubr.f32.gmra.mrb[0].mxu0 %v3617
  %v4077 = vpop.f32.mrb[0].mxu0
  %v4078 = vadd.f32 0.0, %v4077
  %v4079 = vpop.f32.mrb[0].mxu0
  %4080 = vmatprep.mubr.f32.mxu0 0.0
  %4081 = vmatmul.mubr.f32.gmra.mrb[0].mxu0 %v3618
  %v4082 = vpop.f32.mrb[0].mxu0
  %v4083 = vadd.f32 0.0, %v4082
  %v4084 = vpop.f32.mrb[0].mxu0
  %4085 = vmatprep.mubr.f32.mxu0 0.0
  %4086 = vmatmul.mubr.f32.gmra.mrb[0].mxu0 %v3619
  %v4087 = vpop.f32.mrb[0].mxu0
  %v4088 = vadd.f32 0.0, %v4087
  %v4089 = vpop.f32.mrb[0].mxu0
  %4090 = vmatprep.mubr.f32.mxu0 0.0
  %4091 = vmatmul.mubr.f32.gmra.mrb[0].mxu0 %v3620
  %v4092 = vpop.f32.mrb[0].mxu0
  %v4093 = vadd.f32 0.0, %v4092
  %v4094 = vpop.f32.mrb[0].mxu0
  %4095 = vmatprep.mubr.f32.mxu0 0.0
  %4096 = vmatmul.mubr.f32.gmra.mrb[0].mxu0 %v3621
  %v4097 = vpop.f32.mrb[0].mxu0
  %v4098 = vadd.f32 0.0, %v4097
  %v4099 = vpop.f32.mrb[0].mxu0
  %4100 = vmatprep.mubr.f32.mxu0 0.0
  %4101 = vmatmul.mubr.f32.gmra.mrb[0].mxu0 %v3622
  %v4102 = vpop.f32.mrb[0].mxu0
  %v4103 = vadd.f32 0.0, %v4102
  %v4104 = vpop.f32.mrb[0].mxu0
  %4105 = vmatprep.mubr.f32.mxu0 0.0
  %4106 = vmatmul.mubr.f32.gmra.mrb[0].mxu0 %v3623
  %v4107 = vpop.f32.mrb[0].mxu0
  %v4108 = vadd.f32 0.0, %v4107
  %v4109 = vpop.f32.mrb[0].mxu0
  %4110 = vdwg.mxu0
  %v4111 = vadd.f32 %v3462, %v3708
  %v4112 = vadd.f32 %v3463, %v3713
  %v4113 = vadd.f32 %v3464, %v3718
  %v4114 = vadd.f32 %v3465, %v3723
  %v4115 = vadd.f32 %v3466, %v3728
  %v4116 = vadd.f32 %v3467, %v3733
  %v4117 = vadd.f32 %v3468, %v3738
  %v4118 = vadd.f32 %v3469, %v3743
  %v4119 = vadd.f32 %v3470, %v3748
  %v4120 = vadd.f32 %v3471, %v3753
  %v4121 = vadd.f32 %v3472, %v3758
  %v4122 = vadd.f32 %v3473, %v3763
  %v4123 = vadd.f32 %v3474, %v3768
  %v4124 = vadd.f32 %v3475, %v3773
  %v4125 = vadd.f32 %v3476, %v3778
  %v4126 = vadd.f32 %v3477, %v3783
  %v4127 = vadd.f32 %v3478, %v3788
  %v4128 = vadd.f32 %v3479, %v3793
  %v4129 = vadd.f32 %v3480, %v3798
  %v4130 = vadd.f32 %v3481, %v3803
  %v4131 = vadd.f32 %v3482, %v3808
  %v4132 = vadd.f32 %v3483, %v3813
  %v4133 = vadd.f32 %v3484, %v3818
  %v4134 = vadd.f32 %v3485, %v3823
  %v4135 = vadd.f32 %v3486, %v3828
  %v4136 = vadd.f32 %v3487, %v3833
  %v4137 = vadd.f32 %v3488, %v3838
  %v4138 = vadd.f32 %v3489, %v3843
  %v4139 = vadd.f32 %v3490, %v3848
  %v4140 = vadd.f32 %v3491, %v3853
  %v4141 = vadd.f32 %v3492, %v3858
  %v4142 = vadd.f32 %v3493, %v3863
  %v4143 = vadd.f32 %v3494, %v3868
  %v4144 = vadd.f32 %v3495, %v3873
  %v4145 = vadd.f32 %v3496, %v3878
  %v4146 = vadd.f32 %v3497, %v3883
  %v4147 = vadd.f32 %v3498, %v3888
  %v4148 = vadd.f32 %v3499, %v3893
  %v4149 = vadd.f32 %v3500, %v3898
  %v4150 = vadd.f32 %v3501, %v3903
  %v4151 = vadd.f32 %v3502, %v3908
  %v4152 = vadd.f32 %v3503, %v3913
  %v4153 = vadd.f32 %v3504, %v3918
  %v4154 = vadd.f32 %v3505, %v3923
  %v4155 = vadd.f32 %v3506, %v3928
  %v4156 = vadd.f32 %v3507, %v3933
  %v4157 = vadd.f32 %v3508, %v3938
  %v4158 = vadd.f32 %v3509, %v3943
  %v4159 = vadd.f32 %v3510, %v3948
  %v4160 = vadd.f32 %v3511, %v3953
  %v4161 = vadd.f32 %v3512, %v3958
  %v4162 = vadd.f32 %v3513, %v3963
  %v4163 = vadd.f32 %v3514, %v3968
  %v4164 = vadd.f32 %v3515, %v3973
  %v4165 = vadd.f32 %v3516, %v3978
  %v4166 = vadd.f32 %v3517, %v3983
  %v4167 = vadd.f32 %v3518, %v3988
  %v4168 = vadd.f32 %v3519, %v3993
  %v4169 = vadd.f32 %v3520, %v3998
  %v4170 = vadd.f32 %v3521, %v4003
  %v4171 = vadd.f32 %v3522, %v4008
  %v4172 = vadd.f32 %v3523, %v4013
  %v4173 = vadd.f32 %v3524, %v4018
  %v4174 = vadd.f32 %v3525, %v4023
  %v4175 = vadd.f32 %v3526, %v4028
  %v4176 = vadd.f32 %v3527, %v4033
  %v4177 = vadd.f32 %v3528, %v4038
  %v4178 = vadd.f32 %v3529, %v4043
  %v4179 = vadd.f32 %v3530, %v4048
  %v4180 = vadd.f32 %v3531, %v4053
  %v4181 = vadd.f32 %v3532, %v4058
  %v4182 = vadd.f32 %v3533, %v4063
  %v4183 = vadd.f32 %v3534, %v4068
  %v4184 = vadd.f32 %v3535, %v4073
  %v4185 = vadd.f32 %v3536, %v4078
  %v4186 = vadd.f32 %v3537, %v4083
  %v4187 = vadd.f32 %v3538, %v4088
  %v4188 = vadd.f32 %v3539, %v4093
  %v4189 = vadd.f32 %v3540, %v4098
  %v4190 = vadd.f32 %v3541, %v4103
  %v4191 = vadd.f32 %v3542, %v4108
  %v4192 = vld [vmem:[#allocation2 + $0x18] sm:$0xff]
  %v4193 = vld [vmem:[#allocation2 + $0x20] sm:$0xff]
  %v4194 = vld [vmem:[#allocation2 + $0x28] sm:$0xff]
  %v4195 = vld [vmem:[#allocation2 + $0x30] sm:$0xff]
  %v4196 = vld [vmem:[#allocation2 + $0x38] sm:$0xff]
  %v4197 = vld [vmem:[#allocation2 + $0x40] sm:$0xff]
  %v4198 = vld [vmem:[#allocation2 + $0x48] sm:$0xff]
  %v4199 = vld [vmem:[#allocation2 + $0x50] sm:$0xff]
  %v4200 = vld [vmem:[#allocation2 + $0x58] sm:$0xff]
  %v4201 = vld [vmem:[#allocation2 + $0x60] sm:$0xff]
  %v4202 = vld [vmem:[#allocation2 + $0x68] sm:$0xff]
  %v4203 = vld [vmem:[#allocation2 + $0x70] sm:$0xff]
  %v4204 = vld [vmem:[#allocation2 + $0x78] sm:$0xff]
  %v4205 = vld [vmem:[#allocation2 + $0x80] sm:$0xff]
  %v4206 = vld [vmem:[#allocation2 + $0x88] sm:$0xff]
  %v4207 = vld [vmem:[#allocation2 + $0x90] sm:$0xff]
  %v4208 = vld [vmem:[#allocation2 + $0x98] sm:$0xff]
  %v4209 = vld [vmem:[#allocation2 + $0xa0] sm:$0xff]
  %v4210 = vld [vmem:[#allocation2 + $0xa8] sm:$0xff]
  %v4211 = vld [vmem:[#allocation2 + $0xb0] sm:$0xff]
  %v4212 = vld [vmem:[#allocation2 + $0xb8] sm:$0xff]
  %v4213 = vld [vmem:[#allocation2 + $0xc0] sm:$0xff]
  %v4214 = vld [vmem:[#allocation2 + $0xc8] sm:$0xff]
  %v4215 = vld [vmem:[#allocation2 + $0xd0] sm:$0xff]
  %v4216 = vld [vmem:[#allocation2 + $0xd8] sm:$0xff]
  %v4217 = vld [vmem:[#allocation2 + $0xe0] sm:$0xff]
  %v4218 = vld [vmem:[#allocation2 + $0xe8] sm:$0xff]
  %v4219 = vld [vmem:[#allocation2 + $0xf0] sm:$0xff]
  %v4220 = vld [vmem:[#allocation2 + $0xf8] sm:$0xff]
  %v4221 = vld [vmem:[#allocation2 + $0x100] sm:$0xff]
  %v4222 = vld [vmem:[#allocation2 + $0x108] sm:$0xff]
  %v4223 = vld [vmem:[#allocation2 + $0x110] sm:$0xff]
  %v4224 = vld [vmem:[#allocation2 + $0x118] sm:$0xff]
  %v4225 = vld [vmem:[#allocation2 + $0x120] sm:$0xff]
  %v4226 = vld [vmem:[#allocation2 + $0x128] sm:$0xff]
  %v4227 = vld [vmem:[#allocation2 + $0x130] sm:$0xff]
  %v4228 = vld [vmem:[#allocation2 + $0x138] sm:$0xff]
  %v4229 = vld [vmem:[#allocation2 + $0x140] sm:$0xff]
  %v4230 = vld [vmem:[#allocation2 + $0x148] sm:$0xff]
  %v4231 = vld [vmem:[#allocation2 + $0x150] sm:$0xff]
  %v4232 = vld [vmem:[#allocation2 + $0x158] sm:$0xff]
  %v4233 = vld [vmem:[#allocation2 + $0x160] sm:$0xff]
  %v4234 = vld [vmem:[#allocation2 + $0x168] sm:$0xff]
  %v4235 = vld [vmem:[#allocation2 + $0x170] sm:$0xff]
  %v4236 = vld [vmem:[#allocation2 + $0x178] sm:$0xff]
  %v4237 = vld [vmem:[#allocation2 + $0x180] sm:$0xff]
  %v4238 = vld [vmem:[#allocation2 + $0x188] sm:$0xff]
  %v4239 = vld [vmem:[#allocation2 + $0x190] sm:$0xff]
  %v4240 = vld [vmem:[#allocation2 + $0x198] sm:$0xff]
  %v4241 = vld [vmem:[#allocation2 + $0x1a0] sm:$0xff]
  %v4242 = vld [vmem:[#allocation2 + $0x1a8] sm:$0xff]
  %v4243 = vld [vmem:[#allocation2 + $0x1b0] sm:$0xff]
  %v4244 = vld [vmem:[#allocation2 + $0x1b8] sm:$0xff]
  %v4245 = vld [vmem:[#allocation2 + $0x1c0] sm:$0xff]
  %v4246 = vld [vmem:[#allocation2 + $0x1c8] sm:$0xff]
  %v4247 = vld [vmem:[#allocation2 + $0x1d0] sm:$0xff]
  %v4248 = vld [vmem:[#allocation2 + $0x1d8] sm:$0xff]
  %v4249 = vld [vmem:[#allocation2 + $0x1e0] sm:$0xff]
  %v4250 = vld [vmem:[#allocation2 + $0x1e8] sm:$0xff]
  %v4251 = vld [vmem:[#allocation2 + $0x1f0] sm:$0xff]
  %v4252 = vld [vmem:[#allocation2 + $0x1f8] sm:$0xff]
  %v4253 = vld [vmem:[#allocation2 + $0x200] sm:$0xff]
  %v4254 = vld [vmem:[#allocation2 + $0x208] sm:$0xff]
  %v4255 = vld [vmem:[#allocation2 + $0x210] sm:$0xff]
  %v4256 = vld [vmem:[#allocation2 + $0x218] sm:$0xff]
  %v4257 = vld [vmem:[#allocation2 + $0x220] sm:$0xff]
  %v4258 = vld [vmem:[#allocation2 + $0x228] sm:$0xff]
  %v4259 = vld [vmem:[#allocation2 + $0x230] sm:$0xff]
  %v4260 = vld [vmem:[#allocation2 + $0x238] sm:$0xff]
  %v4261 = vld [vmem:[#allocation2 + $0x240] sm:$0xff]
  %v4262 = vld [vmem:[#allocation2 + $0x248] sm:$0xff]
  %v4263 = vld [vmem:[#allocation2 + $0x250] sm:$0xff]
  %v4264 = vld [vmem:[#allocation2 + $0x258] sm:$0xff]
  %v4265 = vld [vmem:[#allocation2 + $0x260] sm:$0xff]
  %v4266 = vld [vmem:[#allocation2 + $0x268] sm:$0xff]
  %v4267 = vld [vmem:[#allocation2 + $0x270] sm:$0xff]
  %v4268 = vld [vmem:[#allocation2 + $0x278] sm:$0xff]
  %v4269 = vld [vmem:[#allocation2 + $0x280] sm:$0xff]
  %v4270 = vld [vmem:[#allocation2 + $0x288] sm:$0xff]
  %v4271 = vld [vmem:[#allocation2 + $0x290] sm:$0xff]
  %v4272 = vld [vmem:[#allocation2 + $0x298] sm:$0xff]
  %s4273 = scalar_lea.vmem %s2, 512
  %v4274 = vld [vmem:[%s4273] sm:$0xff]
  %v4275 = vld [vmem:[%s4273 + $0x8] sm:$0xff]
  %v4276 = vld [vmem:[%s4273 + $0x10] sm:$0xff]
  %v4277 = vld [vmem:[%s4273 + $0x18] sm:$0xff]
  %v4278 = vld [vmem:[%s4273 + $0x20] sm:$0xff]
  %v4279 = vld [vmem:[%s4273 + $0x28] sm:$0xff]
  %v4280 = vld [vmem:[%s4273 + $0x30] sm:$0xff]
  %v4281 = vld [vmem:[%s4273 + $0x38] sm:$0xff]
  %v4282 = vld [vmem:[%s4273 + $0x40] sm:$0xff]
  %v4283 = vld [vmem:[%s4273 + $0x48] sm:$0xff]
  %v4284 = vld [vmem:[%s4273 + $0x50] sm:$0xff]
  %v4285 = vld [vmem:[%s4273 + $0x58] sm:$0xff]
  %v4286 = vld [vmem:[%s4273 + $0x60] sm:$0xff]
  %v4287 = vld [vmem:[%s4273 + $0x68] sm:$0xff]
  %v4288 = vld [vmem:[%s4273 + $0x70] sm:$0xff]
  %v4289 = vld [vmem:[%s4273 + $0x78] sm:$0xff]
  %4290 = vmatprep.subr.mxu0 0.0
  %4291 = vmatpush1.msra.mxu0 %v4274
  %4292 = vmatprep.subr.mxu0 0.0
  %4293 = vmatpush1.msra.mxu0 %v4275
  %4294 = vmatprep.subr.mxu0 0.0
  %4295 = vmatpush1.msra.mxu0 %v4276
  %4296 = vmatprep.subr.mxu0 0.0
  %4297 = vmatpush1.msra.mxu0 %v4277
  %4298 = vmatprep.subr.mxu0 0.0
  %4299 = vmatpush1.msra.mxu0 %v4278
  %4300 = vmatprep.subr.mxu0 0.0
  %4301 = vmatpush1.msra.mxu0 %v4279
  %4302 = vmatprep.subr.mxu0 0.0
  %4303 = vmatpush1.msra.mxu0 %v4280
  %4304 = vmatprep.subr.mxu0 0.0
  %4305 = vmatpush1.msra.mxu0 %v4281
  %4306 = vmatprep.subr.mxu0 0.0
  %4307 = vmatpush1.msra.mxu0 %v4282
  %4308 = vmatprep.subr.mxu0 0.0
  %4309 = vmatpush1.msra.mxu0 %v4283
  %4310 = vmatprep.subr.mxu0 0.0
  %4311 = vmatpush1.msra.mxu0 %v4284
  %4312 = vmatprep.subr.mxu0 0.0
  %4313 = vmatpush1.msra.mxu0 %v4285
  %4314 = vmatprep.subr.mxu0 0.0
  %4315 = vmatpush1.msra.mxu0 %v4286
  %4316 = vmatprep.subr.mxu0 0.0
  %4317 = vmatpush1.msra.mxu0 %v4287
  %4318 = vmatprep.subr.mxu0 0.0
  %4319 = vmatpush1.msra.mxu0 %v4288
  %4320 = vmatprep.subr.mxu0 0.0
  %4321 = vmatpush1.msra.mxu0 %v4289
  %4322 = vmatprep.subr.mxu0 0.0
  %4323 = vmatpush1.msra.mxu0 0.0
  %4324 = vmatprep.subr.mxu0 0.0
  %4325 = vmatpush1.msra.mxu0 0.0
  %4326 = vmatprep.subr.mxu0 0.0
  %4327 = vmatpush1.msra.mxu0 0.0
  %4328 = vmatprep.subr.mxu0 0.0
  %4329 = vmatpush1.msra.mxu0 0.0
  %4330 = vmatprep.subr.mxu0 0.0
  %4331 = vmatpush1.msra.mxu0 0.0
  %4332 = vmatprep.subr.mxu0 0.0
  %4333 = vmatpush1.msra.mxu0 0.0
  %4334 = vmatprep.subr.mxu0 0.0
  %4335 = vmatpush1.msra.mxu0 0.0
  %4336 = vmatprep.subr.mxu0 0.0
  %4337 = vmatpush1.msra.mxu0 0.0
  %4338 = vmatprep.subr.mxu0 0.0
  %4339 = vmatpush1.msra.mxu0 0.0
  %4340 = vmatprep.subr.mxu0 0.0
  %4341 = vmatpush1.msra.mxu0 0.0
  %4342 = vmatprep.subr.mxu0 0.0
  %4343 = vmatpush1.msra.mxu0 0.0
  %4344 = vmatprep.subr.mxu0 0.0
  %4345 = vmatpush1.msra.mxu0 0.0
  %4346 = vmatprep.subr.mxu0 0.0
  %4347 = vmatpush1.msra.mxu0 0.0
  %4348 = vmatprep.subr.mxu0 0.0
  %4349 = vmatpush1.msra.mxu0 0.0
  %4350 = vmatprep.subr.mxu0 0.0
  %4351 = vmatpush1.msra.mxu0 0.0
  %4352 = vmatprep.subr.mxu0 0.0
  %4353 = vmatpush1.msra.mxu0 0.0
  %4354 = vmatprep.mubr.f32.mxu0 0.0
  %4355 = vmatmul.mubr.f32.gmra.mrb[0].mxu0 %v4192
  %v4356 = vpop.f32.mrb[0].mxu0
  %v4357 = vadd.f32 0.0, %v4356
  %v4358 = vpop.f32.mrb[0].mxu0
  %4359 = vmatprep.mubr.f32.mxu0 0.0
  %4360 = vmatmul.mubr.f32.gmra.mrb[0].mxu0 %v4193
  %v4361 = vpop.f32.mrb[0].mxu0
  %v4362 = vadd.f32 0.0, %v4361
  %v4363 = vpop.f32.mrb[0].mxu0
  %4364 = vmatprep.mubr.f32.mxu0 0.0
  %4365 = vmatmul.mubr.f32.gmra.mrb[0].mxu0 %v4194
  %v4366 = vpop.f32.mrb[0].mxu0
  %v4367 = vadd.f32 0.0, %v4366
  %v4368 = vpop.f32.mrb[0].mxu0
  %4369 = vmatprep.mubr.f32.mxu0 0.0
  %4370 = vmatmul.mubr.f32.gmra.mrb[0].mxu0 %v4195
  %v4371 = vpop.f32.mrb[0].mxu0
  %v4372 = vadd.f32 0.0, %v4371
  %v4373 = vpop.f32.mrb[0].mxu0
  %4374 = vmatprep.mubr.f32.mxu0 0.0
  %4375 = vmatmul.mubr.f32.gmra.mrb[0].mxu0 %v4196
  %v4376 = vpop.f32.mrb[0].mxu0
  %v4377 = vadd.f32 0.0, %v4376
  %v4378 = vpop.f32.mrb[0].mxu0
  %4379 = vmatprep.mubr.f32.mxu0 0.0
  %4380 = vmatmul.mubr.f32.gmra.mrb[0].mxu0 %v4197
  %v4381 = vpop.f32.mrb[0].mxu0
  %v4382 = vadd.f32 0.0, %v4381
  %v4383 = vpop.f32.mrb[0].mxu0
  %4384 = vmatprep.mubr.f32.mxu0 0.0
  %4385 = vmatmul.mubr.f32.gmra.mrb[0].mxu0 %v4198
  %v4386 = vpop.f32.mrb[0].mxu0
  %v4387 = vadd.f32 0.0, %v4386
  %v4388 = vpop.f32.mrb[0].mxu0
  %4389 = vmatprep.mubr.f32.mxu0 0.0
  %4390 = vmatmul.mubr.f32.gmra.mrb[0].mxu0 %v4199
  %v4391 = vpop.f32.mrb[0].mxu0
  %v4392 = vadd.f32 0.0, %v4391
  %v4393 = vpop.f32.mrb[0].mxu0
  %4394 = vmatprep.mubr.f32.mxu0 0.0
  %4395 = vmatmul.mubr.f32.gmra.mrb[0].mxu0 %v4200
  %v4396 = vpop.f32.mrb[0].mxu0
  %v4397 = vadd.f32 0.0, %v4396
  %v4398 = vpop.f32.mrb[0].mxu0
  %4399 = vmatprep.mubr.f32.mxu0 0.0
  %4400 = vmatmul.mubr.f32.gmra.mrb[0].mxu0 %v4201
  %v4401 = vpop.f32.mrb[0].mxu0
  %v4402 = vadd.f32 0.0, %v4401
  %v4403 = vpop.f32.mrb[0].mxu0
  %4404 = vmatprep.mubr.f32.mxu0 0.0
  %4405 = vmatmul.mubr.f32.gmra.mrb[0].mxu0 %v4202
  %v4406 = vpop.f32.mrb[0].mxu0
  %v4407 = vadd.f32 0.0, %v4406
  %v4408 = vpop.f32.mrb[0].mxu0
  %4409 = vmatprep.mubr.f32.mxu0 0.0
  %4410 = vmatmul.mubr.f32.gmra.mrb[0].mxu0 %v4203
  %v4411 = vpop.f32.mrb[0].mxu0
  %v4412 = vadd.f32 0.0, %v4411
  %v4413 = vpop.f32.mrb[0].mxu0
  %4414 = vmatprep.mubr.f32.mxu0 0.0
  %4415 = vmatmul.mubr.f32.gmra.mrb[0].mxu0 %v4204
  %v4416 = vpop.f32.mrb[0].mxu0
  %v4417 = vadd.f32 0.0, %v4416
  %v4418 = vpop.f32.mrb[0].mxu0
  %4419 = vmatprep.mubr.f32.mxu0 0.0
  %4420 = vmatmul.mubr.f32.gmra.mrb[0].mxu0 %v4205
  %v4421 = vpop.f32.mrb[0].mxu0
  %v4422 = vadd.f32 0.0, %v4421
  %v4423 = vpop.f32.mrb[0].mxu0
  %4424 = vmatprep.mubr.f32.mxu0 0.0
  %4425 = vmatmul.mubr.f32.gmra.mrb[0].mxu0 %v4206
  %v4426 = vpop.f32.mrb[0].mxu0
  %v4427 = vadd.f32 0.0, %v4426
  %v4428 = vpop.f32.mrb[0].mxu0
  %4429 = vmatprep.mubr.f32.mxu0 0.0
  %4430 = vmatmul.mubr.f32.gmra.mrb[0].mxu0 %v4207
  %v4431 = vpop.f32.mrb[0].mxu0
  %v4432 = vadd.f32 0.0, %v4431
  %v4433 = vpop.f32.mrb[0].mxu0
  %4434 = vmatprep.mubr.f32.mxu0 0.0
  %4435 = vmatmul.mubr.f32.gmra.mrb[0].mxu0 %v4208
  %v4436 = vpop.f32.mrb[0].mxu0
  %v4437 = vadd.f32 0.0, %v4436
  %v4438 = vpop.f32.mrb[0].mxu0
  %4439 = vmatprep.mubr.f32.mxu0 0.0
  %4440 = vmatmul.mubr.f32.gmra.mrb[0].mxu0 %v4209
  %v4441 = vpop.f32.mrb[0].mxu0
  %v4442 = vadd.f32 0.0, %v4441
  %v4443 = vpop.f32.mrb[0].mxu0
  %4444 = vmatprep.mubr.f32.mxu0 0.0
  %4445 = vmatmul.mubr.f32.gmra.mrb[0].mxu0 %v4210
  %v4446 = vpop.f32.mrb[0].mxu0
  %v4447 = vadd.f32 0.0, %v4446
  %v4448 = vpop.f32.mrb[0].mxu0
  %4449 = vmatprep.mubr.f32.mxu0 0.0
  %4450 = vmatmul.mubr.f32.gmra.mrb[0].mxu0 %v4211
  %v4451 = vpop.f32.mrb[0].mxu0
  %v4452 = vadd.f32 0.0, %v4451
  %v4453 = vpop.f32.mrb[0].mxu0
  %4454 = vmatprep.mubr.f32.mxu0 0.0
  %4455 = vmatmul.mubr.f32.gmra.mrb[0].mxu0 %v4212
  %v4456 = vpop.f32.mrb[0].mxu0
  %v4457 = vadd.f32 0.0, %v4456
  %v4458 = vpop.f32.mrb[0].mxu0
  %4459 = vmatprep.mubr.f32.mxu0 0.0
  %4460 = vmatmul.mubr.f32.gmra.mrb[0].mxu0 %v4213
  %v4461 = vpop.f32.mrb[0].mxu0
  %v4462 = vadd.f32 0.0, %v4461
  %v4463 = vpop.f32.mrb[0].mxu0
  %4464 = vmatprep.mubr.f32.mxu0 0.0
  %4465 = vmatmul.mubr.f32.gmra.mrb[0].mxu0 %v4214
  %v4466 = vpop.f32.mrb[0].mxu0
  %v4467 = vadd.f32 0.0, %v4466
  %v4468 = vpop.f32.mrb[0].mxu0
  %4469 = vmatprep.mubr.f32.mxu0 0.0
  %4470 = vmatmul.mubr.f32.gmra.mrb[0].mxu0 %v4215
  %v4471 = vpop.f32.mrb[0].mxu0
  %v4472 = vadd.f32 0.0, %v4471
  %v4473 = vpop.f32.mrb[0].mxu0
  %4474 = vmatprep.mubr.f32.mxu0 0.0
  %4475 = vmatmul.mubr.f32.gmra.mrb[0].mxu0 %v4216
  %v4476 = vpop.f32.mrb[0].mxu0
  %v4477 = vadd.f32 0.0, %v4476
  %v4478 = vpop.f32.mrb[0].mxu0
  %4479 = vmatprep.mubr.f32.mxu0 0.0
  %4480 = vmatmul.mubr.f32.gmra.mrb[0].mxu0 %v4217
  %v4481 = vpop.f32.mrb[0].mxu0
  %v4482 = vadd.f32 0.0, %v4481
  %v4483 = vpop.f32.mrb[0].mxu0
  %4484 = vmatprep.mubr.f32.mxu0 0.0
  %4485 = vmatmul.mubr.f32.gmra.mrb[0].mxu0 %v4218
  %v4486 = vpop.f32.mrb[0].mxu0
  %v4487 = vadd.f32 0.0, %v4486
  %v4488 = vpop.f32.mrb[0].mxu0
  %4489 = vmatprep.mubr.f32.mxu0 0.0
  %4490 = vmatmul.mubr.f32.gmra.mrb[0].mxu0 %v4219
  %v4491 = vpop.f32.mrb[0].mxu0
  %v4492 = vadd.f32 0.0, %v4491
  %v4493 = vpop.f32.mrb[0].mxu0
  %4494 = vmatprep.mubr.f32.mxu0 0.0
  %4495 = vmatmul.mubr.f32.gmra.mrb[0].mxu0 %v4220
  %v4496 = vpop.f32.mrb[0].mxu0
  %v4497 = vadd.f32 0.0, %v4496
  %v4498 = vpop.f32.mrb[0].mxu0
  %4499 = vmatprep.mubr.f32.mxu0 0.0
  %4500 = vmatmul.mubr.f32.gmra.mrb[0].mxu0 %v4221
  %v4501 = vpop.f32.mrb[0].mxu0
  %v4502 = vadd.f32 0.0, %v4501
  %v4503 = vpop.f32.mrb[0].mxu0
  %4504 = vmatprep.mubr.f32.mxu0 0.0
  %4505 = vmatmul.mubr.f32.gmra.mrb[0].mxu0 %v4222
  %v4506 = vpop.f32.mrb[0].mxu0
  %v4507 = vadd.f32 0.0, %v4506
  %v4508 = vpop.f32.mrb[0].mxu0
  %4509 = vmatprep.mubr.f32.mxu0 0.0
  %4510 = vmatmul.mubr.f32.gmra.mrb[0].mxu0 %v4223
  %v4511 = vpop.f32.mrb[0].mxu0
  %v4512 = vadd.f32 0.0, %v4511
  %v4513 = vpop.f32.mrb[0].mxu0
  %4514 = vmatprep.mubr.f32.mxu0 0.0
  %4515 = vmatmul.mubr.f32.gmra.mrb[0].mxu0 %v4224
  %v4516 = vpop.f32.mrb[0].mxu0
  %v4517 = vadd.f32 0.0, %v4516
  %v4518 = vpop.f32.mrb[0].mxu0
  %4519 = vmatprep.mubr.f32.mxu0 0.0
  %4520 = vmatmul.mubr.f32.gmra.mrb[0].mxu0 %v4225
  %v4521 = vpop.f32.mrb[0].mxu0
  %v4522 = vadd.f32 0.0, %v4521
  %v4523 = vpop.f32.mrb[0].mxu0
  %4524 = vmatprep.mubr.f32.mxu0 0.0
  %4525 = vmatmul.mubr.f32.gmra.mrb[0].mxu0 %v4226
  %v4526 = vpop.f32.mrb[0].mxu0
  %v4527 = vadd.f32 0.0, %v4526
  %v4528 = vpop.f32.mrb[0].mxu0
  %4529 = vmatprep.mubr.f32.mxu0 0.0
  %4530 = vmatmul.mubr.f32.gmra.mrb[0].mxu0 %v4227
  %v4531 = vpop.f32.mrb[0].mxu0
  %v4532 = vadd.f32 0.0, %v4531
  %v4533 = vpop.f32.mrb[0].mxu0
  %4534 = vmatprep.mubr.f32.mxu0 0.0
  %4535 = vmatmul.mubr.f32.gmra.mrb[0].mxu0 %v4228
  %v4536 = vpop.f32.mrb[0].mxu0
  %v4537 = vadd.f32 0.0, %v4536
  %v4538 = vpop.f32.mrb[0].mxu0
  %4539 = vmatprep.mubr.f32.mxu0 0.0
  %4540 = vmatmul.mubr.f32.gmra.mrb[0].mxu0 %v4229
  %v4541 = vpop.f32.mrb[0].mxu0
  %v4542 = vadd.f32 0.0, %v4541
  %v4543 = vpop.f32.mrb[0].mxu0
  %4544 = vmatprep.mubr.f32.mxu0 0.0
  %4545 = vmatmul.mubr.f32.gmra.mrb[0].mxu0 %v4230
  %v4546 = vpop.f32.mrb[0].mxu0
  %v4547 = vadd.f32 0.0, %v4546
  %v4548 = vpop.f32.mrb[0].mxu0
  %4549 = vmatprep.mubr.f32.mxu0 0.0
  %4550 = vmatmul.mubr.f32.gmra.mrb[0].mxu0 %v4231
  %v4551 = vpop.f32.mrb[0].mxu0
  %v4552 = vadd.f32 0.0, %v4551
  %v4553 = vpop.f32.mrb[0].mxu0
  %4554 = vmatprep.mubr.f32.mxu0 0.0
  %4555 = vmatmul.mubr.f32.gmra.mrb[0].mxu0 %v4232
  %v4556 = vpop.f32.mrb[0].mxu0
  %v4557 = vadd.f32 0.0, %v4556
  %v4558 = vpop.f32.mrb[0].mxu0
  %4559 = vmatprep.mubr.f32.mxu0 0.0
  %4560 = vmatmul.mubr.f32.gmra.mrb[0].mxu0 %v4233
  %v4561 = vpop.f32.mrb[0].mxu0
  %v4562 = vadd.f32 0.0, %v4561
  %v4563 = vpop.f32.mrb[0].mxu0
  %4564 = vmatprep.mubr.f32.mxu0 0.0
  %4565 = vmatmul.mubr.f32.gmra.mrb[0].mxu0 %v4234
  %v4566 = vpop.f32.mrb[0].mxu0
  %v4567 = vadd.f32 0.0, %v4566
  %v4568 = vpop.f32.mrb[0].mxu0
  %4569 = vmatprep.mubr.f32.mxu0 0.0
  %4570 = vmatmul.mubr.f32.gmra.mrb[0].mxu0 %v4235
  %v4571 = vpop.f32.mrb[0].mxu0
  %v4572 = vadd.f32 0.0, %v4571
  %v4573 = vpop.f32.mrb[0].mxu0
  %4574 = vmatprep.mubr.f32.mxu0 0.0
  %4575 = vmatmul.mubr.f32.gmra.mrb[0].mxu0 %v4236
  %v4576 = vpop.f32.mrb[0].mxu0
  %v4577 = vadd.f32 0.0, %v4576
  %v4578 = vpop.f32.mrb[0].mxu0
  %4579 = vmatprep.mubr.f32.mxu0 0.0
  %4580 = vmatmul.mubr.f32.gmra.mrb[0].mxu0 %v4237
  %v4581 = vpop.f32.mrb[0].mxu0
  %v4582 = vadd.f32 0.0, %v4581
  %v4583 = vpop.f32.mrb[0].mxu0
  %4584 = vmatprep.mubr.f32.mxu0 0.0
  %4585 = vmatmul.mubr.f32.gmra.mrb[0].mxu0 %v4238
  %v4586 = vpop.f32.mrb[0].mxu0
  %v4587 = vadd.f32 0.0, %v4586
  %v4588 = vpop.f32.mrb[0].mxu0
  %4589 = vmatprep.mubr.f32.mxu0 0.0
  %4590 = vmatmul.mubr.f32.gmra.mrb[0].mxu0 %v4239
  %v4591 = vpop.f32.mrb[0].mxu0
  %v4592 = vadd.f32 0.0, %v4591
  %v4593 = vpop.f32.mrb[0].mxu0
  %4594 = vmatprep.mubr.f32.mxu0 0.0
  %4595 = vmatmul.mubr.f32.gmra.mrb[0].mxu0 %v4240
  %v4596 = vpop.f32.mrb[0].mxu0
  %v4597 = vadd.f32 0.0, %v4596
  %v4598 = vpop.f32.mrb[0].mxu0
  %4599 = vmatprep.mubr.f32.mxu0 0.0
  %4600 = vmatmul.mubr.f32.gmra.mrb[0].mxu0 %v4241
  %v4601 = vpop.f32.mrb[0].mxu0
  %v4602 = vadd.f32 0.0, %v4601
  %v4603 = vpop.f32.mrb[0].mxu0
  %4604 = vmatprep.mubr.f32.mxu0 0.0
  %4605 = vmatmul.mubr.f32.gmra.mrb[0].mxu0 %v4242
  %v4606 = vpop.f32.mrb[0].mxu0
  %v4607 = vadd.f32 0.0, %v4606
  %v4608 = vpop.f32.mrb[0].mxu0
  %4609 = vmatprep.mubr.f32.mxu0 0.0
  %4610 = vmatmul.mubr.f32.gmra.mrb[0].mxu0 %v4243
  %v4611 = vpop.f32.mrb[0].mxu0
  %v4612 = vadd.f32 0.0, %v4611
  %v4613 = vpop.f32.mrb[0].mxu0
  %4614 = vmatprep.mubr.f32.mxu0 0.0
  %4615 = vmatmul.mubr.f32.gmra.mrb[0].mxu0 %v4244
  %v4616 = vpop.f32.mrb[0].mxu0
  %v4617 = vadd.f32 0.0, %v4616
  %v4618 = vpop.f32.mrb[0].mxu0
  %4619 = vmatprep.mubr.f32.mxu0 0.0
  %4620 = vmatmul.mubr.f32.gmra.mrb[0].mxu0 %v4245
  %v4621 = vpop.f32.mrb[0].mxu0
  %v4622 = vadd.f32 0.0, %v4621
  %v4623 = vpop.f32.mrb[0].mxu0
  %4624 = vmatprep.mubr.f32.mxu0 0.0
  %4625 = vmatmul.mubr.f32.gmra.mrb[0].mxu0 %v4246
  %v4626 = vpop.f32.mrb[0].mxu0
  %v4627 = vadd.f32 0.0, %v4626
  %v4628 = vpop.f32.mrb[0].mxu0
  %4629 = vmatprep.mubr.f32.mxu0 0.0
  %4630 = vmatmul.mubr.f32.gmra.mrb[0].mxu0 %v4247
  %v4631 = vpop.f32.mrb[0].mxu0
  %v4632 = vadd.f32 0.0, %v4631
  %v4633 = vpop.f32.mrb[0].mxu0
  %4634 = vmatprep.mubr.f32.mxu0 0.0
  %4635 = vmatmul.mubr.f32.gmra.mrb[0].mxu0 %v4248
  %v4636 = vpop.f32.mrb[0].mxu0
  %v4637 = vadd.f32 0.0, %v4636
  %v4638 = vpop.f32.mrb[0].mxu0
  %4639 = vmatprep.mubr.f32.mxu0 0.0
  %4640 = vmatmul.mubr.f32.gmra.mrb[0].mxu0 %v4249
  %v4641 = vpop.f32.mrb[0].mxu0
  %v4642 = vadd.f32 0.0, %v4641
  %v4643 = vpop.f32.mrb[0].mxu0
  %4644 = vmatprep.mubr.f32.mxu0 0.0
  %4645 = vmatmul.mubr.f32.gmra.mrb[0].mxu0 %v4250
  %v4646 = vpop.f32.mrb[0].mxu0
  %v4647 = vadd.f32 0.0, %v4646
  %v4648 = vpop.f32.mrb[0].mxu0
  %4649 = vmatprep.mubr.f32.mxu0 0.0
  %4650 = vmatmul.mubr.f32.gmra.mrb[0].mxu0 %v4251
  %v4651 = vpop.f32.mrb[0].mxu0
  %v4652 = vadd.f32 0.0, %v4651
  %v4653 = vpop.f32.mrb[0].mxu0
  %4654 = vmatprep.mubr.f32.mxu0 0.0
  %4655 = vmatmul.mubr.f32.gmra.mrb[0].mxu0 %v4252
  %v4656 = vpop.f32.mrb[0].mxu0
  %v4657 = vadd.f32 0.0, %v4656
  %v4658 = vpop.f32.mrb[0].mxu0
  %4659 = vmatprep.mubr.f32.mxu0 0.0
  %4660 = vmatmul.mubr.f32.gmra.mrb[0].mxu0 %v4253
  %v4661 = vpop.f32.mrb[0].mxu0
  %v4662 = vadd.f32 0.0, %v4661
  %v4663 = vpop.f32.mrb[0].mxu0
  %4664 = vmatprep.mubr.f32.mxu0 0.0
  %4665 = vmatmul.mubr.f32.gmra.mrb[0].mxu0 %v4254
  %v4666 = vpop.f32.mrb[0].mxu0
  %v4667 = vadd.f32 0.0, %v4666
  %v4668 = vpop.f32.mrb[0].mxu0
  %4669 = vmatprep.mubr.f32.mxu0 0.0
  %4670 = vmatmul.mubr.f32.gmra.mrb[0].mxu0 %v4255
  %v4671 = vpop.f32.mrb[0].mxu0
  %v4672 = vadd.f32 0.0, %v4671
  %v4673 = vpop.f32.mrb[0].mxu0
  %4674 = vmatprep.mubr.f32.mxu0 0.0
  %4675 = vmatmul.mubr.f32.gmra.mrb[0].mxu0 %v4256
  %v4676 = vpop.f32.mrb[0].mxu0
  %v4677 = vadd.f32 0.0, %v4676
  %v4678 = vpop.f32.mrb[0].mxu0
  %4679 = vmatprep.mubr.f32.mxu0 0.0
  %4680 = vmatmul.mubr.f32.gmra.mrb[0].mxu0 %v4257
  %v4681 = vpop.f32.mrb[0].mxu0
  %v4682 = vadd.f32 0.0, %v4681
  %v4683 = vpop.f32.mrb[0].mxu0
  %4684 = vmatprep.mubr.f32.mxu0 0.0
  %4685 = vmatmul.mubr.f32.gmra.mrb[0].mxu0 %v4258
  %v4686 = vpop.f32.mrb[0].mxu0
  %v4687 = vadd.f32 0.0, %v4686
  %v4688 = vpop.f32.mrb[0].mxu0
  %4689 = vmatprep.mubr.f32.mxu0 0.0
  %4690 = vmatmul.mubr.f32.gmra.mrb[0].mxu0 %v4259
  %v4691 = vpop.f32.mrb[0].mxu0
  %v4692 = vadd.f32 0.0, %v4691
  %v4693 = vpop.f32.mrb[0].mxu0
  %4694 = vmatprep.mubr.f32.mxu0 0.0
  %4695 = vmatmul.mubr.f32.gmra.mrb[0].mxu0 %v4260
  %v4696 = vpop.f32.mrb[0].mxu0
  %v4697 = vadd.f32 0.0, %v4696
  %v4698 = vpop.f32.mrb[0].mxu0
  %4699 = vmatprep.mubr.f32.mxu0 0.0
  %4700 = vmatmul.mubr.f32.gmra.mrb[0].mxu0 %v4261
  %v4701 = vpop.f32.mrb[0].mxu0
  %v4702 = vadd.f32 0.0, %v4701
  %v4703 = vpop.f32.mrb[0].mxu0
  %4704 = vmatprep.mubr.f32.mxu0 0.0
  %4705 = vmatmul.mubr.f32.gmra.mrb[0].mxu0 %v4262
  %v4706 = vpop.f32.mrb[0].mxu0
  %v4707 = vadd.f32 0.0, %v4706
  %v4708 = vpop.f32.mrb[0].mxu0
  %4709 = vmatprep.mubr.f32.mxu0 0.0
  %4710 = vmatmul.mubr.f32.gmra.mrb[0].mxu0 %v4263
  %v4711 = vpop.f32.mrb[0].mxu0
  %v4712 = vadd.f32 0.0, %v4711
  %v4713 = vpop.f32.mrb[0].mxu0
  %4714 = vmatprep.mubr.f32.mxu0 0.0
  %4715 = vmatmul.mubr.f32.gmra.mrb[0].mxu0 %v4264
  %v4716 = vpop.f32.mrb[0].mxu0
  %v4717 = vadd.f32 0.0, %v4716
  %v4718 = vpop.f32.mrb[0].mxu0
  %4719 = vmatprep.mubr.f32.mxu0 0.0
  %4720 = vmatmul.mubr.f32.gmra.mrb[0].mxu0 %v4265
  %v4721 = vpop.f32.mrb[0].mxu0
  %v4722 = vadd.f32 0.0, %v4721
  %v4723 = vpop.f32.mrb[0].mxu0
  %4724 = vmatprep.mubr.f32.mxu0 0.0
  %4725 = vmatmul.mubr.f32.gmra.mrb[0].mxu0 %v4266
  %v4726 = vpop.f32.mrb[0].mxu0
  %v4727 = vadd.f32 0.0, %v4726
  %v4728 = vpop.f32.mrb[0].mxu0
  %4729 = vmatprep.mubr.f32.mxu0 0.0
  %4730 = vmatmul.mubr.f32.gmra.mrb[0].mxu0 %v4267
  %v4731 = vpop.f32.mrb[0].mxu0
  %v4732 = vadd.f32 0.0, %v4731
  %v4733 = vpop.f32.mrb[0].mxu0
  %4734 = vmatprep.mubr.f32.mxu0 0.0
  %4735 = vmatmul.mubr.f32.gmra.mrb[0].mxu0 %v4268
  %v4736 = vpop.f32.mrb[0].mxu0
  %v4737 = vadd.f32 0.0, %v4736
  %v4738 = vpop.f32.mrb[0].mxu0
  %4739 = vmatprep.mubr.f32.mxu0 0.0
  %4740 = vmatmul.mubr.f32.gmra.mrb[0].mxu0 %v4269
  %v4741 = vpop.f32.mrb[0].mxu0
  %v4742 = vadd.f32 0.0, %v4741
  %v4743 = vpop.f32.mrb[0].mxu0
  %4744 = vmatprep.mubr.f32.mxu0 0.0
  %4745 = vmatmul.mubr.f32.gmra.mrb[0].mxu0 %v4270
  %v4746 = vpop.f32.mrb[0].mxu0
  %v4747 = vadd.f32 0.0, %v4746
  %v4748 = vpop.f32.mrb[0].mxu0
  %4749 = vmatprep.mubr.f32.mxu0 0.0
  %4750 = vmatmul.mubr.f32.gmra.mrb[0].mxu0 %v4271
  %v4751 = vpop.f32.mrb[0].mxu0
  %v4752 = vadd.f32 0.0, %v4751
  %v4753 = vpop.f32.mrb[0].mxu0
  %4754 = vmatprep.mubr.f32.mxu0 0.0
  %4755 = vmatmul.mubr.f32.gmra.mrb[0].mxu0 %v4272
  %v4756 = vpop.f32.mrb[0].mxu0
  %v4757 = vadd.f32 0.0, %v4756
  %v4758 = vpop.f32.mrb[0].mxu0
  %4759 = vdwg.mxu0
  %v4760 = vadd.f32 %v4111, %v4357
  %v4761 = vadd.f32 %v4112, %v4362
  %v4762 = vadd.f32 %v4113, %v4367
  %v4763 = vadd.f32 %v4114, %v4372
  %v4764 = vadd.f32 %v4115, %v4377
  %v4765 = vadd.f32 %v4116, %v4382
  %v4766 = vadd.f32 %v4117, %v4387
  %v4767 = vadd.f32 %v4118, %v4392
  %v4768 = vadd.f32 %v4119, %v4397
  %v4769 = vadd.f32 %v4120, %v4402
  %v4770 = vadd.f32 %v4121, %v4407
  %v4771 = vadd.f32 %v4122, %v4412
  %v4772 = vadd.f32 %v4123, %v4417
  %v4773 = vadd.f32 %v4124, %v4422
  %v4774 = vadd.f32 %v4125, %v4427
  %v4775 = vadd.f32 %v4126, %v4432
  %v4776 = vadd.f32 %v4127, %v4437
  %v4777 = vadd.f32 %v4128, %v4442
  %v4778 = vadd.f32 %v4129, %v4447
  %v4779 = vadd.f32 %v4130, %v4452
  %v4780 = vadd.f32 %v4131, %v4457
  %v4781 = vadd.f32 %v4132, %v4462
  %v4782 = vadd.f32 %v4133, %v4467
  %v4783 = vadd.f32 %v4134, %v4472
  %v4784 = vadd.f32 %v4135, %v4477
  %v4785 = vadd.f32 %v4136, %v4482
  %v4786 = vadd.f32 %v4137, %v4487
  %v4787 = vadd.f32 %v4138, %v4492
  %v4788 = vadd.f32 %v4139, %v4497
  %v4789 = vadd.f32 %v4140, %v4502
  %v4790 = vadd.f32 %v4141, %v4507
  %v4791 = vadd.f32 %v4142, %v4512
  %v4792 = vadd.f32 %v4143, %v4517
  %v4793 = vadd.f32 %v4144, %v4522
  %v4794 = vadd.f32 %v4145, %v4527
  %v4795 = vadd.f32 %v4146, %v4532
  %v4796 = vadd.f32 %v4147, %v4537
  %v4797 = vadd.f32 %v4148, %v4542
  %v4798 = vadd.f32 %v4149, %v4547
  %v4799 = vadd.f32 %v4150, %v4552
  %v4800 = vadd.f32 %v4151, %v4557
  %v4801 = vadd.f32 %v4152, %v4562
  %v4802 = vadd.f32 %v4153, %v4567
  %v4803 = vadd.f32 %v4154, %v4572
  %v4804 = vadd.f32 %v4155, %v4577
  %v4805 = vadd.f32 %v4156, %v4582
  %v4806 = vadd.f32 %v4157, %v4587
  %v4807 = vadd.f32 %v4158, %v4592
  %v4808 = vadd.f32 %v4159, %v4597
  %v4809 = vadd.f32 %v4160, %v4602
  %v4810 = vadd.f32 %v4161, %v4607
  %v4811 = vadd.f32 %v4162, %v4612
  %v4812 = vadd.f32 %v4163, %v4617
  %v4813 = vadd.f32 %v4164, %v4622
  %v4814 = vadd.f32 %v4165, %v4627
  %v4815 = vadd.f32 %v4166, %v4632
  %v4816 = vadd.f32 %v4167, %v4637
  %v4817 = vadd.f32 %v4168, %v4642
  %v4818 = vadd.f32 %v4169, %v4647
  %v4819 = vadd.f32 %v4170, %v4652
  %v4820 = vadd.f32 %v4171, %v4657
  %v4821 = vadd.f32 %v4172, %v4662
  %v4822 = vadd.f32 %v4173, %v4667
  %v4823 = vadd.f32 %v4174, %v4672
  %v4824 = vadd.f32 %v4175, %v4677
  %v4825 = vadd.f32 %v4176, %v4682
  %v4826 = vadd.f32 %v4177, %v4687
  %v4827 = vadd.f32 %v4178, %v4692
  %v4828 = vadd.f32 %v4179, %v4697
  %v4829 = vadd.f32 %v4180, %v4702
  %v4830 = vadd.f32 %v4181, %v4707
  %v4831 = vadd.f32 %v4182, %v4712
  %v4832 = vadd.f32 %v4183, %v4717
  %v4833 = vadd.f32 %v4184, %v4722
  %v4834 = vadd.f32 %v4185, %v4727
  %v4835 = vadd.f32 %v4186, %v4732
  %v4836 = vadd.f32 %v4187, %v4737
  %v4837 = vadd.f32 %v4188, %v4742
  %v4838 = vadd.f32 %v4189, %v4747
  %v4839 = vadd.f32 %v4190, %v4752
  %v4840 = vadd.f32 %v4191, %v4757
  %v4841 = vld [vmem:[#allocation2 + $0x19] sm:$0xff]
  %v4842 = vld [vmem:[#allocation2 + $0x21] sm:$0xff]
  %v4843 = vld [vmem:[#allocation2 + $0x29] sm:$0xff]
  %v4844 = vld [vmem:[#allocation2 + $0x31] sm:$0xff]
  %v4845 = vld [vmem:[#allocation2 + $0x39] sm:$0xff]
  %v4846 = vld [vmem:[#allocation2 + $0x41] sm:$0xff]
  %v4847 = vld [vmem:[#allocation2 + $0x49] sm:$0xff]
  %v4848 = vld [vmem:[#allocation2 + $0x51] sm:$0xff]
  %v4849 = vld [vmem:[#allocation2 + $0x59] sm:$0xff]
  %v4850 = vld [vmem:[#allocation2 + $0x61] sm:$0xff]
  %v4851 = vld [vmem:[#allocation2 + $0x69] sm:$0xff]
  %v4852 = vld [vmem:[#allocation2 + $0x71] sm:$0xff]
  %v4853 = vld [vmem:[#allocation2 + $0x79] sm:$0xff]
  %v4854 = vld [vmem:[#allocation2 + $0x81] sm:$0xff]
  %v4855 = vld [vmem:[#allocation2 + $0x89] sm:$0xff]
  %v4856 = vld [vmem:[#allocation2 + $0x91] sm:$0xff]
  %v4857 = vld [vmem:[#allocation2 + $0x99] sm:$0xff]
  %v4858 = vld [vmem:[#allocation2 + $0xa1] sm:$0xff]
  %v4859 = vld [vmem:[#allocation2 + $0xa9] sm:$0xff]
  %v4860 = vld [vmem:[#allocation2 + $0xb1] sm:$0xff]
  %v4861 = vld [vmem:[#allocation2 + $0xb9] sm:$0xff]
  %v4862 = vld [vmem:[#allocation2 + $0xc1] sm:$0xff]
  %v4863 = vld [vmem:[#allocation2 + $0xc9] sm:$0xff]
  %v4864 = vld [vmem:[#allocation2 + $0xd1] sm:$0xff]
  %v4865 = vld [vmem:[#allocation2 + $0xd9] sm:$0xff]
  %v4866 = vld [vmem:[#allocation2 + $0xe1] sm:$0xff]
  %v4867 = vld [vmem:[#allocation2 + $0xe9] sm:$0xff]
  %v4868 = vld [vmem:[#allocation2 + $0xf1] sm:$0xff]
  %v4869 = vld [vmem:[#allocation2 + $0xf9] sm:$0xff]
  %v4870 = vld [vmem:[#allocation2 + $0x101] sm:$0xff]
  %v4871 = vld [vmem:[#allocation2 + $0x109] sm:$0xff]
  %v4872 = vld [vmem:[#allocation2 + $0x111] sm:$0xff]
  %v4873 = vld [vmem:[#allocation2 + $0x119] sm:$0xff]
  %v4874 = vld [vmem:[#allocation2 + $0x121] sm:$0xff]
  %v4875 = vld [vmem:[#allocation2 + $0x129] sm:$0xff]
  %v4876 = vld [vmem:[#allocation2 + $0x131] sm:$0xff]
  %v4877 = vld [vmem:[#allocation2 + $0x139] sm:$0xff]
  %v4878 = vld [vmem:[#allocation2 + $0x141] sm:$0xff]
  %v4879 = vld [vmem:[#allocation2 + $0x149] sm:$0xff]
  %v4880 = vld [vmem:[#allocation2 + $0x151] sm:$0xff]
  %v4881 = vld [vmem:[#allocation2 + $0x159] sm:$0xff]
  %v4882 = vld [vmem:[#allocation2 + $0x161] sm:$0xff]
  %v4883 = vld [vmem:[#allocation2 + $0x169] sm:$0xff]
  %v4884 = vld [vmem:[#allocation2 + $0x171] sm:$0xff]
  %v4885 = vld [vmem:[#allocation2 + $0x179] sm:$0xff]
  %v4886 = vld [vmem:[#allocation2 + $0x181] sm:$0xff]
  %v4887 = vld [vmem:[#allocation2 + $0x189] sm:$0xff]
  %v4888 = vld [vmem:[#allocation2 + $0x191] sm:$0xff]
  %v4889 = vld [vmem:[#allocation2 + $0x199] sm:$0xff]
  %v4890 = vld [vmem:[#allocation2 + $0x1a1] sm:$0xff]
  %v4891 = vld [vmem:[#allocation2 + $0x1a9] sm:$0xff]
  %v4892 = vld [vmem:[#allocation2 + $0x1b1] sm:$0xff]
  %v4893 = vld [vmem:[#allocation2 + $0x1b9] sm:$0xff]
  %v4894 = vld [vmem:[#allocation2 + $0x1c1] sm:$0xff]
  %v4895 = vld [vmem:[#allocation2 + $0x1c9] sm:$0xff]
  %v4896 = vld [vmem:[#allocation2 + $0x1d1] sm:$0xff]
  %v4897 = vld [vmem:[#allocation2 + $0x1d9] sm:$0xff]
  %v4898 = vld [vmem:[#allocation2 + $0x1e1] sm:$0xff]
  %v4899 = vld [vmem:[#allocation2 + $0x1e9] sm:$0xff]
  %v4900 = vld [vmem:[#allocation2 + $0x1f1] sm:$0xff]
  %v4901 = vld [vmem:[#allocation2 + $0x1f9] sm:$0xff]
  %v4902 = vld [vmem:[#allocation2 + $0x201] sm:$0xff]
  %v4903 = vld [vmem:[#allocation2 + $0x209] sm:$0xff]
  %v4904 = vld [vmem:[#allocation2 + $0x211] sm:$0xff]
  %v4905 = vld [vmem:[#allocation2 + $0x219] sm:$0xff]
  %v4906 = vld [vmem:[#allocation2 + $0x221] sm:$0xff]
  %v4907 = vld [vmem:[#allocation2 + $0x229] sm:$0xff]
  %v4908 = vld [vmem:[#allocation2 + $0x231] sm:$0xff]
  %v4909 = vld [vmem:[#allocation2 + $0x239] sm:$0xff]
  %v4910 = vld [vmem:[#allocation2 + $0x241] sm:$0xff]
  %v4911 = vld [vmem:[#allocation2 + $0x249] sm:$0xff]
  %v4912 = vld [vmem:[#allocation2 + $0x251] sm:$0xff]
  %v4913 = vld [vmem:[#allocation2 + $0x259] sm:$0xff]
  %v4914 = vld [vmem:[#allocation2 + $0x261] sm:$0xff]
  %v4915 = vld [vmem:[#allocation2 + $0x269] sm:$0xff]
  %v4916 = vld [vmem:[#allocation2 + $0x271] sm:$0xff]
  %v4917 = vld [vmem:[#allocation2 + $0x279] sm:$0xff]
  %v4918 = vld [vmem:[#allocation2 + $0x281] sm:$0xff]
  %v4919 = vld [vmem:[#allocation2 + $0x289] sm:$0xff]
  %v4920 = vld [vmem:[#allocation2 + $0x291] sm:$0xff]
  %v4921 = vld [vmem:[#allocation2 + $0x299] sm:$0xff]
  %s4922 = scalar_lea.vmem %s2, 640
  %v4923 = vld [vmem:[%s4922] sm:$0xff]
  %v4924 = vld [vmem:[%s4922 + $0x8] sm:$0xff]
  %v4925 = vld [vmem:[%s4922 + $0x10] sm:$0xff]
  %v4926 = vld [vmem:[%s4922 + $0x18] sm:$0xff]
  %v4927 = vld [vmem:[%s4922 + $0x20] sm:$0xff]
  %v4928 = vld [vmem:[%s4922 + $0x28] sm:$0xff]
  %v4929 = vld [vmem:[%s4922 + $0x30] sm:$0xff]
  %v4930 = vld [vmem:[%s4922 + $0x38] sm:$0xff]
  %v4931 = vld [vmem:[%s4922 + $0x40] sm:$0xff]
  %v4932 = vld [vmem:[%s4922 + $0x48] sm:$0xff]
  %v4933 = vld [vmem:[%s4922 + $0x50] sm:$0xff]
  %v4934 = vld [vmem:[%s4922 + $0x58] sm:$0xff]
  %v4935 = vld [vmem:[%s4922 + $0x60] sm:$0xff]
  %v4936 = vld [vmem:[%s4922 + $0x68] sm:$0xff]
  %v4937 = vld [vmem:[%s4922 + $0x70] sm:$0xff]
  %v4938 = vld [vmem:[%s4922 + $0x78] sm:$0xff]
  %4939 = vmatprep.subr.mxu0 0.0
  %4940 = vmatpush1.msra.mxu0 %v4923
  %4941 = vmatprep.subr.mxu0 0.0
  %4942 = vmatpush1.msra.mxu0 %v4924
  %4943 = vmatprep.subr.mxu0 0.0
  %4944 = vmatpush1.msra.mxu0 %v4925
  %4945 = vmatprep.subr.mxu0 0.0
  %4946 = vmatpush1.msra.mxu0 %v4926
  %4947 = vmatprep.subr.mxu0 0.0
  %4948 = vmatpush1.msra.mxu0 %v4927
  %4949 = vmatprep.subr.mxu0 0.0
  %4950 = vmatpush1.msra.mxu0 %v4928
  %4951 = vmatprep.subr.mxu0 0.0
  %4952 = vmatpush1.msra.mxu0 %v4929
  %4953 = vmatprep.subr.mxu0 0.0
  %4954 = vmatpush1.msra.mxu0 %v4930
  %4955 = vmatprep.subr.mxu0 0.0
  %4956 = vmatpush1.msra.mxu0 %v4931
  %4957 = vmatprep.subr.mxu0 0.0
  %4958 = vmatpush1.msra.mxu0 %v4932
  %4959 = vmatprep.subr.mxu0 0.0
  %4960 = vmatpush1.msra.mxu0 %v4933
  %4961 = vmatprep.subr.mxu0 0.0
  %4962 = vmatpush1.msra.mxu0 %v4934
  %4963 = vmatprep.subr.mxu0 0.0
  %4964 = vmatpush1.msra.mxu0 %v4935
  %4965 = vmatprep.subr.mxu0 0.0
  %4966 = vmatpush1.msra.mxu0 %v4936
  %4967 = vmatprep.subr.mxu0 0.0
  %4968 = vmatpush1.msra.mxu0 %v4937
  %4969 = vmatprep.subr.mxu0 0.0
  %4970 = vmatpush1.msra.mxu0 %v4938
  %4971 = vmatprep.subr.mxu0 0.0
  %4972 = vmatpush1.msra.mxu0 0.0
  %4973 = vmatprep.subr.mxu0 0.0
  %4974 = vmatpush1.msra.mxu0 0.0
  %4975 = vmatprep.subr.mxu0 0.0
  %4976 = vmatpush1.msra.mxu0 0.0
  %4977 = vmatprep.subr.mxu0 0.0
  %4978 = vmatpush1.msra.mxu0 0.0
  %4979 = vmatprep.subr.mxu0 0.0
  %4980 = vmatpush1.msra.mxu0 0.0
  %4981 = vmatprep.subr.mxu0 0.0
  %4982 = vmatpush1.msra.mxu0 0.0
  %4983 = vmatprep.subr.mxu0 0.0
  %4984 = vmatpush1.msra.mxu0 0.0
  %4985 = vmatprep.subr.mxu0 0.0
  %4986 = vmatpush1.msra.mxu0 0.0
  %4987 = vmatprep.subr.mxu0 0.0
  %4988 = vmatpush1.msra.mxu0 0.0
  %4989 = vmatprep.subr.mxu0 0.0
  %4990 = vmatpush1.msra.mxu0 0.0
  %4991 = vmatprep.subr.mxu0 0.0
  %4992 = vmatpush1.msra.mxu0 0.0
  %4993 = vmatprep.subr.mxu0 0.0
  %4994 = vmatpush1.msra.mxu0 0.0
  %4995 = vmatprep.subr.mxu0 0.0
  %4996 = vmatpush1.msra.mxu0 0.0
  %4997 = vmatprep.subr.mxu0 0.0
  %4998 = vmatpush1.msra.mxu0 0.0
  %4999 = vmatprep.subr.mxu0 0.0
  %5000 = vmatpush1.msra.mxu0 0.0
  %5001 = vmatprep.subr.mxu0 0.0
  %5002 = vmatpush1.msra.mxu0 0.0
  %5003 = vmatprep.mubr.f32.mxu0 0.0
  %5004 = vmatmul.mubr.f32.gmra.mrb[0].mxu0 %v4841
  %v5005 = vpop.f32.mrb[0].mxu0
  %v5006 = vadd.f32 0.0, %v5005
  %v5007 = vpop.f32.mrb[0].mxu0
  %5008 = vmatprep.mubr.f32.mxu0 0.0
  %5009 = vmatmul.mubr.f32.gmra.mrb[0].mxu0 %v4842
  %v5010 = vpop.f32.mrb[0].mxu0
  %v5011 = vadd.f32 0.0, %v5010
  %v5012 = vpop.f32.mrb[0].mxu0
  %5013 = vmatprep.mubr.f32.mxu0 0.0
  %5014 = vmatmul.mubr.f32.gmra.mrb[0].mxu0 %v4843
  %v5015 = vpop.f32.mrb[0].mxu0
  %v5016 = vadd.f32 0.0, %v5015
  %v5017 = vpop.f32.mrb[0].mxu0
  %5018 = vmatprep.mubr.f32.mxu0 0.0
  %5019 = vmatmul.mubr.f32.gmra.mrb[0].mxu0 %v4844
  %v5020 = vpop.f32.mrb[0].mxu0
  %v5021 = vadd.f32 0.0, %v5020
  %v5022 = vpop.f32.mrb[0].mxu0
  %5023 = vmatprep.mubr.f32.mxu0 0.0
  %5024 = vmatmul.mubr.f32.gmra.mrb[0].mxu0 %v4845
  %v5025 = vpop.f32.mrb[0].mxu0
  %v5026 = vadd.f32 0.0, %v5025
  %v5027 = vpop.f32.mrb[0].mxu0
  %5028 = vmatprep.mubr.f32.mxu0 0.0
  %5029 = vmatmul.mubr.f32.gmra.mrb[0].mxu0 %v4846
  %v5030 = vpop.f32.mrb[0].mxu0
  %v5031 = vadd.f32 0.0, %v5030
  %v5032 = vpop.f32.mrb[0].mxu0
  %5033 = vmatprep.mubr.f32.mxu0 0.0
  %5034 = vmatmul.mubr.f32.gmra.mrb[0].mxu0 %v4847
  %v5035 = vpop.f32.mrb[0].mxu0
  %v5036 = vadd.f32 0.0, %v5035
  %v5037 = vpop.f32.mrb[0].mxu0
  %5038 = vmatprep.mubr.f32.mxu0 0.0
  %5039 = vmatmul.mubr.f32.gmra.mrb[0].mxu0 %v4848
  %v5040 = vpop.f32.mrb[0].mxu0
  %v5041 = vadd.f32 0.0, %v5040
  %v5042 = vpop.f32.mrb[0].mxu0
  %5043 = vmatprep.mubr.f32.mxu0 0.0
  %5044 = vmatmul.mubr.f32.gmra.mrb[0].mxu0 %v4849
  %v5045 = vpop.f32.mrb[0].mxu0
  %v5046 = vadd.f32 0.0, %v5045
  %v5047 = vpop.f32.mrb[0].mxu0
  %5048 = vmatprep.mubr.f32.mxu0 0.0
  %5049 = vmatmul.mubr.f32.gmra.mrb[0].mxu0 %v4850
  %v5050 = vpop.f32.mrb[0].mxu0
  %v5051 = vadd.f32 0.0, %v5050
  %v5052 = vpop.f32.mrb[0].mxu0
  %5053 = vmatprep.mubr.f32.mxu0 0.0
  %5054 = vmatmul.mubr.f32.gmra.mrb[0].mxu0 %v4851
  %v5055 = vpop.f32.mrb[0].mxu0
  %v5056 = vadd.f32 0.0, %v5055
  %v5057 = vpop.f32.mrb[0].mxu0
  %5058 = vmatprep.mubr.f32.mxu0 0.0
  %5059 = vmatmul.mubr.f32.gmra.mrb[0].mxu0 %v4852
  %v5060 = vpop.f32.mrb[0].mxu0
  %v5061 = vadd.f32 0.0, %v5060
  %v5062 = vpop.f32.mrb[0].mxu0
  %5063 = vmatprep.mubr.f32.mxu0 0.0
  %5064 = vmatmul.mubr.f32.gmra.mrb[0].mxu0 %v4853
  %v5065 = vpop.f32.mrb[0].mxu0
  %v5066 = vadd.f32 0.0, %v5065
  %v5067 = vpop.f32.mrb[0].mxu0
  %5068 = vmatprep.mubr.f32.mxu0 0.0
  %5069 = vmatmul.mubr.f32.gmra.mrb[0].mxu0 %v4854
  %v5070 = vpop.f32.mrb[0].mxu0
  %v5071 = vadd.f32 0.0, %v5070
  %v5072 = vpop.f32.mrb[0].mxu0
  %5073 = vmatprep.mubr.f32.mxu0 0.0
  %5074 = vmatmul.mubr.f32.gmra.mrb[0].mxu0 %v4855
  %v5075 = vpop.f32.mrb[0].mxu0
  %v5076 = vadd.f32 0.0, %v5075
  %v5077 = vpop.f32.mrb[0].mxu0
  %5078 = vmatprep.mubr.f32.mxu0 0.0
  %5079 = vmatmul.mubr.f32.gmra.mrb[0].mxu0 %v4856
  %v5080 = vpop.f32.mrb[0].mxu0
  %v5081 = vadd.f32 0.0, %v5080
  %v5082 = vpop.f32.mrb[0].mxu0
  %5083 = vmatprep.mubr.f32.mxu0 0.0
  %5084 = vmatmul.mubr.f32.gmra.mrb[0].mxu0 %v4857
  %v5085 = vpop.f32.mrb[0].mxu0
  %v5086 = vadd.f32 0.0, %v5085
  %v5087 = vpop.f32.mrb[0].mxu0
  %5088 = vmatprep.mubr.f32.mxu0 0.0
  %5089 = vmatmul.mubr.f32.gmra.mrb[0].mxu0 %v4858
  %v5090 = vpop.f32.mrb[0].mxu0
  %v5091 = vadd.f32 0.0, %v5090
  %v5092 = vpop.f32.mrb[0].mxu0
  %5093 = vmatprep.mubr.f32.mxu0 0.0
  %5094 = vmatmul.mubr.f32.gmra.mrb[0].mxu0 %v4859
  %v5095 = vpop.f32.mrb[0].mxu0
  %v5096 = vadd.f32 0.0, %v5095
  %v5097 = vpop.f32.mrb[0].mxu0
  %5098 = vmatprep.mubr.f32.mxu0 0.0
  %5099 = vmatmul.mubr.f32.gmra.mrb[0].mxu0 %v4860
  %v5100 = vpop.f32.mrb[0].mxu0
  %v5101 = vadd.f32 0.0, %v5100
  %v5102 = vpop.f32.mrb[0].mxu0
  %5103 = vmatprep.mubr.f32.mxu0 0.0
  %5104 = vmatmul.mubr.f32.gmra.mrb[0].mxu0 %v4861
  %v5105 = vpop.f32.mrb[0].mxu0
  %v5106 = vadd.f32 0.0, %v5105
  %v5107 = vpop.f32.mrb[0].mxu0
  %5108 = vmatprep.mubr.f32.mxu0 0.0
  %5109 = vmatmul.mubr.f32.gmra.mrb[0].mxu0 %v4862
  %v5110 = vpop.f32.mrb[0].mxu0
  %v5111 = vadd.f32 0.0, %v5110
  %v5112 = vpop.f32.mrb[0].mxu0
  %5113 = vmatprep.mubr.f32.mxu0 0.0
  %5114 = vmatmul.mubr.f32.gmra.mrb[0].mxu0 %v4863
  %v5115 = vpop.f32.mrb[0].mxu0
  %v5116 = vadd.f32 0.0, %v5115
  %v5117 = vpop.f32.mrb[0].mxu0
  %5118 = vmatprep.mubr.f32.mxu0 0.0
  %5119 = vmatmul.mubr.f32.gmra.mrb[0].mxu0 %v4864
  %v5120 = vpop.f32.mrb[0].mxu0
  %v5121 = vadd.f32 0.0, %v5120
  %v5122 = vpop.f32.mrb[0].mxu0
  %5123 = vmatprep.mubr.f32.mxu0 0.0
  %5124 = vmatmul.mubr.f32.gmra.mrb[0].mxu0 %v4865
  %v5125 = vpop.f32.mrb[0].mxu0
  %v5126 = vadd.f32 0.0, %v5125
  %v5127 = vpop.f32.mrb[0].mxu0
  %5128 = vmatprep.mubr.f32.mxu0 0.0
  %5129 = vmatmul.mubr.f32.gmra.mrb[0].mxu0 %v4866
  %v5130 = vpop.f32.mrb[0].mxu0
  %v5131 = vadd.f32 0.0, %v5130
  %v5132 = vpop.f32.mrb[0].mxu0
  %5133 = vmatprep.mubr.f32.mxu0 0.0
  %5134 = vmatmul.mubr.f32.gmra.mrb[0].mxu0 %v4867
  %v5135 = vpop.f32.mrb[0].mxu0
  %v5136 = vadd.f32 0.0, %v5135
  %v5137 = vpop.f32.mrb[0].mxu0
  %5138 = vmatprep.mubr.f32.mxu0 0.0
  %5139 = vmatmul.mubr.f32.gmra.mrb[0].mxu0 %v4868
  %v5140 = vpop.f32.mrb[0].mxu0
  %v5141 = vadd.f32 0.0, %v5140
  %v5142 = vpop.f32.mrb[0].mxu0
  %5143 = vmatprep.mubr.f32.mxu0 0.0
  %5144 = vmatmul.mubr.f32.gmra.mrb[0].mxu0 %v4869
  %v5145 = vpop.f32.mrb[0].mxu0
  %v5146 = vadd.f32 0.0, %v5145
  %v5147 = vpop.f32.mrb[0].mxu0
  %5148 = vmatprep.mubr.f32.mxu0 0.0
  %5149 = vmatmul.mubr.f32.gmra.mrb[0].mxu0 %v4870
  %v5150 = vpop.f32.mrb[0].mxu0
  %v5151 = vadd.f32 0.0, %v5150
  %v5152 = vpop.f32.mrb[0].mxu0
  %5153 = vmatprep.mubr.f32.mxu0 0.0
  %5154 = vmatmul.mubr.f32.gmra.mrb[0].mxu0 %v4871
  %v5155 = vpop.f32.mrb[0].mxu0
  %v5156 = vadd.f32 0.0, %v5155
  %v5157 = vpop.f32.mrb[0].mxu0
  %5158 = vmatprep.mubr.f32.mxu0 0.0
  %5159 = vmatmul.mubr.f32.gmra.mrb[0].mxu0 %v4872
  %v5160 = vpop.f32.mrb[0].mxu0
  %v5161 = vadd.f32 0.0, %v5160
  %v5162 = vpop.f32.mrb[0].mxu0
  %5163 = vmatprep.mubr.f32.mxu0 0.0
  %5164 = vmatmul.mubr.f32.gmra.mrb[0].mxu0 %v4873
  %v5165 = vpop.f32.mrb[0].mxu0
  %v5166 = vadd.f32 0.0, %v5165
  %v5167 = vpop.f32.mrb[0].mxu0
  %5168 = vmatprep.mubr.f32.mxu0 0.0
  %5169 = vmatmul.mubr.f32.gmra.mrb[0].mxu0 %v4874
  %v5170 = vpop.f32.mrb[0].mxu0
  %v5171 = vadd.f32 0.0, %v5170
  %v5172 = vpop.f32.mrb[0].mxu0
  %5173 = vmatprep.mubr.f32.mxu0 0.0
  %5174 = vmatmul.mubr.f32.gmra.mrb[0].mxu0 %v4875
  %v5175 = vpop.f32.mrb[0].mxu0
  %v5176 = vadd.f32 0.0, %v5175
  %v5177 = vpop.f32.mrb[0].mxu0
  %5178 = vmatprep.mubr.f32.mxu0 0.0
  %5179 = vmatmul.mubr.f32.gmra.mrb[0].mxu0 %v4876
  %v5180 = vpop.f32.mrb[0].mxu0
  %v5181 = vadd.f32 0.0, %v5180
  %v5182 = vpop.f32.mrb[0].mxu0
  %5183 = vmatprep.mubr.f32.mxu0 0.0
  %5184 = vmatmul.mubr.f32.gmra.mrb[0].mxu0 %v4877
  %v5185 = vpop.f32.mrb[0].mxu0
  %v5186 = vadd.f32 0.0, %v5185
  %v5187 = vpop.f32.mrb[0].mxu0
  %5188 = vmatprep.mubr.f32.mxu0 0.0
  %5189 = vmatmul.mubr.f32.gmra.mrb[0].mxu0 %v4878
  %v5190 = vpop.f32.mrb[0].mxu0
  %v5191 = vadd.f32 0.0, %v5190
  %v5192 = vpop.f32.mrb[0].mxu0
  %5193 = vmatprep.mubr.f32.mxu0 0.0
  %5194 = vmatmul.mubr.f32.gmra.mrb[0].mxu0 %v4879
  %v5195 = vpop.f32.mrb[0].mxu0
  %v5196 = vadd.f32 0.0, %v5195
  %v5197 = vpop.f32.mrb[0].mxu0
  %5198 = vmatprep.mubr.f32.mxu0 0.0
  %5199 = vmatmul.mubr.f32.gmra.mrb[0].mxu0 %v4880
  %v5200 = vpop.f32.mrb[0].mxu0
  %v5201 = vadd.f32 0.0, %v5200
  %v5202 = vpop.f32.mrb[0].mxu0
  %5203 = vmatprep.mubr.f32.mxu0 0.0
  %5204 = vmatmul.mubr.f32.gmra.mrb[0].mxu0 %v4881
  %v5205 = vpop.f32.mrb[0].mxu0
  %v5206 = vadd.f32 0.0, %v5205
  %v5207 = vpop.f32.mrb[0].mxu0
  %5208 = vmatprep.mubr.f32.mxu0 0.0
  %5209 = vmatmul.mubr.f32.gmra.mrb[0].mxu0 %v4882
  %v5210 = vpop.f32.mrb[0].mxu0
  %v5211 = vadd.f32 0.0, %v5210
  %v5212 = vpop.f32.mrb[0].mxu0
  %5213 = vmatprep.mubr.f32.mxu0 0.0
  %5214 = vmatmul.mubr.f32.gmra.mrb[0].mxu0 %v4883
  %v5215 = vpop.f32.mrb[0].mxu0
  %v5216 = vadd.f32 0.0, %v5215
  %v5217 = vpop.f32.mrb[0].mxu0
  %5218 = vmatprep.mubr.f32.mxu0 0.0
  %5219 = vmatmul.mubr.f32.gmra.mrb[0].mxu0 %v4884
  %v5220 = vpop.f32.mrb[0].mxu0
  %v5221 = vadd.f32 0.0, %v5220
  %v5222 = vpop.f32.mrb[0].mxu0
  %5223 = vmatprep.mubr.f32.mxu0 0.0
  %5224 = vmatmul.mubr.f32.gmra.mrb[0].mxu0 %v4885
  %v5225 = vpop.f32.mrb[0].mxu0
  %v5226 = vadd.f32 0.0, %v5225
  %v5227 = vpop.f32.mrb[0].mxu0
  %5228 = vmatprep.mubr.f32.mxu0 0.0
  %5229 = vmatmul.mubr.f32.gmra.mrb[0].mxu0 %v4886
  %v5230 = vpop.f32.mrb[0].mxu0
  %v5231 = vadd.f32 0.0, %v5230
  %v5232 = vpop.f32.mrb[0].mxu0
  %5233 = vmatprep.mubr.f32.mxu0 0.0
  %5234 = vmatmul.mubr.f32.gmra.mrb[0].mxu0 %v4887
  %v5235 = vpop.f32.mrb[0].mxu0
  %v5236 = vadd.f32 0.0, %v5235
  %v5237 = vpop.f32.mrb[0].mxu0
  %5238 = vmatprep.mubr.f32.mxu0 0.0
  %5239 = vmatmul.mubr.f32.gmra.mrb[0].mxu0 %v4888
  %v5240 = vpop.f32.mrb[0].mxu0
  %v5241 = vadd.f32 0.0, %v5240
  %v5242 = vpop.f32.mrb[0].mxu0
  %5243 = vmatprep.mubr.f32.mxu0 0.0
  %5244 = vmatmul.mubr.f32.gmra.mrb[0].mxu0 %v4889
  %v5245 = vpop.f32.mrb[0].mxu0
  %v5246 = vadd.f32 0.0, %v5245
  %v5247 = vpop.f32.mrb[0].mxu0
  %5248 = vmatprep.mubr.f32.mxu0 0.0
  %5249 = vmatmul.mubr.f32.gmra.mrb[0].mxu0 %v4890
  %v5250 = vpop.f32.mrb[0].mxu0
  %v5251 = vadd.f32 0.0, %v5250
  %v5252 = vpop.f32.mrb[0].mxu0
  %5253 = vmatprep.mubr.f32.mxu0 0.0
  %5254 = vmatmul.mubr.f32.gmra.mrb[0].mxu0 %v4891
  %v5255 = vpop.f32.mrb[0].mxu0
  %v5256 = vadd.f32 0.0, %v5255
  %v5257 = vpop.f32.mrb[0].mxu0
  %5258 = vmatprep.mubr.f32.mxu0 0.0
  %5259 = vmatmul.mubr.f32.gmra.mrb[0].mxu0 %v4892
  %v5260 = vpop.f32.mrb[0].mxu0
  %v5261 = vadd.f32 0.0, %v5260
  %v5262 = vpop.f32.mrb[0].mxu0
  %5263 = vmatprep.mubr.f32.mxu0 0.0
  %5264 = vmatmul.mubr.f32.gmra.mrb[0].mxu0 %v4893
  %v5265 = vpop.f32.mrb[0].mxu0
  %v5266 = vadd.f32 0.0, %v5265
  %v5267 = vpop.f32.mrb[0].mxu0
  %5268 = vmatprep.mubr.f32.mxu0 0.0
  %5269 = vmatmul.mubr.f32.gmra.mrb[0].mxu0 %v4894
  %v5270 = vpop.f32.mrb[0].mxu0
  %v5271 = vadd.f32 0.0, %v5270
  %v5272 = vpop.f32.mrb[0].mxu0
  %5273 = vmatprep.mubr.f32.mxu0 0.0
  %5274 = vmatmul.mubr.f32.gmra.mrb[0].mxu0 %v4895
  %v5275 = vpop.f32.mrb[0].mxu0
  %v5276 = vadd.f32 0.0, %v5275
  %v5277 = vpop.f32.mrb[0].mxu0
  %5278 = vmatprep.mubr.f32.mxu0 0.0
  %5279 = vmatmul.mubr.f32.gmra.mrb[0].mxu0 %v4896
  %v5280 = vpop.f32.mrb[0].mxu0
  %v5281 = vadd.f32 0.0, %v5280
  %v5282 = vpop.f32.mrb[0].mxu0
  %5283 = vmatprep.mubr.f32.mxu0 0.0
  %5284 = vmatmul.mubr.f32.gmra.mrb[0].mxu0 %v4897
  %v5285 = vpop.f32.mrb[0].mxu0
  %v5286 = vadd.f32 0.0, %v5285
  %v5287 = vpop.f32.mrb[0].mxu0
  %5288 = vmatprep.mubr.f32.mxu0 0.0
  %5289 = vmatmul.mubr.f32.gmra.mrb[0].mxu0 %v4898
  %v5290 = vpop.f32.mrb[0].mxu0
  %v5291 = vadd.f32 0.0, %v5290
  %v5292 = vpop.f32.mrb[0].mxu0
  %5293 = vmatprep.mubr.f32.mxu0 0.0
  %5294 = vmatmul.mubr.f32.gmra.mrb[0].mxu0 %v4899
  %v5295 = vpop.f32.mrb[0].mxu0
  %v5296 = vadd.f32 0.0, %v5295
  %v5297 = vpop.f32.mrb[0].mxu0
  %5298 = vmatprep.mubr.f32.mxu0 0.0
  %5299 = vmatmul.mubr.f32.gmra.mrb[0].mxu0 %v4900
  %v5300 = vpop.f32.mrb[0].mxu0
  %v5301 = vadd.f32 0.0, %v5300
  %v5302 = vpop.f32.mrb[0].mxu0
  %5303 = vmatprep.mubr.f32.mxu0 0.0
  %5304 = vmatmul.mubr.f32.gmra.mrb[0].mxu0 %v4901
  %v5305 = vpop.f32.mrb[0].mxu0
  %v5306 = vadd.f32 0.0, %v5305
  %v5307 = vpop.f32.mrb[0].mxu0
  %5308 = vmatprep.mubr.f32.mxu0 0.0
  %5309 = vmatmul.mubr.f32.gmra.mrb[0].mxu0 %v4902
  %v5310 = vpop.f32.mrb[0].mxu0
  %v5311 = vadd.f32 0.0, %v5310
  %v5312 = vpop.f32.mrb[0].mxu0
  %5313 = vmatprep.mubr.f32.mxu0 0.0
  %5314 = vmatmul.mubr.f32.gmra.mrb[0].mxu0 %v4903
  %v5315 = vpop.f32.mrb[0].mxu0
  %v5316 = vadd.f32 0.0, %v5315
  %v5317 = vpop.f32.mrb[0].mxu0
  %5318 = vmatprep.mubr.f32.mxu0 0.0
  %5319 = vmatmul.mubr.f32.gmra.mrb[0].mxu0 %v4904
  %v5320 = vpop.f32.mrb[0].mxu0
  %v5321 = vadd.f32 0.0, %v5320
  %v5322 = vpop.f32.mrb[0].mxu0
  %5323 = vmatprep.mubr.f32.mxu0 0.0
  %5324 = vmatmul.mubr.f32.gmra.mrb[0].mxu0 %v4905
  %v5325 = vpop.f32.mrb[0].mxu0
  %v5326 = vadd.f32 0.0, %v5325
  %v5327 = vpop.f32.mrb[0].mxu0
  %5328 = vmatprep.mubr.f32.mxu0 0.0
  %5329 = vmatmul.mubr.f32.gmra.mrb[0].mxu0 %v4906
  %v5330 = vpop.f32.mrb[0].mxu0
  %v5331 = vadd.f32 0.0, %v5330
  %v5332 = vpop.f32.mrb[0].mxu0
  %5333 = vmatprep.mubr.f32.mxu0 0.0
  %5334 = vmatmul.mubr.f32.gmra.mrb[0].mxu0 %v4907
  %v5335 = vpop.f32.mrb[0].mxu0
  %v5336 = vadd.f32 0.0, %v5335
  %v5337 = vpop.f32.mrb[0].mxu0
  %5338 = vmatprep.mubr.f32.mxu0 0.0
  %5339 = vmatmul.mubr.f32.gmra.mrb[0].mxu0 %v4908
  %v5340 = vpop.f32.mrb[0].mxu0
  %v5341 = vadd.f32 0.0, %v5340
  %v5342 = vpop.f32.mrb[0].mxu0
  %5343 = vmatprep.mubr.f32.mxu0 0.0
  %5344 = vmatmul.mubr.f32.gmra.mrb[0].mxu0 %v4909
  %v5345 = vpop.f32.mrb[0].mxu0
  %v5346 = vadd.f32 0.0, %v5345
  %v5347 = vpop.f32.mrb[0].mxu0
  %5348 = vmatprep.mubr.f32.mxu0 0.0
  %5349 = vmatmul.mubr.f32.gmra.mrb[0].mxu0 %v4910
  %v5350 = vpop.f32.mrb[0].mxu0
  %v5351 = vadd.f32 0.0, %v5350
  %v5352 = vpop.f32.mrb[0].mxu0
  %5353 = vmatprep.mubr.f32.mxu0 0.0
  %5354 = vmatmul.mubr.f32.gmra.mrb[0].mxu0 %v4911
  %v5355 = vpop.f32.mrb[0].mxu0
  %v5356 = vadd.f32 0.0, %v5355
  %v5357 = vpop.f32.mrb[0].mxu0
  %5358 = vmatprep.mubr.f32.mxu0 0.0
  %5359 = vmatmul.mubr.f32.gmra.mrb[0].mxu0 %v4912
  %v5360 = vpop.f32.mrb[0].mxu0
  %v5361 = vadd.f32 0.0, %v5360
  %v5362 = vpop.f32.mrb[0].mxu0
  %5363 = vmatprep.mubr.f32.mxu0 0.0
  %5364 = vmatmul.mubr.f32.gmra.mrb[0].mxu0 %v4913
  %v5365 = vpop.f32.mrb[0].mxu0
  %v5366 = vadd.f32 0.0, %v5365
  %v5367 = vpop.f32.mrb[0].mxu0
  %5368 = vmatprep.mubr.f32.mxu0 0.0
  %5369 = vmatmul.mubr.f32.gmra.mrb[0].mxu0 %v4914
  %v5370 = vpop.f32.mrb[0].mxu0
  %v5371 = vadd.f32 0.0, %v5370
  %v5372 = vpop.f32.mrb[0].mxu0
  %5373 = vmatprep.mubr.f32.mxu0 0.0
  %5374 = vmatmul.mubr.f32.gmra.mrb[0].mxu0 %v4915
  %v5375 = vpop.f32.mrb[0].mxu0
  %v5376 = vadd.f32 0.0, %v5375
  %v5377 = vpop.f32.mrb[0].mxu0
  %5378 = vmatprep.mubr.f32.mxu0 0.0
  %5379 = vmatmul.mubr.f32.gmra.mrb[0].mxu0 %v4916
  %v5380 = vpop.f32.mrb[0].mxu0
  %v5381 = vadd.f32 0.0, %v5380
  %v5382 = vpop.f32.mrb[0].mxu0
  %5383 = vmatprep.mubr.f32.mxu0 0.0
  %5384 = vmatmul.mubr.f32.gmra.mrb[0].mxu0 %v4917
  %v5385 = vpop.f32.mrb[0].mxu0
  %v5386 = vadd.f32 0.0, %v5385
  %v5387 = vpop.f32.mrb[0].mxu0
  %5388 = vmatprep.mubr.f32.mxu0 0.0
  %5389 = vmatmul.mubr.f32.gmra.mrb[0].mxu0 %v4918
  %v5390 = vpop.f32.mrb[0].mxu0
  %v5391 = vadd.f32 0.0, %v5390
  %v5392 = vpop.f32.mrb[0].mxu0
  %5393 = vmatprep.mubr.f32.mxu0 0.0
  %5394 = vmatmul.mubr.f32.gmra.mrb[0].mxu0 %v4919
  %v5395 = vpop.f32.mrb[0].mxu0
  %v5396 = vadd.f32 0.0, %v5395
  %v5397 = vpop.f32.mrb[0].mxu0
  %5398 = vmatprep.mubr.f32.mxu0 0.0
  %5399 = vmatmul.mubr.f32.gmra.mrb[0].mxu0 %v4920
  %v5400 = vpop.f32.mrb[0].mxu0
  %v5401 = vadd.f32 0.0, %v5400
  %v5402 = vpop.f32.mrb[0].mxu0
  %5403 = vmatprep.mubr.f32.mxu0 0.0
  %5404 = vmatmul.mubr.f32.gmra.mrb[0].mxu0 %v4921
  %v5405 = vpop.f32.mrb[0].mxu0
  %v5406 = vadd.f32 0.0, %v5405
  %v5407 = vpop.f32.mrb[0].mxu0
  %5408 = vdwg.mxu0
  %v5409 = vadd.f32 %v4760, %v5006
  %v5410 = vadd.f32 %v4761, %v5011
  %v5411 = vadd.f32 %v4762, %v5016
  %v5412 = vadd.f32 %v4763, %v5021
  %v5413 = vadd.f32 %v4764, %v5026
  %v5414 = vadd.f32 %v4765, %v5031
  %v5415 = vadd.f32 %v4766, %v5036
  %v5416 = vadd.f32 %v4767, %v5041
  %v5417 = vadd.f32 %v4768, %v5046
  %v5418 = vadd.f32 %v4769, %v5051
  %v5419 = vadd.f32 %v4770, %v5056
  %v5420 = vadd.f32 %v4771, %v5061
  %v5421 = vadd.f32 %v4772, %v5066
  %v5422 = vadd.f32 %v4773, %v5071
  %v5423 = vadd.f32 %v4774, %v5076
  %v5424 = vadd.f32 %v4775, %v5081
  %v5425 = vadd.f32 %v4776, %v5086
  %v5426 = vadd.f32 %v4777, %v5091
  %v5427 = vadd.f32 %v4778, %v5096
  %v5428 = vadd.f32 %v4779, %v5101
  %v5429 = vadd.f32 %v4780, %v5106
  %v5430 = vadd.f32 %v4781, %v5111
  %v5431 = vadd.f32 %v4782, %v5116
  %v5432 = vadd.f32 %v4783, %v5121
  %v5433 = vadd.f32 %v4784, %v5126
  %v5434 = vadd.f32 %v4785, %v5131
  %v5435 = vadd.f32 %v4786, %v5136
  %v5436 = vadd.f32 %v4787, %v5141
  %v5437 = vadd.f32 %v4788, %v5146
  %v5438 = vadd.f32 %v4789, %v5151
  %v5439 = vadd.f32 %v4790, %v5156
  %v5440 = vadd.f32 %v4791, %v5161
  %v5441 = vadd.f32 %v4792, %v5166
  %v5442 = vadd.f32 %v4793, %v5171
  %v5443 = vadd.f32 %v4794, %v5176
  %v5444 = vadd.f32 %v4795, %v5181
  %v5445 = vadd.f32 %v4796, %v5186
  %v5446 = vadd.f32 %v4797, %v5191
  %v5447 = vadd.f32 %v4798, %v5196
  %v5448 = vadd.f32 %v4799, %v5201
  %v5449 = vadd.f32 %v4800, %v5206
  %v5450 = vadd.f32 %v4801, %v5211
  %v5451 = vadd.f32 %v4802, %v5216
  %v5452 = vadd.f32 %v4803, %v5221
  %v5453 = vadd.f32 %v4804, %v5226
  %v5454 = vadd.f32 %v4805, %v5231
  %v5455 = vadd.f32 %v4806, %v5236
  %v5456 = vadd.f32 %v4807, %v5241
  %v5457 = vadd.f32 %v4808, %v5246
  %v5458 = vadd.f32 %v4809, %v5251
  %v5459 = vadd.f32 %v4810, %v5256
  %v5460 = vadd.f32 %v4811, %v5261
  %v5461 = vadd.f32 %v4812, %v5266
  %v5462 = vadd.f32 %v4813, %v5271
  %v5463 = vadd.f32 %v4814, %v5276
  %v5464 = vadd.f32 %v4815, %v5281
  %v5465 = vadd.f32 %v4816, %v5286
  %v5466 = vadd.f32 %v4817, %v5291
  %v5467 = vadd.f32 %v4818, %v5296
  %v5468 = vadd.f32 %v4819, %v5301
  %v5469 = vadd.f32 %v4820, %v5306
  %v5470 = vadd.f32 %v4821, %v5311
  %v5471 = vadd.f32 %v4822, %v5316
  %v5472 = vadd.f32 %v4823, %v5321
  %v5473 = vadd.f32 %v4824, %v5326
  %v5474 = vadd.f32 %v4825, %v5331
  %v5475 = vadd.f32 %v4826, %v5336
  %v5476 = vadd.f32 %v4827, %v5341
  %v5477 = vadd.f32 %v4828, %v5346
  %v5478 = vadd.f32 %v4829, %v5351
  %v5479 = vadd.f32 %v4830, %v5356
  %v5480 = vadd.f32 %v4831, %v5361
  %v5481 = vadd.f32 %v4832, %v5366
  %v5482 = vadd.f32 %v4833, %v5371
  %v5483 = vadd.f32 %v4834, %v5376
  %v5484 = vadd.f32 %v4835, %v5381
  %v5485 = vadd.f32 %v4836, %v5386
  %v5486 = vadd.f32 %v4837, %v5391
  %v5487 = vadd.f32 %v4838, %v5396
  %v5488 = vadd.f32 %v4839, %v5401
  %v5489 = vadd.f32 %v4840, %v5406
  %v5490 = vld [vmem:[#allocation2 + $0x29] sm:$0xff]
  %v5491 = vld [vmem:[#allocation2 + $0x31] sm:$0xff]
  %v5492 = vld [vmem:[#allocation2 + $0x39] sm:$0xff]
  %v5493 = vld [vmem:[#allocation2 + $0x41] sm:$0xff]
  %v5494 = vld [vmem:[#allocation2 + $0x49] sm:$0xff]
  %v5495 = vld [vmem:[#allocation2 + $0x51] sm:$0xff]
  %v5496 = vld [vmem:[#allocation2 + $0x59] sm:$0xff]
  %v5497 = vld [vmem:[#allocation2 + $0x61] sm:$0xff]
  %v5498 = vld [vmem:[#allocation2 + $0x69] sm:$0xff]
  %v5499 = vld [vmem:[#allocation2 + $0x71] sm:$0xff]
  %v5500 = vld [vmem:[#allocation2 + $0x79] sm:$0xff]
  %v5501 = vld [vmem:[#allocation2 + $0x81] sm:$0xff]
  %v5502 = vld [vmem:[#allocation2 + $0x89] sm:$0xff]
  %v5503 = vld [vmem:[#allocation2 + $0x91] sm:$0xff]
  %v5504 = vld [vmem:[#allocation2 + $0x99] sm:$0xff]
  %v5505 = vld [vmem:[#allocation2 + $0xa1] sm:$0xff]
  %v5506 = vld [vmem:[#allocation2 + $0xa9] sm:$0xff]
  %v5507 = vld [vmem:[#allocation2 + $0xb1] sm:$0xff]
  %v5508 = vld [vmem:[#allocation2 + $0xb9] sm:$0xff]
  %v5509 = vld [vmem:[#allocation2 + $0xc1] sm:$0xff]
  %v5510 = vld [vmem:[#allocation2 + $0xc9] sm:$0xff]
  %v5511 = vld [vmem:[#allocation2 + $0xd1] sm:$0xff]
  %v5512 = vld [vmem:[#allocation2 + $0xd9] sm:$0xff]
  %v5513 = vld [vmem:[#allocation2 + $0xe1] sm:$0xff]
  %v5514 = vld [vmem:[#allocation2 + $0xe9] sm:$0xff]
  %v5515 = vld [vmem:[#allocation2 + $0xf1] sm:$0xff]
  %v5516 = vld [vmem:[#allocation2 + $0xf9] sm:$0xff]
  %v5517 = vld [vmem:[#allocation2 + $0x101] sm:$0xff]
  %v5518 = vld [vmem:[#allocation2 + $0x109] sm:$0xff]
  %v5519 = vld [vmem:[#allocation2 + $0x111] sm:$0xff]
  %v5520 = vld [vmem:[#allocation2 + $0x119] sm:$0xff]
  %v5521 = vld [vmem:[#allocation2 + $0x121] sm:$0xff]
  %v5522 = vld [vmem:[#allocation2 + $0x129] sm:$0xff]
  %v5523 = vld [vmem:[#allocation2 + $0x131] sm:$0xff]
  %v5524 = vld [vmem:[#allocation2 + $0x139] sm:$0xff]
  %v5525 = vld [vmem:[#allocation2 + $0x141] sm:$0xff]
  %v5526 = vld [vmem:[#allocation2 + $0x149] sm:$0xff]
  %v5527 = vld [vmem:[#allocation2 + $0x151] sm:$0xff]
  %v5528 = vld [vmem:[#allocation2 + $0x159] sm:$0xff]
  %v5529 = vld [vmem:[#allocation2 + $0x161] sm:$0xff]
  %v5530 = vld [vmem:[#allocation2 + $0x169] sm:$0xff]
  %v5531 = vld [vmem:[#allocation2 + $0x171] sm:$0xff]
  %v5532 = vld [vmem:[#allocation2 + $0x179] sm:$0xff]
  %v5533 = vld [vmem:[#allocation2 + $0x181] sm:$0xff]
  %v5534 = vld [vmem:[#allocation2 + $0x189] sm:$0xff]
  %v5535 = vld [vmem:[#allocation2 + $0x191] sm:$0xff]
  %v5536 = vld [vmem:[#allocation2 + $0x199] sm:$0xff]
  %v5537 = vld [vmem:[#allocation2 + $0x1a1] sm:$0xff]
  %v5538 = vld [vmem:[#allocation2 + $0x1a9] sm:$0xff]
  %v5539 = vld [vmem:[#allocation2 + $0x1b1] sm:$0xff]
  %v5540 = vld [vmem:[#allocation2 + $0x1b9] sm:$0xff]
  %v5541 = vld [vmem:[#allocation2 + $0x1c1] sm:$0xff]
  %v5542 = vld [vmem:[#allocation2 + $0x1c9] sm:$0xff]
  %v5543 = vld [vmem:[#allocation2 + $0x1d1] sm:$0xff]
  %v5544 = vld [vmem:[#allocation2 + $0x1d9] sm:$0xff]
  %v5545 = vld [vmem:[#allocation2 + $0x1e1] sm:$0xff]
  %v5546 = vld [vmem:[#allocation2 + $0x1e9] sm:$0xff]
  %v5547 = vld [vmem:[#allocation2 + $0x1f1] sm:$0xff]
  %v5548 = vld [vmem:[#allocation2 + $0x1f9] sm:$0xff]
  %v5549 = vld [vmem:[#allocation2 + $0x201] sm:$0xff]
  %v5550 = vld [vmem:[#allocation2 + $0x209] sm:$0xff]
  %v5551 = vld [vmem:[#allocation2 + $0x211] sm:$0xff]
  %v5552 = vld [vmem:[#allocation2 + $0x219] sm:$0xff]
  %v5553 = vld [vmem:[#allocation2 + $0x221] sm:$0xff]
  %v5554 = vld [vmem:[#allocation2 + $0x229] sm:$0xff]
  %v5555 = vld [vmem:[#allocation2 + $0x231] sm:$0xff]
  %v5556 = vld [vmem:[#allocation2 + $0x239] sm:$0xff]
  %v5557 = vld [vmem:[#allocation2 + $0x241] sm:$0xff]
  %v5558 = vld [vmem:[#allocation2 + $0x249] sm:$0xff]
  %v5559 = vld [vmem:[#allocation2 + $0x251] sm:$0xff]
  %v5560 = vld [vmem:[#allocation2 + $0x259] sm:$0xff]
  %v5561 = vld [vmem:[#allocation2 + $0x261] sm:$0xff]
  %v5562 = vld [vmem:[#allocation2 + $0x269] sm:$0xff]
  %v5563 = vld [vmem:[#allocation2 + $0x271] sm:$0xff]
  %v5564 = vld [vmem:[#allocation2 + $0x279] sm:$0xff]
  %v5565 = vld [vmem:[#allocation2 + $0x281] sm:$0xff]
  %v5566 = vld [vmem:[#allocation2 + $0x289] sm:$0xff]
  %v5567 = vld [vmem:[#allocation2 + $0x291] sm:$0xff]
  %v5568 = vld [vmem:[#allocation2 + $0x299] sm:$0xff]
  %v5569 = vld [vmem:[#allocation2 + $0x2a1] sm:$0xff]
  %v5570 = vld [vmem:[#allocation2 + $0x2a9] sm:$0xff]
  %s5571 = scalar_lea.vmem %s2, 768
  %v5572 = vld [vmem:[%s5571] sm:$0xff]
  %v5573 = vld [vmem:[%s5571 + $0x8] sm:$0xff]
  %v5574 = vld [vmem:[%s5571 + $0x10] sm:$0xff]
  %v5575 = vld [vmem:[%s5571 + $0x18] sm:$0xff]
  %v5576 = vld [vmem:[%s5571 + $0x20] sm:$0xff]
  %v5577 = vld [vmem:[%s5571 + $0x28] sm:$0xff]
  %v5578 = vld [vmem:[%s5571 + $0x30] sm:$0xff]
  %v5579 = vld [vmem:[%s5571 + $0x38] sm:$0xff]
  %v5580 = vld [vmem:[%s5571 + $0x40] sm:$0xff]
  %v5581 = vld [vmem:[%s5571 + $0x48] sm:$0xff]
  %v5582 = vld [vmem:[%s5571 + $0x50] sm:$0xff]
  %v5583 = vld [vmem:[%s5571 + $0x58] sm:$0xff]
  %v5584 = vld [vmem:[%s5571 + $0x60] sm:$0xff]
  %v5585 = vld [vmem:[%s5571 + $0x68] sm:$0xff]
  %v5586 = vld [vmem:[%s5571 + $0x70] sm:$0xff]
  %v5587 = vld [vmem:[%s5571 + $0x78] sm:$0xff]
  %5588 = vmatprep.subr.mxu0 0.0
  %5589 = vmatpush1.msra.mxu0 %v5572
  %5590 = vmatprep.subr.mxu0 0.0
  %5591 = vmatpush1.msra.mxu0 %v5573
  %5592 = vmatprep.subr.mxu0 0.0
  %5593 = vmatpush1.msra.mxu0 %v5574
  %5594 = vmatprep.subr.mxu0 0.0
  %5595 = vmatpush1.msra.mxu0 %v5575
  %5596 = vmatprep.subr.mxu0 0.0
  %5597 = vmatpush1.msra.mxu0 %v5576
  %5598 = vmatprep.subr.mxu0 0.0
  %5599 = vmatpush1.msra.mxu0 %v5577
  %5600 = vmatprep.subr.mxu0 0.0
  %5601 = vmatpush1.msra.mxu0 %v5578
  %5602 = vmatprep.subr.mxu0 0.0
  %5603 = vmatpush1.msra.mxu0 %v5579
  %5604 = vmatprep.subr.mxu0 0.0
  %5605 = vmatpush1.msra.mxu0 %v5580
  %5606 = vmatprep.subr.mxu0 0.0
  %5607 = vmatpush1.msra.mxu0 %v5581
  %5608 = vmatprep.subr.mxu0 0.0
  %5609 = vmatpush1.msra.mxu0 %v5582
  %5610 = vmatprep.subr.mxu0 0.0
  %5611 = vmatpush1.msra.mxu0 %v5583
  %5612 = vmatprep.subr.mxu0 0.0
  %5613 = vmatpush1.msra.mxu0 %v5584
  %5614 = vmatprep.subr.mxu0 0.0
  %5615 = vmatpush1.msra.mxu0 %v5585
  %5616 = vmatprep.subr.mxu0 0.0
  %5617 = vmatpush1.msra.mxu0 %v5586
  %5618 = vmatprep.subr.mxu0 0.0
  %5619 = vmatpush1.msra.mxu0 %v5587
  %5620 = vmatprep.subr.mxu0 0.0
  %5621 = vmatpush1.msra.mxu0 0.0
  %5622 = vmatprep.subr.mxu0 0.0
  %5623 = vmatpush1.msra.mxu0 0.0
  %5624 = vmatprep.subr.mxu0 0.0
  %5625 = vmatpush1.msra.mxu0 0.0
  %5626 = vmatprep.subr.mxu0 0.0
  %5627 = vmatpush1.msra.mxu0 0.0
  %5628 = vmatprep.subr.mxu0 0.0
  %5629 = vmatpush1.msra.mxu0 0.0
  %5630 = vmatprep.subr.mxu0 0.0
  %5631 = vmatpush1.msra.mxu0 0.0
  %5632 = vmatprep.subr.mxu0 0.0
  %5633 = vmatpush1.msra.mxu0 0.0
  %5634 = vmatprep.subr.mxu0 0.0
  %5635 = vmatpush1.msra.mxu0 0.0
  %5636 = vmatprep.subr.mxu0 0.0
  %5637 = vmatpush1.msra.mxu0 0.0
  %5638 = vmatprep.subr.mxu0 0.0
  %5639 = vmatpush1.msra.mxu0 0.0
  %5640 = vmatprep.subr.mxu0 0.0
  %5641 = vmatpush1.msra.mxu0 0.0
  %5642 = vmatprep.subr.mxu0 0.0
  %5643 = vmatpush1.msra.mxu0 0.0
  %5644 = vmatprep.subr.mxu0 0.0
  %5645 = vmatpush1.msra.mxu0 0.0
  %5646 = vmatprep.subr.mxu0 0.0
  %5647 = vmatpush1.msra.mxu0 0.0
  %5648 = vmatprep.subr.mxu0 0.0
  %5649 = vmatpush1.msra.mxu0 0.0
  %5650 = vmatprep.subr.mxu0 0.0
  %5651 = vmatpush1.msra.mxu0 0.0
  %5652 = vmatprep.mubr.f32.mxu0 0.0
  %5653 = vmatmul.mubr.f32.gmra.mrb[0].mxu0 %v5490
  %v5654 = vpop.f32.mrb[0].mxu0
  %v5655 = vadd.f32 0.0, %v5654
  %v5656 = vpop.f32.mrb[0].mxu0
  %5657 = vmatprep.mubr.f32.mxu0 0.0
  %5658 = vmatmul.mubr.f32.gmra.mrb[0].mxu0 %v5491
  %v5659 = vpop.f32.mrb[0].mxu0
  %v5660 = vadd.f32 0.0, %v5659
  %v5661 = vpop.f32.mrb[0].mxu0
  %5662 = vmatprep.mubr.f32.mxu0 0.0
  %5663 = vmatmul.mubr.f32.gmra.mrb[0].mxu0 %v5492
  %v5664 = vpop.f32.mrb[0].mxu0
  %v5665 = vadd.f32 0.0, %v5664
  %v5666 = vpop.f32.mrb[0].mxu0
  %5667 = vmatprep.mubr.f32.mxu0 0.0
  %5668 = vmatmul.mubr.f32.gmra.mrb[0].mxu0 %v5493
  %v5669 = vpop.f32.mrb[0].mxu0
  %v5670 = vadd.f32 0.0, %v5669
  %v5671 = vpop.f32.mrb[0].mxu0
  %5672 = vmatprep.mubr.f32.mxu0 0.0
  %5673 = vmatmul.mubr.f32.gmra.mrb[0].mxu0 %v5494
  %v5674 = vpop.f32.mrb[0].mxu0
  %v5675 = vadd.f32 0.0, %v5674
  %v5676 = vpop.f32.mrb[0].mxu0
  %5677 = vmatprep.mubr.f32.mxu0 0.0
  %5678 = vmatmul.mubr.f32.gmra.mrb[0].mxu0 %v5495
  %v5679 = vpop.f32.mrb[0].mxu0
  %v5680 = vadd.f32 0.0, %v5679
  %v5681 = vpop.f32.mrb[0].mxu0
  %5682 = vmatprep.mubr.f32.mxu0 0.0
  %5683 = vmatmul.mubr.f32.gmra.mrb[0].mxu0 %v5496
  %v5684 = vpop.f32.mrb[0].mxu0
  %v5685 = vadd.f32 0.0, %v5684
  %v5686 = vpop.f32.mrb[0].mxu0
  %5687 = vmatprep.mubr.f32.mxu0 0.0
  %5688 = vmatmul.mubr.f32.gmra.mrb[0].mxu0 %v5497
  %v5689 = vpop.f32.mrb[0].mxu0
  %v5690 = vadd.f32 0.0, %v5689
  %v5691 = vpop.f32.mrb[0].mxu0
  %5692 = vmatprep.mubr.f32.mxu0 0.0
  %5693 = vmatmul.mubr.f32.gmra.mrb[0].mxu0 %v5498
  %v5694 = vpop.f32.mrb[0].mxu0
  %v5695 = vadd.f32 0.0, %v5694
  %v5696 = vpop.f32.mrb[0].mxu0
  %5697 = vmatprep.mubr.f32.mxu0 0.0
  %5698 = vmatmul.mubr.f32.gmra.mrb[0].mxu0 %v5499
  %v5699 = vpop.f32.mrb[0].mxu0
  %v5700 = vadd.f32 0.0, %v5699
  %v5701 = vpop.f32.mrb[0].mxu0
  %5702 = vmatprep.mubr.f32.mxu0 0.0
  %5703 = vmatmul.mubr.f32.gmra.mrb[0].mxu0 %v5500
  %v5704 = vpop.f32.mrb[0].mxu0
  %v5705 = vadd.f32 0.0, %v5704
  %v5706 = vpop.f32.mrb[0].mxu0
  %5707 = vmatprep.mubr.f32.mxu0 0.0
  %5708 = vmatmul.mubr.f32.gmra.mrb[0].mxu0 %v5501
  %v5709 = vpop.f32.mrb[0].mxu0
  %v5710 = vadd.f32 0.0, %v5709
  %v5711 = vpop.f32.mrb[0].mxu0
  %5712 = vmatprep.mubr.f32.mxu0 0.0
  %5713 = vmatmul.mubr.f32.gmra.mrb[0].mxu0 %v5502
  %v5714 = vpop.f32.mrb[0].mxu0
  %v5715 = vadd.f32 0.0, %v5714
  %v5716 = vpop.f32.mrb[0].mxu0
  %5717 = vmatprep.mubr.f32.mxu0 0.0
  %5718 = vmatmul.mubr.f32.gmra.mrb[0].mxu0 %v5503
  %v5719 = vpop.f32.mrb[0].mxu0
  %v5720 = vadd.f32 0.0, %v5719
  %v5721 = vpop.f32.mrb[0].mxu0
  %5722 = vmatprep.mubr.f32.mxu0 0.0
  %5723 = vmatmul.mubr.f32.gmra.mrb[0].mxu0 %v5504
  %v5724 = vpop.f32.mrb[0].mxu0
  %v5725 = vadd.f32 0.0, %v5724
  %v5726 = vpop.f32.mrb[0].mxu0
  %5727 = vmatprep.mubr.f32.mxu0 0.0
  %5728 = vmatmul.mubr.f32.gmra.mrb[0].mxu0 %v5505
  %v5729 = vpop.f32.mrb[0].mxu0
  %v5730 = vadd.f32 0.0, %v5729
  %v5731 = vpop.f32.mrb[0].mxu0
  %5732 = vmatprep.mubr.f32.mxu0 0.0
  %5733 = vmatmul.mubr.f32.gmra.mrb[0].mxu0 %v5506
  %v5734 = vpop.f32.mrb[0].mxu0
  %v5735 = vadd.f32 0.0, %v5734
  %v5736 = vpop.f32.mrb[0].mxu0
  %5737 = vmatprep.mubr.f32.mxu0 0.0
  %5738 = vmatmul.mubr.f32.gmra.mrb[0].mxu0 %v5507
  %v5739 = vpop.f32.mrb[0].mxu0
  %v5740 = vadd.f32 0.0, %v5739
  %v5741 = vpop.f32.mrb[0].mxu0
  %5742 = vmatprep.mubr.f32.mxu0 0.0
  %5743 = vmatmul.mubr.f32.gmra.mrb[0].mxu0 %v5508
  %v5744 = vpop.f32.mrb[0].mxu0
  %v5745 = vadd.f32 0.0, %v5744
  %v5746 = vpop.f32.mrb[0].mxu0
  %5747 = vmatprep.mubr.f32.mxu0 0.0
  %5748 = vmatmul.mubr.f32.gmra.mrb[0].mxu0 %v5509
  %v5749 = vpop.f32.mrb[0].mxu0
  %v5750 = vadd.f32 0.0, %v5749
  %v5751 = vpop.f32.mrb[0].mxu0
  %5752 = vmatprep.mubr.f32.mxu0 0.0
  %5753 = vmatmul.mubr.f32.gmra.mrb[0].mxu0 %v5510
  %v5754 = vpop.f32.mrb[0].mxu0
  %v5755 = vadd.f32 0.0, %v5754
  %v5756 = vpop.f32.mrb[0].mxu0
  %5757 = vmatprep.mubr.f32.mxu0 0.0
  %5758 = vmatmul.mubr.f32.gmra.mrb[0].mxu0 %v5511
  %v5759 = vpop.f32.mrb[0].mxu0
  %v5760 = vadd.f32 0.0, %v5759
  %v5761 = vpop.f32.mrb[0].mxu0
  %5762 = vmatprep.mubr.f32.mxu0 0.0
  %5763 = vmatmul.mubr.f32.gmra.mrb[0].mxu0 %v5512
  %v5764 = vpop.f32.mrb[0].mxu0
  %v5765 = vadd.f32 0.0, %v5764
  %v5766 = vpop.f32.mrb[0].mxu0
  %5767 = vmatprep.mubr.f32.mxu0 0.0
  %5768 = vmatmul.mubr.f32.gmra.mrb[0].mxu0 %v5513
  %v5769 = vpop.f32.mrb[0].mxu0
  %v5770 = vadd.f32 0.0, %v5769
  %v5771 = vpop.f32.mrb[0].mxu0
  %5772 = vmatprep.mubr.f32.mxu0 0.0
  %5773 = vmatmul.mubr.f32.gmra.mrb[0].mxu0 %v5514
  %v5774 = vpop.f32.mrb[0].mxu0
  %v5775 = vadd.f32 0.0, %v5774
  %v5776 = vpop.f32.mrb[0].mxu0
  %5777 = vmatprep.mubr.f32.mxu0 0.0
  %5778 = vmatmul.mubr.f32.gmra.mrb[0].mxu0 %v5515
  %v5779 = vpop.f32.mrb[0].mxu0
  %v5780 = vadd.f32 0.0, %v5779
  %v5781 = vpop.f32.mrb[0].mxu0
  %5782 = vmatprep.mubr.f32.mxu0 0.0
  %5783 = vmatmul.mubr.f32.gmra.mrb[0].mxu0 %v5516
  %v5784 = vpop.f32.mrb[0].mxu0
  %v5785 = vadd.f32 0.0, %v5784
  %v5786 = vpop.f32.mrb[0].mxu0
  %5787 = vmatprep.mubr.f32.mxu0 0.0
  %5788 = vmatmul.mubr.f32.gmra.mrb[0].mxu0 %v5517
  %v5789 = vpop.f32.mrb[0].mxu0
  %v5790 = vadd.f32 0.0, %v5789
  %v5791 = vpop.f32.mrb[0].mxu0
  %5792 = vmatprep.mubr.f32.mxu0 0.0
  %5793 = vmatmul.mubr.f32.gmra.mrb[0].mxu0 %v5518
  %v5794 = vpop.f32.mrb[0].mxu0
  %v5795 = vadd.f32 0.0, %v5794
  %v5796 = vpop.f32.mrb[0].mxu0
  %5797 = vmatprep.mubr.f32.mxu0 0.0
  %5798 = vmatmul.mubr.f32.gmra.mrb[0].mxu0 %v5519
  %v5799 = vpop.f32.mrb[0].mxu0
  %v5800 = vadd.f32 0.0, %v5799
  %v5801 = vpop.f32.mrb[0].mxu0
  %5802 = vmatprep.mubr.f32.mxu0 0.0
  %5803 = vmatmul.mubr.f32.gmra.mrb[0].mxu0 %v5520
  %v5804 = vpop.f32.mrb[0].mxu0
  %v5805 = vadd.f32 0.0, %v5804
  %v5806 = vpop.f32.mrb[0].mxu0
  %5807 = vmatprep.mubr.f32.mxu0 0.0
  %5808 = vmatmul.mubr.f32.gmra.mrb[0].mxu0 %v5521
  %v5809 = vpop.f32.mrb[0].mxu0
  %v5810 = vadd.f32 0.0, %v5809
  %v5811 = vpop.f32.mrb[0].mxu0
  %5812 = vmatprep.mubr.f32.mxu0 0.0
  %5813 = vmatmul.mubr.f32.gmra.mrb[0].mxu0 %v5522
  %v5814 = vpop.f32.mrb[0].mxu0
  %v5815 = vadd.f32 0.0, %v5814
  %v5816 = vpop.f32.mrb[0].mxu0
  %5817 = vmatprep.mubr.f32.mxu0 0.0
  %5818 = vmatmul.mubr.f32.gmra.mrb[0].mxu0 %v5523
  %v5819 = vpop.f32.mrb[0].mxu0
  %v5820 = vadd.f32 0.0, %v5819
  %v5821 = vpop.f32.mrb[0].mxu0
  %5822 = vmatprep.mubr.f32.mxu0 0.0
  %5823 = vmatmul.mubr.f32.gmra.mrb[0].mxu0 %v5524
  %v5824 = vpop.f32.mrb[0].mxu0
  %v5825 = vadd.f32 0.0, %v5824
  %v5826 = vpop.f32.mrb[0].mxu0
  %5827 = vmatprep.mubr.f32.mxu0 0.0
  %5828 = vmatmul.mubr.f32.gmra.mrb[0].mxu0 %v5525
  %v5829 = vpop.f32.mrb[0].mxu0
  %v5830 = vadd.f32 0.0, %v5829
  %v5831 = vpop.f32.mrb[0].mxu0
  %5832 = vmatprep.mubr.f32.mxu0 0.0
  %5833 = vmatmul.mubr.f32.gmra.mrb[0].mxu0 %v5526
  %v5834 = vpop.f32.mrb[0].mxu0
  %v5835 = vadd.f32 0.0, %v5834
  %v5836 = vpop.f32.mrb[0].mxu0
  %5837 = vmatprep.mubr.f32.mxu0 0.0
  %5838 = vmatmul.mubr.f32.gmra.mrb[0].mxu0 %v5527
  %v5839 = vpop.f32.mrb[0].mxu0
  %v5840 = vadd.f32 0.0, %v5839
  %v5841 = vpop.f32.mrb[0].mxu0
  %5842 = vmatprep.mubr.f32.mxu0 0.0
  %5843 = vmatmul.mubr.f32.gmra.mrb[0].mxu0 %v5528
  %v5844 = vpop.f32.mrb[0].mxu0
  %v5845 = vadd.f32 0.0, %v5844
  %v5846 = vpop.f32.mrb[0].mxu0
  %5847 = vmatprep.mubr.f32.mxu0 0.0
  %5848 = vmatmul.mubr.f32.gmra.mrb[0].mxu0 %v5529
  %v5849 = vpop.f32.mrb[0].mxu0
  %v5850 = vadd.f32 0.0, %v5849
  %v5851 = vpop.f32.mrb[0].mxu0
  %5852 = vmatprep.mubr.f32.mxu0 0.0
  %5853 = vmatmul.mubr.f32.gmra.mrb[0].mxu0 %v5530
  %v5854 = vpop.f32.mrb[0].mxu0
  %v5855 = vadd.f32 0.0, %v5854
  %v5856 = vpop.f32.mrb[0].mxu0
  %5857 = vmatprep.mubr.f32.mxu0 0.0
  %5858 = vmatmul.mubr.f32.gmra.mrb[0].mxu0 %v5531
  %v5859 = vpop.f32.mrb[0].mxu0
  %v5860 = vadd.f32 0.0, %v5859
  %v5861 = vpop.f32.mrb[0].mxu0
  %5862 = vmatprep.mubr.f32.mxu0 0.0
  %5863 = vmatmul.mubr.f32.gmra.mrb[0].mxu0 %v5532
  %v5864 = vpop.f32.mrb[0].mxu0
  %v5865 = vadd.f32 0.0, %v5864
  %v5866 = vpop.f32.mrb[0].mxu0
  %5867 = vmatprep.mubr.f32.mxu0 0.0
  %5868 = vmatmul.mubr.f32.gmra.mrb[0].mxu0 %v5533
  %v5869 = vpop.f32.mrb[0].mxu0
  %v5870 = vadd.f32 0.0, %v5869
  %v5871 = vpop.f32.mrb[0].mxu0
  %5872 = vmatprep.mubr.f32.mxu0 0.0
  %5873 = vmatmul.mubr.f32.gmra.mrb[0].mxu0 %v5534
  %v5874 = vpop.f32.mrb[0].mxu0
  %v5875 = vadd.f32 0.0, %v5874
  %v5876 = vpop.f32.mrb[0].mxu0
  %5877 = vmatprep.mubr.f32.mxu0 0.0
  %5878 = vmatmul.mubr.f32.gmra.mrb[0].mxu0 %v5535
  %v5879 = vpop.f32.mrb[0].mxu0
  %v5880 = vadd.f32 0.0, %v5879
  %v5881 = vpop.f32.mrb[0].mxu0
  %5882 = vmatprep.mubr.f32.mxu0 0.0
  %5883 = vmatmul.mubr.f32.gmra.mrb[0].mxu0 %v5536
  %v5884 = vpop.f32.mrb[0].mxu0
  %v5885 = vadd.f32 0.0, %v5884
  %v5886 = vpop.f32.mrb[0].mxu0
  %5887 = vmatprep.mubr.f32.mxu0 0.0
  %5888 = vmatmul.mubr.f32.gmra.mrb[0].mxu0 %v5537
  %v5889 = vpop.f32.mrb[0].mxu0
  %v5890 = vadd.f32 0.0, %v5889
  %v5891 = vpop.f32.mrb[0].mxu0
  %5892 = vmatprep.mubr.f32.mxu0 0.0
  %5893 = vmatmul.mubr.f32.gmra.mrb[0].mxu0 %v5538
  %v5894 = vpop.f32.mrb[0].mxu0
  %v5895 = vadd.f32 0.0, %v5894
  %v5896 = vpop.f32.mrb[0].mxu0
  %5897 = vmatprep.mubr.f32.mxu0 0.0
  %5898 = vmatmul.mubr.f32.gmra.mrb[0].mxu0 %v5539
  %v5899 = vpop.f32.mrb[0].mxu0
  %v5900 = vadd.f32 0.0, %v5899
  %v5901 = vpop.f32.mrb[0].mxu0
  %5902 = vmatprep.mubr.f32.mxu0 0.0
  %5903 = vmatmul.mubr.f32.gmra.mrb[0].mxu0 %v5540
  %v5904 = vpop.f32.mrb[0].mxu0
  %v5905 = vadd.f32 0.0, %v5904
  %v5906 = vpop.f32.mrb[0].mxu0
  %5907 = vmatprep.mubr.f32.mxu0 0.0
  %5908 = vmatmul.mubr.f32.gmra.mrb[0].mxu0 %v5541
  %v5909 = vpop.f32.mrb[0].mxu0
  %v5910 = vadd.f32 0.0, %v5909
  %v5911 = vpop.f32.mrb[0].mxu0
  %5912 = vmatprep.mubr.f32.mxu0 0.0
  %5913 = vmatmul.mubr.f32.gmra.mrb[0].mxu0 %v5542
  %v5914 = vpop.f32.mrb[0].mxu0
  %v5915 = vadd.f32 0.0, %v5914
  %v5916 = vpop.f32.mrb[0].mxu0
  %5917 = vmatprep.mubr.f32.mxu0 0.0
  %5918 = vmatmul.mubr.f32.gmra.mrb[0].mxu0 %v5543
  %v5919 = vpop.f32.mrb[0].mxu0
  %v5920 = vadd.f32 0.0, %v5919
  %v5921 = vpop.f32.mrb[0].mxu0
  %5922 = vmatprep.mubr.f32.mxu0 0.0
  %5923 = vmatmul.mubr.f32.gmra.mrb[0].mxu0 %v5544
  %v5924 = vpop.f32.mrb[0].mxu0
  %v5925 = vadd.f32 0.0, %v5924
  %v5926 = vpop.f32.mrb[0].mxu0
  %5927 = vmatprep.mubr.f32.mxu0 0.0
  %5928 = vmatmul.mubr.f32.gmra.mrb[0].mxu0 %v5545
  %v5929 = vpop.f32.mrb[0].mxu0
  %v5930 = vadd.f32 0.0, %v5929
  %v5931 = vpop.f32.mrb[0].mxu0
  %5932 = vmatprep.mubr.f32.mxu0 0.0
  %5933 = vmatmul.mubr.f32.gmra.mrb[0].mxu0 %v5546
  %v5934 = vpop.f32.mrb[0].mxu0
  %v5935 = vadd.f32 0.0, %v5934
  %v5936 = vpop.f32.mrb[0].mxu0
  %5937 = vmatprep.mubr.f32.mxu0 0.0
  %5938 = vmatmul.mubr.f32.gmra.mrb[0].mxu0 %v5547
  %v5939 = vpop.f32.mrb[0].mxu0
  %v5940 = vadd.f32 0.0, %v5939
  %v5941 = vpop.f32.mrb[0].mxu0
  %5942 = vmatprep.mubr.f32.mxu0 0.0
  %5943 = vmatmul.mubr.f32.gmra.mrb[0].mxu0 %v5548
  %v5944 = vpop.f32.mrb[0].mxu0
  %v5945 = vadd.f32 0.0, %v5944
  %v5946 = vpop.f32.mrb[0].mxu0
  %5947 = vmatprep.mubr.f32.mxu0 0.0
  %5948 = vmatmul.mubr.f32.gmra.mrb[0].mxu0 %v5549
  %v5949 = vpop.f32.mrb[0].mxu0
  %v5950 = vadd.f32 0.0, %v5949
  %v5951 = vpop.f32.mrb[0].mxu0
  %5952 = vmatprep.mubr.f32.mxu0 0.0
  %5953 = vmatmul.mubr.f32.gmra.mrb[0].mxu0 %v5550
  %v5954 = vpop.f32.mrb[0].mxu0
  %v5955 = vadd.f32 0.0, %v5954
  %v5956 = vpop.f32.mrb[0].mxu0
  %5957 = vmatprep.mubr.f32.mxu0 0.0
  %5958 = vmatmul.mubr.f32.gmra.mrb[0].mxu0 %v5551
  %v5959 = vpop.f32.mrb[0].mxu0
  %v5960 = vadd.f32 0.0, %v5959
  %v5961 = vpop.f32.mrb[0].mxu0
  %5962 = vmatprep.mubr.f32.mxu0 0.0
  %5963 = vmatmul.mubr.f32.gmra.mrb[0].mxu0 %v5552
  %v5964 = vpop.f32.mrb[0].mxu0
  %v5965 = vadd.f32 0.0, %v5964
  %v5966 = vpop.f32.mrb[0].mxu0
  %5967 = vmatprep.mubr.f32.mxu0 0.0
  %5968 = vmatmul.mubr.f32.gmra.mrb[0].mxu0 %v5553
  %v5969 = vpop.f32.mrb[0].mxu0
  %v5970 = vadd.f32 0.0, %v5969
  %v5971 = vpop.f32.mrb[0].mxu0
  %5972 = vmatprep.mubr.f32.mxu0 0.0
  %5973 = vmatmul.mubr.f32.gmra.mrb[0].mxu0 %v5554
  %v5974 = vpop.f32.mrb[0].mxu0
  %v5975 = vadd.f32 0.0, %v5974
  %v5976 = vpop.f32.mrb[0].mxu0
  %5977 = vmatprep.mubr.f32.mxu0 0.0
  %5978 = vmatmul.mubr.f32.gmra.mrb[0].mxu0 %v5555
  %v5979 = vpop.f32.mrb[0].mxu0
  %v5980 = vadd.f32 0.0, %v5979
  %v5981 = vpop.f32.mrb[0].mxu0
  %5982 = vmatprep.mubr.f32.mxu0 0.0
  %5983 = vmatmul.mubr.f32.gmra.mrb[0].mxu0 %v5556
  %v5984 = vpop.f32.mrb[0].mxu0
  %v5985 = vadd.f32 0.0, %v5984
  %v5986 = vpop.f32.mrb[0].mxu0
  %5987 = vmatprep.mubr.f32.mxu0 0.0
  %5988 = vmatmul.mubr.f32.gmra.mrb[0].mxu0 %v5557
  %v5989 = vpop.f32.mrb[0].mxu0
  %v5990 = vadd.f32 0.0, %v5989
  %v5991 = vpop.f32.mrb[0].mxu0
  %5992 = vmatprep.mubr.f32.mxu0 0.0
  %5993 = vmatmul.mubr.f32.gmra.mrb[0].mxu0 %v5558
  %v5994 = vpop.f32.mrb[0].mxu0
  %v5995 = vadd.f32 0.0, %v5994
  %v5996 = vpop.f32.mrb[0].mxu0
  %5997 = vmatprep.mubr.f32.mxu0 0.0
  %5998 = vmatmul.mubr.f32.gmra.mrb[0].mxu0 %v5559
  %v5999 = vpop.f32.mrb[0].mxu0
  %v6000 = vadd.f32 0.0, %v5999
  %v6001 = vpop.f32.mrb[0].mxu0
  %6002 = vmatprep.mubr.f32.mxu0 0.0
  %6003 = vmatmul.mubr.f32.gmra.mrb[0].mxu0 %v5560
  %v6004 = vpop.f32.mrb[0].mxu0
  %v6005 = vadd.f32 0.0, %v6004
  %v6006 = vpop.f32.mrb[0].mxu0
  %6007 = vmatprep.mubr.f32.mxu0 0.0
  %6008 = vmatmul.mubr.f32.gmra.mrb[0].mxu0 %v5561
  %v6009 = vpop.f32.mrb[0].mxu0
  %v6010 = vadd.f32 0.0, %v6009
  %v6011 = vpop.f32.mrb[0].mxu0
  %6012 = vmatprep.mubr.f32.mxu0 0.0
  %6013 = vmatmul.mubr.f32.gmra.mrb[0].mxu0 %v5562
  %v6014 = vpop.f32.mrb[0].mxu0
  %v6015 = vadd.f32 0.0, %v6014
  %v6016 = vpop.f32.mrb[0].mxu0
  %6017 = vmatprep.mubr.f32.mxu0 0.0
  %6018 = vmatmul.mubr.f32.gmra.mrb[0].mxu0 %v5563
  %v6019 = vpop.f32.mrb[0].mxu0
  %v6020 = vadd.f32 0.0, %v6019
  %v6021 = vpop.f32.mrb[0].mxu0
  %6022 = vmatprep.mubr.f32.mxu0 0.0
  %6023 = vmatmul.mubr.f32.gmra.mrb[0].mxu0 %v5564
  %v6024 = vpop.f32.mrb[0].mxu0
  %v6025 = vadd.f32 0.0, %v6024
  %v6026 = vpop.f32.mrb[0].mxu0
  %6027 = vmatprep.mubr.f32.mxu0 0.0
  %6028 = vmatmul.mubr.f32.gmra.mrb[0].mxu0 %v5565
  %v6029 = vpop.f32.mrb[0].mxu0
  %v6030 = vadd.f32 0.0, %v6029
  %v6031 = vpop.f32.mrb[0].mxu0
  %6032 = vmatprep.mubr.f32.mxu0 0.0
  %6033 = vmatmul.mubr.f32.gmra.mrb[0].mxu0 %v5566
  %v6034 = vpop.f32.mrb[0].mxu0
  %v6035 = vadd.f32 0.0, %v6034
  %v6036 = vpop.f32.mrb[0].mxu0
  %6037 = vmatprep.mubr.f32.mxu0 0.0
  %6038 = vmatmul.mubr.f32.gmra.mrb[0].mxu0 %v5567
  %v6039 = vpop.f32.mrb[0].mxu0
  %v6040 = vadd.f32 0.0, %v6039
  %v6041 = vpop.f32.mrb[0].mxu0
  %6042 = vmatprep.mubr.f32.mxu0 0.0
  %6043 = vmatmul.mubr.f32.gmra.mrb[0].mxu0 %v5568
  %v6044 = vpop.f32.mrb[0].mxu0
  %v6045 = vadd.f32 0.0, %v6044
  %v6046 = vpop.f32.mrb[0].mxu0
  %6047 = vmatprep.mubr.f32.mxu0 0.0
  %6048 = vmatmul.mubr.f32.gmra.mrb[0].mxu0 %v5569
  %v6049 = vpop.f32.mrb[0].mxu0
  %v6050 = vadd.f32 0.0, %v6049
  %v6051 = vpop.f32.mrb[0].mxu0
  %6052 = vmatprep.mubr.f32.mxu0 0.0
  %6053 = vmatmul.mubr.f32.gmra.mrb[0].mxu0 %v5570
  %v6054 = vpop.f32.mrb[0].mxu0
  %v6055 = vadd.f32 0.0, %v6054
  %v6056 = vpop.f32.mrb[0].mxu0
  %6057 = vdwg.mxu0
  %v6058 = vadd.f32 %v5409, %v5655
  %v6059 = vadd.f32 %v5410, %v5660
  %v6060 = vadd.f32 %v5411, %v5665
  %v6061 = vadd.f32 %v5412, %v5670
  %v6062 = vadd.f32 %v5413, %v5675
  %v6063 = vadd.f32 %v5414, %v5680
  %v6064 = vadd.f32 %v5415, %v5685
  %v6065 = vadd.f32 %v5416, %v5690
  %v6066 = vadd.f32 %v5417, %v5695
  %v6067 = vadd.f32 %v5418, %v5700
  %v6068 = vadd.f32 %v5419, %v5705
  %v6069 = vadd.f32 %v5420, %v5710
  %v6070 = vadd.f32 %v5421, %v5715
  %v6071 = vadd.f32 %v5422, %v5720
  %v6072 = vadd.f32 %v5423, %v5725
  %v6073 = vadd.f32 %v5424, %v5730
  %v6074 = vadd.f32 %v5425, %v5735
  %v6075 = vadd.f32 %v5426, %v5740
  %v6076 = vadd.f32 %v5427, %v5745
  %v6077 = vadd.f32 %v5428, %v5750
  %v6078 = vadd.f32 %v5429, %v5755
  %v6079 = vadd.f32 %v5430, %v5760
  %v6080 = vadd.f32 %v5431, %v5765
  %v6081 = vadd.f32 %v5432, %v5770
  %v6082 = vadd.f32 %v5433, %v5775
  %v6083 = vadd.f32 %v5434, %v5780
  %v6084 = vadd.f32 %v5435, %v5785
  %v6085 = vadd.f32 %v5436, %v5790
  %v6086 = vadd.f32 %v5437, %v5795
  %v6087 = vadd.f32 %v5438, %v5800
  %v6088 = vadd.f32 %v5439, %v5805
  %v6089 = vadd.f32 %v5440, %v5810
  %v6090 = vadd.f32 %v5441, %v5815
  %v6091 = vadd.f32 %v5442, %v5820
  %v6092 = vadd.f32 %v5443, %v5825
  %v6093 = vadd.f32 %v5444, %v5830
  %v6094 = vadd.f32 %v5445, %v5835
  %v6095 = vadd.f32 %v5446, %v5840
  %v6096 = vadd.f32 %v5447, %v5845
  %v6097 = vadd.f32 %v5448, %v5850
  %v6098 = vadd.f32 %v5449, %v5855
  %v6099 = vadd.f32 %v5450, %v5860
  %v6100 = vadd.f32 %v5451, %v5865
  %v6101 = vadd.f32 %v5452, %v5870
  %v6102 = vadd.f32 %v5453, %v5875
  %v6103 = vadd.f32 %v5454, %v5880
  %v6104 = vadd.f32 %v5455, %v5885
  %v6105 = vadd.f32 %v5456, %v5890
  %v6106 = vadd.f32 %v5457, %v5895
  %v6107 = vadd.f32 %v5458, %v5900
  %v6108 = vadd.f32 %v5459, %v5905
  %v6109 = vadd.f32 %v5460, %v5910
  %v6110 = vadd.f32 %v5461, %v5915
  %v6111 = vadd.f32 %v5462, %v5920
  %v6112 = vadd.f32 %v5463, %v5925
  %v6113 = vadd.f32 %v5464, %v5930
  %v6114 = vadd.f32 %v5465, %v5935
  %v6115 = vadd.f32 %v5466, %v5940
  %v6116 = vadd.f32 %v5467, %v5945
  %v6117 = vadd.f32 %v5468, %v5950
  %v6118 = vadd.f32 %v5469, %v5955
  %v6119 = vadd.f32 %v5470, %v5960
  %v6120 = vadd.f32 %v5471, %v5965
  %v6121 = vadd.f32 %v5472, %v5970
  %v6122 = vadd.f32 %v5473, %v5975
  %v6123 = vadd.f32 %v5474, %v5980
  %v6124 = vadd.f32 %v5475, %v5985
  %v6125 = vadd.f32 %v5476, %v5990
  %v6126 = vadd.f32 %v5477, %v5995
  %v6127 = vadd.f32 %v5478, %v6000
  %v6128 = vadd.f32 %v5479, %v6005
  %v6129 = vadd.f32 %v5480, %v6010
  %v6130 = vadd.f32 %v5481, %v6015
  %v6131 = vadd.f32 %v5482, %v6020
  %v6132 = vadd.f32 %v5483, %v6025
  %v6133 = vadd.f32 %v5484, %v6030
  %v6134 = vadd.f32 %v5485, %v6035
  %v6135 = vadd.f32 %v5486, %v6040
  %v6136 = vadd.f32 %v5487, %v6045
  %v6137 = vadd.f32 %v5488, %v6050
  %v6138 = vadd.f32 %v5489, %v6055
  %v6139 = vld [vmem:[#allocation2 + $0x2a] sm:$0xff]
  %v6140 = vld [vmem:[#allocation2 + $0x32] sm:$0xff]
  %v6141 = vld [vmem:[#allocation2 + $0x3a] sm:$0xff]
  %v6142 = vld [vmem:[#allocation2 + $0x42] sm:$0xff]
  %v6143 = vld [vmem:[#allocation2 + $0x4a] sm:$0xff]
  %v6144 = vld [vmem:[#allocation2 + $0x52] sm:$0xff]
  %v6145 = vld [vmem:[#allocation2 + $0x5a] sm:$0xff]
  %v6146 = vld [vmem:[#allocation2 + $0x62] sm:$0xff]
  %v6147 = vld [vmem:[#allocation2 + $0x6a] sm:$0xff]
  %v6148 = vld [vmem:[#allocation2 + $0x72] sm:$0xff]
  %v6149 = vld [vmem:[#allocation2 + $0x7a] sm:$0xff]
  %v6150 = vld [vmem:[#allocation2 + $0x82] sm:$0xff]
  %v6151 = vld [vmem:[#allocation2 + $0x8a] sm:$0xff]
  %v6152 = vld [vmem:[#allocation2 + $0x92] sm:$0xff]
  %v6153 = vld [vmem:[#allocation2 + $0x9a] sm:$0xff]
  %v6154 = vld [vmem:[#allocation2 + $0xa2] sm:$0xff]
  %v6155 = vld [vmem:[#allocation2 + $0xaa] sm:$0xff]
  %v6156 = vld [vmem:[#allocation2 + $0xb2] sm:$0xff]
  %v6157 = vld [vmem:[#allocation2 + $0xba] sm:$0xff]
  %v6158 = vld [vmem:[#allocation2 + $0xc2] sm:$0xff]
  %v6159 = vld [vmem:[#allocation2 + $0xca] sm:$0xff]
  %v6160 = vld [vmem:[#allocation2 + $0xd2] sm:$0xff]
  %v6161 = vld [vmem:[#allocation2 + $0xda] sm:$0xff]
  %v6162 = vld [vmem:[#allocation2 + $0xe2] sm:$0xff]
  %v6163 = vld [vmem:[#allocation2 + $0xea] sm:$0xff]
  %v6164 = vld [vmem:[#allocation2 + $0xf2] sm:$0xff]
  %v6165 = vld [vmem:[#allocation2 + $0xfa] sm:$0xff]
  %v6166 = vld [vmem:[#allocation2 + $0x102] sm:$0xff]
  %v6167 = vld [vmem:[#allocation2 + $0x10a] sm:$0xff]
  %v6168 = vld [vmem:[#allocation2 + $0x112] sm:$0xff]
  %v6169 = vld [vmem:[#allocation2 + $0x11a] sm:$0xff]
  %v6170 = vld [vmem:[#allocation2 + $0x122] sm:$0xff]
  %v6171 = vld [vmem:[#allocation2 + $0x12a] sm:$0xff]
  %v6172 = vld [vmem:[#allocation2 + $0x132] sm:$0xff]
  %v6173 = vld [vmem:[#allocation2 + $0x13a] sm:$0xff]
  %v6174 = vld [vmem:[#allocation2 + $0x142] sm:$0xff]
  %v6175 = vld [vmem:[#allocation2 + $0x14a] sm:$0xff]
  %v6176 = vld [vmem:[#allocation2 + $0x152] sm:$0xff]
  %v6177 = vld [vmem:[#allocation2 + $0x15a] sm:$0xff]
  %v6178 = vld [vmem:[#allocation2 + $0x162] sm:$0xff]
  %v6179 = vld [vmem:[#allocation2 + $0x16a] sm:$0xff]
  %v6180 = vld [vmem:[#allocation2 + $0x172] sm:$0xff]
  %v6181 = vld [vmem:[#allocation2 + $0x17a] sm:$0xff]
  %v6182 = vld [vmem:[#allocation2 + $0x182] sm:$0xff]
  %v6183 = vld [vmem:[#allocation2 + $0x18a] sm:$0xff]
  %v6184 = vld [vmem:[#allocation2 + $0x192] sm:$0xff]
  %v6185 = vld [vmem:[#allocation2 + $0x19a] sm:$0xff]
  %v6186 = vld [vmem:[#allocation2 + $0x1a2] sm:$0xff]
  %v6187 = vld [vmem:[#allocation2 + $0x1aa] sm:$0xff]
  %v6188 = vld [vmem:[#allocation2 + $0x1b2] sm:$0xff]
  %v6189 = vld [vmem:[#allocation2 + $0x1ba] sm:$0xff]
  %v6190 = vld [vmem:[#allocation2 + $0x1c2] sm:$0xff]
  %v6191 = vld [vmem:[#allocation2 + $0x1ca] sm:$0xff]
  %v6192 = vld [vmem:[#allocation2 + $0x1d2] sm:$0xff]
  %v6193 = vld [vmem:[#allocation2 + $0x1da] sm:$0xff]
  %v6194 = vld [vmem:[#allocation2 + $0x1e2] sm:$0xff]
  %v6195 = vld [vmem:[#allocation2 + $0x1ea] sm:$0xff]
  %v6196 = vld [vmem:[#allocation2 + $0x1f2] sm:$0xff]
  %v6197 = vld [vmem:[#allocation2 + $0x1fa] sm:$0xff]
  %v6198 = vld [vmem:[#allocation2 + $0x202] sm:$0xff]
  %v6199 = vld [vmem:[#allocation2 + $0x20a] sm:$0xff]
  %v6200 = vld [vmem:[#allocation2 + $0x212] sm:$0xff]
  %v6201 = vld [vmem:[#allocation2 + $0x21a] sm:$0xff]
  %v6202 = vld [vmem:[#allocation2 + $0x222] sm:$0xff]
  %v6203 = vld [vmem:[#allocation2 + $0x22a] sm:$0xff]
  %v6204 = vld [vmem:[#allocation2 + $0x232] sm:$0xff]
  %v6205 = vld [vmem:[#allocation2 + $0x23a] sm:$0xff]
  %v6206 = vld [vmem:[#allocation2 + $0x242] sm:$0xff]
  %v6207 = vld [vmem:[#allocation2 + $0x24a] sm:$0xff]
  %v6208 = vld [vmem:[#allocation2 + $0x252] sm:$0xff]
  %v6209 = vld [vmem:[#allocation2 + $0x25a] sm:$0xff]
  %v6210 = vld [vmem:[#allocation2 + $0x262] sm:$0xff]
  %v6211 = vld [vmem:[#allocation2 + $0x26a] sm:$0xff]
  %v6212 = vld [vmem:[#allocation2 + $0x272] sm:$0xff]
  %v6213 = vld [vmem:[#allocation2 + $0x27a] sm:$0xff]
  %v6214 = vld [vmem:[#allocation2 + $0x282] sm:$0xff]
  %v6215 = vld [vmem:[#allocation2 + $0x28a] sm:$0xff]
  %v6216 = vld [vmem:[#allocation2 + $0x292] sm:$0xff]
  %v6217 = vld [vmem:[#allocation2 + $0x29a] sm:$0xff]
  %v6218 = vld [vmem:[#allocation2 + $0x2a2] sm:$0xff]
  %v6219 = vld [vmem:[#allocation2 + $0x2aa] sm:$0xff]
  %s6220 = scalar_lea.vmem %s2, 896
  %v6221 = vld [vmem:[%s6220] sm:$0xff]
  %v6222 = vld [vmem:[%s6220 + $0x8] sm:$0xff]
  %v6223 = vld [vmem:[%s6220 + $0x10] sm:$0xff]
  %v6224 = vld [vmem:[%s6220 + $0x18] sm:$0xff]
  %v6225 = vld [vmem:[%s6220 + $0x20] sm:$0xff]
  %v6226 = vld [vmem:[%s6220 + $0x28] sm:$0xff]
  %v6227 = vld [vmem:[%s6220 + $0x30] sm:$0xff]
  %v6228 = vld [vmem:[%s6220 + $0x38] sm:$0xff]
  %v6229 = vld [vmem:[%s6220 + $0x40] sm:$0xff]
  %v6230 = vld [vmem:[%s6220 + $0x48] sm:$0xff]
  %v6231 = vld [vmem:[%s6220 + $0x50] sm:$0xff]
  %v6232 = vld [vmem:[%s6220 + $0x58] sm:$0xff]
  %v6233 = vld [vmem:[%s6220 + $0x60] sm:$0xff]
  %v6234 = vld [vmem:[%s6220 + $0x68] sm:$0xff]
  %v6235 = vld [vmem:[%s6220 + $0x70] sm:$0xff]
  %v6236 = vld [vmem:[%s6220 + $0x78] sm:$0xff]
  %6237 = vmatprep.subr.mxu0 0.0
  %6238 = vmatpush1.msra.mxu0 %v6221
  %6239 = vmatprep.subr.mxu0 0.0
  %6240 = vmatpush1.msra.mxu0 %v6222
  %6241 = vmatprep.subr.mxu0 0.0
  %6242 = vmatpush1.msra.mxu0 %v6223
  %6243 = vmatprep.subr.mxu0 0.0
  %6244 = vmatpush1.msra.mxu0 %v6224
  %6245 = vmatprep.subr.mxu0 0.0
  %6246 = vmatpush1.msra.mxu0 %v6225
  %6247 = vmatprep.subr.mxu0 0.0
  %6248 = vmatpush1.msra.mxu0 %v6226
  %6249 = vmatprep.subr.mxu0 0.0
  %6250 = vmatpush1.msra.mxu0 %v6227
  %6251 = vmatprep.subr.mxu0 0.0
  %6252 = vmatpush1.msra.mxu0 %v6228
  %6253 = vmatprep.subr.mxu0 0.0
  %6254 = vmatpush1.msra.mxu0 %v6229
  %6255 = vmatprep.subr.mxu0 0.0
  %6256 = vmatpush1.msra.mxu0 %v6230
  %6257 = vmatprep.subr.mxu0 0.0
  %6258 = vmatpush1.msra.mxu0 %v6231
  %6259 = vmatprep.subr.mxu0 0.0
  %6260 = vmatpush1.msra.mxu0 %v6232
  %6261 = vmatprep.subr.mxu0 0.0
  %6262 = vmatpush1.msra.mxu0 %v6233
  %6263 = vmatprep.subr.mxu0 0.0
  %6264 = vmatpush1.msra.mxu0 %v6234
  %6265 = vmatprep.subr.mxu0 0.0
  %6266 = vmatpush1.msra.mxu0 %v6235
  %6267 = vmatprep.subr.mxu0 0.0
  %6268 = vmatpush1.msra.mxu0 %v6236
  %6269 = vmatprep.subr.mxu0 0.0
  %6270 = vmatpush1.msra.mxu0 0.0
  %6271 = vmatprep.subr.mxu0 0.0
  %6272 = vmatpush1.msra.mxu0 0.0
  %6273 = vmatprep.subr.mxu0 0.0
  %6274 = vmatpush1.msra.mxu0 0.0
  %6275 = vmatprep.subr.mxu0 0.0
  %6276 = vmatpush1.msra.mxu0 0.0
  %6277 = vmatprep.subr.mxu0 0.0
  %6278 = vmatpush1.msra.mxu0 0.0
  %6279 = vmatprep.subr.mxu0 0.0
  %6280 = vmatpush1.msra.mxu0 0.0
  %6281 = vmatprep.subr.mxu0 0.0
  %6282 = vmatpush1.msra.mxu0 0.0
  %6283 = vmatprep.subr.mxu0 0.0
  %6284 = vmatpush1.msra.mxu0 0.0
  %6285 = vmatprep.subr.mxu0 0.0
  %6286 = vmatpush1.msra.mxu0 0.0
  %6287 = vmatprep.subr.mxu0 0.0
  %6288 = vmatpush1.msra.mxu0 0.0
  %6289 = vmatprep.subr.mxu0 0.0
  %6290 = vmatpush1.msra.mxu0 0.0
  %6291 = vmatprep.subr.mxu0 0.0
  %6292 = vmatpush1.msra.mxu0 0.0
  %6293 = vmatprep.subr.mxu0 0.0
  %6294 = vmatpush1.msra.mxu0 0.0
  %6295 = vmatprep.subr.mxu0 0.0
  %6296 = vmatpush1.msra.mxu0 0.0
  %6297 = vmatprep.subr.mxu0 0.0
  %6298 = vmatpush1.msra.mxu0 0.0
  %6299 = vmatprep.subr.mxu0 0.0
  %6300 = vmatpush1.msra.mxu0 0.0
  %6301 = vmatprep.mubr.f32.mxu0 0.0
  %6302 = vmatmul.mubr.f32.gmra.mrb[0].mxu0 %v6139
  %v6303 = vpop.f32.mrb[0].mxu0
  %v6304 = vadd.f32 0.0, %v6303
  %v6305 = vpop.f32.mrb[0].mxu0
  %6306 = vmatprep.mubr.f32.mxu0 0.0
  %6307 = vmatmul.mubr.f32.gmra.mrb[0].mxu0 %v6140
  %v6308 = vpop.f32.mrb[0].mxu0
  %v6309 = vadd.f32 0.0, %v6308
  %v6310 = vpop.f32.mrb[0].mxu0
  %6311 = vmatprep.mubr.f32.mxu0 0.0
  %6312 = vmatmul.mubr.f32.gmra.mrb[0].mxu0 %v6141
  %v6313 = vpop.f32.mrb[0].mxu0
  %v6314 = vadd.f32 0.0, %v6313
  %v6315 = vpop.f32.mrb[0].mxu0
  %6316 = vmatprep.mubr.f32.mxu0 0.0
  %6317 = vmatmul.mubr.f32.gmra.mrb[0].mxu0 %v6142
  %v6318 = vpop.f32.mrb[0].mxu0
  %v6319 = vadd.f32 0.0, %v6318
  %v6320 = vpop.f32.mrb[0].mxu0
  %6321 = vmatprep.mubr.f32.mxu0 0.0
  %6322 = vmatmul.mubr.f32.gmra.mrb[0].mxu0 %v6143
  %v6323 = vpop.f32.mrb[0].mxu0
  %v6324 = vadd.f32 0.0, %v6323
  %v6325 = vpop.f32.mrb[0].mxu0
  %6326 = vmatprep.mubr.f32.mxu0 0.0
  %6327 = vmatmul.mubr.f32.gmra.mrb[0].mxu0 %v6144
  %v6328 = vpop.f32.mrb[0].mxu0
  %v6329 = vadd.f32 0.0, %v6328
  %v6330 = vpop.f32.mrb[0].mxu0
  %6331 = vmatprep.mubr.f32.mxu0 0.0
  %6332 = vmatmul.mubr.f32.gmra.mrb[0].mxu0 %v6145
  %v6333 = vpop.f32.mrb[0].mxu0
  %v6334 = vadd.f32 0.0, %v6333
  %v6335 = vpop.f32.mrb[0].mxu0
  %6336 = vmatprep.mubr.f32.mxu0 0.0
  %6337 = vmatmul.mubr.f32.gmra.mrb[0].mxu0 %v6146
  %v6338 = vpop.f32.mrb[0].mxu0
  %v6339 = vadd.f32 0.0, %v6338
  %v6340 = vpop.f32.mrb[0].mxu0
  %6341 = vmatprep.mubr.f32.mxu0 0.0
  %6342 = vmatmul.mubr.f32.gmra.mrb[0].mxu0 %v6147
  %v6343 = vpop.f32.mrb[0].mxu0
  %v6344 = vadd.f32 0.0, %v6343
  %v6345 = vpop.f32.mrb[0].mxu0
  %6346 = vmatprep.mubr.f32.mxu0 0.0
  %6347 = vmatmul.mubr.f32.gmra.mrb[0].mxu0 %v6148
  %v6348 = vpop.f32.mrb[0].mxu0
  %v6349 = vadd.f32 0.0, %v6348
  %v6350 = vpop.f32.mrb[0].mxu0
  %6351 = vmatprep.mubr.f32.mxu0 0.0
  %6352 = vmatmul.mubr.f32.gmra.mrb[0].mxu0 %v6149
  %v6353 = vpop.f32.mrb[0].mxu0
  %v6354 = vadd.f32 0.0, %v6353
  %v6355 = vpop.f32.mrb[0].mxu0
  %6356 = vmatprep.mubr.f32.mxu0 0.0
  %6357 = vmatmul.mubr.f32.gmra.mrb[0].mxu0 %v6150
  %v6358 = vpop.f32.mrb[0].mxu0
  %v6359 = vadd.f32 0.0, %v6358
  %v6360 = vpop.f32.mrb[0].mxu0
  %6361 = vmatprep.mubr.f32.mxu0 0.0
  %6362 = vmatmul.mubr.f32.gmra.mrb[0].mxu0 %v6151
  %v6363 = vpop.f32.mrb[0].mxu0
  %v6364 = vadd.f32 0.0, %v6363
  %v6365 = vpop.f32.mrb[0].mxu0
  %6366 = vmatprep.mubr.f32.mxu0 0.0
  %6367 = vmatmul.mubr.f32.gmra.mrb[0].mxu0 %v6152
  %v6368 = vpop.f32.mrb[0].mxu0
  %v6369 = vadd.f32 0.0, %v6368
  %v6370 = vpop.f32.mrb[0].mxu0
  %6371 = vmatprep.mubr.f32.mxu0 0.0
  %6372 = vmatmul.mubr.f32.gmra.mrb[0].mxu0 %v6153
  %v6373 = vpop.f32.mrb[0].mxu0
  %v6374 = vadd.f32 0.0, %v6373
  %v6375 = vpop.f32.mrb[0].mxu0
  %6376 = vmatprep.mubr.f32.mxu0 0.0
  %6377 = vmatmul.mubr.f32.gmra.mrb[0].mxu0 %v6154
  %v6378 = vpop.f32.mrb[0].mxu0
  %v6379 = vadd.f32 0.0, %v6378
  %v6380 = vpop.f32.mrb[0].mxu0
  %6381 = vmatprep.mubr.f32.mxu0 0.0
  %6382 = vmatmul.mubr.f32.gmra.mrb[0].mxu0 %v6155
  %v6383 = vpop.f32.mrb[0].mxu0
  %v6384 = vadd.f32 0.0, %v6383
  %v6385 = vpop.f32.mrb[0].mxu0
  %6386 = vmatprep.mubr.f32.mxu0 0.0
  %6387 = vmatmul.mubr.f32.gmra.mrb[0].mxu0 %v6156
  %v6388 = vpop.f32.mrb[0].mxu0
  %v6389 = vadd.f32 0.0, %v6388
  %v6390 = vpop.f32.mrb[0].mxu0
  %6391 = vmatprep.mubr.f32.mxu0 0.0
  %6392 = vmatmul.mubr.f32.gmra.mrb[0].mxu0 %v6157
  %v6393 = vpop.f32.mrb[0].mxu0
  %v6394 = vadd.f32 0.0, %v6393
  %v6395 = vpop.f32.mrb[0].mxu0
  %6396 = vmatprep.mubr.f32.mxu0 0.0
  %6397 = vmatmul.mubr.f32.gmra.mrb[0].mxu0 %v6158
  %v6398 = vpop.f32.mrb[0].mxu0
  %v6399 = vadd.f32 0.0, %v6398
  %v6400 = vpop.f32.mrb[0].mxu0
  %6401 = vmatprep.mubr.f32.mxu0 0.0
  %6402 = vmatmul.mubr.f32.gmra.mrb[0].mxu0 %v6159
  %v6403 = vpop.f32.mrb[0].mxu0
  %v6404 = vadd.f32 0.0, %v6403
  %v6405 = vpop.f32.mrb[0].mxu0
  %6406 = vmatprep.mubr.f32.mxu0 0.0
  %6407 = vmatmul.mubr.f32.gmra.mrb[0].mxu0 %v6160
  %v6408 = vpop.f32.mrb[0].mxu0
  %v6409 = vadd.f32 0.0, %v6408
  %v6410 = vpop.f32.mrb[0].mxu0
  %6411 = vmatprep.mubr.f32.mxu0 0.0
  %6412 = vmatmul.mubr.f32.gmra.mrb[0].mxu0 %v6161
  %v6413 = vpop.f32.mrb[0].mxu0
  %v6414 = vadd.f32 0.0, %v6413
  %v6415 = vpop.f32.mrb[0].mxu0
  %6416 = vmatprep.mubr.f32.mxu0 0.0
  %6417 = vmatmul.mubr.f32.gmra.mrb[0].mxu0 %v6162
  %v6418 = vpop.f32.mrb[0].mxu0
  %v6419 = vadd.f32 0.0, %v6418
  %v6420 = vpop.f32.mrb[0].mxu0
  %6421 = vmatprep.mubr.f32.mxu0 0.0
  %6422 = vmatmul.mubr.f32.gmra.mrb[0].mxu0 %v6163
  %v6423 = vpop.f32.mrb[0].mxu0
  %v6424 = vadd.f32 0.0, %v6423
  %v6425 = vpop.f32.mrb[0].mxu0
  %6426 = vmatprep.mubr.f32.mxu0 0.0
  %6427 = vmatmul.mubr.f32.gmra.mrb[0].mxu0 %v6164
  %v6428 = vpop.f32.mrb[0].mxu0
  %v6429 = vadd.f32 0.0, %v6428
  %v6430 = vpop.f32.mrb[0].mxu0
  %6431 = vmatprep.mubr.f32.mxu0 0.0
  %6432 = vmatmul.mubr.f32.gmra.mrb[0].mxu0 %v6165
  %v6433 = vpop.f32.mrb[0].mxu0
  %v6434 = vadd.f32 0.0, %v6433
  %v6435 = vpop.f32.mrb[0].mxu0
  %6436 = vmatprep.mubr.f32.mxu0 0.0
  %6437 = vmatmul.mubr.f32.gmra.mrb[0].mxu0 %v6166
  %v6438 = vpop.f32.mrb[0].mxu0
  %v6439 = vadd.f32 0.0, %v6438
  %v6440 = vpop.f32.mrb[0].mxu0
  %6441 = vmatprep.mubr.f32.mxu0 0.0
  %6442 = vmatmul.mubr.f32.gmra.mrb[0].mxu0 %v6167
  %v6443 = vpop.f32.mrb[0].mxu0
  %v6444 = vadd.f32 0.0, %v6443
  %v6445 = vpop.f32.mrb[0].mxu0
  %6446 = vmatprep.mubr.f32.mxu0 0.0
  %6447 = vmatmul.mubr.f32.gmra.mrb[0].mxu0 %v6168
  %v6448 = vpop.f32.mrb[0].mxu0
  %v6449 = vadd.f32 0.0, %v6448
  %v6450 = vpop.f32.mrb[0].mxu0
  %6451 = vmatprep.mubr.f32.mxu0 0.0
  %6452 = vmatmul.mubr.f32.gmra.mrb[0].mxu0 %v6169
  %v6453 = vpop.f32.mrb[0].mxu0
  %v6454 = vadd.f32 0.0, %v6453
  %v6455 = vpop.f32.mrb[0].mxu0
  %6456 = vmatprep.mubr.f32.mxu0 0.0
  %6457 = vmatmul.mubr.f32.gmra.mrb[0].mxu0 %v6170
  %v6458 = vpop.f32.mrb[0].mxu0
  %v6459 = vadd.f32 0.0, %v6458
  %v6460 = vpop.f32.mrb[0].mxu0
  %6461 = vmatprep.mubr.f32.mxu0 0.0
  %6462 = vmatmul.mubr.f32.gmra.mrb[0].mxu0 %v6171
  %v6463 = vpop.f32.mrb[0].mxu0
  %v6464 = vadd.f32 0.0, %v6463
  %v6465 = vpop.f32.mrb[0].mxu0
  %6466 = vmatprep.mubr.f32.mxu0 0.0
  %6467 = vmatmul.mubr.f32.gmra.mrb[0].mxu0 %v6172
  %v6468 = vpop.f32.mrb[0].mxu0
  %v6469 = vadd.f32 0.0, %v6468
  %v6470 = vpop.f32.mrb[0].mxu0
  %6471 = vmatprep.mubr.f32.mxu0 0.0
  %6472 = vmatmul.mubr.f32.gmra.mrb[0].mxu0 %v6173
  %v6473 = vpop.f32.mrb[0].mxu0
  %v6474 = vadd.f32 0.0, %v6473
  %v6475 = vpop.f32.mrb[0].mxu0
  %6476 = vmatprep.mubr.f32.mxu0 0.0
  %6477 = vmatmul.mubr.f32.gmra.mrb[0].mxu0 %v6174
  %v6478 = vpop.f32.mrb[0].mxu0
  %v6479 = vadd.f32 0.0, %v6478
  %v6480 = vpop.f32.mrb[0].mxu0
  %6481 = vmatprep.mubr.f32.mxu0 0.0
  %6482 = vmatmul.mubr.f32.gmra.mrb[0].mxu0 %v6175
  %v6483 = vpop.f32.mrb[0].mxu0
  %v6484 = vadd.f32 0.0, %v6483
  %v6485 = vpop.f32.mrb[0].mxu0
  %6486 = vmatprep.mubr.f32.mxu0 0.0
  %6487 = vmatmul.mubr.f32.gmra.mrb[0].mxu0 %v6176
  %v6488 = vpop.f32.mrb[0].mxu0
  %v6489 = vadd.f32 0.0, %v6488
  %v6490 = vpop.f32.mrb[0].mxu0
  %6491 = vmatprep.mubr.f32.mxu0 0.0
  %6492 = vmatmul.mubr.f32.gmra.mrb[0].mxu0 %v6177
  %v6493 = vpop.f32.mrb[0].mxu0
  %v6494 = vadd.f32 0.0, %v6493
  %v6495 = vpop.f32.mrb[0].mxu0
  %6496 = vmatprep.mubr.f32.mxu0 0.0
  %6497 = vmatmul.mubr.f32.gmra.mrb[0].mxu0 %v6178
  %v6498 = vpop.f32.mrb[0].mxu0
  %v6499 = vadd.f32 0.0, %v6498
  %v6500 = vpop.f32.mrb[0].mxu0
  %6501 = vmatprep.mubr.f32.mxu0 0.0
  %6502 = vmatmul.mubr.f32.gmra.mrb[0].mxu0 %v6179
  %v6503 = vpop.f32.mrb[0].mxu0
  %v6504 = vadd.f32 0.0, %v6503
  %v6505 = vpop.f32.mrb[0].mxu0
  %6506 = vmatprep.mubr.f32.mxu0 0.0
  %6507 = vmatmul.mubr.f32.gmra.mrb[0].mxu0 %v6180
  %v6508 = vpop.f32.mrb[0].mxu0
  %v6509 = vadd.f32 0.0, %v6508
  %v6510 = vpop.f32.mrb[0].mxu0
  %6511 = vmatprep.mubr.f32.mxu0 0.0
  %6512 = vmatmul.mubr.f32.gmra.mrb[0].mxu0 %v6181
  %v6513 = vpop.f32.mrb[0].mxu0
  %v6514 = vadd.f32 0.0, %v6513
  %v6515 = vpop.f32.mrb[0].mxu0
  %6516 = vmatprep.mubr.f32.mxu0 0.0
  %6517 = vmatmul.mubr.f32.gmra.mrb[0].mxu0 %v6182
  %v6518 = vpop.f32.mrb[0].mxu0
  %v6519 = vadd.f32 0.0, %v6518
  %v6520 = vpop.f32.mrb[0].mxu0
  %6521 = vmatprep.mubr.f32.mxu0 0.0
  %6522 = vmatmul.mubr.f32.gmra.mrb[0].mxu0 %v6183
  %v6523 = vpop.f32.mrb[0].mxu0
  %v6524 = vadd.f32 0.0, %v6523
  %v6525 = vpop.f32.mrb[0].mxu0
  %6526 = vmatprep.mubr.f32.mxu0 0.0
  %6527 = vmatmul.mubr.f32.gmra.mrb[0].mxu0 %v6184
  %v6528 = vpop.f32.mrb[0].mxu0
  %v6529 = vadd.f32 0.0, %v6528
  %v6530 = vpop.f32.mrb[0].mxu0
  %6531 = vmatprep.mubr.f32.mxu0 0.0
  %6532 = vmatmul.mubr.f32.gmra.mrb[0].mxu0 %v6185
  %v6533 = vpop.f32.mrb[0].mxu0
  %v6534 = vadd.f32 0.0, %v6533
  %v6535 = vpop.f32.mrb[0].mxu0
  %6536 = vmatprep.mubr.f32.mxu0 0.0
  %6537 = vmatmul.mubr.f32.gmra.mrb[0].mxu0 %v6186
  %v6538 = vpop.f32.mrb[0].mxu0
  %v6539 = vadd.f32 0.0, %v6538
  %v6540 = vpop.f32.mrb[0].mxu0
  %6541 = vmatprep.mubr.f32.mxu0 0.0
  %6542 = vmatmul.mubr.f32.gmra.mrb[0].mxu0 %v6187
  %v6543 = vpop.f32.mrb[0].mxu0
  %v6544 = vadd.f32 0.0, %v6543
  %v6545 = vpop.f32.mrb[0].mxu0
  %6546 = vmatprep.mubr.f32.mxu0 0.0
  %6547 = vmatmul.mubr.f32.gmra.mrb[0].mxu0 %v6188
  %v6548 = vpop.f32.mrb[0].mxu0
  %v6549 = vadd.f32 0.0, %v6548
  %v6550 = vpop.f32.mrb[0].mxu0
  %6551 = vmatprep.mubr.f32.mxu0 0.0
  %6552 = vmatmul.mubr.f32.gmra.mrb[0].mxu0 %v6189
  %v6553 = vpop.f32.mrb[0].mxu0
  %v6554 = vadd.f32 0.0, %v6553
  %v6555 = vpop.f32.mrb[0].mxu0
  %6556 = vmatprep.mubr.f32.mxu0 0.0
  %6557 = vmatmul.mubr.f32.gmra.mrb[0].mxu0 %v6190
  %v6558 = vpop.f32.mrb[0].mxu0
  %v6559 = vadd.f32 0.0, %v6558
  %v6560 = vpop.f32.mrb[0].mxu0
  %6561 = vmatprep.mubr.f32.mxu0 0.0
  %6562 = vmatmul.mubr.f32.gmra.mrb[0].mxu0 %v6191
  %v6563 = vpop.f32.mrb[0].mxu0
  %v6564 = vadd.f32 0.0, %v6563
  %v6565 = vpop.f32.mrb[0].mxu0
  %6566 = vmatprep.mubr.f32.mxu0 0.0
  %6567 = vmatmul.mubr.f32.gmra.mrb[0].mxu0 %v6192
  %v6568 = vpop.f32.mrb[0].mxu0
  %v6569 = vadd.f32 0.0, %v6568
  %v6570 = vpop.f32.mrb[0].mxu0
  %6571 = vmatprep.mubr.f32.mxu0 0.0
  %6572 = vmatmul.mubr.f32.gmra.mrb[0].mxu0 %v6193
  %v6573 = vpop.f32.mrb[0].mxu0
  %v6574 = vadd.f32 0.0, %v6573
  %v6575 = vpop.f32.mrb[0].mxu0
  %6576 = vmatprep.mubr.f32.mxu0 0.0
  %6577 = vmatmul.mubr.f32.gmra.mrb[0].mxu0 %v6194
  %v6578 = vpop.f32.mrb[0].mxu0
  %v6579 = vadd.f32 0.0, %v6578
  %v6580 = vpop.f32.mrb[0].mxu0
  %6581 = vmatprep.mubr.f32.mxu0 0.0
  %6582 = vmatmul.mubr.f32.gmra.mrb[0].mxu0 %v6195
  %v6583 = vpop.f32.mrb[0].mxu0
  %v6584 = vadd.f32 0.0, %v6583
  %v6585 = vpop.f32.mrb[0].mxu0
  %6586 = vmatprep.mubr.f32.mxu0 0.0
  %6587 = vmatmul.mubr.f32.gmra.mrb[0].mxu0 %v6196
  %v6588 = vpop.f32.mrb[0].mxu0
  %v6589 = vadd.f32 0.0, %v6588
  %v6590 = vpop.f32.mrb[0].mxu0
  %6591 = vmatprep.mubr.f32.mxu0 0.0
  %6592 = vmatmul.mubr.f32.gmra.mrb[0].mxu0 %v6197
  %v6593 = vpop.f32.mrb[0].mxu0
  %v6594 = vadd.f32 0.0, %v6593
  %v6595 = vpop.f32.mrb[0].mxu0
  %6596 = vmatprep.mubr.f32.mxu0 0.0
  %6597 = vmatmul.mubr.f32.gmra.mrb[0].mxu0 %v6198
  %v6598 = vpop.f32.mrb[0].mxu0
  %v6599 = vadd.f32 0.0, %v6598
  %v6600 = vpop.f32.mrb[0].mxu0
  %6601 = vmatprep.mubr.f32.mxu0 0.0
  %6602 = vmatmul.mubr.f32.gmra.mrb[0].mxu0 %v6199
  %v6603 = vpop.f32.mrb[0].mxu0
  %v6604 = vadd.f32 0.0, %v6603
  %v6605 = vpop.f32.mrb[0].mxu0
  %6606 = vmatprep.mubr.f32.mxu0 0.0
  %6607 = vmatmul.mubr.f32.gmra.mrb[0].mxu0 %v6200
  %v6608 = vpop.f32.mrb[0].mxu0
  %v6609 = vadd.f32 0.0, %v6608
  %v6610 = vpop.f32.mrb[0].mxu0
  %6611 = vmatprep.mubr.f32.mxu0 0.0
  %6612 = vmatmul.mubr.f32.gmra.mrb[0].mxu0 %v6201
  %v6613 = vpop.f32.mrb[0].mxu0
  %v6614 = vadd.f32 0.0, %v6613
  %v6615 = vpop.f32.mrb[0].mxu0
  %6616 = vmatprep.mubr.f32.mxu0 0.0
  %6617 = vmatmul.mubr.f32.gmra.mrb[0].mxu0 %v6202
  %v6618 = vpop.f32.mrb[0].mxu0
  %v6619 = vadd.f32 0.0, %v6618
  %v6620 = vpop.f32.mrb[0].mxu0
  %6621 = vmatprep.mubr.f32.mxu0 0.0
  %6622 = vmatmul.mubr.f32.gmra.mrb[0].mxu0 %v6203
  %v6623 = vpop.f32.mrb[0].mxu0
  %v6624 = vadd.f32 0.0, %v6623
  %v6625 = vpop.f32.mrb[0].mxu0
  %6626 = vmatprep.mubr.f32.mxu0 0.0
  %6627 = vmatmul.mubr.f32.gmra.mrb[0].mxu0 %v6204
  %v6628 = vpop.f32.mrb[0].mxu0
  %v6629 = vadd.f32 0.0, %v6628
  %v6630 = vpop.f32.mrb[0].mxu0
  %6631 = vmatprep.mubr.f32.mxu0 0.0
  %6632 = vmatmul.mubr.f32.gmra.mrb[0].mxu0 %v6205
  %v6633 = vpop.f32.mrb[0].mxu0
  %v6634 = vadd.f32 0.0, %v6633
  %v6635 = vpop.f32.mrb[0].mxu0
  %6636 = vmatprep.mubr.f32.mxu0 0.0
  %6637 = vmatmul.mubr.f32.gmra.mrb[0].mxu0 %v6206
  %v6638 = vpop.f32.mrb[0].mxu0
  %v6639 = vadd.f32 0.0, %v6638
  %v6640 = vpop.f32.mrb[0].mxu0
  %6641 = vmatprep.mubr.f32.mxu0 0.0
  %6642 = vmatmul.mubr.f32.gmra.mrb[0].mxu0 %v6207
  %v6643 = vpop.f32.mrb[0].mxu0
  %v6644 = vadd.f32 0.0, %v6643
  %v6645 = vpop.f32.mrb[0].mxu0
  %6646 = vmatprep.mubr.f32.mxu0 0.0
  %6647 = vmatmul.mubr.f32.gmra.mrb[0].mxu0 %v6208
  %v6648 = vpop.f32.mrb[0].mxu0
  %v6649 = vadd.f32 0.0, %v6648
  %v6650 = vpop.f32.mrb[0].mxu0
  %6651 = vmatprep.mubr.f32.mxu0 0.0
  %6652 = vmatmul.mubr.f32.gmra.mrb[0].mxu0 %v6209
  %v6653 = vpop.f32.mrb[0].mxu0
  %v6654 = vadd.f32 0.0, %v6653
  %v6655 = vpop.f32.mrb[0].mxu0
  %6656 = vmatprep.mubr.f32.mxu0 0.0
  %6657 = vmatmul.mubr.f32.gmra.mrb[0].mxu0 %v6210
  %v6658 = vpop.f32.mrb[0].mxu0
  %v6659 = vadd.f32 0.0, %v6658
  %v6660 = vpop.f32.mrb[0].mxu0
  %6661 = vmatprep.mubr.f32.mxu0 0.0
  %6662 = vmatmul.mubr.f32.gmra.mrb[0].mxu0 %v6211
  %v6663 = vpop.f32.mrb[0].mxu0
  %v6664 = vadd.f32 0.0, %v6663
  %v6665 = vpop.f32.mrb[0].mxu0
  %6666 = vmatprep.mubr.f32.mxu0 0.0
  %6667 = vmatmul.mubr.f32.gmra.mrb[0].mxu0 %v6212
  %v6668 = vpop.f32.mrb[0].mxu0
  %v6669 = vadd.f32 0.0, %v6668
  %v6670 = vpop.f32.mrb[0].mxu0
  %6671 = vmatprep.mubr.f32.mxu0 0.0
  %6672 = vmatmul.mubr.f32.gmra.mrb[0].mxu0 %v6213
  %v6673 = vpop.f32.mrb[0].mxu0
  %v6674 = vadd.f32 0.0, %v6673
  %v6675 = vpop.f32.mrb[0].mxu0
  %6676 = vmatprep.mubr.f32.mxu0 0.0
  %6677 = vmatmul.mubr.f32.gmra.mrb[0].mxu0 %v6214
  %v6678 = vpop.f32.mrb[0].mxu0
  %v6679 = vadd.f32 0.0, %v6678
  %v6680 = vpop.f32.mrb[0].mxu0
  %6681 = vmatprep.mubr.f32.mxu0 0.0
  %6682 = vmatmul.mubr.f32.gmra.mrb[0].mxu0 %v6215
  %v6683 = vpop.f32.mrb[0].mxu0
  %v6684 = vadd.f32 0.0, %v6683
  %v6685 = vpop.f32.mrb[0].mxu0
  %6686 = vmatprep.mubr.f32.mxu0 0.0
  %6687 = vmatmul.mubr.f32.gmra.mrb[0].mxu0 %v6216
  %v6688 = vpop.f32.mrb[0].mxu0
  %v6689 = vadd.f32 0.0, %v6688
  %v6690 = vpop.f32.mrb[0].mxu0
  %6691 = vmatprep.mubr.f32.mxu0 0.0
  %6692 = vmatmul.mubr.f32.gmra.mrb[0].mxu0 %v6217
  %v6693 = vpop.f32.mrb[0].mxu0
  %v6694 = vadd.f32 0.0, %v6693
  %v6695 = vpop.f32.mrb[0].mxu0
  %6696 = vmatprep.mubr.f32.mxu0 0.0
  %6697 = vmatmul.mubr.f32.gmra.mrb[0].mxu0 %v6218
  %v6698 = vpop.f32.mrb[0].mxu0
  %v6699 = vadd.f32 0.0, %v6698
  %v6700 = vpop.f32.mrb[0].mxu0
  %6701 = vmatprep.mubr.f32.mxu0 0.0
  %6702 = vmatmul.mubr.f32.gmra.mrb[0].mxu0 %v6219
  %v6703 = vpop.f32.mrb[0].mxu0
  %v6704 = vadd.f32 0.0, %v6703
  %v6705 = vpop.f32.mrb[0].mxu0
  %6706 = vdwg.mxu0
  %v6707 = vadd.f32 %v6058, %v6304
  %v6708 = vadd.f32 %v6059, %v6309
  %v6709 = vadd.f32 %v6060, %v6314
  %v6710 = vadd.f32 %v6061, %v6319
  %v6711 = vadd.f32 %v6062, %v6324
  %v6712 = vadd.f32 %v6063, %v6329
  %v6713 = vadd.f32 %v6064, %v6334
  %v6714 = vadd.f32 %v6065, %v6339
  %v6715 = vadd.f32 %v6066, %v6344
  %v6716 = vadd.f32 %v6067, %v6349
  %v6717 = vadd.f32 %v6068, %v6354
  %v6718 = vadd.f32 %v6069, %v6359
  %v6719 = vadd.f32 %v6070, %v6364
  %v6720 = vadd.f32 %v6071, %v6369
  %v6721 = vadd.f32 %v6072, %v6374
  %v6722 = vadd.f32 %v6073, %v6379
  %v6723 = vadd.f32 %v6074, %v6384
  %v6724 = vadd.f32 %v6075, %v6389
  %v6725 = vadd.f32 %v6076, %v6394
  %v6726 = vadd.f32 %v6077, %v6399
  %v6727 = vadd.f32 %v6078, %v6404
  %v6728 = vadd.f32 %v6079, %v6409
  %v6729 = vadd.f32 %v6080, %v6414
  %v6730 = vadd.f32 %v6081, %v6419
  %v6731 = vadd.f32 %v6082, %v6424
  %v6732 = vadd.f32 %v6083, %v6429
  %v6733 = vadd.f32 %v6084, %v6434
  %v6734 = vadd.f32 %v6085, %v6439
  %v6735 = vadd.f32 %v6086, %v6444
  %v6736 = vadd.f32 %v6087, %v6449
  %v6737 = vadd.f32 %v6088, %v6454
  %v6738 = vadd.f32 %v6089, %v6459
  %v6739 = vadd.f32 %v6090, %v6464
  %v6740 = vadd.f32 %v6091, %v6469
  %v6741 = vadd.f32 %v6092, %v6474
  %v6742 = vadd.f32 %v6093, %v6479
  %v6743 = vadd.f32 %v6094, %v6484
  %v6744 = vadd.f32 %v6095, %v6489
  %v6745 = vadd.f32 %v6096, %v6494
  %v6746 = vadd.f32 %v6097, %v6499
  %v6747 = vadd.f32 %v6098, %v6504
  %v6748 = vadd.f32 %v6099, %v6509
  %v6749 = vadd.f32 %v6100, %v6514
  %v6750 = vadd.f32 %v6101, %v6519
  %v6751 = vadd.f32 %v6102, %v6524
  %v6752 = vadd.f32 %v6103, %v6529
  %v6753 = vadd.f32 %v6104, %v6534
  %v6754 = vadd.f32 %v6105, %v6539
  %v6755 = vadd.f32 %v6106, %v6544
  %v6756 = vadd.f32 %v6107, %v6549
  %v6757 = vadd.f32 %v6108, %v6554
  %v6758 = vadd.f32 %v6109, %v6559
  %v6759 = vadd.f32 %v6110, %v6564
  %v6760 = vadd.f32 %v6111, %v6569
  %v6761 = vadd.f32 %v6112, %v6574
  %v6762 = vadd.f32 %v6113, %v6579
  %v6763 = vadd.f32 %v6114, %v6584
  %v6764 = vadd.f32 %v6115, %v6589
  %v6765 = vadd.f32 %v6116, %v6594
  %v6766 = vadd.f32 %v6117, %v6599
  %v6767 = vadd.f32 %v6118, %v6604
  %v6768 = vadd.f32 %v6119, %v6609
  %v6769 = vadd.f32 %v6120, %v6614
  %v6770 = vadd.f32 %v6121, %v6619
  %v6771 = vadd.f32 %v6122, %v6624
  %v6772 = vadd.f32 %v6123, %v6629
  %v6773 = vadd.f32 %v6124, %v6634
  %v6774 = vadd.f32 %v6125, %v6639
  %v6775 = vadd.f32 %v6126, %v6644
  %v6776 = vadd.f32 %v6127, %v6649
  %v6777 = vadd.f32 %v6128, %v6654
  %v6778 = vadd.f32 %v6129, %v6659
  %v6779 = vadd.f32 %v6130, %v6664
  %v6780 = vadd.f32 %v6131, %v6669
  %v6781 = vadd.f32 %v6132, %v6674
  %v6782 = vadd.f32 %v6133, %v6679
  %v6783 = vadd.f32 %v6134, %v6684
  %v6784 = vadd.f32 %v6135, %v6689
  %v6785 = vadd.f32 %v6136, %v6694
  %v6786 = vadd.f32 %v6137, %v6699
  %v6787 = vadd.f32 %v6138, %v6704
  %v6788 = vld [vmem:[#allocation2 + $0x2b] sm:$0xff]
  %v6789 = vld [vmem:[#allocation2 + $0x33] sm:$0xff]
  %v6790 = vld [vmem:[#allocation2 + $0x3b] sm:$0xff]
  %v6791 = vld [vmem:[#allocation2 + $0x43] sm:$0xff]
  %v6792 = vld [vmem:[#allocation2 + $0x4b] sm:$0xff]
  %v6793 = vld [vmem:[#allocation2 + $0x53] sm:$0xff]
  %v6794 = vld [vmem:[#allocation2 + $0x5b] sm:$0xff]
  %v6795 = vld [vmem:[#allocation2 + $0x63] sm:$0xff]
  %v6796 = vld [vmem:[#allocation2 + $0x6b] sm:$0xff]
  %v6797 = vld [vmem:[#allocation2 + $0x73] sm:$0xff]
  %v6798 = vld [vmem:[#allocation2 + $0x7b] sm:$0xff]
  %v6799 = vld [vmem:[#allocation2 + $0x83] sm:$0xff]
  %v6800 = vld [vmem:[#allocation2 + $0x8b] sm:$0xff]
  %v6801 = vld [vmem:[#allocation2 + $0x93] sm:$0xff]
  %v6802 = vld [vmem:[#allocation2 + $0x9b] sm:$0xff]
  %v6803 = vld [vmem:[#allocation2 + $0xa3] sm:$0xff]
  %v6804 = vld [vmem:[#allocation2 + $0xab] sm:$0xff]
  %v6805 = vld [vmem:[#allocation2 + $0xb3] sm:$0xff]
  %v6806 = vld [vmem:[#allocation2 + $0xbb] sm:$0xff]
  %v6807 = vld [vmem:[#allocation2 + $0xc3] sm:$0xff]
  %v6808 = vld [vmem:[#allocation2 + $0xcb] sm:$0xff]
  %v6809 = vld [vmem:[#allocation2 + $0xd3] sm:$0xff]
  %v6810 = vld [vmem:[#allocation2 + $0xdb] sm:$0xff]
  %v6811 = vld [vmem:[#allocation2 + $0xe3] sm:$0xff]
  %v6812 = vld [vmem:[#allocation2 + $0xeb] sm:$0xff]
  %v6813 = vld [vmem:[#allocation2 + $0xf3] sm:$0xff]
  %v6814 = vld [vmem:[#allocation2 + $0xfb] sm:$0xff]
  %v6815 = vld [vmem:[#allocation2 + $0x103] sm:$0xff]
  %v6816 = vld [vmem:[#allocation2 + $0x10b] sm:$0xff]
  %v6817 = vld [vmem:[#allocation2 + $0x113] sm:$0xff]
  %v6818 = vld [vmem:[#allocation2 + $0x11b] sm:$0xff]
  %v6819 = vld [vmem:[#allocation2 + $0x123] sm:$0xff]
  %v6820 = vld [vmem:[#allocation2 + $0x12b] sm:$0xff]
  %v6821 = vld [vmem:[#allocation2 + $0x133] sm:$0xff]
  %v6822 = vld [vmem:[#allocation2 + $0x13b] sm:$0xff]
  %v6823 = vld [vmem:[#allocation2 + $0x143] sm:$0xff]
  %v6824 = vld [vmem:[#allocation2 + $0x14b] sm:$0xff]
  %v6825 = vld [vmem:[#allocation2 + $0x153] sm:$0xff]
  %v6826 = vld [vmem:[#allocation2 + $0x15b] sm:$0xff]
  %v6827 = vld [vmem:[#allocation2 + $0x163] sm:$0xff]
  %v6828 = vld [vmem:[#allocation2 + $0x16b] sm:$0xff]
  %v6829 = vld [vmem:[#allocation2 + $0x173] sm:$0xff]
  %v6830 = vld [vmem:[#allocation2 + $0x17b] sm:$0xff]
  %v6831 = vld [vmem:[#allocation2 + $0x183] sm:$0xff]
  %v6832 = vld [vmem:[#allocation2 + $0x18b] sm:$0xff]
  %v6833 = vld [vmem:[#allocation2 + $0x193] sm:$0xff]
  %v6834 = vld [vmem:[#allocation2 + $0x19b] sm:$0xff]
  %v6835 = vld [vmem:[#allocation2 + $0x1a3] sm:$0xff]
  %v6836 = vld [vmem:[#allocation2 + $0x1ab] sm:$0xff]
  %v6837 = vld [vmem:[#allocation2 + $0x1b3] sm:$0xff]
  %v6838 = vld [vmem:[#allocation2 + $0x1bb] sm:$0xff]
  %v6839 = vld [vmem:[#allocation2 + $0x1c3] sm:$0xff]
  %v6840 = vld [vmem:[#allocation2 + $0x1cb] sm:$0xff]
  %v6841 = vld [vmem:[#allocation2 + $0x1d3] sm:$0xff]
  %v6842 = vld [vmem:[#allocation2 + $0x1db] sm:$0xff]
  %v6843 = vld [vmem:[#allocation2 + $0x1e3] sm:$0xff]
  %v6844 = vld [vmem:[#allocation2 + $0x1eb] sm:$0xff]
  %v6845 = vld [vmem:[#allocation2 + $0x1f3] sm:$0xff]
  %v6846 = vld [vmem:[#allocation2 + $0x1fb] sm:$0xff]
  %v6847 = vld [vmem:[#allocation2 + $0x203] sm:$0xff]
  %v6848 = vld [vmem:[#allocation2 + $0x20b] sm:$0xff]
  %v6849 = vld [vmem:[#allocation2 + $0x213] sm:$0xff]
  %v6850 = vld [vmem:[#allocation2 + $0x21b] sm:$0xff]
  %v6851 = vld [vmem:[#allocation2 + $0x223] sm:$0xff]
  %v6852 = vld [vmem:[#allocation2 + $0x22b] sm:$0xff]
  %v6853 = vld [vmem:[#allocation2 + $0x233] sm:$0xff]
  %v6854 = vld [vmem:[#allocation2 + $0x23b] sm:$0xff]
  %v6855 = vld [vmem:[#allocation2 + $0x243] sm:$0xff]
  %v6856 = vld [vmem:[#allocation2 + $0x24b] sm:$0xff]
  %v6857 = vld [vmem:[#allocation2 + $0x253] sm:$0xff]
  %v6858 = vld [vmem:[#allocation2 + $0x25b] sm:$0xff]
  %v6859 = vld [vmem:[#allocation2 + $0x263] sm:$0xff]
  %v6860 = vld [vmem:[#allocation2 + $0x26b] sm:$0xff]
  %v6861 = vld [vmem:[#allocation2 + $0x273] sm:$0xff]
  %v6862 = vld [vmem:[#allocation2 + $0x27b] sm:$0xff]
  %v6863 = vld [vmem:[#allocation2 + $0x283] sm:$0xff]
  %v6864 = vld [vmem:[#allocation2 + $0x28b] sm:$0xff]
  %v6865 = vld [vmem:[#allocation2 + $0x293] sm:$0xff]
  %v6866 = vld [vmem:[#allocation2 + $0x29b] sm:$0xff]
  %v6867 = vld [vmem:[#allocation2 + $0x2a3] sm:$0xff]
  %v6868 = vld [vmem:[#allocation2 + $0x2ab] sm:$0xff]
  %s6869 = scalar_lea.vmem %s2, 1024
  %v6870 = vld [vmem:[%s6869] sm:$0xff]
  %v6871 = vld [vmem:[%s6869 + $0x8] sm:$0xff]
  %v6872 = vld [vmem:[%s6869 + $0x10] sm:$0xff]
  %v6873 = vld [vmem:[%s6869 + $0x18] sm:$0xff]
  %v6874 = vld [vmem:[%s6869 + $0x20] sm:$0xff]
  %v6875 = vld [vmem:[%s6869 + $0x28] sm:$0xff]
  %v6876 = vld [vmem:[%s6869 + $0x30] sm:$0xff]
  %v6877 = vld [vmem:[%s6869 + $0x38] sm:$0xff]
  %v6878 = vld [vmem:[%s6869 + $0x40] sm:$0xff]
  %v6879 = vld [vmem:[%s6869 + $0x48] sm:$0xff]
  %v6880 = vld [vmem:[%s6869 + $0x50] sm:$0xff]
  %v6881 = vld [vmem:[%s6869 + $0x58] sm:$0xff]
  %v6882 = vld [vmem:[%s6869 + $0x60] sm:$0xff]
  %v6883 = vld [vmem:[%s6869 + $0x68] sm:$0xff]
  %v6884 = vld [vmem:[%s6869 + $0x70] sm:$0xff]
  %v6885 = vld [vmem:[%s6869 + $0x78] sm:$0xff]
  %6886 = vmatprep.subr.mxu0 0.0
  %6887 = vmatpush1.msra.mxu0 %v6870
  %6888 = vmatprep.subr.mxu0 0.0
  %6889 = vmatpush1.msra.mxu0 %v6871
  %6890 = vmatprep.subr.mxu0 0.0
  %6891 = vmatpush1.msra.mxu0 %v6872
  %6892 = vmatprep.subr.mxu0 0.0
  %6893 = vmatpush1.msra.mxu0 %v6873
  %6894 = vmatprep.subr.mxu0 0.0
  %6895 = vmatpush1.msra.mxu0 %v6874
  %6896 = vmatprep.subr.mxu0 0.0
  %6897 = vmatpush1.msra.mxu0 %v6875
  %6898 = vmatprep.subr.mxu0 0.0
  %6899 = vmatpush1.msra.mxu0 %v6876
  %6900 = vmatprep.subr.mxu0 0.0
  %6901 = vmatpush1.msra.mxu0 %v6877
  %6902 = vmatprep.subr.mxu0 0.0
  %6903 = vmatpush1.msra.mxu0 %v6878
  %6904 = vmatprep.subr.mxu0 0.0
  %6905 = vmatpush1.msra.mxu0 %v6879
  %6906 = vmatprep.subr.mxu0 0.0
  %6907 = vmatpush1.msra.mxu0 %v6880
  %6908 = vmatprep.subr.mxu0 0.0
  %6909 = vmatpush1.msra.mxu0 %v6881
  %6910 = vmatprep.subr.mxu0 0.0
  %6911 = vmatpush1.msra.mxu0 %v6882
  %6912 = vmatprep.subr.mxu0 0.0
  %6913 = vmatpush1.msra.mxu0 %v6883
  %6914 = vmatprep.subr.mxu0 0.0
  %6915 = vmatpush1.msra.mxu0 %v6884
  %6916 = vmatprep.subr.mxu0 0.0
  %6917 = vmatpush1.msra.mxu0 %v6885
  %6918 = vmatprep.subr.mxu0 0.0
  %6919 = vmatpush1.msra.mxu0 0.0
  %6920 = vmatprep.subr.mxu0 0.0
  %6921 = vmatpush1.msra.mxu0 0.0
  %6922 = vmatprep.subr.mxu0 0.0
  %6923 = vmatpush1.msra.mxu0 0.0
  %6924 = vmatprep.subr.mxu0 0.0
  %6925 = vmatpush1.msra.mxu0 0.0
  %6926 = vmatprep.subr.mxu0 0.0
  %6927 = vmatpush1.msra.mxu0 0.0
  %6928 = vmatprep.subr.mxu0 0.0
  %6929 = vmatpush1.msra.mxu0 0.0
  %6930 = vmatprep.subr.mxu0 0.0
  %6931 = vmatpush1.msra.mxu0 0.0
  %6932 = vmatprep.subr.mxu0 0.0
  %6933 = vmatpush1.msra.mxu0 0.0
  %6934 = vmatprep.subr.mxu0 0.0
  %6935 = vmatpush1.msra.mxu0 0.0
  %6936 = vmatprep.subr.mxu0 0.0
  %6937 = vmatpush1.msra.mxu0 0.0
  %6938 = vmatprep.subr.mxu0 0.0
  %6939 = vmatpush1.msra.mxu0 0.0
  %6940 = vmatprep.subr.mxu0 0.0
  %6941 = vmatpush1.msra.mxu0 0.0
  %6942 = vmatprep.subr.mxu0 0.0
  %6943 = vmatpush1.msra.mxu0 0.0
  %6944 = vmatprep.subr.mxu0 0.0
  %6945 = vmatpush1.msra.mxu0 0.0
  %6946 = vmatprep.subr.mxu0 0.0
  %6947 = vmatpush1.msra.mxu0 0.0
  %6948 = vmatprep.subr.mxu0 0.0
  %6949 = vmatpush1.msra.mxu0 0.0
  %6950 = vmatprep.mubr.f32.mxu0 0.0
  %6951 = vmatmul.mubr.f32.gmra.mrb[0].mxu0 %v6788
  %v6952 = vpop.f32.mrb[0].mxu0
  %v6953 = vadd.f32 0.0, %v6952
  %v6954 = vpop.f32.mrb[0].mxu0
  %6955 = vmatprep.mubr.f32.mxu0 0.0
  %6956 = vmatmul.mubr.f32.gmra.mrb[0].mxu0 %v6789
  %v6957 = vpop.f32.mrb[0].mxu0
  %v6958 = vadd.f32 0.0, %v6957
  %v6959 = vpop.f32.mrb[0].mxu0
  %6960 = vmatprep.mubr.f32.mxu0 0.0
  %6961 = vmatmul.mubr.f32.gmra.mrb[0].mxu0 %v6790
  %v6962 = vpop.f32.mrb[0].mxu0
  %v6963 = vadd.f32 0.0, %v6962
  %v6964 = vpop.f32.mrb[0].mxu0
  %6965 = vmatprep.mubr.f32.mxu0 0.0
  %6966 = vmatmul.mubr.f32.gmra.mrb[0].mxu0 %v6791
  %v6967 = vpop.f32.mrb[0].mxu0
  %v6968 = vadd.f32 0.0, %v6967
  %v6969 = vpop.f32.mrb[0].mxu0
  %6970 = vmatprep.mubr.f32.mxu0 0.0
  %6971 = vmatmul.mubr.f32.gmra.mrb[0].mxu0 %v6792
  %v6972 = vpop.f32.mrb[0].mxu0
  %v6973 = vadd.f32 0.0, %v6972
  %v6974 = vpop.f32.mrb[0].mxu0
  %6975 = vmatprep.mubr.f32.mxu0 0.0
  %6976 = vmatmul.mubr.f32.gmra.mrb[0].mxu0 %v6793
  %v6977 = vpop.f32.mrb[0].mxu0
  %v6978 = vadd.f32 0.0, %v6977
  %v6979 = vpop.f32.mrb[0].mxu0
  %6980 = vmatprep.mubr.f32.mxu0 0.0
  %6981 = vmatmul.mubr.f32.gmra.mrb[0].mxu0 %v6794
  %v6982 = vpop.f32.mrb[0].mxu0
  %v6983 = vadd.f32 0.0, %v6982
  %v6984 = vpop.f32.mrb[0].mxu0
  %6985 = vmatprep.mubr.f32.mxu0 0.0
  %6986 = vmatmul.mubr.f32.gmra.mrb[0].mxu0 %v6795
  %v6987 = vpop.f32.mrb[0].mxu0
  %v6988 = vadd.f32 0.0, %v6987
  %v6989 = vpop.f32.mrb[0].mxu0
  %6990 = vmatprep.mubr.f32.mxu0 0.0
  %6991 = vmatmul.mubr.f32.gmra.mrb[0].mxu0 %v6796
  %v6992 = vpop.f32.mrb[0].mxu0
  %v6993 = vadd.f32 0.0, %v6992
  %v6994 = vpop.f32.mrb[0].mxu0
  %6995 = vmatprep.mubr.f32.mxu0 0.0
  %6996 = vmatmul.mubr.f32.gmra.mrb[0].mxu0 %v6797
  %v6997 = vpop.f32.mrb[0].mxu0
  %v6998 = vadd.f32 0.0, %v6997
  %v6999 = vpop.f32.mrb[0].mxu0
  %7000 = vmatprep.mubr.f32.mxu0 0.0
  %7001 = vmatmul.mubr.f32.gmra.mrb[0].mxu0 %v6798
  %v7002 = vpop.f32.mrb[0].mxu0
  %v7003 = vadd.f32 0.0, %v7002
  %v7004 = vpop.f32.mrb[0].mxu0
  %7005 = vmatprep.mubr.f32.mxu0 0.0
  %7006 = vmatmul.mubr.f32.gmra.mrb[0].mxu0 %v6799
  %v7007 = vpop.f32.mrb[0].mxu0
  %v7008 = vadd.f32 0.0, %v7007
  %v7009 = vpop.f32.mrb[0].mxu0
  %7010 = vmatprep.mubr.f32.mxu0 0.0
  %7011 = vmatmul.mubr.f32.gmra.mrb[0].mxu0 %v6800
  %v7012 = vpop.f32.mrb[0].mxu0
  %v7013 = vadd.f32 0.0, %v7012
  %v7014 = vpop.f32.mrb[0].mxu0
  %7015 = vmatprep.mubr.f32.mxu0 0.0
  %7016 = vmatmul.mubr.f32.gmra.mrb[0].mxu0 %v6801
  %v7017 = vpop.f32.mrb[0].mxu0
  %v7018 = vadd.f32 0.0, %v7017
  %v7019 = vpop.f32.mrb[0].mxu0
  %7020 = vmatprep.mubr.f32.mxu0 0.0
  %7021 = vmatmul.mubr.f32.gmra.mrb[0].mxu0 %v6802
  %v7022 = vpop.f32.mrb[0].mxu0
  %v7023 = vadd.f32 0.0, %v7022
  %v7024 = vpop.f32.mrb[0].mxu0
  %7025 = vmatprep.mubr.f32.mxu0 0.0
  %7026 = vmatmul.mubr.f32.gmra.mrb[0].mxu0 %v6803
  %v7027 = vpop.f32.mrb[0].mxu0
  %v7028 = vadd.f32 0.0, %v7027
  %v7029 = vpop.f32.mrb[0].mxu0
  %7030 = vmatprep.mubr.f32.mxu0 0.0
  %7031 = vmatmul.mubr.f32.gmra.mrb[0].mxu0 %v6804
  %v7032 = vpop.f32.mrb[0].mxu0
  %v7033 = vadd.f32 0.0, %v7032
  %v7034 = vpop.f32.mrb[0].mxu0
  %7035 = vmatprep.mubr.f32.mxu0 0.0
  %7036 = vmatmul.mubr.f32.gmra.mrb[0].mxu0 %v6805
  %v7037 = vpop.f32.mrb[0].mxu0
  %v7038 = vadd.f32 0.0, %v7037
  %v7039 = vpop.f32.mrb[0].mxu0
  %7040 = vmatprep.mubr.f32.mxu0 0.0
  %7041 = vmatmul.mubr.f32.gmra.mrb[0].mxu0 %v6806
  %v7042 = vpop.f32.mrb[0].mxu0
  %v7043 = vadd.f32 0.0, %v7042
  %v7044 = vpop.f32.mrb[0].mxu0
  %7045 = vmatprep.mubr.f32.mxu0 0.0
  %7046 = vmatmul.mubr.f32.gmra.mrb[0].mxu0 %v6807
  %v7047 = vpop.f32.mrb[0].mxu0
  %v7048 = vadd.f32 0.0, %v7047
  %v7049 = vpop.f32.mrb[0].mxu0
  %7050 = vmatprep.mubr.f32.mxu0 0.0
  %7051 = vmatmul.mubr.f32.gmra.mrb[0].mxu0 %v6808
  %v7052 = vpop.f32.mrb[0].mxu0
  %v7053 = vadd.f32 0.0, %v7052
  %v7054 = vpop.f32.mrb[0].mxu0
  %7055 = vmatprep.mubr.f32.mxu0 0.0
  %7056 = vmatmul.mubr.f32.gmra.mrb[0].mxu0 %v6809
  %v7057 = vpop.f32.mrb[0].mxu0
  %v7058 = vadd.f32 0.0, %v7057
  %v7059 = vpop.f32.mrb[0].mxu0
  %7060 = vmatprep.mubr.f32.mxu0 0.0
  %7061 = vmatmul.mubr.f32.gmra.mrb[0].mxu0 %v6810
  %v7062 = vpop.f32.mrb[0].mxu0
  %v7063 = vadd.f32 0.0, %v7062
  %v7064 = vpop.f32.mrb[0].mxu0
  %7065 = vmatprep.mubr.f32.mxu0 0.0
  %7066 = vmatmul.mubr.f32.gmra.mrb[0].mxu0 %v6811
  %v7067 = vpop.f32.mrb[0].mxu0
  %v7068 = vadd.f32 0.0, %v7067
  %v7069 = vpop.f32.mrb[0].mxu0
  %7070 = vmatprep.mubr.f32.mxu0 0.0
  %7071 = vmatmul.mubr.f32.gmra.mrb[0].mxu0 %v6812
  %v7072 = vpop.f32.mrb[0].mxu0
  %v7073 = vadd.f32 0.0, %v7072
  %v7074 = vpop.f32.mrb[0].mxu0
  %7075 = vmatprep.mubr.f32.mxu0 0.0
  %7076 = vmatmul.mubr.f32.gmra.mrb[0].mxu0 %v6813
  %v7077 = vpop.f32.mrb[0].mxu0
  %v7078 = vadd.f32 0.0, %v7077
  %v7079 = vpop.f32.mrb[0].mxu0
  %7080 = vmatprep.mubr.f32.mxu0 0.0
  %7081 = vmatmul.mubr.f32.gmra.mrb[0].mxu0 %v6814
  %v7082 = vpop.f32.mrb[0].mxu0
  %v7083 = vadd.f32 0.0, %v7082
  %v7084 = vpop.f32.mrb[0].mxu0
  %7085 = vmatprep.mubr.f32.mxu0 0.0
  %7086 = vmatmul.mubr.f32.gmra.mrb[0].mxu0 %v6815
  %v7087 = vpop.f32.mrb[0].mxu0
  %v7088 = vadd.f32 0.0, %v7087
  %v7089 = vpop.f32.mrb[0].mxu0
  %7090 = vmatprep.mubr.f32.mxu0 0.0
  %7091 = vmatmul.mubr.f32.gmra.mrb[0].mxu0 %v6816
  %v7092 = vpop.f32.mrb[0].mxu0
  %v7093 = vadd.f32 0.0, %v7092
  %v7094 = vpop.f32.mrb[0].mxu0
  %7095 = vmatprep.mubr.f32.mxu0 0.0
  %7096 = vmatmul.mubr.f32.gmra.mrb[0].mxu0 %v6817
  %v7097 = vpop.f32.mrb[0].mxu0
  %v7098 = vadd.f32 0.0, %v7097
  %v7099 = vpop.f32.mrb[0].mxu0
  %7100 = vmatprep.mubr.f32.mxu0 0.0
  %7101 = vmatmul.mubr.f32.gmra.mrb[0].mxu0 %v6818
  %v7102 = vpop.f32.mrb[0].mxu0
  %v7103 = vadd.f32 0.0, %v7102
  %v7104 = vpop.f32.mrb[0].mxu0
  %7105 = vmatprep.mubr.f32.mxu0 0.0
  %7106 = vmatmul.mubr.f32.gmra.mrb[0].mxu0 %v6819
  %v7107 = vpop.f32.mrb[0].mxu0
  %v7108 = vadd.f32 0.0, %v7107
  %v7109 = vpop.f32.mrb[0].mxu0
  %7110 = vmatprep.mubr.f32.mxu0 0.0
  %7111 = vmatmul.mubr.f32.gmra.mrb[0].mxu0 %v6820
  %v7112 = vpop.f32.mrb[0].mxu0
  %v7113 = vadd.f32 0.0, %v7112
  %v7114 = vpop.f32.mrb[0].mxu0
  %7115 = vmatprep.mubr.f32.mxu0 0.0
  %7116 = vmatmul.mubr.f32.gmra.mrb[0].mxu0 %v6821
  %v7117 = vpop.f32.mrb[0].mxu0
  %v7118 = vadd.f32 0.0, %v7117
  %v7119 = vpop.f32.mrb[0].mxu0
  %7120 = vmatprep.mubr.f32.mxu0 0.0
  %7121 = vmatmul.mubr.f32.gmra.mrb[0].mxu0 %v6822
  %v7122 = vpop.f32.mrb[0].mxu0
  %v7123 = vadd.f32 0.0, %v7122
  %v7124 = vpop.f32.mrb[0].mxu0
  %7125 = vmatprep.mubr.f32.mxu0 0.0
  %7126 = vmatmul.mubr.f32.gmra.mrb[0].mxu0 %v6823
  %v7127 = vpop.f32.mrb[0].mxu0
  %v7128 = vadd.f32 0.0, %v7127
  %v7129 = vpop.f32.mrb[0].mxu0
  %7130 = vmatprep.mubr.f32.mxu0 0.0
  %7131 = vmatmul.mubr.f32.gmra.mrb[0].mxu0 %v6824
  %v7132 = vpop.f32.mrb[0].mxu0
  %v7133 = vadd.f32 0.0, %v7132
  %v7134 = vpop.f32.mrb[0].mxu0
  %7135 = vmatprep.mubr.f32.mxu0 0.0
  %7136 = vmatmul.mubr.f32.gmra.mrb[0].mxu0 %v6825
  %v7137 = vpop.f32.mrb[0].mxu0
  %v7138 = vadd.f32 0.0, %v7137
  %v7139 = vpop.f32.mrb[0].mxu0
  %7140 = vmatprep.mubr.f32.mxu0 0.0
  %7141 = vmatmul.mubr.f32.gmra.mrb[0].mxu0 %v6826
  %v7142 = vpop.f32.mrb[0].mxu0
  %v7143 = vadd.f32 0.0, %v7142
  %v7144 = vpop.f32.mrb[0].mxu0
  %7145 = vmatprep.mubr.f32.mxu0 0.0
  %7146 = vmatmul.mubr.f32.gmra.mrb[0].mxu0 %v6827
  %v7147 = vpop.f32.mrb[0].mxu0
  %v7148 = vadd.f32 0.0, %v7147
  %v7149 = vpop.f32.mrb[0].mxu0
  %7150 = vmatprep.mubr.f32.mxu0 0.0
  %7151 = vmatmul.mubr.f32.gmra.mrb[0].mxu0 %v6828
  %v7152 = vpop.f32.mrb[0].mxu0
  %v7153 = vadd.f32 0.0, %v7152
  %v7154 = vpop.f32.mrb[0].mxu0
  %7155 = vmatprep.mubr.f32.mxu0 0.0
  %7156 = vmatmul.mubr.f32.gmra.mrb[0].mxu0 %v6829
  %v7157 = vpop.f32.mrb[0].mxu0
  %v7158 = vadd.f32 0.0, %v7157
  %v7159 = vpop.f32.mrb[0].mxu0
  %7160 = vmatprep.mubr.f32.mxu0 0.0
  %7161 = vmatmul.mubr.f32.gmra.mrb[0].mxu0 %v6830
  %v7162 = vpop.f32.mrb[0].mxu0
  %v7163 = vadd.f32 0.0, %v7162
  %v7164 = vpop.f32.mrb[0].mxu0
  %7165 = vmatprep.mubr.f32.mxu0 0.0
  %7166 = vmatmul.mubr.f32.gmra.mrb[0].mxu0 %v6831
  %v7167 = vpop.f32.mrb[0].mxu0
  %v7168 = vadd.f32 0.0, %v7167
  %v7169 = vpop.f32.mrb[0].mxu0
  %7170 = vmatprep.mubr.f32.mxu0 0.0
  %7171 = vmatmul.mubr.f32.gmra.mrb[0].mxu0 %v6832
  %v7172 = vpop.f32.mrb[0].mxu0
  %v7173 = vadd.f32 0.0, %v7172
  %v7174 = vpop.f32.mrb[0].mxu0
  %7175 = vmatprep.mubr.f32.mxu0 0.0
  %7176 = vmatmul.mubr.f32.gmra.mrb[0].mxu0 %v6833
  %v7177 = vpop.f32.mrb[0].mxu0
  %v7178 = vadd.f32 0.0, %v7177
  %v7179 = vpop.f32.mrb[0].mxu0
  %7180 = vmatprep.mubr.f32.mxu0 0.0
  %7181 = vmatmul.mubr.f32.gmra.mrb[0].mxu0 %v6834
  %v7182 = vpop.f32.mrb[0].mxu0
  %v7183 = vadd.f32 0.0, %v7182
  %v7184 = vpop.f32.mrb[0].mxu0
  %7185 = vmatprep.mubr.f32.mxu0 0.0
  %7186 = vmatmul.mubr.f32.gmra.mrb[0].mxu0 %v6835
  %v7187 = vpop.f32.mrb[0].mxu0
  %v7188 = vadd.f32 0.0, %v7187
  %v7189 = vpop.f32.mrb[0].mxu0
  %7190 = vmatprep.mubr.f32.mxu0 0.0
  %7191 = vmatmul.mubr.f32.gmra.mrb[0].mxu0 %v6836
  %v7192 = vpop.f32.mrb[0].mxu0
  %v7193 = vadd.f32 0.0, %v7192
  %v7194 = vpop.f32.mrb[0].mxu0
  %7195 = vmatprep.mubr.f32.mxu0 0.0
  %7196 = vmatmul.mubr.f32.gmra.mrb[0].mxu0 %v6837
  %v7197 = vpop.f32.mrb[0].mxu0
  %v7198 = vadd.f32 0.0, %v7197
  %v7199 = vpop.f32.mrb[0].mxu0
  %7200 = vmatprep.mubr.f32.mxu0 0.0
  %7201 = vmatmul.mubr.f32.gmra.mrb[0].mxu0 %v6838
  %v7202 = vpop.f32.mrb[0].mxu0
  %v7203 = vadd.f32 0.0, %v7202
  %v7204 = vpop.f32.mrb[0].mxu0
  %7205 = vmatprep.mubr.f32.mxu0 0.0
  %7206 = vmatmul.mubr.f32.gmra.mrb[0].mxu0 %v6839
  %v7207 = vpop.f32.mrb[0].mxu0
  %v7208 = vadd.f32 0.0, %v7207
  %v7209 = vpop.f32.mrb[0].mxu0
  %7210 = vmatprep.mubr.f32.mxu0 0.0
  %7211 = vmatmul.mubr.f32.gmra.mrb[0].mxu0 %v6840
  %v7212 = vpop.f32.mrb[0].mxu0
  %v7213 = vadd.f32 0.0, %v7212
  %v7214 = vpop.f32.mrb[0].mxu0
  %7215 = vmatprep.mubr.f32.mxu0 0.0
  %7216 = vmatmul.mubr.f32.gmra.mrb[0].mxu0 %v6841
  %v7217 = vpop.f32.mrb[0].mxu0
  %v7218 = vadd.f32 0.0, %v7217
  %v7219 = vpop.f32.mrb[0].mxu0
  %7220 = vmatprep.mubr.f32.mxu0 0.0
  %7221 = vmatmul.mubr.f32.gmra.mrb[0].mxu0 %v6842
  %v7222 = vpop.f32.mrb[0].mxu0
  %v7223 = vadd.f32 0.0, %v7222
  %v7224 = vpop.f32.mrb[0].mxu0
  %7225 = vmatprep.mubr.f32.mxu0 0.0
  %7226 = vmatmul.mubr.f32.gmra.mrb[0].mxu0 %v6843
  %v7227 = vpop.f32.mrb[0].mxu0
  %v7228 = vadd.f32 0.0, %v7227
  %v7229 = vpop.f32.mrb[0].mxu0
  %7230 = vmatprep.mubr.f32.mxu0 0.0
  %7231 = vmatmul.mubr.f32.gmra.mrb[0].mxu0 %v6844
  %v7232 = vpop.f32.mrb[0].mxu0
  %v7233 = vadd.f32 0.0, %v7232
  %v7234 = vpop.f32.mrb[0].mxu0
  %7235 = vmatprep.mubr.f32.mxu0 0.0
  %7236 = vmatmul.mubr.f32.gmra.mrb[0].mxu0 %v6845
  %v7237 = vpop.f32.mrb[0].mxu0
  %v7238 = vadd.f32 0.0, %v7237
  %v7239 = vpop.f32.mrb[0].mxu0
  %7240 = vmatprep.mubr.f32.mxu0 0.0
  %7241 = vmatmul.mubr.f32.gmra.mrb[0].mxu0 %v6846
  %v7242 = vpop.f32.mrb[0].mxu0
  %v7243 = vadd.f32 0.0, %v7242
  %v7244 = vpop.f32.mrb[0].mxu0
  %7245 = vmatprep.mubr.f32.mxu0 0.0
  %7246 = vmatmul.mubr.f32.gmra.mrb[0].mxu0 %v6847
  %v7247 = vpop.f32.mrb[0].mxu0
  %v7248 = vadd.f32 0.0, %v7247
  %v7249 = vpop.f32.mrb[0].mxu0
  %7250 = vmatprep.mubr.f32.mxu0 0.0
  %7251 = vmatmul.mubr.f32.gmra.mrb[0].mxu0 %v6848
  %v7252 = vpop.f32.mrb[0].mxu0
  %v7253 = vadd.f32 0.0, %v7252
  %v7254 = vpop.f32.mrb[0].mxu0
  %7255 = vmatprep.mubr.f32.mxu0 0.0
  %7256 = vmatmul.mubr.f32.gmra.mrb[0].mxu0 %v6849
  %v7257 = vpop.f32.mrb[0].mxu0
  %v7258 = vadd.f32 0.0, %v7257
  %v7259 = vpop.f32.mrb[0].mxu0
  %7260 = vmatprep.mubr.f32.mxu0 0.0
  %7261 = vmatmul.mubr.f32.gmra.mrb[0].mxu0 %v6850
  %v7262 = vpop.f32.mrb[0].mxu0
  %v7263 = vadd.f32 0.0, %v7262
  %v7264 = vpop.f32.mrb[0].mxu0
  %7265 = vmatprep.mubr.f32.mxu0 0.0
  %7266 = vmatmul.mubr.f32.gmra.mrb[0].mxu0 %v6851
  %v7267 = vpop.f32.mrb[0].mxu0
  %v7268 = vadd.f32 0.0, %v7267
  %v7269 = vpop.f32.mrb[0].mxu0
  %7270 = vmatprep.mubr.f32.mxu0 0.0
  %7271 = vmatmul.mubr.f32.gmra.mrb[0].mxu0 %v6852
  %v7272 = vpop.f32.mrb[0].mxu0
  %v7273 = vadd.f32 0.0, %v7272
  %v7274 = vpop.f32.mrb[0].mxu0
  %7275 = vmatprep.mubr.f32.mxu0 0.0
  %7276 = vmatmul.mubr.f32.gmra.mrb[0].mxu0 %v6853
  %v7277 = vpop.f32.mrb[0].mxu0
  %v7278 = vadd.f32 0.0, %v7277
  %v7279 = vpop.f32.mrb[0].mxu0
  %7280 = vmatprep.mubr.f32.mxu0 0.0
  %7281 = vmatmul.mubr.f32.gmra.mrb[0].mxu0 %v6854
  %v7282 = vpop.f32.mrb[0].mxu0
  %v7283 = vadd.f32 0.0, %v7282
  %v7284 = vpop.f32.mrb[0].mxu0
  %7285 = vmatprep.mubr.f32.mxu0 0.0
  %7286 = vmatmul.mubr.f32.gmra.mrb[0].mxu0 %v6855
  %v7287 = vpop.f32.mrb[0].mxu0
  %v7288 = vadd.f32 0.0, %v7287
  %v7289 = vpop.f32.mrb[0].mxu0
  %7290 = vmatprep.mubr.f32.mxu0 0.0
  %7291 = vmatmul.mubr.f32.gmra.mrb[0].mxu0 %v6856
  %v7292 = vpop.f32.mrb[0].mxu0
  %v7293 = vadd.f32 0.0, %v7292
  %v7294 = vpop.f32.mrb[0].mxu0
  %7295 = vmatprep.mubr.f32.mxu0 0.0
  %7296 = vmatmul.mubr.f32.gmra.mrb[0].mxu0 %v6857
  %v7297 = vpop.f32.mrb[0].mxu0
  %v7298 = vadd.f32 0.0, %v7297
  %v7299 = vpop.f32.mrb[0].mxu0
  %7300 = vmatprep.mubr.f32.mxu0 0.0
  %7301 = vmatmul.mubr.f32.gmra.mrb[0].mxu0 %v6858
  %v7302 = vpop.f32.mrb[0].mxu0
  %v7303 = vadd.f32 0.0, %v7302
  %v7304 = vpop.f32.mrb[0].mxu0
  %7305 = vmatprep.mubr.f32.mxu0 0.0
  %7306 = vmatmul.mubr.f32.gmra.mrb[0].mxu0 %v6859
  %v7307 = vpop.f32.mrb[0].mxu0
  %v7308 = vadd.f32 0.0, %v7307
  %v7309 = vpop.f32.mrb[0].mxu0
  %7310 = vmatprep.mubr.f32.mxu0 0.0
  %7311 = vmatmul.mubr.f32.gmra.mrb[0].mxu0 %v6860
  %v7312 = vpop.f32.mrb[0].mxu0
  %v7313 = vadd.f32 0.0, %v7312
  %v7314 = vpop.f32.mrb[0].mxu0
  %7315 = vmatprep.mubr.f32.mxu0 0.0
  %7316 = vmatmul.mubr.f32.gmra.mrb[0].mxu0 %v6861
  %v7317 = vpop.f32.mrb[0].mxu0
  %v7318 = vadd.f32 0.0, %v7317
  %v7319 = vpop.f32.mrb[0].mxu0
  %7320 = vmatprep.mubr.f32.mxu0 0.0
  %7321 = vmatmul.mubr.f32.gmra.mrb[0].mxu0 %v6862
  %v7322 = vpop.f32.mrb[0].mxu0
  %v7323 = vadd.f32 0.0, %v7322
  %v7324 = vpop.f32.mrb[0].mxu0
  %7325 = vmatprep.mubr.f32.mxu0 0.0
  %7326 = vmatmul.mubr.f32.gmra.mrb[0].mxu0 %v6863
  %v7327 = vpop.f32.mrb[0].mxu0
  %v7328 = vadd.f32 0.0, %v7327
  %v7329 = vpop.f32.mrb[0].mxu0
  %7330 = vmatprep.mubr.f32.mxu0 0.0
  %7331 = vmatmul.mubr.f32.gmra.mrb[0].mxu0 %v6864
  %v7332 = vpop.f32.mrb[0].mxu0
  %v7333 = vadd.f32 0.0, %v7332
  %v7334 = vpop.f32.mrb[0].mxu0
  %7335 = vmatprep.mubr.f32.mxu0 0.0
  %7336 = vmatmul.mubr.f32.gmra.mrb[0].mxu0 %v6865
  %v7337 = vpop.f32.mrb[0].mxu0
  %v7338 = vadd.f32 0.0, %v7337
  %v7339 = vpop.f32.mrb[0].mxu0
  %7340 = vmatprep.mubr.f32.mxu0 0.0
  %7341 = vmatmul.mubr.f32.gmra.mrb[0].mxu0 %v6866
  %v7342 = vpop.f32.mrb[0].mxu0
  %v7343 = vadd.f32 0.0, %v7342
  %v7344 = vpop.f32.mrb[0].mxu0
  %7345 = vmatprep.mubr.f32.mxu0 0.0
  %7346 = vmatmul.mubr.f32.gmra.mrb[0].mxu0 %v6867
  %v7347 = vpop.f32.mrb[0].mxu0
  %v7348 = vadd.f32 0.0, %v7347
  %v7349 = vpop.f32.mrb[0].mxu0
  %7350 = vmatprep.mubr.f32.mxu0 0.0
  %7351 = vmatmul.mubr.f32.gmra.mrb[0].mxu0 %v6868
  %v7352 = vpop.f32.mrb[0].mxu0
  %v7353 = vadd.f32 0.0, %v7352
  %v7354 = vpop.f32.mrb[0].mxu0
  %7355 = vdwg.mxu0
  %v7356 = vadd.f32 %v6707, %v6953
  %v7357 = vadd.f32 %v6708, %v6958
  %v7358 = vadd.f32 %v6709, %v6963
  %v7359 = vadd.f32 %v6710, %v6968
  %v7360 = vadd.f32 %v6711, %v6973
  %v7361 = vadd.f32 %v6712, %v6978
  %v7362 = vadd.f32 %v6713, %v6983
  %v7363 = vadd.f32 %v6714, %v6988
  %v7364 = vadd.f32 %v6715, %v6993
  %v7365 = vadd.f32 %v6716, %v6998
  %v7366 = vadd.f32 %v6717, %v7003
  %v7367 = vadd.f32 %v6718, %v7008
  %v7368 = vadd.f32 %v6719, %v7013
  %v7369 = vadd.f32 %v6720, %v7018
  %v7370 = vadd.f32 %v6721, %v7023
  %v7371 = vadd.f32 %v6722, %v7028
  %v7372 = vadd.f32 %v6723, %v7033
  %v7373 = vadd.f32 %v6724, %v7038
  %v7374 = vadd.f32 %v6725, %v7043
  %v7375 = vadd.f32 %v6726, %v7048
  %v7376 = vadd.f32 %v6727, %v7053
  %v7377 = vadd.f32 %v6728, %v7058
  %v7378 = vadd.f32 %v6729, %v7063
  %v7379 = vadd.f32 %v6730, %v7068
  %v7380 = vadd.f32 %v6731, %v7073
  %v7381 = vadd.f32 %v6732, %v7078
  %v7382 = vadd.f32 %v6733, %v7083
  %v7383 = vadd.f32 %v6734, %v7088
  %v7384 = vadd.f32 %v6735, %v7093
  %v7385 = vadd.f32 %v6736, %v7098
  %v7386 = vadd.f32 %v6737, %v7103
  %v7387 = vadd.f32 %v6738, %v7108
  %v7388 = vadd.f32 %v6739, %v7113
  %v7389 = vadd.f32 %v6740, %v7118
  %v7390 = vadd.f32 %v6741, %v7123
  %v7391 = vadd.f32 %v6742, %v7128
  %v7392 = vadd.f32 %v6743, %v7133
  %v7393 = vadd.f32 %v6744, %v7138
  %v7394 = vadd.f32 %v6745, %v7143
  %v7395 = vadd.f32 %v6746, %v7148
  %v7396 = vadd.f32 %v6747, %v7153
  %v7397 = vadd.f32 %v6748, %v7158
  %v7398 = vadd.f32 %v6749, %v7163
  %v7399 = vadd.f32 %v6750, %v7168
  %v7400 = vadd.f32 %v6751, %v7173
  %v7401 = vadd.f32 %v6752, %v7178
  %v7402 = vadd.f32 %v6753, %v7183
  %v7403 = vadd.f32 %v6754, %v7188
  %v7404 = vadd.f32 %v6755, %v7193
  %v7405 = vadd.f32 %v6756, %v7198
  %v7406 = vadd.f32 %v6757, %v7203
  %v7407 = vadd.f32 %v6758, %v7208
  %v7408 = vadd.f32 %v6759, %v7213
  %v7409 = vadd.f32 %v6760, %v7218
  %v7410 = vadd.f32 %v6761, %v7223
  %v7411 = vadd.f32 %v6762, %v7228
  %v7412 = vadd.f32 %v6763, %v7233
  %v7413 = vadd.f32 %v6764, %v7238
  %v7414 = vadd.f32 %v6765, %v7243
  %v7415 = vadd.f32 %v6766, %v7248
  %v7416 = vadd.f32 %v6767, %v7253
  %v7417 = vadd.f32 %v6768, %v7258
  %v7418 = vadd.f32 %v6769, %v7263
  %v7419 = vadd.f32 %v6770, %v7268
  %v7420 = vadd.f32 %v6771, %v7273
  %v7421 = vadd.f32 %v6772, %v7278
  %v7422 = vadd.f32 %v6773, %v7283
  %v7423 = vadd.f32 %v6774, %v7288
  %v7424 = vadd.f32 %v6775, %v7293
  %v7425 = vadd.f32 %v6776, %v7298
  %v7426 = vadd.f32 %v6777, %v7303
  %v7427 = vadd.f32 %v6778, %v7308
  %v7428 = vadd.f32 %v6779, %v7313
  %v7429 = vadd.f32 %v6780, %v7318
  %v7430 = vadd.f32 %v6781, %v7323
  %v7431 = vadd.f32 %v6782, %v7328
  %v7432 = vadd.f32 %v6783, %v7333
  %v7433 = vadd.f32 %v6784, %v7338
  %v7434 = vadd.f32 %v6785, %v7343
  %v7435 = vadd.f32 %v6786, %v7348
  %v7436 = vadd.f32 %v6787, %v7353
  %v7437 = vld [vmem:[%s4 + $0x2] sm:$0x1]
  %v7438 = vld [vmem:[%s4 + $0x3] sm:$0x1]
  %v7439 = vmul.f32 %v7356, %v1189
  %v7440 = vmul.f32 %v7357, %v1194
  %v7441 = vmul.f32 %v7358, %v1199
  %v7442 = vmul.f32 %v7359, %v1204
  %v7443 = vmul.f32 %v7360, %v1209
  %v7444 = vmul.f32 %v7361, %v1214
  %v7445 = vmul.f32 %v7362, %v1219
  %v7446 = vmul.f32 %v7363, %v1224
  %v7447 = vmul.f32 %v7364, %v1229
  %v7448 = vmul.f32 %v7365, %v1234
  %v7449 = vmul.f32 %v7366, %v1239
  %v7450 = vmul.f32 %v7367, %v1244
  %v7451 = vmul.f32 %v7368, %v1249
  %v7452 = vmul.f32 %v7369, %v1254
  %v7453 = vmul.f32 %v7370, %v1259
  %v7454 = vmul.f32 %v7371, %v1264
  %v7455 = vmul.f32 %v7372, %v1269
  %v7456 = vmul.f32 %v7373, %v1274
  %v7457 = vmul.f32 %v7374, %v1279
  %v7458 = vmul.f32 %v7375, %v1284
  %v7459 = vmul.f32 %v7376, %v1289
  %v7460 = vmul.f32 %v7377, %v1294
  %v7461 = vmul.f32 %v7378, %v1299
  %v7462 = vmul.f32 %v7379, %v1304
  %v7463 = vmul.f32 %v7380, %v1309
  %v7464 = vmul.f32 %v7381, %v1314
  %v7465 = vmul.f32 %v7382, %v1319
  %v7466 = vmul.f32 %v7383, %v1324
  %v7467 = vmul.f32 %v7384, %v1329
  %v7468 = vmul.f32 %v7385, %v1334
  %v7469 = vmul.f32 %v7386, %v1339
  %v7470 = vmul.f32 %v7387, %v1344
  %v7471 = vmul.f32 %v7388, %v1349
  %v7472 = vmul.f32 %v7389, %v1354
  %v7473 = vmul.f32 %v7390, %v1359
  %v7474 = vmul.f32 %v7391, %v1364
  %v7475 = vmul.f32 %v7392, %v1369
  %v7476 = vmul.f32 %v7393, %v1374
  %v7477 = vmul.f32 %v7394, %v1379
  %v7478 = vmul.f32 %v7395, %v1384
  %v7479 = vmul.f32 %v7396, %v1389
  %v7480 = vmul.f32 %v7397, %v1394
  %v7481 = vmul.f32 %v7398, %v1399
  %v7482 = vmul.f32 %v7399, %v1404
  %v7483 = vmul.f32 %v7400, %v1409
  %v7484 = vmul.f32 %v7401, %v1414
  %v7485 = vmul.f32 %v7402, %v1419
  %v7486 = vmul.f32 %v7403, %v1424
  %v7487 = vmul.f32 %v7404, %v1429
  %v7488 = vmul.f32 %v7405, %v1434
  %v7489 = vmul.f32 %v7406, %v1439
  %v7490 = vmul.f32 %v7407, %v1444
  %v7491 = vmul.f32 %v7408, %v1449
  %v7492 = vmul.f32 %v7409, %v1454
  %v7493 = vmul.f32 %v7410, %v1459
  %v7494 = vmul.f32 %v7411, %v1464
  %v7495 = vmul.f32 %v7412, %v1469
  %v7496 = vmul.f32 %v7413, %v1474
  %v7497 = vmul.f32 %v7414, %v1479
  %v7498 = vmul.f32 %v7415, %v1484
  %v7499 = vmul.f32 %v7416, %v1489
  %v7500 = vmul.f32 %v7417, %v1494
  %v7501 = vmul.f32 %v7418, %v1499
  %v7502 = vmul.f32 %v7419, %v1504
  %v7503 = vmul.f32 %v7420, %v1509
  %v7504 = vmul.f32 %v7421, %v1514
  %v7505 = vmul.f32 %v7422, %v1519
  %v7506 = vmul.f32 %v7423, %v1524
  %v7507 = vmul.f32 %v7424, %v1529
  %v7508 = vmul.f32 %v7425, %v1534
  %v7509 = vmul.f32 %v7426, %v1539
  %v7510 = vmul.f32 %v7427, %v1544
  %v7511 = vmul.f32 %v7428, %v1549
  %v7512 = vmul.f32 %v7429, %v1554
  %v7513 = vmul.f32 %v7430, %v1559
  %v7514 = vmul.f32 %v7431, %v1564
  %v7515 = vmul.f32 %v7432, %v1569
  %v7516 = vmul.f32 %v7433, %v1574
  %v7517 = vmul.f32 %v7434, %v1579
  %v7518 = vmul.f32 %v7435, %v1584
  %v7519 = vmul.f32 %v7436, %v1589
  %v7520 = vadd.f32 %v7439, %v7440
  %v7521 = vadd.f32 %v7520, %v7441
  %v7522 = vadd.f32 %v7521, %v7442
  %v7523 = vadd.f32 %v7522, %v7443
  %v7524 = vadd.f32 %v7523, %v7444
  %v7525 = vadd.f32 %v7524, %v7445
  %v7526 = vadd.f32 %v7525, %v7446
  %v7527 = vadd.f32 %v7526, %v7447
  %v7528 = vadd.f32 %v7527, %v7448
  %v7529 = vadd.f32 %v7528, %v7449
  %v7530 = vadd.f32 %v7529, %v7450
  %v7531 = vadd.f32 %v7530, %v7451
  %v7532 = vadd.f32 %v7531, %v7452
  %v7533 = vadd.f32 %v7532, %v7453
  %v7534 = vadd.f32 %v7533, %v7454
  %v7535 = vadd.f32 %v7534, %v7455
  %v7536 = vadd.f32 %v7535, %v7456
  %v7537 = vadd.f32 %v7536, %v7457
  %v7538 = vadd.f32 %v7537, %v7458
  %v7539 = vadd.f32 %v7538, %v7459
  %v7540 = vadd.f32 %v7539, %v7460
  %v7541 = vadd.f32 %v7540, %v7461
  %v7542 = vadd.f32 %v7541, %v7462
  %v7543 = vadd.f32 %v7542, %v7463
  %v7544 = vadd.f32 %v7543, %v7464
  %v7545 = vadd.f32 %v7544, %v7465
  %v7546 = vadd.f32 %v7545, %v7466
  %v7547 = vadd.f32 %v7546, %v7467
  %v7548 = vadd.f32 %v7547, %v7468
  %v7549 = vadd.f32 %v7548, %v7469
  %v7550 = vadd.f32 %v7549, %v7470
  %v7551 = vadd.f32 %v7550, %v7471
  %v7552 = vadd.f32 %v7551, %v7472
  %v7553 = vadd.f32 %v7552, %v7473
  %v7554 = vadd.f32 %v7553, %v7474
  %v7555 = vadd.f32 %v7554, %v7475
  %v7556 = vadd.f32 %v7555, %v7476
  %v7557 = vadd.f32 %v7556, %v7477
  %v7558 = vadd.f32 %v7557, %v7478
  %v7559 = vadd.f32 %v7558, %v7479
  %v7560 = vadd.f32 %v7559, %v7480
  %v7561 = vadd.f32 %v7560, %v7481
  %v7562 = vadd.f32 %v7561, %v7482
  %v7563 = vadd.f32 %v7562, %v7483
  %v7564 = vadd.f32 %v7563, %v7484
  %v7565 = vadd.f32 %v7564, %v7485
  %v7566 = vadd.f32 %v7565, %v7486
  %v7567 = vadd.f32 %v7566, %v7487
  %v7568 = vadd.f32 %v7567, %v7488
  %v7569 = vadd.f32 %v7568, %v7489
  %v7570 = vadd.f32 %v7569, %v7490
  %v7571 = vadd.f32 %v7570, %v7491
  %v7572 = vadd.f32 %v7571, %v7492
  %v7573 = vadd.f32 %v7572, %v7493
  %v7574 = vadd.f32 %v7573, %v7494
  %v7575 = vadd.f32 %v7574, %v7495
  %v7576 = vadd.f32 %v7575, %v7496
  %v7577 = vadd.f32 %v7576, %v7497
  %v7578 = vadd.f32 %v7577, %v7498
  %v7579 = vadd.f32 %v7578, %v7499
  %v7580 = vadd.f32 %v7579, %v7500
  %v7581 = vadd.f32 %v7580, %v7501
  %v7582 = vadd.f32 %v7581, %v7502
  %v7583 = vadd.f32 %v7582, %v7503
  %v7584 = vadd.f32 %v7583, %v7504
  %v7585 = vadd.f32 %v7584, %v7505
  %v7586 = vadd.f32 %v7585, %v7506
  %v7587 = vadd.f32 %v7586, %v7507
  %v7588 = vadd.f32 %v7587, %v7508
  %v7589 = vadd.f32 %v7588, %v7509
  %v7590 = vadd.f32 %v7589, %v7510
  %v7591 = vadd.f32 %v7590, %v7511
  %v7592 = vadd.f32 %v7591, %v7512
  %v7593 = vadd.f32 %v7592, %v7513
  %v7594 = vadd.f32 %v7593, %v7514
  %v7595 = vadd.f32 %v7594, %v7515
  %v7596 = vadd.f32 %v7595, %v7516
  %v7597 = vadd.f32 %v7596, %v7517
  %v7598 = vadd.f32 %v7597, %v7518
  %v7599 = vadd.f32 %v7598, %v7519
  %v7600 = vrot.slane %v7599, 4
  %v7601 = vadd.f32 %v7599, %v7600
  %v7602 = vrot.slane %v7601, 2
  %v7603 = vadd.f32 %v7601, %v7602
  %v7604 = vrot.slane %v7603, 1
  %v7605 = vadd.f32 %v7603, %v7604
  %v7606 = vmul.f32 %v7605, 0.001953125
  %v7607 = vmul.f32 %v7439, %v7439
  %v7608 = vmul.f32 %v7440, %v7440
  %v7609 = vmul.f32 %v7441, %v7441
  %v7610 = vmul.f32 %v7442, %v7442
  %v7611 = vmul.f32 %v7443, %v7443
  %v7612 = vmul.f32 %v7444, %v7444
  %v7613 = vmul.f32 %v7445, %v7445
  %v7614 = vmul.f32 %v7446, %v7446
  %v7615 = vmul.f32 %v7447, %v7447
  %v7616 = vmul.f32 %v7448, %v7448
  %v7617 = vmul.f32 %v7449, %v7449
  %v7618 = vmul.f32 %v7450, %v7450
  %v7619 = vmul.f32 %v7451, %v7451
  %v7620 = vmul.f32 %v7452, %v7452
  %v7621 = vmul.f32 %v7453, %v7453
  %v7622 = vmul.f32 %v7454, %v7454
  %v7623 = vmul.f32 %v7455, %v7455
  %v7624 = vmul.f32 %v7456, %v7456
  %v7625 = vmul.f32 %v7457, %v7457
  %v7626 = vmul.f32 %v7458, %v7458
  %v7627 = vmul.f32 %v7459, %v7459
  %v7628 = vmul.f32 %v7460, %v7460
  %v7629 = vmul.f32 %v7461, %v7461
  %v7630 = vmul.f32 %v7462, %v7462
  %v7631 = vmul.f32 %v7463, %v7463
  %v7632 = vmul.f32 %v7464, %v7464
  %v7633 = vmul.f32 %v7465, %v7465
  %v7634 = vmul.f32 %v7466, %v7466
  %v7635 = vmul.f32 %v7467, %v7467
  %v7636 = vmul.f32 %v7468, %v7468
  %v7637 = vmul.f32 %v7469, %v7469
  %v7638 = vmul.f32 %v7470, %v7470
  %v7639 = vmul.f32 %v7471, %v7471
  %v7640 = vmul.f32 %v7472, %v7472
  %v7641 = vmul.f32 %v7473, %v7473
  %v7642 = vmul.f32 %v7474, %v7474
  %v7643 = vmul.f32 %v7475, %v7475
  %v7644 = vmul.f32 %v7476, %v7476
  %v7645 = vmul.f32 %v7477, %v7477
  %v7646 = vmul.f32 %v7478, %v7478
  %v7647 = vmul.f32 %v7479, %v7479
  %v7648 = vmul.f32 %v7480, %v7480
  %v7649 = vmul.f32 %v7481, %v7481
  %v7650 = vmul.f32 %v7482, %v7482
  %v7651 = vmul.f32 %v7483, %v7483
  %v7652 = vmul.f32 %v7484, %v7484
  %v7653 = vmul.f32 %v7485, %v7485
  %v7654 = vmul.f32 %v7486, %v7486
  %v7655 = vmul.f32 %v7487, %v7487
  %v7656 = vmul.f32 %v7488, %v7488
  %v7657 = vmul.f32 %v7489, %v7489
  %v7658 = vmul.f32 %v7490, %v7490
  %v7659 = vmul.f32 %v7491, %v7491
  %v7660 = vmul.f32 %v7492, %v7492
  %v7661 = vmul.f32 %v7493, %v7493
  %v7662 = vmul.f32 %v7494, %v7494
  %v7663 = vmul.f32 %v7495, %v7495
  %v7664 = vmul.f32 %v7496, %v7496
  %v7665 = vmul.f32 %v7497, %v7497
  %v7666 = vmul.f32 %v7498, %v7498
  %v7667 = vmul.f32 %v7499, %v7499
  %v7668 = vmul.f32 %v7500, %v7500
  %v7669 = vmul.f32 %v7501, %v7501
  %v7670 = vmul.f32 %v7502, %v7502
  %v7671 = vmul.f32 %v7503, %v7503
  %v7672 = vmul.f32 %v7504, %v7504
  %v7673 = vmul.f32 %v7505, %v7505
  %v7674 = vmul.f32 %v7506, %v7506
  %v7675 = vmul.f32 %v7507, %v7507
  %v7676 = vmul.f32 %v7508, %v7508
  %v7677 = vmul.f32 %v7509, %v7509
  %v7678 = vmul.f32 %v7510, %v7510
  %v7679 = vmul.f32 %v7511, %v7511
  %v7680 = vmul.f32 %v7512, %v7512
  %v7681 = vmul.f32 %v7513, %v7513
  %v7682 = vmul.f32 %v7514, %v7514
  %v7683 = vmul.f32 %v7515, %v7515
  %v7684 = vmul.f32 %v7516, %v7516
  %v7685 = vmul.f32 %v7517, %v7517
  %v7686 = vmul.f32 %v7518, %v7518
  %v7687 = vmul.f32 %v7519, %v7519
  %v7688 = vadd.f32 %v7607, %v7608
  %v7689 = vadd.f32 %v7688, %v7609
  %v7690 = vadd.f32 %v7689, %v7610
  %v7691 = vadd.f32 %v7690, %v7611
  %v7692 = vadd.f32 %v7691, %v7612
  %v7693 = vadd.f32 %v7692, %v7613
  %v7694 = vadd.f32 %v7693, %v7614
  %v7695 = vadd.f32 %v7694, %v7615
  %v7696 = vadd.f32 %v7695, %v7616
  %v7697 = vadd.f32 %v7696, %v7617
  %v7698 = vadd.f32 %v7697, %v7618
  %v7699 = vadd.f32 %v7698, %v7619
  %v7700 = vadd.f32 %v7699, %v7620
  %v7701 = vadd.f32 %v7700, %v7621
  %v7702 = vadd.f32 %v7701, %v7622
  %v7703 = vadd.f32 %v7702, %v7623
  %v7704 = vadd.f32 %v7703, %v7624
  %v7705 = vadd.f32 %v7704, %v7625
  %v7706 = vadd.f32 %v7705, %v7626
  %v7707 = vadd.f32 %v7706, %v7627
  %v7708 = vadd.f32 %v7707, %v7628
  %v7709 = vadd.f32 %v7708, %v7629
  %v7710 = vadd.f32 %v7709, %v7630
  %v7711 = vadd.f32 %v7710, %v7631
  %v7712 = vadd.f32 %v7711, %v7632
  %v7713 = vadd.f32 %v7712, %v7633
  %v7714 = vadd.f32 %v7713, %v7634
  %v7715 = vadd.f32 %v7714, %v7635
  %v7716 = vadd.f32 %v7715, %v7636
  %v7717 = vadd.f32 %v7716, %v7637
  %v7718 = vadd.f32 %v7717, %v7638
  %v7719 = vadd.f32 %v7718, %v7639
  %v7720 = vadd.f32 %v7719, %v7640
  %v7721 = vadd.f32 %v7720, %v7641
  %v7722 = vadd.f32 %v7721, %v7642
  %v7723 = vadd.f32 %v7722, %v7643
  %v7724 = vadd.f32 %v7723, %v7644
  %v7725 = vadd.f32 %v7724, %v7645
  %v7726 = vadd.f32 %v7725, %v7646
  %v7727 = vadd.f32 %v7726, %v7647
  %v7728 = vadd.f32 %v7727, %v7648
  %v7729 = vadd.f32 %v7728, %v7649
  %v7730 = vadd.f32 %v7729, %v7650
  %v7731 = vadd.f32 %v7730, %v7651
  %v7732 = vadd.f32 %v7731, %v7652
  %v7733 = vadd.f32 %v7732, %v7653
  %v7734 = vadd.f32 %v7733, %v7654
  %v7735 = vadd.f32 %v7734, %v7655
  %v7736 = vadd.f32 %v7735, %v7656
  %v7737 = vadd.f32 %v7736, %v7657
  %v7738 = vadd.f32 %v7737, %v7658
  %v7739 = vadd.f32 %v7738, %v7659
  %v7740 = vadd.f32 %v7739, %v7660
  %v7741 = vadd.f32 %v7740, %v7661
  %v7742 = vadd.f32 %v7741, %v7662
  %v7743 = vadd.f32 %v7742, %v7663
  %v7744 = vadd.f32 %v7743, %v7664
  %v7745 = vadd.f32 %v7744, %v7665
  %v7746 = vadd.f32 %v7745, %v7666
  %v7747 = vadd.f32 %v7746, %v7667
  %v7748 = vadd.f32 %v7747, %v7668
  %v7749 = vadd.f32 %v7748, %v7669
  %v7750 = vadd.f32 %v7749, %v7670
  %v7751 = vadd.f32 %v7750, %v7671
  %v7752 = vadd.f32 %v7751, %v7672
  %v7753 = vadd.f32 %v7752, %v7673
  %v7754 = vadd.f32 %v7753, %v7674
  %v7755 = vadd.f32 %v7754, %v7675
  %v7756 = vadd.f32 %v7755, %v7676
  %v7757 = vadd.f32 %v7756, %v7677
  %v7758 = vadd.f32 %v7757, %v7678
  %v7759 = vadd.f32 %v7758, %v7679
  %v7760 = vadd.f32 %v7759, %v7680
  %v7761 = vadd.f32 %v7760, %v7681
  %v7762 = vadd.f32 %v7761, %v7682
  %v7763 = vadd.f32 %v7762, %v7683
  %v7764 = vadd.f32 %v7763, %v7684
  %v7765 = vadd.f32 %v7764, %v7685
  %v7766 = vadd.f32 %v7765, %v7686
  %v7767 = vadd.f32 %v7766, %v7687
  %v7768 = vrot.slane %v7767, 4
  %v7769 = vadd.f32 %v7767, %v7768
  %v7770 = vrot.slane %v7769, 2
  %v7771 = vadd.f32 %v7769, %v7770
  %v7772 = vrot.slane %v7771, 1
  %v7773 = vadd.f32 %v7771, %v7772
  %v7774 = vmul.f32 %v7773, 0.001953125
  %v7775 = vmul.f32 %v7606, %v7606
  %v7776 = vsub.f32 %v7774, %v7775
  %v7777 = vadd.f32 %v7776, 1e-05
  %v7778 = vrsqrt.pop %v7777
  %v7779 = vmul.f32 %v7437, %v7778
  %v7780 = vmul.f32 %v7606, %v7779
  %v7781 = vsub.f32 %v7438, %v7780
  %v7782 = vlaneseq
  %v7783 = vshrl.u32 %v7782, 7
  %v7784 = vsub.s32 0, %v7783
  %v7785 = vrot.slane %v7779, %v7784
  %v7786 = vmul.f32 %v7356, %v7785
  %v7787 = vmul.f32 %v7357, %v7785
  %v7788 = vmul.f32 %v7358, %v7785
  %v7789 = vmul.f32 %v7359, %v7785
  %v7790 = vmul.f32 %v7360, %v7785
  %v7791 = vmul.f32 %v7361, %v7785
  %v7792 = vmul.f32 %v7362, %v7785
  %v7793 = vmul.f32 %v7363, %v7785
  %v7794 = vmul.f32 %v7364, %v7785
  %v7795 = vmul.f32 %v7365, %v7785
  %v7796 = vmul.f32 %v7366, %v7785
  %v7797 = vmul.f32 %v7367, %v7785
  %v7798 = vmul.f32 %v7368, %v7785
  %v7799 = vmul.f32 %v7369, %v7785
  %v7800 = vmul.f32 %v7370, %v7785
  %v7801 = vmul.f32 %v7371, %v7785
  %v7802 = vmul.f32 %v7372, %v7785
  %v7803 = vmul.f32 %v7373, %v7785
  %v7804 = vmul.f32 %v7374, %v7785
  %v7805 = vmul.f32 %v7375, %v7785
  %v7806 = vmul.f32 %v7376, %v7785
  %v7807 = vmul.f32 %v7377, %v7785
  %v7808 = vmul.f32 %v7378, %v7785
  %v7809 = vmul.f32 %v7379, %v7785
  %v7810 = vmul.f32 %v7380, %v7785
  %v7811 = vmul.f32 %v7381, %v7785
  %v7812 = vmul.f32 %v7382, %v7785
  %v7813 = vmul.f32 %v7383, %v7785
  %v7814 = vmul.f32 %v7384, %v7785
  %v7815 = vmul.f32 %v7385, %v7785
  %v7816 = vmul.f32 %v7386, %v7785
  %v7817 = vmul.f32 %v7387, %v7785
  %v7818 = vmul.f32 %v7388, %v7785
  %v7819 = vmul.f32 %v7389, %v7785
  %v7820 = vmul.f32 %v7390, %v7785
  %v7821 = vmul.f32 %v7391, %v7785
  %v7822 = vmul.f32 %v7392, %v7785
  %v7823 = vmul.f32 %v7393, %v7785
  %v7824 = vmul.f32 %v7394, %v7785
  %v7825 = vmul.f32 %v7395, %v7785
  %v7826 = vmul.f32 %v7396, %v7785
  %v7827 = vmul.f32 %v7397, %v7785
  %v7828 = vmul.f32 %v7398, %v7785
  %v7829 = vmul.f32 %v7399, %v7785
  %v7830 = vmul.f32 %v7400, %v7785
  %v7831 = vmul.f32 %v7401, %v7785
  %v7832 = vmul.f32 %v7402, %v7785
  %v7833 = vmul.f32 %v7403, %v7785
  %v7834 = vmul.f32 %v7404, %v7785
  %v7835 = vmul.f32 %v7405, %v7785
  %v7836 = vmul.f32 %v7406, %v7785
  %v7837 = vmul.f32 %v7407, %v7785
  %v7838 = vmul.f32 %v7408, %v7785
  %v7839 = vmul.f32 %v7409, %v7785
  %v7840 = vmul.f32 %v7410, %v7785
  %v7841 = vmul.f32 %v7411, %v7785
  %v7842 = vmul.f32 %v7412, %v7785
  %v7843 = vmul.f32 %v7413, %v7785
  %v7844 = vmul.f32 %v7414, %v7785
  %v7845 = vmul.f32 %v7415, %v7785
  %v7846 = vmul.f32 %v7416, %v7785
  %v7847 = vmul.f32 %v7417, %v7785
  %v7848 = vmul.f32 %v7418, %v7785
  %v7849 = vmul.f32 %v7419, %v7785
  %v7850 = vmul.f32 %v7420, %v7785
  %v7851 = vmul.f32 %v7421, %v7785
  %v7852 = vmul.f32 %v7422, %v7785
  %v7853 = vmul.f32 %v7423, %v7785
  %v7854 = vmul.f32 %v7424, %v7785
  %v7855 = vmul.f32 %v7425, %v7785
  %v7856 = vmul.f32 %v7426, %v7785
  %v7857 = vmul.f32 %v7427, %v7785
  %v7858 = vmul.f32 %v7428, %v7785
  %v7859 = vmul.f32 %v7429, %v7785
  %v7860 = vmul.f32 %v7430, %v7785
  %v7861 = vmul.f32 %v7431, %v7785
  %v7862 = vmul.f32 %v7432, %v7785
  %v7863 = vmul.f32 %v7433, %v7785
  %v7864 = vmul.f32 %v7434, %v7785
  %v7865 = vmul.f32 %v7435, %v7785
  %v7866 = vmul.f32 %v7436, %v7785
  %v7867 = vlaneseq
  %v7868 = vshrl.u32 %v7867, 7
  %v7869 = vsub.s32 0, %v7868
  %v7870 = vrot.slane %v7781, %v7869
  %v7871 = vadd.f32 %v7786, %v7870
  %v7872 = vadd.f32 %v7787, %v7870
  %v7873 = vadd.f32 %v7788, %v7870
  %v7874 = vadd.f32 %v7789, %v7870
  %v7875 = vadd.f32 %v7790, %v7870
  %v7876 = vadd.f32 %v7791, %v7870
  %v7877 = vadd.f32 %v7792, %v7870
  %v7878 = vadd.f32 %v7793, %v7870
  %v7879 = vadd.f32 %v7794, %v7870
  %v7880 = vadd.f32 %v7795, %v7870
  %v7881 = vadd.f32 %v7796, %v7870
  %v7882 = vadd.f32 %v7797, %v7870
  %v7883 = vadd.f32 %v7798, %v7870
  %v7884 = vadd.f32 %v7799, %v7870
  %v7885 = vadd.f32 %v7800, %v7870
  %v7886 = vadd.f32 %v7801, %v7870
  %v7887 = vadd.f32 %v7802, %v7870
  %v7888 = vadd.f32 %v7803, %v7870
  %v7889 = vadd.f32 %v7804, %v7870
  %v7890 = vadd.f32 %v7805, %v7870
  %v7891 = vadd.f32 %v7806, %v7870
  %v7892 = vadd.f32 %v7807, %v7870
  %v7893 = vadd.f32 %v7808, %v7870
  %v7894 = vadd.f32 %v7809, %v7870
  %v7895 = vadd.f32 %v7810, %v7870
  %v7896 = vadd.f32 %v7811, %v7870
  %v7897 = vadd.f32 %v7812, %v7870
  %v7898 = vadd.f32 %v7813, %v7870
  %v7899 = vadd.f32 %v7814, %v7870
  %v7900 = vadd.f32 %v7815, %v7870
  %v7901 = vadd.f32 %v7816, %v7870
  %v7902 = vadd.f32 %v7817, %v7870
  %v7903 = vadd.f32 %v7818, %v7870
  %v7904 = vadd.f32 %v7819, %v7870
  %v7905 = vadd.f32 %v7820, %v7870
  %v7906 = vadd.f32 %v7821, %v7870
  %v7907 = vadd.f32 %v7822, %v7870
  %v7908 = vadd.f32 %v7823, %v7870
  %v7909 = vadd.f32 %v7824, %v7870
  %v7910 = vadd.f32 %v7825, %v7870
  %v7911 = vadd.f32 %v7826, %v7870
  %v7912 = vadd.f32 %v7827, %v7870
  %v7913 = vadd.f32 %v7828, %v7870
  %v7914 = vadd.f32 %v7829, %v7870
  %v7915 = vadd.f32 %v7830, %v7870
  %v7916 = vadd.f32 %v7831, %v7870
  %v7917 = vadd.f32 %v7832, %v7870
  %v7918 = vadd.f32 %v7833, %v7870
  %v7919 = vadd.f32 %v7834, %v7870
  %v7920 = vadd.f32 %v7835, %v7870
  %v7921 = vadd.f32 %v7836, %v7870
  %v7922 = vadd.f32 %v7837, %v7870
  %v7923 = vadd.f32 %v7838, %v7870
  %v7924 = vadd.f32 %v7839, %v7870
  %v7925 = vadd.f32 %v7840, %v7870
  %v7926 = vadd.f32 %v7841, %v7870
  %v7927 = vadd.f32 %v7842, %v7870
  %v7928 = vadd.f32 %v7843, %v7870
  %v7929 = vadd.f32 %v7844, %v7870
  %v7930 = vadd.f32 %v7845, %v7870
  %v7931 = vadd.f32 %v7846, %v7870
  %v7932 = vadd.f32 %v7847, %v7870
  %v7933 = vadd.f32 %v7848, %v7870
  %v7934 = vadd.f32 %v7849, %v7870
  %v7935 = vadd.f32 %v7850, %v7870
  %v7936 = vadd.f32 %v7851, %v7870
  %v7937 = vadd.f32 %v7852, %v7870
  %v7938 = vadd.f32 %v7853, %v7870
  %v7939 = vadd.f32 %v7854, %v7870
  %v7940 = vadd.f32 %v7855, %v7870
  %v7941 = vadd.f32 %v7856, %v7870
  %v7942 = vadd.f32 %v7857, %v7870
  %v7943 = vadd.f32 %v7858, %v7870
  %v7944 = vadd.f32 %v7859, %v7870
  %v7945 = vadd.f32 %v7860, %v7870
  %v7946 = vadd.f32 %v7861, %v7870
  %v7947 = vadd.f32 %v7862, %v7870
  %v7948 = vadd.f32 %v7863, %v7870
  %v7949 = vadd.f32 %v7864, %v7870
  %v7950 = vadd.f32 %v7865, %v7870
  %v7951 = vadd.f32 %v7866, %v7870
  %v7952 = vmax.f32 %v7871, 0.0
  %v7953 = vmax.f32 %v7872, 0.0
  %v7954 = vmax.f32 %v7873, 0.0
  %v7955 = vmax.f32 %v7874, 0.0
  %v7956 = vmax.f32 %v7875, 0.0
  %v7957 = vmax.f32 %v7876, 0.0
  %v7958 = vmax.f32 %v7877, 0.0
  %v7959 = vmax.f32 %v7878, 0.0
  %v7960 = vmax.f32 %v7879, 0.0
  %v7961 = vmax.f32 %v7880, 0.0
  %v7962 = vmax.f32 %v7881, 0.0
  %v7963 = vmax.f32 %v7882, 0.0
  %v7964 = vmax.f32 %v7883, 0.0
  %v7965 = vmax.f32 %v7884, 0.0
  %v7966 = vmax.f32 %v7885, 0.0
  %v7967 = vmax.f32 %v7886, 0.0
  %v7968 = vmax.f32 %v7887, 0.0
  %v7969 = vmax.f32 %v7888, 0.0
  %v7970 = vmax.f32 %v7889, 0.0
  %v7971 = vmax.f32 %v7890, 0.0
  %v7972 = vmax.f32 %v7891, 0.0
  %v7973 = vmax.f32 %v7892, 0.0
  %v7974 = vmax.f32 %v7893, 0.0
  %v7975 = vmax.f32 %v7894, 0.0
  %v7976 = vmax.f32 %v7895, 0.0
  %v7977 = vmax.f32 %v7896, 0.0
  %v7978 = vmax.f32 %v7897, 0.0
  %v7979 = vmax.f32 %v7898, 0.0
  %v7980 = vmax.f32 %v7899, 0.0
  %v7981 = vmax.f32 %v7900, 0.0
  %v7982 = vmax.f32 %v7901, 0.0
  %v7983 = vmax.f32 %v7902, 0.0
  %v7984 = vmax.f32 %v7903, 0.0
  %v7985 = vmax.f32 %v7904, 0.0
  %v7986 = vmax.f32 %v7905, 0.0
  %v7987 = vmax.f32 %v7906, 0.0
  %v7988 = vmax.f32 %v7907, 0.0
  %v7989 = vmax.f32 %v7908, 0.0
  %v7990 = vmax.f32 %v7909, 0.0
  %v7991 = vmax.f32 %v7910, 0.0
  %v7992 = vmax.f32 %v7911, 0.0
  %v7993 = vmax.f32 %v7912, 0.0
  %v7994 = vmax.f32 %v7913, 0.0
  %v7995 = vmax.f32 %v7914, 0.0
  %v7996 = vmax.f32 %v7915, 0.0
  %v7997 = vmax.f32 %v7916, 0.0
  %v7998 = vmax.f32 %v7917, 0.0
  %v7999 = vmax.f32 %v7918, 0.0
  %v8000 = vmax.f32 %v7919, 0.0
  %v8001 = vmax.f32 %v7920, 0.0
  %v8002 = vmax.f32 %v7921, 0.0
  %v8003 = vmax.f32 %v7922, 0.0
  %v8004 = vmax.f32 %v7923, 0.0
  %v8005 = vmax.f32 %v7924, 0.0
  %v8006 = vmax.f32 %v7925, 0.0
  %v8007 = vmax.f32 %v7926, 0.0
  %v8008 = vmax.f32 %v7927, 0.0
  %v8009 = vmax.f32 %v7928, 0.0
  %v8010 = vmax.f32 %v7929, 0.0
  %v8011 = vmax.f32 %v7930, 0.0
  %v8012 = vmax.f32 %v7931, 0.0
  %v8013 = vmax.f32 %v7932, 0.0
  %v8014 = vmax.f32 %v7933, 0.0
  %v8015 = vmax.f32 %v7934, 0.0
  %v8016 = vmax.f32 %v7935, 0.0
  %v8017 = vmax.f32 %v7936, 0.0
  %v8018 = vmax.f32 %v7937, 0.0
  %v8019 = vmax.f32 %v7938, 0.0
  %v8020 = vmax.f32 %v7939, 0.0
  %v8021 = vmax.f32 %v7940, 0.0
  %v8022 = vmax.f32 %v7941, 0.0
  %v8023 = vmax.f32 %v7942, 0.0
  %v8024 = vmax.f32 %v7943, 0.0
  %v8025 = vmax.f32 %v7944, 0.0
  %v8026 = vmax.f32 %v7945, 0.0
  %v8027 = vmax.f32 %v7946, 0.0
  %v8028 = vmax.f32 %v7947, 0.0
  %v8029 = vmax.f32 %v7948, 0.0
  %v8030 = vmax.f32 %v7949, 0.0
  %v8031 = vmax.f32 %v7950, 0.0
  %v8032 = vmax.f32 %v7951, 0.0
  %v8033 = vld [vmem:[%s3] sm:$0xff]
  %v8034 = vld [vmem:[%s3 + $0x8] sm:$0xff]
  %v8035 = vld [vmem:[%s3 + $0x10] sm:$0xff]
  %v8036 = vld [vmem:[%s3 + $0x18] sm:$0xff]
  %v8037 = vld [vmem:[%s3 + $0x20] sm:$0xff]
  %v8038 = vld [vmem:[%s3 + $0x28] sm:$0xff]
  %v8039 = vld [vmem:[%s3 + $0x30] sm:$0xff]
  %v8040 = vld [vmem:[%s3 + $0x38] sm:$0xff]
  %v8041 = vld [vmem:[%s3 + $0x40] sm:$0xff]
  %v8042 = vld [vmem:[%s3 + $0x48] sm:$0xff]
  %v8043 = vld [vmem:[%s3 + $0x50] sm:$0xff]
  %v8044 = vld [vmem:[%s3 + $0x58] sm:$0xff]
  %v8045 = vld [vmem:[%s3 + $0x60] sm:$0xff]
  %v8046 = vld [vmem:[%s3 + $0x68] sm:$0xff]
  %v8047 = vld [vmem:[%s3 + $0x70] sm:$0xff]
  %v8048 = vld [vmem:[%s3 + $0x78] sm:$0xff]
  %8049 = vmatprep.subr.mxu0 0.0
  %8050 = vmatpush1.msra.mxu0 %v8033
  %8051 = vmatprep.subr.mxu0 0.0
  %8052 = vmatpush1.msra.mxu0 %v8034
  %8053 = vmatprep.subr.mxu0 0.0
  %8054 = vmatpush1.msra.mxu0 %v8035
  %8055 = vmatprep.subr.mxu0 0.0
  %8056 = vmatpush1.msra.mxu0 %v8036
  %8057 = vmatprep.subr.mxu0 0.0
  %8058 = vmatpush1.msra.mxu0 %v8037
  %8059 = vmatprep.subr.mxu0 0.0
  %8060 = vmatpush1.msra.mxu0 %v8038
  %8061 = vmatprep.subr.mxu0 0.0
  %8062 = vmatpush1.msra.mxu0 %v8039
  %8063 = vmatprep.subr.mxu0 0.0
  %8064 = vmatpush1.msra.mxu0 %v8040
  %8065 = vmatprep.subr.mxu0 0.0
  %8066 = vmatpush1.msra.mxu0 %v8041
  %8067 = vmatprep.subr.mxu0 0.0
  %8068 = vmatpush1.msra.mxu0 %v8042
  %8069 = vmatprep.subr.mxu0 0.0
  %8070 = vmatpush1.msra.mxu0 %v8043
  %8071 = vmatprep.subr.mxu0 0.0
  %8072 = vmatpush1.msra.mxu0 %v8044
  %8073 = vmatprep.subr.mxu0 0.0
  %8074 = vmatpush1.msra.mxu0 %v8045
  %8075 = vmatprep.subr.mxu0 0.0
  %8076 = vmatpush1.msra.mxu0 %v8046
  %8077 = vmatprep.subr.mxu0 0.0
  %8078 = vmatpush1.msra.mxu0 %v8047
  %8079 = vmatprep.subr.mxu0 0.0
  %8080 = vmatpush1.msra.mxu0 %v8048
  %8081 = vmatprep.subr.mxu0 0.0
  %8082 = vmatpush1.msra.mxu0 0.0
  %8083 = vmatprep.subr.mxu0 0.0
  %8084 = vmatpush1.msra.mxu0 0.0
  %8085 = vmatprep.subr.mxu0 0.0
  %8086 = vmatpush1.msra.mxu0 0.0
  %8087 = vmatprep.subr.mxu0 0.0
  %8088 = vmatpush1.msra.mxu0 0.0
  %8089 = vmatprep.subr.mxu0 0.0
  %8090 = vmatpush1.msra.mxu0 0.0
  %8091 = vmatprep.subr.mxu0 0.0
  %8092 = vmatpush1.msra.mxu0 0.0
  %8093 = vmatprep.subr.mxu0 0.0
  %8094 = vmatpush1.msra.mxu0 0.0
  %8095 = vmatprep.subr.mxu0 0.0
  %8096 = vmatpush1.msra.mxu0 0.0
  %8097 = vmatprep.subr.mxu0 0.0
  %8098 = vmatpush1.msra.mxu0 0.0
  %8099 = vmatprep.subr.mxu0 0.0
  %8100 = vmatpush1.msra.mxu0 0.0
  %8101 = vmatprep.subr.mxu0 0.0
  %8102 = vmatpush1.msra.mxu0 0.0
  %8103 = vmatprep.subr.mxu0 0.0
  %8104 = vmatpush1.msra.mxu0 0.0
  %8105 = vmatprep.subr.mxu0 0.0
  %8106 = vmatpush1.msra.mxu0 0.0
  %8107 = vmatprep.subr.mxu0 0.0
  %8108 = vmatpush1.msra.mxu0 0.0
  %8109 = vmatprep.subr.mxu0 0.0
  %8110 = vmatpush1.msra.mxu0 0.0
  %8111 = vmatprep.subr.mxu0 0.0
  %8112 = vmatpush1.msra.mxu0 0.0
  %8113 = vmatprep.mubr.f32.mxu0 0.0
  %8114 = vmatmul.mubr.f32.gmra.mrb[0].mxu0 %v7952
  %v8115 = vpop.f32.mrb[0].mxu0
  %v8116 = vadd.f32 0.0, %v8115
  %v8117 = vpop.f32.mrb[0].mxu0
  %8118 = vmatprep.mubr.f32.mxu0 0.0
  %8119 = vmatmul.mubr.f32.gmra.mrb[0].mxu0 %v7953
  %v8120 = vpop.f32.mrb[0].mxu0
  %v8121 = vadd.f32 0.0, %v8120
  %v8122 = vpop.f32.mrb[0].mxu0
  %8123 = vmatprep.mubr.f32.mxu0 0.0
  %8124 = vmatmul.mubr.f32.gmra.mrb[0].mxu0 %v7954
  %v8125 = vpop.f32.mrb[0].mxu0
  %v8126 = vadd.f32 0.0, %v8125
  %v8127 = vpop.f32.mrb[0].mxu0
  %8128 = vmatprep.mubr.f32.mxu0 0.0
  %8129 = vmatmul.mubr.f32.gmra.mrb[0].mxu0 %v7955
  %v8130 = vpop.f32.mrb[0].mxu0
  %v8131 = vadd.f32 0.0, %v8130
  %v8132 = vpop.f32.mrb[0].mxu0
  %8133 = vmatprep.mubr.f32.mxu0 0.0
  %8134 = vmatmul.mubr.f32.gmra.mrb[0].mxu0 %v7956
  %v8135 = vpop.f32.mrb[0].mxu0
  %v8136 = vadd.f32 0.0, %v8135
  %v8137 = vpop.f32.mrb[0].mxu0
  %8138 = vmatprep.mubr.f32.mxu0 0.0
  %8139 = vmatmul.mubr.f32.gmra.mrb[0].mxu0 %v7957
  %v8140 = vpop.f32.mrb[0].mxu0
  %v8141 = vadd.f32 0.0, %v8140
  %v8142 = vpop.f32.mrb[0].mxu0
  %8143 = vmatprep.mubr.f32.mxu0 0.0
  %8144 = vmatmul.mubr.f32.gmra.mrb[0].mxu0 %v7958
  %v8145 = vpop.f32.mrb[0].mxu0
  %v8146 = vadd.f32 0.0, %v8145
  %v8147 = vpop.f32.mrb[0].mxu0
  %8148 = vmatprep.mubr.f32.mxu0 0.0
  %8149 = vmatmul.mubr.f32.gmra.mrb[0].mxu0 %v7959
  %v8150 = vpop.f32.mrb[0].mxu0
  %v8151 = vadd.f32 0.0, %v8150
  %v8152 = vpop.f32.mrb[0].mxu0
  %8153 = vmatprep.mubr.f32.mxu0 0.0
  %8154 = vmatmul.mubr.f32.gmra.mrb[0].mxu0 %v7960
  %v8155 = vpop.f32.mrb[0].mxu0
  %v8156 = vadd.f32 0.0, %v8155
  %v8157 = vpop.f32.mrb[0].mxu0
  %8158 = vmatprep.mubr.f32.mxu0 0.0
  %8159 = vmatmul.mubr.f32.gmra.mrb[0].mxu0 %v7961
  %v8160 = vpop.f32.mrb[0].mxu0
  %v8161 = vadd.f32 0.0, %v8160
  %v8162 = vpop.f32.mrb[0].mxu0
  %8163 = vmatprep.mubr.f32.mxu0 0.0
  %8164 = vmatmul.mubr.f32.gmra.mrb[0].mxu0 %v7962
  %v8165 = vpop.f32.mrb[0].mxu0
  %v8166 = vadd.f32 0.0, %v8165
  %v8167 = vpop.f32.mrb[0].mxu0
  %8168 = vmatprep.mubr.f32.mxu0 0.0
  %8169 = vmatmul.mubr.f32.gmra.mrb[0].mxu0 %v7963
  %v8170 = vpop.f32.mrb[0].mxu0
  %v8171 = vadd.f32 0.0, %v8170
  %v8172 = vpop.f32.mrb[0].mxu0
  %8173 = vmatprep.mubr.f32.mxu0 0.0
  %8174 = vmatmul.mubr.f32.gmra.mrb[0].mxu0 %v7964
  %v8175 = vpop.f32.mrb[0].mxu0
  %v8176 = vadd.f32 0.0, %v8175
  %v8177 = vpop.f32.mrb[0].mxu0
  %8178 = vmatprep.mubr.f32.mxu0 0.0
  %8179 = vmatmul.mubr.f32.gmra.mrb[0].mxu0 %v7965
  %v8180 = vpop.f32.mrb[0].mxu0
  %v8181 = vadd.f32 0.0, %v8180
  %v8182 = vpop.f32.mrb[0].mxu0
  %8183 = vmatprep.mubr.f32.mxu0 0.0
  %8184 = vmatmul.mubr.f32.gmra.mrb[0].mxu0 %v7966
  %v8185 = vpop.f32.mrb[0].mxu0
  %v8186 = vadd.f32 0.0, %v8185
  %v8187 = vpop.f32.mrb[0].mxu0
  %8188 = vmatprep.mubr.f32.mxu0 0.0
  %8189 = vmatmul.mubr.f32.gmra.mrb[0].mxu0 %v7967
  %v8190 = vpop.f32.mrb[0].mxu0
  %v8191 = vadd.f32 0.0, %v8190
  %v8192 = vpop.f32.mrb[0].mxu0
  %8193 = vmatprep.mubr.f32.mxu0 0.0
  %8194 = vmatmul.mubr.f32.gmra.mrb[0].mxu0 %v7968
  %v8195 = vpop.f32.mrb[0].mxu0
  %v8196 = vadd.f32 0.0, %v8195
  %v8197 = vpop.f32.mrb[0].mxu0
  %8198 = vmatprep.mubr.f32.mxu0 0.0
  %8199 = vmatmul.mubr.f32.gmra.mrb[0].mxu0 %v7969
  %v8200 = vpop.f32.mrb[0].mxu0
  %v8201 = vadd.f32 0.0, %v8200
  %v8202 = vpop.f32.mrb[0].mxu0
  %8203 = vmatprep.mubr.f32.mxu0 0.0
  %8204 = vmatmul.mubr.f32.gmra.mrb[0].mxu0 %v7970
  %v8205 = vpop.f32.mrb[0].mxu0
  %v8206 = vadd.f32 0.0, %v8205
  %v8207 = vpop.f32.mrb[0].mxu0
  %8208 = vmatprep.mubr.f32.mxu0 0.0
  %8209 = vmatmul.mubr.f32.gmra.mrb[0].mxu0 %v7971
  %v8210 = vpop.f32.mrb[0].mxu0
  %v8211 = vadd.f32 0.0, %v8210
  %v8212 = vpop.f32.mrb[0].mxu0
  %8213 = vmatprep.mubr.f32.mxu0 0.0
  %8214 = vmatmul.mubr.f32.gmra.mrb[0].mxu0 %v7972
  %v8215 = vpop.f32.mrb[0].mxu0
  %v8216 = vadd.f32 0.0, %v8215
  %v8217 = vpop.f32.mrb[0].mxu0
  %8218 = vmatprep.mubr.f32.mxu0 0.0
  %8219 = vmatmul.mubr.f32.gmra.mrb[0].mxu0 %v7973
  %v8220 = vpop.f32.mrb[0].mxu0
  %v8221 = vadd.f32 0.0, %v8220
  %v8222 = vpop.f32.mrb[0].mxu0
  %8223 = vmatprep.mubr.f32.mxu0 0.0
  %8224 = vmatmul.mubr.f32.gmra.mrb[0].mxu0 %v7974
  %v8225 = vpop.f32.mrb[0].mxu0
  %v8226 = vadd.f32 0.0, %v8225
  %v8227 = vpop.f32.mrb[0].mxu0
  %8228 = vmatprep.mubr.f32.mxu0 0.0
  %8229 = vmatmul.mubr.f32.gmra.mrb[0].mxu0 %v7975
  %v8230 = vpop.f32.mrb[0].mxu0
  %v8231 = vadd.f32 0.0, %v8230
  %v8232 = vpop.f32.mrb[0].mxu0
  %8233 = vmatprep.mubr.f32.mxu0 0.0
  %8234 = vmatmul.mubr.f32.gmra.mrb[0].mxu0 %v7976
  %v8235 = vpop.f32.mrb[0].mxu0
  %v8236 = vadd.f32 0.0, %v8235
  %v8237 = vpop.f32.mrb[0].mxu0
  %8238 = vmatprep.mubr.f32.mxu0 0.0
  %8239 = vmatmul.mubr.f32.gmra.mrb[0].mxu0 %v7977
  %v8240 = vpop.f32.mrb[0].mxu0
  %v8241 = vadd.f32 0.0, %v8240
  %v8242 = vpop.f32.mrb[0].mxu0
  %8243 = vmatprep.mubr.f32.mxu0 0.0
  %8244 = vmatmul.mubr.f32.gmra.mrb[0].mxu0 %v7978
  %v8245 = vpop.f32.mrb[0].mxu0
  %v8246 = vadd.f32 0.0, %v8245
  %v8247 = vpop.f32.mrb[0].mxu0
  %8248 = vmatprep.mubr.f32.mxu0 0.0
  %8249 = vmatmul.mubr.f32.gmra.mrb[0].mxu0 %v7979
  %v8250 = vpop.f32.mrb[0].mxu0
  %v8251 = vadd.f32 0.0, %v8250
  %v8252 = vpop.f32.mrb[0].mxu0
  %8253 = vmatprep.mubr.f32.mxu0 0.0
  %8254 = vmatmul.mubr.f32.gmra.mrb[0].mxu0 %v7980
  %v8255 = vpop.f32.mrb[0].mxu0
  %v8256 = vadd.f32 0.0, %v8255
  %v8257 = vpop.f32.mrb[0].mxu0
  %8258 = vmatprep.mubr.f32.mxu0 0.0
  %8259 = vmatmul.mubr.f32.gmra.mrb[0].mxu0 %v7981
  %v8260 = vpop.f32.mrb[0].mxu0
  %v8261 = vadd.f32 0.0, %v8260
  %v8262 = vpop.f32.mrb[0].mxu0
  %8263 = vmatprep.mubr.f32.mxu0 0.0
  %8264 = vmatmul.mubr.f32.gmra.mrb[0].mxu0 %v7982
  %v8265 = vpop.f32.mrb[0].mxu0
  %v8266 = vadd.f32 0.0, %v8265
  %v8267 = vpop.f32.mrb[0].mxu0
  %8268 = vmatprep.mubr.f32.mxu0 0.0
  %8269 = vmatmul.mubr.f32.gmra.mrb[0].mxu0 %v7983
  %v8270 = vpop.f32.mrb[0].mxu0
  %v8271 = vadd.f32 0.0, %v8270
  %v8272 = vpop.f32.mrb[0].mxu0
  %8273 = vmatprep.mubr.f32.mxu0 0.0
  %8274 = vmatmul.mubr.f32.gmra.mrb[0].mxu0 %v7984
  %v8275 = vpop.f32.mrb[0].mxu0
  %v8276 = vadd.f32 0.0, %v8275
  %v8277 = vpop.f32.mrb[0].mxu0
  %8278 = vmatprep.mubr.f32.mxu0 0.0
  %8279 = vmatmul.mubr.f32.gmra.mrb[0].mxu0 %v7985
  %v8280 = vpop.f32.mrb[0].mxu0
  %v8281 = vadd.f32 0.0, %v8280
  %v8282 = vpop.f32.mrb[0].mxu0
  %8283 = vmatprep.mubr.f32.mxu0 0.0
  %8284 = vmatmul.mubr.f32.gmra.mrb[0].mxu0 %v7986
  %v8285 = vpop.f32.mrb[0].mxu0
  %v8286 = vadd.f32 0.0, %v8285
  %v8287 = vpop.f32.mrb[0].mxu0
  %8288 = vmatprep.mubr.f32.mxu0 0.0
  %8289 = vmatmul.mubr.f32.gmra.mrb[0].mxu0 %v7987
  %v8290 = vpop.f32.mrb[0].mxu0
  %v8291 = vadd.f32 0.0, %v8290
  %v8292 = vpop.f32.mrb[0].mxu0
  %8293 = vmatprep.mubr.f32.mxu0 0.0
  %8294 = vmatmul.mubr.f32.gmra.mrb[0].mxu0 %v7988
  %v8295 = vpop.f32.mrb[0].mxu0
  %v8296 = vadd.f32 0.0, %v8295
  %v8297 = vpop.f32.mrb[0].mxu0
  %8298 = vmatprep.mubr.f32.mxu0 0.0
  %8299 = vmatmul.mubr.f32.gmra.mrb[0].mxu0 %v7989
  %v8300 = vpop.f32.mrb[0].mxu0
  %v8301 = vadd.f32 0.0, %v8300
  %v8302 = vpop.f32.mrb[0].mxu0
  %8303 = vmatprep.mubr.f32.mxu0 0.0
  %8304 = vmatmul.mubr.f32.gmra.mrb[0].mxu0 %v7990
  %v8305 = vpop.f32.mrb[0].mxu0
  %v8306 = vadd.f32 0.0, %v8305
  %v8307 = vpop.f32.mrb[0].mxu0
  %8308 = vmatprep.mubr.f32.mxu0 0.0
  %8309 = vmatmul.mubr.f32.gmra.mrb[0].mxu0 %v7991
  %v8310 = vpop.f32.mrb[0].mxu0
  %v8311 = vadd.f32 0.0, %v8310
  %v8312 = vpop.f32.mrb[0].mxu0
  %8313 = vmatprep.mubr.f32.mxu0 0.0
  %8314 = vmatmul.mubr.f32.gmra.mrb[0].mxu0 %v7992
  %v8315 = vpop.f32.mrb[0].mxu0
  %v8316 = vadd.f32 0.0, %v8315
  %v8317 = vpop.f32.mrb[0].mxu0
  %8318 = vmatprep.mubr.f32.mxu0 0.0
  %8319 = vmatmul.mubr.f32.gmra.mrb[0].mxu0 %v7993
  %v8320 = vpop.f32.mrb[0].mxu0
  %v8321 = vadd.f32 0.0, %v8320
  %v8322 = vpop.f32.mrb[0].mxu0
  %8323 = vmatprep.mubr.f32.mxu0 0.0
  %8324 = vmatmul.mubr.f32.gmra.mrb[0].mxu0 %v7994
  %v8325 = vpop.f32.mrb[0].mxu0
  %v8326 = vadd.f32 0.0, %v8325
  %v8327 = vpop.f32.mrb[0].mxu0
  %8328 = vmatprep.mubr.f32.mxu0 0.0
  %8329 = vmatmul.mubr.f32.gmra.mrb[0].mxu0 %v7995
  %v8330 = vpop.f32.mrb[0].mxu0
  %v8331 = vadd.f32 0.0, %v8330
  %v8332 = vpop.f32.mrb[0].mxu0
  %8333 = vmatprep.mubr.f32.mxu0 0.0
  %8334 = vmatmul.mubr.f32.gmra.mrb[0].mxu0 %v7996
  %v8335 = vpop.f32.mrb[0].mxu0
  %v8336 = vadd.f32 0.0, %v8335
  %v8337 = vpop.f32.mrb[0].mxu0
  %8338 = vmatprep.mubr.f32.mxu0 0.0
  %8339 = vmatmul.mubr.f32.gmra.mrb[0].mxu0 %v7997
  %v8340 = vpop.f32.mrb[0].mxu0
  %v8341 = vadd.f32 0.0, %v8340
  %v8342 = vpop.f32.mrb[0].mxu0
  %8343 = vmatprep.mubr.f32.mxu0 0.0
  %8344 = vmatmul.mubr.f32.gmra.mrb[0].mxu0 %v7998
  %v8345 = vpop.f32.mrb[0].mxu0
  %v8346 = vadd.f32 0.0, %v8345
  %v8347 = vpop.f32.mrb[0].mxu0
  %8348 = vmatprep.mubr.f32.mxu0 0.0
  %8349 = vmatmul.mubr.f32.gmra.mrb[0].mxu0 %v7999
  %v8350 = vpop.f32.mrb[0].mxu0
  %v8351 = vadd.f32 0.0, %v8350
  %v8352 = vpop.f32.mrb[0].mxu0
  %8353 = vmatprep.mubr.f32.mxu0 0.0
  %8354 = vmatmul.mubr.f32.gmra.mrb[0].mxu0 %v8000
  %v8355 = vpop.f32.mrb[0].mxu0
  %v8356 = vadd.f32 0.0, %v8355
  %v8357 = vpop.f32.mrb[0].mxu0
  %8358 = vmatprep.mubr.f32.mxu0 0.0
  %8359 = vmatmul.mubr.f32.gmra.mrb[0].mxu0 %v8001
  %v8360 = vpop.f32.mrb[0].mxu0
  %v8361 = vadd.f32 0.0, %v8360
  %v8362 = vpop.f32.mrb[0].mxu0
  %8363 = vmatprep.mubr.f32.mxu0 0.0
  %8364 = vmatmul.mubr.f32.gmra.mrb[0].mxu0 %v8002
  %v8365 = vpop.f32.mrb[0].mxu0
  %v8366 = vadd.f32 0.0, %v8365
  %v8367 = vpop.f32.mrb[0].mxu0
  %8368 = vmatprep.mubr.f32.mxu0 0.0
  %8369 = vmatmul.mubr.f32.gmra.mrb[0].mxu0 %v8003
  %v8370 = vpop.f32.mrb[0].mxu0
  %v8371 = vadd.f32 0.0, %v8370
  %v8372 = vpop.f32.mrb[0].mxu0
  %8373 = vmatprep.mubr.f32.mxu0 0.0
  %8374 = vmatmul.mubr.f32.gmra.mrb[0].mxu0 %v8004
  %v8375 = vpop.f32.mrb[0].mxu0
  %v8376 = vadd.f32 0.0, %v8375
  %v8377 = vpop.f32.mrb[0].mxu0
  %8378 = vmatprep.mubr.f32.mxu0 0.0
  %8379 = vmatmul.mubr.f32.gmra.mrb[0].mxu0 %v8005
  %v8380 = vpop.f32.mrb[0].mxu0
  %v8381 = vadd.f32 0.0, %v8380
  %v8382 = vpop.f32.mrb[0].mxu0
  %8383 = vmatprep.mubr.f32.mxu0 0.0
  %8384 = vmatmul.mubr.f32.gmra.mrb[0].mxu0 %v8006
  %v8385 = vpop.f32.mrb[0].mxu0
  %v8386 = vadd.f32 0.0, %v8385
  %v8387 = vpop.f32.mrb[0].mxu0
  %8388 = vmatprep.mubr.f32.mxu0 0.0
  %8389 = vmatmul.mubr.f32.gmra.mrb[0].mxu0 %v8007
  %v8390 = vpop.f32.mrb[0].mxu0
  %v8391 = vadd.f32 0.0, %v8390
  %v8392 = vpop.f32.mrb[0].mxu0
  %8393 = vmatprep.mubr.f32.mxu0 0.0
  %8394 = vmatmul.mubr.f32.gmra.mrb[0].mxu0 %v8008
  %v8395 = vpop.f32.mrb[0].mxu0
  %v8396 = vadd.f32 0.0, %v8395
  %v8397 = vpop.f32.mrb[0].mxu0
  %8398 = vmatprep.mubr.f32.mxu0 0.0
  %8399 = vmatmul.mubr.f32.gmra.mrb[0].mxu0 %v8009
  %v8400 = vpop.f32.mrb[0].mxu0
  %v8401 = vadd.f32 0.0, %v8400
  %v8402 = vpop.f32.mrb[0].mxu0
  %8403 = vmatprep.mubr.f32.mxu0 0.0
  %8404 = vmatmul.mubr.f32.gmra.mrb[0].mxu0 %v8010
  %v8405 = vpop.f32.mrb[0].mxu0
  %v8406 = vadd.f32 0.0, %v8405
  %v8407 = vpop.f32.mrb[0].mxu0
  %8408 = vmatprep.mubr.f32.mxu0 0.0
  %8409 = vmatmul.mubr.f32.gmra.mrb[0].mxu0 %v8011
  %v8410 = vpop.f32.mrb[0].mxu0
  %v8411 = vadd.f32 0.0, %v8410
  %v8412 = vpop.f32.mrb[0].mxu0
  %8413 = vmatprep.mubr.f32.mxu0 0.0
  %8414 = vmatmul.mubr.f32.gmra.mrb[0].mxu0 %v8012
  %v8415 = vpop.f32.mrb[0].mxu0
  %v8416 = vadd.f32 0.0, %v8415
  %v8417 = vpop.f32.mrb[0].mxu0
  %8418 = vmatprep.mubr.f32.mxu0 0.0
  %8419 = vmatmul.mubr.f32.gmra.mrb[0].mxu0 %v8013
  %v8420 = vpop.f32.mrb[0].mxu0
  %v8421 = vadd.f32 0.0, %v8420
  %v8422 = vpop.f32.mrb[0].mxu0
  %8423 = vmatprep.mubr.f32.mxu0 0.0
  %8424 = vmatmul.mubr.f32.gmra.mrb[0].mxu0 %v8014
  %v8425 = vpop.f32.mrb[0].mxu0
  %v8426 = vadd.f32 0.0, %v8425
  %v8427 = vpop.f32.mrb[0].mxu0
  %8428 = vmatprep.mubr.f32.mxu0 0.0
  %8429 = vmatmul.mubr.f32.gmra.mrb[0].mxu0 %v8015
  %v8430 = vpop.f32.mrb[0].mxu0
  %v8431 = vadd.f32 0.0, %v8430
  %v8432 = vpop.f32.mrb[0].mxu0
  %8433 = vmatprep.mubr.f32.mxu0 0.0
  %8434 = vmatmul.mubr.f32.gmra.mrb[0].mxu0 %v8016
  %v8435 = vpop.f32.mrb[0].mxu0
  %v8436 = vadd.f32 0.0, %v8435
  %v8437 = vpop.f32.mrb[0].mxu0
  %8438 = vmatprep.mubr.f32.mxu0 0.0
  %8439 = vmatmul.mubr.f32.gmra.mrb[0].mxu0 %v8017
  %v8440 = vpop.f32.mrb[0].mxu0
  %v8441 = vadd.f32 0.0, %v8440
  %v8442 = vpop.f32.mrb[0].mxu0
  %8443 = vmatprep.mubr.f32.mxu0 0.0
  %8444 = vmatmul.mubr.f32.gmra.mrb[0].mxu0 %v8018
  %v8445 = vpop.f32.mrb[0].mxu0
  %v8446 = vadd.f32 0.0, %v8445
  %v8447 = vpop.f32.mrb[0].mxu0
  %8448 = vmatprep.mubr.f32.mxu0 0.0
  %8449 = vmatmul.mubr.f32.gmra.mrb[0].mxu0 %v8019
  %v8450 = vpop.f32.mrb[0].mxu0
  %v8451 = vadd.f32 0.0, %v8450
  %v8452 = vpop.f32.mrb[0].mxu0
  %8453 = vmatprep.mubr.f32.mxu0 0.0
  %8454 = vmatmul.mubr.f32.gmra.mrb[0].mxu0 %v8020
  %v8455 = vpop.f32.mrb[0].mxu0
  %v8456 = vadd.f32 0.0, %v8455
  %v8457 = vpop.f32.mrb[0].mxu0
  %8458 = vmatprep.mubr.f32.mxu0 0.0
  %8459 = vmatmul.mubr.f32.gmra.mrb[0].mxu0 %v8021
  %v8460 = vpop.f32.mrb[0].mxu0
  %v8461 = vadd.f32 0.0, %v8460
  %v8462 = vpop.f32.mrb[0].mxu0
  %8463 = vmatprep.mubr.f32.mxu0 0.0
  %8464 = vmatmul.mubr.f32.gmra.mrb[0].mxu0 %v8022
  %v8465 = vpop.f32.mrb[0].mxu0
  %v8466 = vadd.f32 0.0, %v8465
  %v8467 = vpop.f32.mrb[0].mxu0
  %8468 = vmatprep.mubr.f32.mxu0 0.0
  %8469 = vmatmul.mubr.f32.gmra.mrb[0].mxu0 %v8023
  %v8470 = vpop.f32.mrb[0].mxu0
  %v8471 = vadd.f32 0.0, %v8470
  %v8472 = vpop.f32.mrb[0].mxu0
  %8473 = vmatprep.mubr.f32.mxu0 0.0
  %8474 = vmatmul.mubr.f32.gmra.mrb[0].mxu0 %v8024
  %v8475 = vpop.f32.mrb[0].mxu0
  %v8476 = vadd.f32 0.0, %v8475
  %v8477 = vpop.f32.mrb[0].mxu0
  %8478 = vmatprep.mubr.f32.mxu0 0.0
  %8479 = vmatmul.mubr.f32.gmra.mrb[0].mxu0 %v8025
  %v8480 = vpop.f32.mrb[0].mxu0
  %v8481 = vadd.f32 0.0, %v8480
  %v8482 = vpop.f32.mrb[0].mxu0
  %8483 = vmatprep.mubr.f32.mxu0 0.0
  %8484 = vmatmul.mubr.f32.gmra.mrb[0].mxu0 %v8026
  %v8485 = vpop.f32.mrb[0].mxu0
  %v8486 = vadd.f32 0.0, %v8485
  %v8487 = vpop.f32.mrb[0].mxu0
  %8488 = vmatprep.mubr.f32.mxu0 0.0
  %8489 = vmatmul.mubr.f32.gmra.mrb[0].mxu0 %v8027
  %v8490 = vpop.f32.mrb[0].mxu0
  %v8491 = vadd.f32 0.0, %v8490
  %v8492 = vpop.f32.mrb[0].mxu0
  %8493 = vmatprep.mubr.f32.mxu0 0.0
  %8494 = vmatmul.mubr.f32.gmra.mrb[0].mxu0 %v8028
  %v8495 = vpop.f32.mrb[0].mxu0
  %v8496 = vadd.f32 0.0, %v8495
  %v8497 = vpop.f32.mrb[0].mxu0
  %8498 = vmatprep.mubr.f32.mxu0 0.0
  %8499 = vmatmul.mubr.f32.gmra.mrb[0].mxu0 %v8029
  %v8500 = vpop.f32.mrb[0].mxu0
  %v8501 = vadd.f32 0.0, %v8500
  %v8502 = vpop.f32.mrb[0].mxu0
  %8503 = vmatprep.mubr.f32.mxu0 0.0
  %8504 = vmatmul.mubr.f32.gmra.mrb[0].mxu0 %v8030
  %v8505 = vpop.f32.mrb[0].mxu0
  %v8506 = vadd.f32 0.0, %v8505
  %v8507 = vpop.f32.mrb[0].mxu0
  %8508 = vmatprep.mubr.f32.mxu0 0.0
  %8509 = vmatmul.mubr.f32.gmra.mrb[0].mxu0 %v8031
  %v8510 = vpop.f32.mrb[0].mxu0
  %v8511 = vadd.f32 0.0, %v8510
  %v8512 = vpop.f32.mrb[0].mxu0
  %8513 = vmatprep.mubr.f32.mxu0 0.0
  %8514 = vmatmul.mubr.f32.gmra.mrb[0].mxu0 %v8032
  %v8515 = vpop.f32.mrb[0].mxu0
  %v8516 = vadd.f32 0.0, %v8515
  %v8517 = vpop.f32.mrb[0].mxu0
  %8518 = vdwg.mxu0
  %v8519 = vld [vmem:[%s4 + $0x4] sm:$0x1]
  %v8520 = vld [vmem:[%s4 + $0x5] sm:$0x1]
  %v8521 = vmul.f32 %v8116, %v1189
  %v8522 = vmul.f32 %v8121, %v1194
  %v8523 = vmul.f32 %v8126, %v1199
  %v8524 = vmul.f32 %v8131, %v1204
  %v8525 = vmul.f32 %v8136, %v1209
  %v8526 = vmul.f32 %v8141, %v1214
  %v8527 = vmul.f32 %v8146, %v1219
  %v8528 = vmul.f32 %v8151, %v1224
  %v8529 = vmul.f32 %v8156, %v1229
  %v8530 = vmul.f32 %v8161, %v1234
  %v8531 = vmul.f32 %v8166, %v1239
  %v8532 = vmul.f32 %v8171, %v1244
  %v8533 = vmul.f32 %v8176, %v1249
  %v8534 = vmul.f32 %v8181, %v1254
  %v8535 = vmul.f32 %v8186, %v1259
  %v8536 = vmul.f32 %v8191, %v1264
  %v8537 = vmul.f32 %v8196, %v1269
  %v8538 = vmul.f32 %v8201, %v1274
  %v8539 = vmul.f32 %v8206, %v1279
  %v8540 = vmul.f32 %v8211, %v1284
  %v8541 = vmul.f32 %v8216, %v1289
  %v8542 = vmul.f32 %v8221, %v1294
  %v8543 = vmul.f32 %v8226, %v1299
  %v8544 = vmul.f32 %v8231, %v1304
  %v8545 = vmul.f32 %v8236, %v1309
  %v8546 = vmul.f32 %v8241, %v1314
  %v8547 = vmul.f32 %v8246, %v1319
  %v8548 = vmul.f32 %v8251, %v1324
  %v8549 = vmul.f32 %v8256, %v1329
  %v8550 = vmul.f32 %v8261, %v1334
  %v8551 = vmul.f32 %v8266, %v1339
  %v8552 = vmul.f32 %v8271, %v1344
  %v8553 = vmul.f32 %v8276, %v1349
  %v8554 = vmul.f32 %v8281, %v1354
  %v8555 = vmul.f32 %v8286, %v1359
  %v8556 = vmul.f32 %v8291, %v1364
  %v8557 = vmul.f32 %v8296, %v1369
  %v8558 = vmul.f32 %v8301, %v1374
  %v8559 = vmul.f32 %v8306, %v1379
  %v8560 = vmul.f32 %v8311, %v1384
  %v8561 = vmul.f32 %v8316, %v1389
  %v8562 = vmul.f32 %v8321, %v1394
  %v8563 = vmul.f32 %v8326, %v1399
  %v8564 = vmul.f32 %v8331, %v1404
  %v8565 = vmul.f32 %v8336, %v1409
  %v8566 = vmul.f32 %v8341, %v1414
  %v8567 = vmul.f32 %v8346, %v1419
  %v8568 = vmul.f32 %v8351, %v1424
  %v8569 = vmul.f32 %v8356, %v1429
  %v8570 = vmul.f32 %v8361, %v1434
  %v8571 = vmul.f32 %v8366, %v1439
  %v8572 = vmul.f32 %v8371, %v1444
  %v8573 = vmul.f32 %v8376, %v1449
  %v8574 = vmul.f32 %v8381, %v1454
  %v8575 = vmul.f32 %v8386, %v1459
  %v8576 = vmul.f32 %v8391, %v1464
  %v8577 = vmul.f32 %v8396, %v1469
  %v8578 = vmul.f32 %v8401, %v1474
  %v8579 = vmul.f32 %v8406, %v1479
  %v8580 = vmul.f32 %v8411, %v1484
  %v8581 = vmul.f32 %v8416, %v1489
  %v8582 = vmul.f32 %v8421, %v1494
  %v8583 = vmul.f32 %v8426, %v1499
  %v8584 = vmul.f32 %v8431, %v1504
  %v8585 = vmul.f32 %v8436, %v1509
  %v8586 = vmul.f32 %v8441, %v1514
  %v8587 = vmul.f32 %v8446, %v1519
  %v8588 = vmul.f32 %v8451, %v1524
  %v8589 = vmul.f32 %v8456, %v1529
  %v8590 = vmul.f32 %v8461, %v1534
  %v8591 = vmul.f32 %v8466, %v1539
  %v8592 = vmul.f32 %v8471, %v1544
  %v8593 = vmul.f32 %v8476, %v1549
  %v8594 = vmul.f32 %v8481, %v1554
  %v8595 = vmul.f32 %v8486, %v1559
  %v8596 = vmul.f32 %v8491, %v1564
  %v8597 = vmul.f32 %v8496, %v1569
  %v8598 = vmul.f32 %v8501, %v1574
  %v8599 = vmul.f32 %v8506, %v1579
  %v8600 = vmul.f32 %v8511, %v1584
  %v8601 = vmul.f32 %v8516, %v1589
  %v8602 = vadd.f32 %v8521, %v8522
  %v8603 = vadd.f32 %v8602, %v8523
  %v8604 = vadd.f32 %v8603, %v8524
  %v8605 = vadd.f32 %v8604, %v8525
  %v8606 = vadd.f32 %v8605, %v8526
  %v8607 = vadd.f32 %v8606, %v8527
  %v8608 = vadd.f32 %v8607, %v8528
  %v8609 = vadd.f32 %v8608, %v8529
  %v8610 = vadd.f32 %v8609, %v8530
  %v8611 = vadd.f32 %v8610, %v8531
  %v8612 = vadd.f32 %v8611, %v8532
  %v8613 = vadd.f32 %v8612, %v8533
  %v8614 = vadd.f32 %v8613, %v8534
  %v8615 = vadd.f32 %v8614, %v8535
  %v8616 = vadd.f32 %v8615, %v8536
  %v8617 = vadd.f32 %v8616, %v8537
  %v8618 = vadd.f32 %v8617, %v8538
  %v8619 = vadd.f32 %v8618, %v8539
  %v8620 = vadd.f32 %v8619, %v8540
  %v8621 = vadd.f32 %v8620, %v8541
  %v8622 = vadd.f32 %v8621, %v8542
  %v8623 = vadd.f32 %v8622, %v8543
  %v8624 = vadd.f32 %v8623, %v8544
  %v8625 = vadd.f32 %v8624, %v8545
  %v8626 = vadd.f32 %v8625, %v8546
  %v8627 = vadd.f32 %v8626, %v8547
  %v8628 = vadd.f32 %v8627, %v8548
  %v8629 = vadd.f32 %v8628, %v8549
  %v8630 = vadd.f32 %v8629, %v8550
  %v8631 = vadd.f32 %v8630, %v8551
  %v8632 = vadd.f32 %v8631, %v8552
  %v8633 = vadd.f32 %v8632, %v8553
  %v8634 = vadd.f32 %v8633, %v8554
  %v8635 = vadd.f32 %v8634, %v8555
  %v8636 = vadd.f32 %v8635, %v8556
  %v8637 = vadd.f32 %v8636, %v8557
  %v8638 = vadd.f32 %v8637, %v8558
  %v8639 = vadd.f32 %v8638, %v8559
  %v8640 = vadd.f32 %v8639, %v8560
  %v8641 = vadd.f32 %v8640, %v8561
  %v8642 = vadd.f32 %v8641, %v8562
  %v8643 = vadd.f32 %v8642, %v8563
  %v8644 = vadd.f32 %v8643, %v8564
  %v8645 = vadd.f32 %v8644, %v8565
  %v8646 = vadd.f32 %v8645, %v8566
  %v8647 = vadd.f32 %v8646, %v8567
  %v8648 = vadd.f32 %v8647, %v8568
  %v8649 = vadd.f32 %v8648, %v8569
  %v8650 = vadd.f32 %v8649, %v8570
  %v8651 = vadd.f32 %v8650, %v8571
  %v8652 = vadd.f32 %v8651, %v8572
  %v8653 = vadd.f32 %v8652, %v8573
  %v8654 = vadd.f32 %v8653, %v8574
  %v8655 = vadd.f32 %v8654, %v8575
  %v8656 = vadd.f32 %v8655, %v8576
  %v8657 = vadd.f32 %v8656, %v8577
  %v8658 = vadd.f32 %v8657, %v8578
  %v8659 = vadd.f32 %v8658, %v8579
  %v8660 = vadd.f32 %v8659, %v8580
  %v8661 = vadd.f32 %v8660, %v8581
  %v8662 = vadd.f32 %v8661, %v8582
  %v8663 = vadd.f32 %v8662, %v8583
  %v8664 = vadd.f32 %v8663, %v8584
  %v8665 = vadd.f32 %v8664, %v8585
  %v8666 = vadd.f32 %v8665, %v8586
  %v8667 = vadd.f32 %v8666, %v8587
  %v8668 = vadd.f32 %v8667, %v8588
  %v8669 = vadd.f32 %v8668, %v8589
  %v8670 = vadd.f32 %v8669, %v8590
  %v8671 = vadd.f32 %v8670, %v8591
  %v8672 = vadd.f32 %v8671, %v8592
  %v8673 = vadd.f32 %v8672, %v8593
  %v8674 = vadd.f32 %v8673, %v8594
  %v8675 = vadd.f32 %v8674, %v8595
  %v8676 = vadd.f32 %v8675, %v8596
  %v8677 = vadd.f32 %v8676, %v8597
  %v8678 = vadd.f32 %v8677, %v8598
  %v8679 = vadd.f32 %v8678, %v8599
  %v8680 = vadd.f32 %v8679, %v8600
  %v8681 = vadd.f32 %v8680, %v8601
  %v8682 = vrot.slane %v8681, 4
  %v8683 = vadd.f32 %v8681, %v8682
  %v8684 = vrot.slane %v8683, 2
  %v8685 = vadd.f32 %v8683, %v8684
  %v8686 = vrot.slane %v8685, 1
  %v8687 = vadd.f32 %v8685, %v8686
  %v8688 = vmul.f32 %v8687, 0.001953125
  %v8689 = vmul.f32 %v8521, %v8521
  %v8690 = vmul.f32 %v8522, %v8522
  %v8691 = vmul.f32 %v8523, %v8523
  %v8692 = vmul.f32 %v8524, %v8524
  %v8693 = vmul.f32 %v8525, %v8525
  %v8694 = vmul.f32 %v8526, %v8526
  %v8695 = vmul.f32 %v8527, %v8527
  %v8696 = vmul.f32 %v8528, %v8528
  %v8697 = vmul.f32 %v8529, %v8529
  %v8698 = vmul.f32 %v8530, %v8530
  %v8699 = vmul.f32 %v8531, %v8531
  %v8700 = vmul.f32 %v8532, %v8532
  %v8701 = vmul.f32 %v8533, %v8533
  %v8702 = vmul.f32 %v8534, %v8534
  %v8703 = vmul.f32 %v8535, %v8535
  %v8704 = vmul.f32 %v8536, %v8536
  %v8705 = vmul.f32 %v8537, %v8537
  %v8706 = vmul.f32 %v8538, %v8538
  %v8707 = vmul.f32 %v8539, %v8539
  %v8708 = vmul.f32 %v8540, %v8540
  %v8709 = vmul.f32 %v8541, %v8541
  %v8710 = vmul.f32 %v8542, %v8542
  %v8711 = vmul.f32 %v8543, %v8543
  %v8712 = vmul.f32 %v8544, %v8544
  %v8713 = vmul.f32 %v8545, %v8545
  %v8714 = vmul.f32 %v8546, %v8546
  %v8715 = vmul.f32 %v8547, %v8547
  %v8716 = vmul.f32 %v8548, %v8548
  %v8717 = vmul.f32 %v8549, %v8549
  %v8718 = vmul.f32 %v8550, %v8550
  %v8719 = vmul.f32 %v8551, %v8551
  %v8720 = vmul.f32 %v8552, %v8552
  %v8721 = vmul.f32 %v8553, %v8553
  %v8722 = vmul.f32 %v8554, %v8554
  %v8723 = vmul.f32 %v8555, %v8555
  %v8724 = vmul.f32 %v8556, %v8556
  %v8725 = vmul.f32 %v8557, %v8557
  %v8726 = vmul.f32 %v8558, %v8558
  %v8727 = vmul.f32 %v8559, %v8559
  %v8728 = vmul.f32 %v8560, %v8560
  %v8729 = vmul.f32 %v8561, %v8561
  %v8730 = vmul.f32 %v8562, %v8562
  %v8731 = vmul.f32 %v8563, %v8563
  %v8732 = vmul.f32 %v8564, %v8564
  %v8733 = vmul.f32 %v8565, %v8565
  %v8734 = vmul.f32 %v8566, %v8566
  %v8735 = vmul.f32 %v8567, %v8567
  %v8736 = vmul.f32 %v8568, %v8568
  %v8737 = vmul.f32 %v8569, %v8569
  %v8738 = vmul.f32 %v8570, %v8570
  %v8739 = vmul.f32 %v8571, %v8571
  %v8740 = vmul.f32 %v8572, %v8572
  %v8741 = vmul.f32 %v8573, %v8573
  %v8742 = vmul.f32 %v8574, %v8574
  %v8743 = vmul.f32 %v8575, %v8575
  %v8744 = vmul.f32 %v8576, %v8576
  %v8745 = vmul.f32 %v8577, %v8577
  %v8746 = vmul.f32 %v8578, %v8578
  %v8747 = vmul.f32 %v8579, %v8579
  %v8748 = vmul.f32 %v8580, %v8580
  %v8749 = vmul.f32 %v8581, %v8581
  %v8750 = vmul.f32 %v8582, %v8582
  %v8751 = vmul.f32 %v8583, %v8583
  %v8752 = vmul.f32 %v8584, %v8584
  %v8753 = vmul.f32 %v8585, %v8585
  %v8754 = vmul.f32 %v8586, %v8586
  %v8755 = vmul.f32 %v8587, %v8587
  %v8756 = vmul.f32 %v8588, %v8588
  %v8757 = vmul.f32 %v8589, %v8589
  %v8758 = vmul.f32 %v8590, %v8590
  %v8759 = vmul.f32 %v8591, %v8591
  %v8760 = vmul.f32 %v8592, %v8592
  %v8761 = vmul.f32 %v8593, %v8593
  %v8762 = vmul.f32 %v8594, %v8594
  %v8763 = vmul.f32 %v8595, %v8595
  %v8764 = vmul.f32 %v8596, %v8596
  %v8765 = vmul.f32 %v8597, %v8597
  %v8766 = vmul.f32 %v8598, %v8598
  %v8767 = vmul.f32 %v8599, %v8599
  %v8768 = vmul.f32 %v8600, %v8600
  %v8769 = vmul.f32 %v8601, %v8601
  %v8770 = vadd.f32 %v8689, %v8690
  %v8771 = vadd.f32 %v8770, %v8691
  %v8772 = vadd.f32 %v8771, %v8692
  %v8773 = vadd.f32 %v8772, %v8693
  %v8774 = vadd.f32 %v8773, %v8694
  %v8775 = vadd.f32 %v8774, %v8695
  %v8776 = vadd.f32 %v8775, %v8696
  %v8777 = vadd.f32 %v8776, %v8697
  %v8778 = vadd.f32 %v8777, %v8698
  %v8779 = vadd.f32 %v8778, %v8699
  %v8780 = vadd.f32 %v8779, %v8700
  %v8781 = vadd.f32 %v8780, %v8701
  %v8782 = vadd.f32 %v8781, %v8702
  %v8783 = vadd.f32 %v8782, %v8703
  %v8784 = vadd.f32 %v8783, %v8704
  %v8785 = vadd.f32 %v8784, %v8705
  %v8786 = vadd.f32 %v8785, %v8706
  %v8787 = vadd.f32 %v8786, %v8707
  %v8788 = vadd.f32 %v8787, %v8708
  %v8789 = vadd.f32 %v8788, %v8709
  %v8790 = vadd.f32 %v8789, %v8710
  %v8791 = vadd.f32 %v8790, %v8711
  %v8792 = vadd.f32 %v8791, %v8712
  %v8793 = vadd.f32 %v8792, %v8713
  %v8794 = vadd.f32 %v8793, %v8714
  %v8795 = vadd.f32 %v8794, %v8715
  %v8796 = vadd.f32 %v8795, %v8716
  %v8797 = vadd.f32 %v8796, %v8717
  %v8798 = vadd.f32 %v8797, %v8718
  %v8799 = vadd.f32 %v8798, %v8719
  %v8800 = vadd.f32 %v8799, %v8720
  %v8801 = vadd.f32 %v8800, %v8721
  %v8802 = vadd.f32 %v8801, %v8722
  %v8803 = vadd.f32 %v8802, %v8723
  %v8804 = vadd.f32 %v8803, %v8724
  %v8805 = vadd.f32 %v8804, %v8725
  %v8806 = vadd.f32 %v8805, %v8726
  %v8807 = vadd.f32 %v8806, %v8727
  %v8808 = vadd.f32 %v8807, %v8728
  %v8809 = vadd.f32 %v8808, %v8729
  %v8810 = vadd.f32 %v8809, %v8730
  %v8811 = vadd.f32 %v8810, %v8731
  %v8812 = vadd.f32 %v8811, %v8732
  %v8813 = vadd.f32 %v8812, %v8733
  %v8814 = vadd.f32 %v8813, %v8734
  %v8815 = vadd.f32 %v8814, %v8735
  %v8816 = vadd.f32 %v8815, %v8736
  %v8817 = vadd.f32 %v8816, %v8737
  %v8818 = vadd.f32 %v8817, %v8738
  %v8819 = vadd.f32 %v8818, %v8739
  %v8820 = vadd.f32 %v8819, %v8740
  %v8821 = vadd.f32 %v8820, %v8741
  %v8822 = vadd.f32 %v8821, %v8742
  %v8823 = vadd.f32 %v8822, %v8743
  %v8824 = vadd.f32 %v8823, %v8744
  %v8825 = vadd.f32 %v8824, %v8745
  %v8826 = vadd.f32 %v8825, %v8746
  %v8827 = vadd.f32 %v8826, %v8747
  %v8828 = vadd.f32 %v8827, %v8748
  %v8829 = vadd.f32 %v8828, %v8749
  %v8830 = vadd.f32 %v8829, %v8750
  %v8831 = vadd.f32 %v8830, %v8751
  %v8832 = vadd.f32 %v8831, %v8752
  %v8833 = vadd.f32 %v8832, %v8753
  %v8834 = vadd.f32 %v8833, %v8754
  %v8835 = vadd.f32 %v8834, %v8755
  %v8836 = vadd.f32 %v8835, %v8756
  %v8837 = vadd.f32 %v8836, %v8757
  %v8838 = vadd.f32 %v8837, %v8758
  %v8839 = vadd.f32 %v8838, %v8759
  %v8840 = vadd.f32 %v8839, %v8760
  %v8841 = vadd.f32 %v8840, %v8761
  %v8842 = vadd.f32 %v8841, %v8762
  %v8843 = vadd.f32 %v8842, %v8763
  %v8844 = vadd.f32 %v8843, %v8764
  %v8845 = vadd.f32 %v8844, %v8765
  %v8846 = vadd.f32 %v8845, %v8766
  %v8847 = vadd.f32 %v8846, %v8767
  %v8848 = vadd.f32 %v8847, %v8768
  %v8849 = vadd.f32 %v8848, %v8769
  %v8850 = vrot.slane %v8849, 4
  %v8851 = vadd.f32 %v8849, %v8850
  %v8852 = vrot.slane %v8851, 2
  %v8853 = vadd.f32 %v8851, %v8852
  %v8854 = vrot.slane %v8853, 1
  %v8855 = vadd.f32 %v8853, %v8854
  %v8856 = vmul.f32 %v8855, 0.001953125
  %v8857 = vmul.f32 %v8688, %v8688
  %v8858 = vsub.f32 %v8856, %v8857
  %v8859 = vadd.f32 %v8858, 1e-05
  %v8860 = vrsqrt.pop %v8859
  %v8861 = vmul.f32 %v8519, %v8860
  %v8862 = vmul.f32 %v8688, %v8861
  %v8863 = vsub.f32 %v8520, %v8862
  %v8864 = vlaneseq
  %v8865 = vshrl.u32 %v8864, 7
  %v8866 = vsub.s32 0, %v8865
  %v8867 = vrot.slane %v8861, %v8866
  %v8868 = vmul.f32 %v8116, %v8867
  %v8869 = vmul.f32 %v8121, %v8867
  %v8870 = vmul.f32 %v8126, %v8867
  %v8871 = vmul.f32 %v8131, %v8867
  %v8872 = vmul.f32 %v8136, %v8867
  %v8873 = vmul.f32 %v8141, %v8867
  %v8874 = vmul.f32 %v8146, %v8867
  %v8875 = vmul.f32 %v8151, %v8867
  %v8876 = vmul.f32 %v8156, %v8867
  %v8877 = vmul.f32 %v8161, %v8867
  %v8878 = vmul.f32 %v8166, %v8867
  %v8879 = vmul.f32 %v8171, %v8867
  %v8880 = vmul.f32 %v8176, %v8867
  %v8881 = vmul.f32 %v8181, %v8867
  %v8882 = vmul.f32 %v8186, %v8867
  %v8883 = vmul.f32 %v8191, %v8867
  %v8884 = vmul.f32 %v8196, %v8867
  %v8885 = vmul.f32 %v8201, %v8867
  %v8886 = vmul.f32 %v8206, %v8867
  %v8887 = vmul.f32 %v8211, %v8867
  %v8888 = vmul.f32 %v8216, %v8867
  %v8889 = vmul.f32 %v8221, %v8867
  %v8890 = vmul.f32 %v8226, %v8867
  %v8891 = vmul.f32 %v8231, %v8867
  %v8892 = vmul.f32 %v8236, %v8867
  %v8893 = vmul.f32 %v8241, %v8867
  %v8894 = vmul.f32 %v8246, %v8867
  %v8895 = vmul.f32 %v8251, %v8867
  %v8896 = vmul.f32 %v8256, %v8867
  %v8897 = vmul.f32 %v8261, %v8867
  %v8898 = vmul.f32 %v8266, %v8867
  %v8899 = vmul.f32 %v8271, %v8867
  %v8900 = vmul.f32 %v8276, %v8867
  %v8901 = vmul.f32 %v8281, %v8867
  %v8902 = vmul.f32 %v8286, %v8867
  %v8903 = vmul.f32 %v8291, %v8867
  %v8904 = vmul.f32 %v8296, %v8867
  %v8905 = vmul.f32 %v8301, %v8867
  %v8906 = vmul.f32 %v8306, %v8867
  %v8907 = vmul.f32 %v8311, %v8867
  %v8908 = vmul.f32 %v8316, %v8867
  %v8909 = vmul.f32 %v8321, %v8867
  %v8910 = vmul.f32 %v8326, %v8867
  %v8911 = vmul.f32 %v8331, %v8867
  %v8912 = vmul.f32 %v8336, %v8867
  %v8913 = vmul.f32 %v8341, %v8867
  %v8914 = vmul.f32 %v8346, %v8867
  %v8915 = vmul.f32 %v8351, %v8867
  %v8916 = vmul.f32 %v8356, %v8867
  %v8917 = vmul.f32 %v8361, %v8867
  %v8918 = vmul.f32 %v8366, %v8867
  %v8919 = vmul.f32 %v8371, %v8867
  %v8920 = vmul.f32 %v8376, %v8867
  %v8921 = vmul.f32 %v8381, %v8867
  %v8922 = vmul.f32 %v8386, %v8867
  %v8923 = vmul.f32 %v8391, %v8867
  %v8924 = vmul.f32 %v8396, %v8867
  %v8925 = vmul.f32 %v8401, %v8867
  %v8926 = vmul.f32 %v8406, %v8867
  %v8927 = vmul.f32 %v8411, %v8867
  %v8928 = vmul.f32 %v8416, %v8867
  %v8929 = vmul.f32 %v8421, %v8867
  %v8930 = vmul.f32 %v8426, %v8867
  %v8931 = vmul.f32 %v8431, %v8867
  %v8932 = vmul.f32 %v8436, %v8867
  %v8933 = vmul.f32 %v8441, %v8867
  %v8934 = vmul.f32 %v8446, %v8867
  %v8935 = vmul.f32 %v8451, %v8867
  %v8936 = vmul.f32 %v8456, %v8867
  %v8937 = vmul.f32 %v8461, %v8867
  %v8938 = vmul.f32 %v8466, %v8867
  %v8939 = vmul.f32 %v8471, %v8867
  %v8940 = vmul.f32 %v8476, %v8867
  %v8941 = vmul.f32 %v8481, %v8867
  %v8942 = vmul.f32 %v8486, %v8867
  %v8943 = vmul.f32 %v8491, %v8867
  %v8944 = vmul.f32 %v8496, %v8867
  %v8945 = vmul.f32 %v8501, %v8867
  %v8946 = vmul.f32 %v8506, %v8867
  %v8947 = vmul.f32 %v8511, %v8867
  %v8948 = vmul.f32 %v8516, %v8867
  %v8949 = vlaneseq
  %v8950 = vshrl.u32 %v8949, 7
  %v8951 = vsub.s32 0, %v8950
  %v8952 = vrot.slane %v8863, %v8951
  %v8953 = vadd.f32 %v8868, %v8952
  %v8954 = vadd.f32 %v8869, %v8952
  %v8955 = vadd.f32 %v8870, %v8952
  %v8956 = vadd.f32 %v8871, %v8952
  %v8957 = vadd.f32 %v8872, %v8952
  %v8958 = vadd.f32 %v8873, %v8952
  %v8959 = vadd.f32 %v8874, %v8952
  %v8960 = vadd.f32 %v8875, %v8952
  %v8961 = vadd.f32 %v8876, %v8952
  %v8962 = vadd.f32 %v8877, %v8952
  %v8963 = vadd.f32 %v8878, %v8952
  %v8964 = vadd.f32 %v8879, %v8952
  %v8965 = vadd.f32 %v8880, %v8952
  %v8966 = vadd.f32 %v8881, %v8952
  %v8967 = vadd.f32 %v8882, %v8952
  %v8968 = vadd.f32 %v8883, %v8952
  %v8969 = vadd.f32 %v8884, %v8952
  %v8970 = vadd.f32 %v8885, %v8952
  %v8971 = vadd.f32 %v8886, %v8952
  %v8972 = vadd.f32 %v8887, %v8952
  %v8973 = vadd.f32 %v8888, %v8952
  %v8974 = vadd.f32 %v8889, %v8952
  %v8975 = vadd.f32 %v8890, %v8952
  %v8976 = vadd.f32 %v8891, %v8952
  %v8977 = vadd.f32 %v8892, %v8952
  %v8978 = vadd.f32 %v8893, %v8952
  %v8979 = vadd.f32 %v8894, %v8952
  %v8980 = vadd.f32 %v8895, %v8952
  %v8981 = vadd.f32 %v8896, %v8952
  %v8982 = vadd.f32 %v8897, %v8952
  %v8983 = vadd.f32 %v8898, %v8952
  %v8984 = vadd.f32 %v8899, %v8952
  %v8985 = vadd.f32 %v8900, %v8952
  %v8986 = vadd.f32 %v8901, %v8952
  %v8987 = vadd.f32 %v8902, %v8952
  %v8988 = vadd.f32 %v8903, %v8952
  %v8989 = vadd.f32 %v8904, %v8952
  %v8990 = vadd.f32 %v8905, %v8952
  %v8991 = vadd.f32 %v8906, %v8952
  %v8992 = vadd.f32 %v8907, %v8952
  %v8993 = vadd.f32 %v8908, %v8952
  %v8994 = vadd.f32 %v8909, %v8952
  %v8995 = vadd.f32 %v8910, %v8952
  %v8996 = vadd.f32 %v8911, %v8952
  %v8997 = vadd.f32 %v8912, %v8952
  %v8998 = vadd.f32 %v8913, %v8952
  %v8999 = vadd.f32 %v8914, %v8952
  %v9000 = vadd.f32 %v8915, %v8952
  %v9001 = vadd.f32 %v8916, %v8952
  %v9002 = vadd.f32 %v8917, %v8952
  %v9003 = vadd.f32 %v8918, %v8952
  %v9004 = vadd.f32 %v8919, %v8952
  %v9005 = vadd.f32 %v8920, %v8952
  %v9006 = vadd.f32 %v8921, %v8952
  %v9007 = vadd.f32 %v8922, %v8952
  %v9008 = vadd.f32 %v8923, %v8952
  %v9009 = vadd.f32 %v8924, %v8952
  %v9010 = vadd.f32 %v8925, %v8952
  %v9011 = vadd.f32 %v8926, %v8952
  %v9012 = vadd.f32 %v8927, %v8952
  %v9013 = vadd.f32 %v8928, %v8952
  %v9014 = vadd.f32 %v8929, %v8952
  %v9015 = vadd.f32 %v8930, %v8952
  %v9016 = vadd.f32 %v8931, %v8952
  %v9017 = vadd.f32 %v8932, %v8952
  %v9018 = vadd.f32 %v8933, %v8952
  %v9019 = vadd.f32 %v8934, %v8952
  %v9020 = vadd.f32 %v8935, %v8952
  %v9021 = vadd.f32 %v8936, %v8952
  %v9022 = vadd.f32 %v8937, %v8952
  %v9023 = vadd.f32 %v8938, %v8952
  %v9024 = vadd.f32 %v8939, %v8952
  %v9025 = vadd.f32 %v8940, %v8952
  %v9026 = vadd.f32 %v8941, %v8952
  %v9027 = vadd.f32 %v8942, %v8952
  %v9028 = vadd.f32 %v8943, %v8952
  %v9029 = vadd.f32 %v8944, %v8952
  %v9030 = vadd.f32 %v8945, %v8952
  %v9031 = vadd.f32 %v8946, %v8952
  %v9032 = vadd.f32 %v8947, %v8952
  %v9033 = vadd.f32 %v8948, %v8952
  %v9034 = vld [vmem:[%s0] sm:$0xff]
  %v9035 = vld [vmem:[%s0 + $0x8] sm:$0xff]
  %v9036 = vld [vmem:[%s0 + $0x10] sm:$0xff]
  %v9037 = vld [vmem:[%s0 + $0x18] sm:$0xff]
  %v9038 = vld [vmem:[%s0 + $0x20] sm:$0xff]
  %v9039 = vld [vmem:[%s0 + $0x28] sm:$0xff]
  %v9040 = vld [vmem:[%s0 + $0x30] sm:$0xff]
  %v9041 = vld [vmem:[%s0 + $0x38] sm:$0xff]
  %v9042 = vld [vmem:[%s0 + $0x40] sm:$0xff]
  %v9043 = vld [vmem:[%s0 + $0x48] sm:$0xff]
  %v9044 = vld [vmem:[%s0 + $0x50] sm:$0xff]
  %v9045 = vld [vmem:[%s0 + $0x58] sm:$0xff]
  %v9046 = vld [vmem:[%s0 + $0x60] sm:$0xff]
  %v9047 = vld [vmem:[%s0 + $0x68] sm:$0xff]
  %v9048 = vld [vmem:[%s0 + $0x70] sm:$0xff]
  %v9049 = vld [vmem:[%s0 + $0x78] sm:$0xff]
  %v9050 = vld [vmem:[%s0 + $0x80] sm:$0xff]
  %v9051 = vld [vmem:[%s0 + $0x88] sm:$0xff]
  %v9052 = vld [vmem:[%s0 + $0x90] sm:$0xff]
  %v9053 = vld [vmem:[%s0 + $0x98] sm:$0xff]
  %v9054 = vld [vmem:[%s0 + $0xa0] sm:$0xff]
  %v9055 = vld [vmem:[%s0 + $0xa8] sm:$0xff]
  %v9056 = vld [vmem:[%s0 + $0xb0] sm:$0xff]
  %v9057 = vld [vmem:[%s0 + $0xb8] sm:$0xff]
  %v9058 = vld [vmem:[%s0 + $0xc0] sm:$0xff]
  %v9059 = vld [vmem:[%s0 + $0xc8] sm:$0xff]
  %v9060 = vld [vmem:[%s0 + $0xd0] sm:$0xff]
  %v9061 = vld [vmem:[%s0 + $0xd8] sm:$0xff]
  %v9062 = vld [vmem:[%s0 + $0xe0] sm:$0xff]
  %v9063 = vld [vmem:[%s0 + $0xe8] sm:$0xff]
  %v9064 = vld [vmem:[%s0 + $0xf0] sm:$0xff]
  %v9065 = vld [vmem:[%s0 + $0xf8] sm:$0xff]
  %v9066 = vld [vmem:[%s0 + $0x100] sm:$0xff]
  %v9067 = vld [vmem:[%s0 + $0x108] sm:$0xff]
  %v9068 = vld [vmem:[%s0 + $0x110] sm:$0xff]
  %v9069 = vld [vmem:[%s0 + $0x118] sm:$0xff]
  %v9070 = vld [vmem:[%s0 + $0x120] sm:$0xff]
  %v9071 = vld [vmem:[%s0 + $0x128] sm:$0xff]
  %v9072 = vld [vmem:[%s0 + $0x130] sm:$0xff]
  %v9073 = vld [vmem:[%s0 + $0x138] sm:$0xff]
  %v9074 = vld [vmem:[%s0 + $0x140] sm:$0xff]
  %v9075 = vld [vmem:[%s0 + $0x148] sm:$0xff]
  %v9076 = vld [vmem:[%s0 + $0x150] sm:$0xff]
  %v9077 = vld [vmem:[%s0 + $0x158] sm:$0xff]
  %v9078 = vld [vmem:[%s0 + $0x160] sm:$0xff]
  %v9079 = vld [vmem:[%s0 + $0x168] sm:$0xff]
  %v9080 = vld [vmem:[%s0 + $0x170] sm:$0xff]
  %v9081 = vld [vmem:[%s0 + $0x178] sm:$0xff]
  %v9082 = vld [vmem:[%s0 + $0x180] sm:$0xff]
  %v9083 = vld [vmem:[%s0 + $0x188] sm:$0xff]
  %v9084 = vld [vmem:[%s0 + $0x190] sm:$0xff]
  %v9085 = vld [vmem:[%s0 + $0x198] sm:$0xff]
  %v9086 = vld [vmem:[%s0 + $0x1a0] sm:$0xff]
  %v9087 = vld [vmem:[%s0 + $0x1a8] sm:$0xff]
  %v9088 = vld [vmem:[%s0 + $0x1b0] sm:$0xff]
  %v9089 = vld [vmem:[%s0 + $0x1b8] sm:$0xff]
  %v9090 = vld [vmem:[%s0 + $0x1c0] sm:$0xff]
  %v9091 = vld [vmem:[%s0 + $0x1c8] sm:$0xff]
  %v9092 = vld [vmem:[%s0 + $0x1d0] sm:$0xff]
  %v9093 = vld [vmem:[%s0 + $0x1d8] sm:$0xff]
  %v9094 = vld [vmem:[%s0 + $0x1e0] sm:$0xff]
  %v9095 = vld [vmem:[%s0 + $0x1e8] sm:$0xff]
  %v9096 = vld [vmem:[%s0 + $0x1f0] sm:$0xff]
  %v9097 = vld [vmem:[%s0 + $0x1f8] sm:$0xff]
  %v9098 = vld [vmem:[%s0 + $0x200] sm:$0xff]
  %v9099 = vld [vmem:[%s0 + $0x208] sm:$0xff]
  %v9100 = vld [vmem:[%s0 + $0x210] sm:$0xff]
  %v9101 = vld [vmem:[%s0 + $0x218] sm:$0xff]
  %v9102 = vld [vmem:[%s0 + $0x220] sm:$0xff]
  %v9103 = vld [vmem:[%s0 + $0x228] sm:$0xff]
  %v9104 = vld [vmem:[%s0 + $0x230] sm:$0xff]
  %v9105 = vld [vmem:[%s0 + $0x238] sm:$0xff]
  %v9106 = vld [vmem:[%s0 + $0x240] sm:$0xff]
  %v9107 = vld [vmem:[%s0 + $0x248] sm:$0xff]
  %v9108 = vld [vmem:[%s0 + $0x250] sm:$0xff]
  %v9109 = vld [vmem:[%s0 + $0x258] sm:$0xff]
  %v9110 = vld [vmem:[%s0 + $0x260] sm:$0xff]
  %v9111 = vld [vmem:[%s0 + $0x268] sm:$0xff]
  %v9112 = vld [vmem:[%s0 + $0x270] sm:$0xff]
  %v9113 = vld [vmem:[%s0 + $0x278] sm:$0xff]
  %v9114 = vld [vmem:[%s0 + $0x280] sm:$0xff]
  %v9115 = vadd.f32 %v8953, %v9034
  %v9116 = vadd.f32 %v8954, %v9035
  %v9117 = vadd.f32 %v8955, %v9036
  %v9118 = vadd.f32 %v8956, %v9037
  %v9119 = vadd.f32 %v8957, %v9038
  %v9120 = vadd.f32 %v8958, %v9039
  %v9121 = vadd.f32 %v8959, %v9040
  %v9122 = vadd.f32 %v8960, %v9041
  %v9123 = vadd.f32 %v8961, %v9042
  %v9124 = vadd.f32 %v8962, %v9043
  %v9125 = vadd.f32 %v8963, %v9044
  %v9126 = vadd.f32 %v8964, %v9045
  %v9127 = vadd.f32 %v8965, %v9046
  %v9128 = vadd.f32 %v8966, %v9047
  %v9129 = vadd.f32 %v8967, %v9048
  %v9130 = vadd.f32 %v8968, %v9049
  %v9131 = vadd.f32 %v8969, %v9050
  %v9132 = vadd.f32 %v8970, %v9051
  %v9133 = vadd.f32 %v8971, %v9052
  %v9134 = vadd.f32 %v8972, %v9053
  %v9135 = vadd.f32 %v8973, %v9054
  %v9136 = vadd.f32 %v8974, %v9055
  %v9137 = vadd.f32 %v8975, %v9056
  %v9138 = vadd.f32 %v8976, %v9057
  %v9139 = vadd.f32 %v8977, %v9058
  %v9140 = vadd.f32 %v8978, %v9059
  %v9141 = vadd.f32 %v8979, %v9060
  %v9142 = vadd.f32 %v8980, %v9061
  %v9143 = vadd.f32 %v8981, %v9062
  %v9144 = vadd.f32 %v8982, %v9063
  %v9145 = vadd.f32 %v8983, %v9064
  %v9146 = vadd.f32 %v8984, %v9065
  %v9147 = vadd.f32 %v8985, %v9066
  %v9148 = vadd.f32 %v8986, %v9067
  %v9149 = vadd.f32 %v8987, %v9068
  %v9150 = vadd.f32 %v8988, %v9069
  %v9151 = vadd.f32 %v8989, %v9070
  %v9152 = vadd.f32 %v8990, %v9071
  %v9153 = vadd.f32 %v8991, %v9072
  %v9154 = vadd.f32 %v8992, %v9073
  %v9155 = vadd.f32 %v8993, %v9074
  %v9156 = vadd.f32 %v8994, %v9075
  %v9157 = vadd.f32 %v8995, %v9076
  %v9158 = vadd.f32 %v8996, %v9077
  %v9159 = vadd.f32 %v8997, %v9078
  %v9160 = vadd.f32 %v8998, %v9079
  %v9161 = vadd.f32 %v8999, %v9080
  %v9162 = vadd.f32 %v9000, %v9081
  %v9163 = vadd.f32 %v9001, %v9082
  %v9164 = vadd.f32 %v9002, %v9083
  %v9165 = vadd.f32 %v9003, %v9084
  %v9166 = vadd.f32 %v9004, %v9085
  %v9167 = vadd.f32 %v9005, %v9086
  %v9168 = vadd.f32 %v9006, %v9087
  %v9169 = vadd.f32 %v9007, %v9088
  %v9170 = vadd.f32 %v9008, %v9089
  %v9171 = vadd.f32 %v9009, %v9090
  %v9172 = vadd.f32 %v9010, %v9091
  %v9173 = vadd.f32 %v9011, %v9092
  %v9174 = vadd.f32 %v9012, %v9093
  %v9175 = vadd.f32 %v9013, %v9094
  %v9176 = vadd.f32 %v9014, %v9095
  %v9177 = vadd.f32 %v9015, %v9096
  %v9178 = vadd.f32 %v9016, %v9097
  %v9179 = vadd.f32 %v9017, %v9098
  %v9180 = vadd.f32 %v9018, %v9099
  %v9181 = vadd.f32 %v9019, %v9100
  %v9182 = vadd.f32 %v9020, %v9101
  %v9183 = vadd.f32 %v9021, %v9102
  %v9184 = vadd.f32 %v9022, %v9103
  %v9185 = vadd.f32 %v9023, %v9104
  %v9186 = vadd.f32 %v9024, %v9105
  %v9187 = vadd.f32 %v9025, %v9106
  %v9188 = vadd.f32 %v9026, %v9107
  %v9189 = vadd.f32 %v9027, %v9108
  %v9190 = vadd.f32 %v9028, %v9109
  %v9191 = vadd.f32 %v9029, %v9110
  %v9192 = vadd.f32 %v9030, %v9111
  %v9193 = vadd.f32 %v9031, %v9112
  %v9194 = vadd.f32 %v9032, %v9113
  %v9195 = vadd.f32 %v9033, %v9114
  %v9196 = vmax.f32 %v9115, 0.0
  %v9197 = vmax.f32 %v9116, 0.0
  %v9198 = vmax.f32 %v9117, 0.0
  %v9199 = vmax.f32 %v9118, 0.0
  %v9200 = vmax.f32 %v9119, 0.0
  %v9201 = vmax.f32 %v9120, 0.0
  %v9202 = vmax.f32 %v9121, 0.0
  %v9203 = vmax.f32 %v9122, 0.0
  %v9204 = vmax.f32 %v9123, 0.0
  %v9205 = vmax.f32 %v9124, 0.0
  %v9206 = vmax.f32 %v9125, 0.0
  %v9207 = vmax.f32 %v9126, 0.0
  %v9208 = vmax.f32 %v9127, 0.0
  %v9209 = vmax.f32 %v9128, 0.0
  %v9210 = vmax.f32 %v9129, 0.0
  %v9211 = vmax.f32 %v9130, 0.0
  %v9212 = vmax.f32 %v9131, 0.0
  %v9213 = vmax.f32 %v9132, 0.0
  %v9214 = vmax.f32 %v9133, 0.0
  %v9215 = vmax.f32 %v9134, 0.0
  %v9216 = vmax.f32 %v9135, 0.0
  %v9217 = vmax.f32 %v9136, 0.0
  %v9218 = vmax.f32 %v9137, 0.0
  %v9219 = vmax.f32 %v9138, 0.0
  %v9220 = vmax.f32 %v9139, 0.0
  %v9221 = vmax.f32 %v9140, 0.0
  %v9222 = vmax.f32 %v9141, 0.0
  %v9223 = vmax.f32 %v9142, 0.0
  %v9224 = vmax.f32 %v9143, 0.0
  %v9225 = vmax.f32 %v9144, 0.0
  %v9226 = vmax.f32 %v9145, 0.0
  %v9227 = vmax.f32 %v9146, 0.0
  %v9228 = vmax.f32 %v9147, 0.0
  %v9229 = vmax.f32 %v9148, 0.0
  %v9230 = vmax.f32 %v9149, 0.0
  %v9231 = vmax.f32 %v9150, 0.0
  %v9232 = vmax.f32 %v9151, 0.0
  %v9233 = vmax.f32 %v9152, 0.0
  %v9234 = vmax.f32 %v9153, 0.0
  %v9235 = vmax.f32 %v9154, 0.0
  %v9236 = vmax.f32 %v9155, 0.0
  %v9237 = vmax.f32 %v9156, 0.0
  %v9238 = vmax.f32 %v9157, 0.0
  %v9239 = vmax.f32 %v9158, 0.0
  %v9240 = vmax.f32 %v9159, 0.0
  %v9241 = vmax.f32 %v9160, 0.0
  %v9242 = vmax.f32 %v9161, 0.0
  %v9243 = vmax.f32 %v9162, 0.0
  %v9244 = vmax.f32 %v9163, 0.0
  %v9245 = vmax.f32 %v9164, 0.0
  %v9246 = vmax.f32 %v9165, 0.0
  %v9247 = vmax.f32 %v9166, 0.0
  %v9248 = vmax.f32 %v9167, 0.0
  %v9249 = vmax.f32 %v9168, 0.0
  %v9250 = vmax.f32 %v9169, 0.0
  %v9251 = vmax.f32 %v9170, 0.0
  %v9252 = vmax.f32 %v9171, 0.0
  %v9253 = vmax.f32 %v9172, 0.0
  %v9254 = vmax.f32 %v9173, 0.0
  %v9255 = vmax.f32 %v9174, 0.0
  %v9256 = vmax.f32 %v9175, 0.0
  %v9257 = vmax.f32 %v9176, 0.0
  %v9258 = vmax.f32 %v9177, 0.0
  %v9259 = vmax.f32 %v9178, 0.0
  %v9260 = vmax.f32 %v9179, 0.0
  %v9261 = vmax.f32 %v9180, 0.0
  %v9262 = vmax.f32 %v9181, 0.0
  %v9263 = vmax.f32 %v9182, 0.0
  %v9264 = vmax.f32 %v9183, 0.0
  %v9265 = vmax.f32 %v9184, 0.0
  %v9266 = vmax.f32 %v9185, 0.0
  %v9267 = vmax.f32 %v9186, 0.0
  %v9268 = vmax.f32 %v9187, 0.0
  %v9269 = vmax.f32 %v9188, 0.0
  %v9270 = vmax.f32 %v9189, 0.0
  %v9271 = vmax.f32 %v9190, 0.0
  %v9272 = vmax.f32 %v9191, 0.0
  %v9273 = vmax.f32 %v9192, 0.0
  %v9274 = vmax.f32 %v9193, 0.0
  %v9275 = vmax.f32 %v9194, 0.0
  %v9276 = vmax.f32 %v9195, 0.0
  %9277 = vst [vmem:[%s6] sm:$0xff] %v9196
  %9278 = vst [vmem:[%s6 + $0x8] sm:$0xff] %v9197
  %9279 = vst [vmem:[%s6 + $0x10] sm:$0xff] %v9198
  %9280 = vst [vmem:[%s6 + $0x18] sm:$0xff] %v9199
  %9281 = vst [vmem:[%s6 + $0x20] sm:$0xff] %v9200
  %9282 = vst [vmem:[%s6 + $0x28] sm:$0xff] %v9201
  %9283 = vst [vmem:[%s6 + $0x30] sm:$0xff] %v9202
  %9284 = vst [vmem:[%s6 + $0x38] sm:$0xff] %v9203
  %9285 = vst [vmem:[%s6 + $0x40] sm:$0xff] %v9204
  %9286 = vst [vmem:[%s6 + $0x48] sm:$0xff] %v9205
  %9287 = vst [vmem:[%s6 + $0x50] sm:$0xff] %v9206
  %9288 = vst [vmem:[%s6 + $0x58] sm:$0xff] %v9207
  %9289 = vst [vmem:[%s6 + $0x60] sm:$0xff] %v9208
  %9290 = vst [vmem:[%s6 + $0x68] sm:$0xff] %v9209
  %9291 = vst [vmem:[%s6 + $0x70] sm:$0xff] %v9210
  %9292 = vst [vmem:[%s6 + $0x78] sm:$0xff] %v9211
  %9293 = vst [vmem:[%s6 + $0x80] sm:$0xff] %v9212
  %9294 = vst [vmem:[%s6 + $0x88] sm:$0xff] %v9213
  %9295 = vst [vmem:[%s6 + $0x90] sm:$0xff] %v9214
  %9296 = vst [vmem:[%s6 + $0x98] sm:$0xff] %v9215
  %9297 = vst [vmem:[%s6 + $0xa0] sm:$0xff] %v9216
  %9298 = vst [vmem:[%s6 + $0xa8] sm:$0xff] %v9217
  %9299 = vst [vmem:[%s6 + $0xb0] sm:$0xff] %v9218
  %9300 = vst [vmem:[%s6 + $0xb8] sm:$0xff] %v9219
  %9301 = vst [vmem:[%s6 + $0xc0] sm:$0xff] %v9220
  %9302 = vst [vmem:[%s6 + $0xc8] sm:$0xff] %v9221
  %9303 = vst [vmem:[%s6 + $0xd0] sm:$0xff] %v9222
  %9304 = vst [vmem:[%s6 + $0xd8] sm:$0xff] %v9223
  %9305 = vst [vmem:[%s6 + $0xe0] sm:$0xff] %v9224
  %9306 = vst [vmem:[%s6 + $0xe8] sm:$0xff] %v9225
  %9307 = vst [vmem:[%s6 + $0xf0] sm:$0xff] %v9226
  %9308 = vst [vmem:[%s6 + $0xf8] sm:$0xff] %v9227
  %9309 = vst [vmem:[%s6 + $0x100] sm:$0xff] %v9228
  %9310 = vst [vmem:[%s6 + $0x108] sm:$0xff] %v9229
  %9311 = vst [vmem:[%s6 + $0x110] sm:$0xff] %v9230
  %9312 = vst [vmem:[%s6 + $0x118] sm:$0xff] %v9231
  %9313 = vst [vmem:[%s6 + $0x120] sm:$0xff] %v9232
  %9314 = vst [vmem:[%s6 + $0x128] sm:$0xff] %v9233
  %9315 = vst [vmem:[%s6 + $0x130] sm:$0xff] %v9234
  %9316 = vst [vmem:[%s6 + $0x138] sm:$0xff] %v9235
  %9317 = vst [vmem:[%s6 + $0x140] sm:$0xff] %v9236
  %9318 = vst [vmem:[%s6 + $0x148] sm:$0xff] %v9237
  %9319 = vst [vmem:[%s6 + $0x150] sm:$0xff] %v9238
  %9320 = vst [vmem:[%s6 + $0x158] sm:$0xff] %v9239
  %9321 = vst [vmem:[%s6 + $0x160] sm:$0xff] %v9240
  %9322 = vst [vmem:[%s6 + $0x168] sm:$0xff] %v9241
  %9323 = vst [vmem:[%s6 + $0x170] sm:$0xff] %v9242
  %9324 = vst [vmem:[%s6 + $0x178] sm:$0xff] %v9243
  %9325 = vst [vmem:[%s6 + $0x180] sm:$0xff] %v9244
  %9326 = vst [vmem:[%s6 + $0x188] sm:$0xff] %v9245
  %9327 = vst [vmem:[%s6 + $0x190] sm:$0xff] %v9246
  %9328 = vst [vmem:[%s6 + $0x198] sm:$0xff] %v9247
  %9329 = vst [vmem:[%s6 + $0x1a0] sm:$0xff] %v9248
  %9330 = vst [vmem:[%s6 + $0x1a8] sm:$0xff] %v9249
  %9331 = vst [vmem:[%s6 + $0x1b0] sm:$0xff] %v9250
  %9332 = vst [vmem:[%s6 + $0x1b8] sm:$0xff] %v9251
  %9333 = vst [vmem:[%s6 + $0x1c0] sm:$0xff] %v9252
  %9334 = vst [vmem:[%s6 + $0x1c8] sm:$0xff] %v9253
  %9335 = vst [vmem:[%s6 + $0x1d0] sm:$0xff] %v9254
  %9336 = vst [vmem:[%s6 + $0x1d8] sm:$0xff] %v9255
  %9337 = vst [vmem:[%s6 + $0x1e0] sm:$0xff] %v9256
  %9338 = vst [vmem:[%s6 + $0x1e8] sm:$0xff] %v9257
  %9339 = vst [vmem:[%s6 + $0x1f0] sm:$0xff] %v9258
  %9340 = vst [vmem:[%s6 + $0x1f8] sm:$0xff] %v9259
  %9341 = vst [vmem:[%s6 + $0x200] sm:$0xff] %v9260
  %9342 = vst [vmem:[%s6 + $0x208] sm:$0xff] %v9261
  %9343 = vst [vmem:[%s6 + $0x210] sm:$0xff] %v9262
  %9344 = vst [vmem:[%s6 + $0x218] sm:$0xff] %v9263
  %9345 = vst [vmem:[%s6 + $0x220] sm:$0xff] %v9264
  %9346 = vst [vmem:[%s6 + $0x228] sm:$0xff] %v9265
  %9347 = vst [vmem:[%s6 + $0x230] sm:$0xff] %v9266
  %9348 = vst [vmem:[%s6 + $0x238] sm:$0xff] %v9267
  %9349 = vst [vmem:[%s6 + $0x240] sm:$0xff] %v9268
  %9350 = vst [vmem:[%s6 + $0x248] sm:$0xff] %v9269
  %9351 = vst [vmem:[%s6 + $0x250] sm:$0xff] %v9270
  %9352 = vst [vmem:[%s6 + $0x258] sm:$0xff] %v9271
  %9353 = vst [vmem:[%s6 + $0x260] sm:$0xff] %v9272
  %9354 = vst [vmem:[%s6 + $0x268] sm:$0xff] %v9273
  %9355 = vst [vmem:[%s6 + $0x270] sm:$0xff] %v9274
  %9356 = vst [vmem:[%s6 + $0x278] sm:$0xff] %v9275
  %9357 = vst [vmem:[%s6 + $0x280] sm:$0xff] %v9276
  // Predicated region
  $region26: #{bottleneck_forward.1} parent=0 // pred_check
    _
  $region27: #{bottleneck_forward.1} parent=0 // pred_check_branch
    %9359 = sbr.rel (0) target = $region29
  $region28: #{bottleneck_forward.1} parent=0 // pred_region
    _
  $region29: #{bottleneck_forward.1} parent=0 // pred_fallthru
    _
  // Predicated region
  $region30: #{bottleneck_forward.1} parent=0 // pred_check
    _
  $region31: #{bottleneck_forward.1} parent=0 // pred_check_branch
    %9361 = sbr.rel (0) target = $region33
  $region32: #{bottleneck_forward.1} parent=0 // pred_region
    _
  $region33: #{bottleneck_forward.1} parent=0 // pred_fallthru
    _

</llo_original>
